<compile_context>
chip_gen: v7x
topology: tpu7x:2x2x1
jax: 0.10.0
libtpu: 0.0.40
codegen_flags: <defaults>
</compile_context>

<pallas_src>
import functools

import jax
import jax.numpy as jnp
from jax.experimental import pallas as pl
from jax.experimental.pallas import tpu as pltpu


_LANE = 128  # TPU lane width; padded K for the [viewdirs|sin|cos] operand.


# ---------------------------------------------------------------------------
# Reference-side positional encoding (matches the torch code exactly).
# ---------------------------------------------------------------------------
def positional_encoding(positions, freqs):
    freq_bands = 2.0 ** jnp.arange(freqs, dtype=jnp.float32)          # [freqs]
    pts = positions[..., None] * freq_bands                           # [..., C, freqs]
    pts = pts.reshape(positions.shape[:-1] + (freqs * positions.shape[-1],))
    return jnp.concatenate([jnp.sin(pts), jnp.cos(pts)], axis=-1)


# ---------------------------------------------------------------------------
# Pallas kernel: PE + 3-layer MLP + sigmoid, fully fused in VMEM.
# ---------------------------------------------------------------------------
def _mlp_render_kernel(view_ref, feat_ref, m_ref,
                       w1f_ref, w1vsc_ref, b1_ref,
                       w2_ref, b2_ref, w3_ref, b3_ref, o_ref, *, viewpe):
    bf16 = jnp.bfloat16
    v = view_ref[...]                                   # [TM, 3]     f32
    feat = feat_ref[...].astype(bf16)                   # cast in VMEM (one VPU pass)

    # Build concat([viewdirs, sin(pts), cos(pts)]) lane-dense in one [TM, 128]
    # f32 tile, entirely on the VPU/EUP (no MXU pass, no lane concat).
    # masks[c, j] holds a single 2**f (or 1 for the passthrough lanes) in each
    # column j owned by viewdir component c, zero elsewhere, so each column of
    # `full` is exactly v[:, c] * 2**f (power-of-two products are exact in f32).
    m = m_ref[...]                                      # [3, 128]    f32
    full = (v[:, 0:1] * m[0:1, :]
            + v[:, 1:2] * m[1:2, :]
            + v[:, 2:3] * m[2:3, :])                    # [TM, 128]   f32 (exact)

    if viewpe > 0:
        pe_w = 3 * viewpe
        lane = jax.lax.broadcasted_iota(jnp.int32, full.shape, 1)
        # lanes [0,3): viewdirs passthrough; [3, 3+3P): sin; [3+3P, 3+6P): cos.
        # Lanes beyond 3+6P hit zero rows of w1vsc, so their value is irrelevant.
        vsc = jnp.where(lane < 3, full,
                        jnp.where(lane < 3 + pe_w, jnp.sin(full), jnp.cos(full)))
    else:
        vsc = full                                      # just the viewdirs lanes

    # Layer 1 == concat([features, viewdirs, sin, cos]) @ W1, as 2 bf16 MXU
    # matmuls with f32 accumulation (K=in_c and K=128 fully lane-aligned).
    h = jnp.dot(feat, w1f_ref[...], preferred_element_type=jnp.float32)
    h = h + jnp.dot(vsc.astype(bf16), w1vsc_ref[...],
                    preferred_element_type=jnp.float32)
    h = jnp.maximum(h + b1_ref[...], 0.0)               # [TM, F] f32

    # Layer 2
    h = jnp.dot(h.astype(bf16), w2_ref[...], preferred_element_type=jnp.float32)
    h = jnp.maximum(h + b2_ref[...], 0.0)

    # Layer 3 + sigmoid
    out = jnp.dot(h.astype(bf16), w3_ref[...], preferred_element_type=jnp.float32)
    o_ref[...] = jax.nn.sigmoid(out + b3_ref[...])


def _pick_tile_m(n):
    # Biggest tile (amortize ~0.35 us/grid-step), but keep >= 8 grid steps when
    # the problem is big enough so v7x's two TensorCores both get work.
    tm = 2048
    while tm > 256 and pl.cdiv(n, tm) < 8:
        tm //= 2
    return tm


@functools.partial(jax.jit, static_argnames=("viewpe", "tile_m"))
def mlp_render_forward(pts, viewdirs, features, params, *, viewpe=6,
                       tile_m=None):
    """Pallas implementation of MLPRender.forward.

    pts:       [N, 3]   (unused by the torch forward, kept for API parity)
    viewdirs:  [N, 3]
    features:  [N, inChanel]  (f32 or bf16; cast to bf16 happens in-kernel)
    tile_m:    rows per grid step (multiple of 8); None -> auto.
    """
    del pts  # unused in the reference forward
    w1, b1, w2, b2, w3, b3 = params

    n = viewdirs.shape[0]
    in_c = features.shape[1]
    feat_c = w1.shape[1]
    w_tail = 3 + 6 * viewpe if viewpe > 0 else 3        # rows of w1 after features
    assert w_tail <= _LANE, "viewpe too large for single-lane-tile PE operand"
    if tile_m is None:
        tile_m = _pick_tile_m(n)

    # Constant PE mask rows (depend only on static viewpe -> constant-folded).
    eye3 = jnp.eye(3, dtype=jnp.float32)
    if viewpe > 0:
        freq = 2.0 ** jnp.arange(viewpe, dtype=jnp.float32)            # [P]
        scat = jnp.kron(eye3, freq[None, :])                           # [3, 3P]
        masks = jnp.concatenate([eye3, scat, scat], axis=1)            # [3, 3+6P]
    else:
        masks = eye3
    masks = jnp.pad(masks, ((0, 0), (0, _LANE - masks.shape[1])))      # [3, 128]

    # Weight prep (tiny arrays; negligible vs. per-point traffic).
    # concat order in the reference is [features, viewdirs, sin, cos], so the
    # tail rows of W1 are already contiguous: w1[in_c:].
    w1f = w1[:in_c].astype(jnp.bfloat16)                               # [in_c, F]
    w1vsc = jnp.pad(w1[in_c:], ((0, _LANE - w_tail), (0, 0))
                    ).astype(jnp.bfloat16)                             # [128, F]
    w2b = w2.astype(jnp.bfloat16)
    w3b = w3.astype(jnp.bfloat16)
    b1_2d = b1.reshape(1, feat_c).astype(jnp.float32)
    b2_2d = b2.reshape(1, feat_c).astype(jnp.float32)
    b3_2d = b3.reshape(1, 3).astype(jnp.float32)

    viewdirs = viewdirs.astype(jnp.float32)   # PE needs f32 args; [N,3] is tiny

    grid = (pl.cdiv(n, tile_m),)              # ragged last block handled by Pallas
    out = pl.pallas_call(
        functools.partial(_mlp_render_kernel, viewpe=viewpe),
        out_shape=jax.ShapeDtypeStruct((n, 3), jnp.float32),
        grid_spec=pl.GridSpec(
            grid=grid,
            in_specs=[
                pl.BlockSpec((tile_m, 3), lambda i: (i, 0)),       # viewdirs tile
                pl.BlockSpec((tile_m, in_c), lambda i: (i, 0)),    # features tile
                pl.BlockSpec((3, _LANE), lambda i: (0, 0)),        # PE mask rows
                pl.BlockSpec((in_c, feat_c), lambda i: (0, 0)),    # W1[features]
                pl.BlockSpec((_LANE, feat_c), lambda i: (0, 0)),   # W1[v|sin|cos] padded
                pl.BlockSpec((1, feat_c), lambda i: (0, 0)),       # b1
                pl.BlockSpec((feat_c, feat_c), lambda i: (0, 0)),  # W2
                pl.BlockSpec((1, feat_c), lambda i: (0, 0)),       # b2
                pl.BlockSpec((feat_c, 3), lambda i: (0, 0)),       # W3
                pl.BlockSpec((1, 3), lambda i: (0, 0)),            # b3
            ],
            out_specs=pl.BlockSpec((tile_m, 3), lambda i: (i, 0)),
        ),
        compiler_params=pltpu.CompilerParams(
            dimension_semantics=("parallel",),
            # ~10-12 MiB worst case at tile_m=2048 incl. 128-lane padding of the
            # narrow blocks; 32 MiB raises v5e's 16 MiB scoped default and stays
            # comfortably inside v7x's 64 MiB physical VMEM.
            vmem_limit_bytes=32 * 1024 * 1024,
        ),
    )(viewdirs, features, masks, w1f, w1vsc, b1_2d, w2b, b2_2d, w3b, b3_2d)
    return out


# ---------------------------------------------------------------------------
# Deterministic parameter init (mirrors torch.nn.Linear default init, with
# the last bias zeroed as in MLPRender.__init__).
# ---------------------------------------------------------------------------
def init_params(key, in_mlpc, feature_c):
    ks = jax.random.split(key, 6)

    def linear_init(kw, kb, fan_in, fan_out):
        bound = 1.0 / jnp.sqrt(fan_in)
        w = jax.random.uniform(kw, (fan_in, fan_out), jnp.float32,
                               minval=-bound, maxval=bound)
        b = jax.random.uniform(kb, (fan_out,), jnp.float32,
                               minval=-bound, maxval=bound)
        return w, b

    w1, b1 = linear_init(ks[0], ks[1], in_mlpc, feature_c)
    w2, b2 = linear_init(ks[2], ks[3], feature_c, feature_c)
    w3, _ = linear_init(ks[4], ks[5], feature_c, 3)
    b3 = jnp.zeros((3,), jnp.float32)        # torch.nn.init.constant_(bias, 0)
    return (w1, b1, w2, b2, w3, b3)


# ---------------------------------------------------------------------------
# Pure-JAX f32 reference for a correctness check.
# ---------------------------------------------------------------------------
def reference_forward(pts, viewdirs, features, params, viewpe=6):
    del pts
    w1, b1, w2, b2, w3, b3 = params
    indata = [features, viewdirs]
    if viewpe > 0:
        indata.append(positional_encoding(viewdirs, viewpe))
    x = jnp.concatenate(indata, axis=-1)
    h = jnp.maximum(x @ w1 + b1, 0.0)
    h = jnp.maximum(h @ w2 + b2, 0.0)
    return jax.nn.sigmoid(h @ w3 + b3)


if __name__ == "__main__":
    key = jax.random.PRNGKey(0)
    k_pts, k_dir, k_feat, k_param, k_param0 = jax.random.split(key, 5)

    # Small shapes consistent with the module; N deliberately NOT a multiple of
    # the tile size so the ragged last block is exercised.
    N = 1000
    in_chanel = 24
    viewpe = 6
    feature_c = 128
    in_mlpc = 3 + 2 * viewpe * 3 + in_chanel   # 63

    pts = jax.random.normal(k_pts, (N, 3), jnp.float32)
    viewdirs = jax.random.normal(k_dir, (N, 3), jnp.float32)
    viewdirs = viewdirs / jnp.linalg.norm(viewdirs, axis=-1, keepdims=True)
    features = jax.random.normal(k_feat, (N, in_chanel), jnp.float32)

    params = init_params(k_param, in_mlpc, feature_c)

    rgb = mlp_render_forward(pts, viewdirs, features, params, viewpe=viewpe)
    rgb = jax.block_until_ready(rgb)
    rgb_ref = reference_forward(pts, viewdirs, features, params, viewpe=viewpe)
    assert rgb.shape == (N, 3)
    max_err = float(jnp.max(jnp.abs(rgb - rgb_ref)))
    # bf16 matmuls with f32 accumulation vs. an f32 reference -> relaxed tol.
    assert max_err < 3e-2, f"max abs err {max_err}"

    # viewpe == 0 specialization (no PE / trig in the kernel).
    M = 200
    params0 = init_params(k_param0, 3 + in_chanel, feature_c)
    rgb0 = mlp_render_forward(pts[:M], viewdirs[:M], features[:M], params0,
                              viewpe=0)
    rgb0 = jax.block_until_ready(rgb0)
    rgb0_ref = reference_forward(pts[:M], viewdirs[:M], features[:M], params0,
                                 viewpe=0)
    max_err0 = float(jnp.max(jnp.abs(rgb0 - rgb0_ref)))
    assert max_err0 < 3e-2, f"viewpe=0 max abs err {max_err0}"

    print("KERNEL_OK")
</pallas_src>

<mosaic_0001>
module attributes {stable_mosaic.version = 11 : i64} {
  func.func @_mlp_render_kernel(%arg0: i32, %arg1: memref<256x3xf32, #tpu.memory_space<vmem>>, %arg2: memref<256x24xf32, #tpu.memory_space<vmem>>, %arg3: memref<3x128xf32, #tpu.memory_space<vmem>>, %arg4: memref<24x128xbf16, #tpu.memory_space<vmem>>, %arg5: memref<128x128xbf16, #tpu.memory_space<vmem>>, %arg6: memref<1x128xf32, #tpu.memory_space<vmem>>, %arg7: memref<128x128xbf16, #tpu.memory_space<vmem>>, %arg8: memref<1x128xf32, #tpu.memory_space<vmem>>, %arg9: memref<128x3xbf16, #tpu.memory_space<vmem>>, %arg10: memref<1x3xf32, #tpu.memory_space<vmem>>, %arg11: memref<256x3xf32, #tpu.memory_space<vmem>>) attributes {dimension_semantics = [#tpu.dimension_semantics<parallel>], iteration_bounds = array<i64: 4>, scalar_prefetch = 0 : i64, scratch_operands = 0 : i64, tpu.core_type = #tpu.core_type<tc>, window_params = [{transform_indices = @transform_0, window_bounds = array<i64: 256, 3>}, {transform_indices = @transform_1, window_bounds = array<i64: 256, 24>}, {pipeline_mode = #tpu.pipeline_mode<synchronous>, transform_indices = @transform_2, window_bounds = array<i64: 3, 128>}, {pipeline_mode = #tpu.pipeline_mode<synchronous>, transform_indices = @transform_3, window_bounds = array<i64: 24, 128>}, {pipeline_mode = #tpu.pipeline_mode<synchronous>, transform_indices = @transform_4, window_bounds = array<i64: 128, 128>}, {pipeline_mode = #tpu.pipeline_mode<synchronous>, transform_indices = @transform_5, window_bounds = array<i64: 1, 128>}, {pipeline_mode = #tpu.pipeline_mode<synchronous>, transform_indices = @transform_6, window_bounds = array<i64: 128, 128>}, {pipeline_mode = #tpu.pipeline_mode<synchronous>, transform_indices = @transform_7, window_bounds = array<i64: 1, 128>}, {pipeline_mode = #tpu.pipeline_mode<synchronous>, transform_indices = @transform_8, window_bounds = array<i64: 128, 3>}, {pipeline_mode = #tpu.pipeline_mode<synchronous>, transform_indices = @transform_9, window_bounds = array<i64: 1, 3>}, {transform_indices = @transform_10, window_bounds = array<i64: 256, 3>}]} {
    %c0 = arith.constant 0 : index
    %c0_0 = arith.constant 0 : index
    %0 = vector.load %arg1[%c0, %c0_0] : memref<256x3xf32, #tpu.memory_space<vmem>>, vector<256x3xf32>
    %c0_1 = arith.constant 0 : index
    %c0_2 = arith.constant 0 : index
    %1 = vector.load %arg2[%c0_1, %c0_2] : memref<256x24xf32, #tpu.memory_space<vmem>>, vector<256x24xf32>
    %2 = arith.truncf %1 : vector<256x24xf32> to vector<256x24xbf16>
    %c0_3 = arith.constant 0 : index
    %c0_4 = arith.constant 0 : index
    %3 = vector.load %arg3[%c0_3, %c0_4] : memref<3x128xf32, #tpu.memory_space<vmem>>, vector<3x128xf32>
    %4 = vector.extract_strided_slice %0 {offsets = [0, 0], sizes = [256, 1], strides = [1, 1]} : vector<256x3xf32> to vector<256x1xf32>
    %5 = vector.extract_strided_slice %3 {offsets = [0, 0], sizes = [1, 128], strides = [1, 1]} : vector<3x128xf32> to vector<1x128xf32>
    %6 = vector.broadcast %4 : vector<256x1xf32> to vector<256x128xf32>
    %7 = vector.broadcast %5 : vector<1x128xf32> to vector<256x128xf32>
    %8 = arith.mulf %6, %7 : vector<256x128xf32>
    %9 = vector.extract_strided_slice %0 {offsets = [0, 1], sizes = [256, 1], strides = [1, 1]} : vector<256x3xf32> to vector<256x1xf32>
    %10 = vector.extract_strided_slice %3 {offsets = [1, 0], sizes = [1, 128], strides = [1, 1]} : vector<3x128xf32> to vector<1x128xf32>
    %11 = vector.broadcast %9 : vector<256x1xf32> to vector<256x128xf32>
    %12 = vector.broadcast %10 : vector<1x128xf32> to vector<256x128xf32>
    %13 = arith.mulf %11, %12 : vector<256x128xf32>
    %14 = arith.addf %8, %13 : vector<256x128xf32>
    %15 = vector.extract_strided_slice %0 {offsets = [0, 2], sizes = [256, 1], strides = [1, 1]} : vector<256x3xf32> to vector<256x1xf32>
    %16 = vector.extract_strided_slice %3 {offsets = [2, 0], sizes = [1, 128], strides = [1, 1]} : vector<3x128xf32> to vector<1x128xf32>
    %17 = vector.broadcast %15 : vector<256x1xf32> to vector<256x128xf32>
    %18 = vector.broadcast %16 : vector<1x128xf32> to vector<256x128xf32>
    %19 = arith.mulf %17, %18 : vector<256x128xf32>
    %20 = arith.addf %14, %19 : vector<256x128xf32>
    %21 = tpu.iota {dimensions = array<i32: 1>} : vector<256x128xi32>
    %c3_i32 = arith.constant 3 : i32
    %22 = vector.broadcast %c3_i32 : i32 to vector<256x128xi32>
    %23 = arith.cmpi slt, %21, %22 : vector<256x128xi32>
    %c21_i32 = arith.constant 21 : i32
    %24 = vector.broadcast %c21_i32 : i32 to vector<256x128xi32>
    %25 = arith.cmpi slt, %21, %24 : vector<256x128xi32>
    %26 = math.sin %20 : vector<256x128xf32>
    %27 = math.cos %20 : vector<256x128xf32>
    %28 = arith.select %25, %26, %27 : vector<256x128xi1>, vector<256x128xf32>
    %29 = arith.select %23, %20, %28 : vector<256x128xi1>, vector<256x128xf32>
    %c0_5 = arith.constant 0 : index
    %c0_6 = arith.constant 0 : index
    %30 = vector.load %arg4[%c0_5, %c0_6] : memref<24x128xbf16, #tpu.memory_space<vmem>>, vector<24x128xbf16>
    %cst = arith.constant dense<0.000000e+00> : vector<256x128xf32>
    %31 = tpu.matmul %2, %30, %cst {dimension_numbers = #tpu.dot_dimension_numbers<[1], [0], [0], [1], [0, 0, 1, 1], [], []>} : vector<256x24xbf16>, vector<24x128xbf16>, vector<256x128xf32> -> vector<256x128xf32>
    %32 = arith.truncf %29 : vector<256x128xf32> to vector<256x128xbf16>
    %c0_7 = arith.constant 0 : index
    %c0_8 = arith.constant 0 : index
    %33 = vector.load %arg5[%c0_7, %c0_8] : memref<128x128xbf16, #tpu.memory_space<vmem>>, vector<128x128xbf16>
    %cst_9 = arith.constant dense<0.000000e+00> : vector<256x128xf32>
    %34 = tpu.matmul %32, %33, %cst_9 {dimension_numbers = #tpu.dot_dimension_numbers<[1], [0], [0], [1], [0, 0, 1, 1], [], []>} : vector<256x128xbf16>, vector<128x128xbf16>, vector<256x128xf32> -> vector<256x128xf32>
    %35 = arith.addf %31, %34 : vector<256x128xf32>
    %c0_10 = arith.constant 0 : index
    %c0_11 = arith.constant 0 : index
    %36 = vector.load %arg6[%c0_10, %c0_11] : memref<1x128xf32, #tpu.memory_space<vmem>>, vector<1x128xf32>
    %37 = vector.broadcast %36 : vector<1x128xf32> to vector<256x128xf32>
    %38 = arith.addf %35, %37 : vector<256x128xf32>
    %cst_12 = arith.constant 0.000000e+00 : f32
    %39 = vector.broadcast %cst_12 : f32 to vector<256x128xf32>
    %40 = arith.maximumf %38, %39 : vector<256x128xf32>
    %41 = arith.truncf %40 : vector<256x128xf32> to vector<256x128xbf16>
    %c0_13 = arith.constant 0 : index
    %c0_14 = arith.constant 0 : index
    %42 = vector.load %arg7[%c0_13, %c0_14] : memref<128x128xbf16, #tpu.memory_space<vmem>>, vector<128x128xbf16>
    %cst_15 = arith.constant dense<0.000000e+00> : vector<256x128xf32>
    %43 = tpu.matmul %41, %42, %cst_15 {dimension_numbers = #tpu.dot_dimension_numbers<[1], [0], [0], [1], [0, 0, 1, 1], [], []>} : vector<256x128xbf16>, vector<128x128xbf16>, vector<256x128xf32> -> vector<256x128xf32>
    %c0_16 = arith.constant 0 : index
    %c0_17 = arith.constant 0 : index
    %44 = vector.load %arg8[%c0_16, %c0_17] : memref<1x128xf32, #tpu.memory_space<vmem>>, vector<1x128xf32>
    %45 = vector.broadcast %44 : vector<1x128xf32> to vector<256x128xf32>
    %46 = arith.addf %43, %45 : vector<256x128xf32>
    %cst_18 = arith.constant 0.000000e+00 : f32
    %47 = vector.broadcast %cst_18 : f32 to vector<256x128xf32>
    %48 = arith.maximumf %46, %47 : vector<256x128xf32>
    %49 = arith.truncf %48 : vector<256x128xf32> to vector<256x128xbf16>
    %c0_19 = arith.constant 0 : index
    %c0_20 = arith.constant 0 : index
    %50 = vector.load %arg9[%c0_19, %c0_20] : memref<128x3xbf16, #tpu.memory_space<vmem>>, vector<128x3xbf16>
    %cst_21 = arith.constant dense<0.000000e+00> : vector<256x3xf32>
    %51 = tpu.matmul %49, %50, %cst_21 {dimension_numbers = #tpu.dot_dimension_numbers<[1], [0], [0], [1], [0, 0, 1, 1], [], []>} : vector<256x128xbf16>, vector<128x3xbf16>, vector<256x3xf32> -> vector<256x3xf32>
    %c0_22 = arith.constant 0 : index
    %c0_23 = arith.constant 0 : index
    %52 = vector.load %arg10[%c0_22, %c0_23] : memref<1x3xf32, #tpu.memory_space<vmem>>, vector<1x3xf32>
    %53 = vector.broadcast %52 : vector<1x3xf32> to vector<256x3xf32>
    %54 = arith.addf %51, %53 : vector<256x3xf32>
    %55 = arith.negf %54 : vector<256x3xf32>
    %56 = math.exp %55 : vector<256x3xf32>
    %cst_24 = arith.constant 1.000000e+00 : f32
    %57 = vector.broadcast %cst_24 : f32 to vector<256x3xf32>
    %58 = arith.addf %57, %56 : vector<256x3xf32>
    %59 = arith.divf %57, %58 : vector<256x3xf32>
    %c0_25 = arith.constant 0 : index
    %c0_26 = arith.constant 0 : index
    %60 = vector.load %arg11[%c0_25, %c0_26] : memref<256x3xf32, #tpu.memory_space<vmem>>, vector<256x3xf32>
    tpu.vector_store %arg11[%c0_25, %c0_26], %59 {strides = array<i32>} : memref<256x3xf32, #tpu.memory_space<vmem>>, vector<256x3xf32>,
    return
  }
  func.func @transform_0(%arg0: i32) -> (i32, i32) {
    %c0_i32 = arith.constant 0 : i32
    %c0_i32_0 = arith.constant 0 : i32
    return %arg0, %c0_i32 : i32, i32
  }
  func.func @transform_1(%arg0: i32) -> (i32, i32) {
    %c0_i32 = arith.constant 0 : i32
    %c0_i32_0 = arith.constant 0 : i32
    return %arg0, %c0_i32 : i32, i32
  }
  func.func @transform_2(%arg0: i32) -> (i32, i32) {
    %c0_i32 = arith.constant 0 : i32
    %c0_i32_0 = arith.constant 0 : i32
    %c0_i32_1 = arith.constant 0 : i32
    return %c0_i32, %c0_i32_0 : i32, i32
  }
  func.func @transform_3(%arg0: i32) -> (i32, i32) {
    %c0_i32 = arith.constant 0 : i32
    %c0_i32_0 = arith.constant 0 : i32
    %c0_i32_1 = arith.constant 0 : i32
    return %c0_i32, %c0_i32_0 : i32, i32
  }
  func.func @transform_4(%arg0: i32) -> (i32, i32) {
    %c0_i32 = arith.constant 0 : i32
    %c0_i32_0 = arith.constant 0 : i32
    %c0_i32_1 = arith.constant 0 : i32
    return %c0_i32, %c0_i32_0 : i32, i32
  }
  func.func @transform_5(%arg0: i32) -> (i32, i32) {
    %c0_i32 = arith.constant 0 : i32
    %c0_i32_0 = arith.constant 0 : i32
    %c0_i32_1 = arith.constant 0 : i32
    return %c0_i32, %c0_i32_0 : i32, i32
  }
  func.func @transform_6(%arg0: i32) -> (i32, i32) {
    %c0_i32 = arith.constant 0 : i32
    %c0_i32_0 = arith.constant 0 : i32
    %c0_i32_1 = arith.constant 0 : i32
    return %c0_i32, %c0_i32_0 : i32, i32
  }
  func.func @transform_7(%arg0: i32) -> (i32, i32) {
    %c0_i32 = arith.constant 0 : i32
    %c0_i32_0 = arith.constant 0 : i32
    %c0_i32_1 = arith.constant 0 : i32
    return %c0_i32, %c0_i32_0 : i32, i32
  }
  func.func @transform_8(%arg0: i32) -> (i32, i32) {
    %c0_i32 = arith.constant 0 : i32
    %c0_i32_0 = arith.constant 0 : i32
    %c0_i32_1 = arith.constant 0 : i32
    return %c0_i32, %c0_i32_0 : i32, i32
  }
  func.func @transform_9(%arg0: i32) -> (i32, i32) {
    %c0_i32 = arith.constant 0 : i32
    %c0_i32_0 = arith.constant 0 : i32
    %c0_i32_1 = arith.constant 0 : i32
    return %c0_i32, %c0_i32_0 : i32, i32
  }
  func.func @transform_10(%arg0: i32) -> (i32, i32) {
    %c0_i32 = arith.constant 0 : i32
    %c0_i32_0 = arith.constant 0 : i32
    return %arg0, %c0_i32 : i32, i32
  }
}

</mosaic_0001>

<llo_original>
// kernel: mlp_render_forward.1
$region0: #{mlp_render_forward.1}
  #allocation0 [shape = 'u32[]', space=smem, size = 0x4, offset = 0x4, fixed_abs, tag = 'smem constant byte address 0x4 - core index']
  #allocation1 [shape = 'u32[144,128]{1,0:T(1,128)}', space=vmem, size = 0x12000, scoped, tag = 'internal scratch']
  %s0 = inlined_call_operand.vmem [shape: f32[1000,3], index: 0, kind: input, shape index: {}]
  %s1 = inlined_call_operand.vmem [shape: f32[1000,24], index: 1, kind: input, shape index: {}]
  %s2 = inlined_call_operand.vmem [shape: f32[3,128], index: 2, kind: input, shape index: {}]
  %s3 = inlined_call_operand.vmem [shape: bf16[24,128], index: 3, kind: input, shape index: {}]
  %s4 = inlined_call_operand.vmem [shape: bf16[128,128], index: 4, kind: input, shape index: {}]
  %s5 = inlined_call_operand.vmem [shape: f32[1,128], index: 5, kind: input, shape index: {}]
  %s6 = inlined_call_operand.vmem [shape: bf16[128,128], index: 6, kind: input, shape index: {}]
  %s7 = inlined_call_operand.vmem [shape: f32[1,128], index: 7, kind: input, shape index: {}]
  %s8 = inlined_call_operand.vmem [shape: bf16[128,3], index: 8, kind: input, shape index: {}]
  %s9 = inlined_call_operand.vmem [shape: f32[1,3], index: 9, kind: input, shape index: {}]
  %s10 = inlined_call_operand.vmem [shape: f32[1000,3], index: 10, kind: output, shape index: {}]
  %s11 = sld [smem:[#allocation0]]
  $region121: #{mlp_render_forward.1} parent=0
    _
  %s13 = ssub.s32 1, %s11
  %s14 = scalar_select 0, %s13, %s11
  $region1: #{mlp_render_forward.1} parent=0
    #allocation2 [shape = 'u8[262144]{0}', space=vmem, size = 0x40000, scoped, tag = 'output window, operand 0']
    loop: start=0, step=1, limit=6
    $region2: #{mlp_render_forward.1} parent=1 // loop_pre_header
      _
    $region3: #{mlp_render_forward.1} parent=1 // loop_header
      %s16 = sphi 0, %s20
      %p17 = scmp.ge.s32.totalorder %s16, 6
      %s26 = sphi 0, %s28
      %s29 = sphi 0, %s26
      %s30 = sphi 0, %s29
      %s46 = sphi 0, %s30
      %s52 = sphi 0, %s54
      %s55 = sphi 0, %s52
      %s56 = sphi 0, %s55
      %s72 = sphi 0, %s56
      %s76 = sphi 0, %s76
      %s78 = sphi 0, %s76
      %s79 = sphi 0, %s78
      %s93 = sphi 0, %s79
      %s97 = sphi 0, %s97
      %s99 = sphi 0, %s97
      %s100 = sphi 0, %s99
      %s114 = sphi 0, %s100
      %s118 = sphi 0, %s118
      %s120 = sphi 0, %s118
      %s121 = sphi 0, %s120
      %s135 = sphi 0, %s121
      %s139 = sphi 0, %s139
      %s141 = sphi 0, %s139
      %s142 = sphi 0, %s141
      %s156 = sphi 0, %s142
      %s160 = sphi 0, %s160
      %s162 = sphi 0, %s160
      %s163 = sphi 0, %s162
      %s177 = sphi 0, %s163
      %s181 = sphi 0, %s181
      %s183 = sphi 0, %s181
      %s184 = sphi 0, %s183
      %s198 = sphi 0, %s184
      %s202 = sphi 0, %s202
      %s204 = sphi 0, %s202
      %s205 = sphi 0, %s204
      %s219 = sphi 0, %s205
      %s223 = sphi 0, %s223
      %s225 = sphi 0, %s223
      %s226 = sphi 0, %s225
      %s240 = sphi 0, %s226
      %s246 = sphi 0, %s248
      %s249 = sphi 0, %s246
      %s250 = sphi 0, %s249
      %s266 = sphi 0, %s250
    $region4: #{mlp_render_forward.1} parent=1 // loop_header_branch
      %19 = sbr.rel (%p17) target = $region8
    $region5: #{mlp_render_forward.1} parent=1 // loop_body
      %s21 = ssub.s32 %s16, 1
      %s22 = ssub.s32 %s16, 2
      %s23 = sadd.s32 %s16, 1
      %s24 = ssub.s32 %s16, %s23
      %p25 = scmp.eq.s32.totalorder %s24, 0
      %s27 = sadd.s32 %s26, 1
      %s28 = scalar_select %p25, %s26, %s27
      %p31 = pneg %p25
      %p32 = scmp.eq.s32.totalorder %s16, 3
      %p33 = por %p31, %p32
      %p34 = scmp.ne.s32.totalorder %s26, %s29
      %p35 = scmp.eq.s32.totalorder %s16, 0
      %p36 = por %p34, %p35
      %p37 = scmp.ne.s32.totalorder %s26, %s29
      %p38 = scmp.eq.s32.totalorder %s21, 3
      %p39 = por %p37, %p38
      %p40 = scmp.ne.s32.totalorder %s29, %s30
      %p41 = scmp.eq.s32.totalorder %s21, 0
      %p42 = por %p40, %p41
      %p43 = scmp.ne.s32.totalorder %s29, %s30
      %p44 = scmp.eq.s32.totalorder %s22, 3
      %p45 = por %p43, %p44
      %p47 = scmp.ne.s32.totalorder %s30, %s46
      %p48 = scmp.eq.s32.totalorder %s22, 0
      %p49 = por %p47, %p48
      %s50 = ssub.s32 %s16, %s23
      %p51 = scmp.eq.s32.totalorder %s50, 0
      %s53 = sadd.s32 %s52, 1
      %s54 = scalar_select %p51, %s52, %s53
      %p57 = pneg %p51
      %p58 = scmp.eq.s32.totalorder %s16, 3
      %p59 = por %p57, %p58
      %p60 = scmp.ne.s32.totalorder %s52, %s55
      %p61 = scmp.eq.s32.totalorder %s16, 0
      %p62 = por %p60, %p61
      %p63 = scmp.ne.s32.totalorder %s52, %s55
      %p64 = scmp.eq.s32.totalorder %s21, 3
      %p65 = por %p63, %p64
      %p66 = scmp.ne.s32.totalorder %s55, %s56
      %p67 = scmp.eq.s32.totalorder %s21, 0
      %p68 = por %p66, %p67
      %p69 = scmp.ne.s32.totalorder %s55, %s56
      %p70 = scmp.eq.s32.totalorder %s22, 3
      %p71 = por %p69, %p70
      %p73 = scmp.ne.s32.totalorder %s56, %s72
      %p74 = scmp.eq.s32.totalorder %s22, 0
      %p75 = por %p73, %p74
      %s77 = sadd.s32 %s76, 1
      %p80 = scmp.eq.s32.totalorder %s16, 3
      %p81 = scmp.ne.s32.totalorder %s76, %s78
      %p82 = scmp.eq.s32.totalorder %s16, 0
      %p83 = por %p81, %p82
      %p84 = scmp.ne.s32.totalorder %s76, %s78
      %p85 = scmp.eq.s32.totalorder %s21, 3
      %p86 = por %p84, %p85
      %p87 = scmp.ne.s32.totalorder %s78, %s79
      %p88 = scmp.eq.s32.totalorder %s21, 0
      %p89 = por %p87, %p88
      %p90 = scmp.ne.s32.totalorder %s78, %s79
      %p91 = scmp.eq.s32.totalorder %s22, 3
      %p92 = por %p90, %p91
      %p94 = scmp.ne.s32.totalorder %s79, %s93
      %p95 = scmp.eq.s32.totalorder %s22, 0
      %p96 = por %p94, %p95
      %s98 = sadd.s32 %s97, 1
      %p101 = scmp.eq.s32.totalorder %s16, 3
      %p102 = scmp.ne.s32.totalorder %s97, %s99
      %p103 = scmp.eq.s32.totalorder %s16, 0
      %p104 = por %p102, %p103
      %p105 = scmp.ne.s32.totalorder %s97, %s99
      %p106 = scmp.eq.s32.totalorder %s21, 3
      %p107 = por %p105, %p106
      %p108 = scmp.ne.s32.totalorder %s99, %s100
      %p109 = scmp.eq.s32.totalorder %s21, 0
      %p110 = por %p108, %p109
      %p111 = scmp.ne.s32.totalorder %s99, %s100
      %p112 = scmp.eq.s32.totalorder %s22, 3
      %p113 = por %p111, %p112
      %p115 = scmp.ne.s32.totalorder %s100, %s114
      %p116 = scmp.eq.s32.totalorder %s22, 0
      %p117 = por %p115, %p116
      %s119 = sadd.s32 %s118, 1
      %p122 = scmp.eq.s32.totalorder %s16, 3
      %p123 = scmp.ne.s32.totalorder %s118, %s120
      %p124 = scmp.eq.s32.totalorder %s16, 0
      %p125 = por %p123, %p124
      %p126 = scmp.ne.s32.totalorder %s118, %s120
      %p127 = scmp.eq.s32.totalorder %s21, 3
      %p128 = por %p126, %p127
      %p129 = scmp.ne.s32.totalorder %s120, %s121
      %p130 = scmp.eq.s32.totalorder %s21, 0
      %p131 = por %p129, %p130
      %p132 = scmp.ne.s32.totalorder %s120, %s121
      %p133 = scmp.eq.s32.totalorder %s22, 3
      %p134 = por %p132, %p133
      %p136 = scmp.ne.s32.totalorder %s121, %s135
      %p137 = scmp.eq.s32.totalorder %s22, 0
      %p138 = por %p136, %p137
      %s140 = sadd.s32 %s139, 1
      %p143 = scmp.eq.s32.totalorder %s16, 3
      %p144 = scmp.ne.s32.totalorder %s139, %s141
      %p145 = scmp.eq.s32.totalorder %s16, 0
      %p146 = por %p144, %p145
      %p147 = scmp.ne.s32.totalorder %s139, %s141
      %p148 = scmp.eq.s32.totalorder %s21, 3
      %p149 = por %p147, %p148
      %p150 = scmp.ne.s32.totalorder %s141, %s142
      %p151 = scmp.eq.s32.totalorder %s21, 0
      %p152 = por %p150, %p151
      %p153 = scmp.ne.s32.totalorder %s141, %s142
      %p154 = scmp.eq.s32.totalorder %s22, 3
      %p155 = por %p153, %p154
      %p157 = scmp.ne.s32.totalorder %s142, %s156
      %p158 = scmp.eq.s32.totalorder %s22, 0
      %p159 = por %p157, %p158
      %s161 = sadd.s32 %s160, 1
      %p164 = scmp.eq.s32.totalorder %s16, 3
      %p165 = scmp.ne.s32.totalorder %s160, %s162
      %p166 = scmp.eq.s32.totalorder %s16, 0
      %p167 = por %p165, %p166
      %p168 = scmp.ne.s32.totalorder %s160, %s162
      %p169 = scmp.eq.s32.totalorder %s21, 3
      %p170 = por %p168, %p169
      %p171 = scmp.ne.s32.totalorder %s162, %s163
      %p172 = scmp.eq.s32.totalorder %s21, 0
      %p173 = por %p171, %p172
      %p174 = scmp.ne.s32.totalorder %s162, %s163
      %p175 = scmp.eq.s32.totalorder %s22, 3
      %p176 = por %p174, %p175
      %p178 = scmp.ne.s32.totalorder %s163, %s177
      %p179 = scmp.eq.s32.totalorder %s22, 0
      %p180 = por %p178, %p179
      %s182 = sadd.s32 %s181, 1
      %p185 = scmp.eq.s32.totalorder %s16, 3
      %p186 = scmp.ne.s32.totalorder %s181, %s183
      %p187 = scmp.eq.s32.totalorder %s16, 0
      %p188 = por %p186, %p187
      %p189 = scmp.ne.s32.totalorder %s181, %s183
      %p190 = scmp.eq.s32.totalorder %s21, 3
      %p191 = por %p189, %p190
      %p192 = scmp.ne.s32.totalorder %s183, %s184
      %p193 = scmp.eq.s32.totalorder %s21, 0
      %p194 = por %p192, %p193
      %p195 = scmp.ne.s32.totalorder %s183, %s184
      %p196 = scmp.eq.s32.totalorder %s22, 3
      %p197 = por %p195, %p196
      %p199 = scmp.ne.s32.totalorder %s184, %s198
      %p200 = scmp.eq.s32.totalorder %s22, 0
      %p201 = por %p199, %p200
      %s203 = sadd.s32 %s202, 1
      %p206 = scmp.eq.s32.totalorder %s16, 3
      %p207 = scmp.ne.s32.totalorder %s202, %s204
      %p208 = scmp.eq.s32.totalorder %s16, 0
      %p209 = por %p207, %p208
      %p210 = scmp.ne.s32.totalorder %s202, %s204
      %p211 = scmp.eq.s32.totalorder %s21, 3
      %p212 = por %p210, %p211
      %p213 = scmp.ne.s32.totalorder %s204, %s205
      %p214 = scmp.eq.s32.totalorder %s21, 0
      %p215 = por %p213, %p214
      %p216 = scmp.ne.s32.totalorder %s204, %s205
      %p217 = scmp.eq.s32.totalorder %s22, 3
      %p218 = por %p216, %p217
      %p220 = scmp.ne.s32.totalorder %s205, %s219
      %p221 = scmp.eq.s32.totalorder %s22, 0
      %p222 = por %p220, %p221
      %s224 = sadd.s32 %s223, 1
      %p227 = scmp.eq.s32.totalorder %s16, 3
      %p228 = scmp.ne.s32.totalorder %s223, %s225
      %p229 = scmp.eq.s32.totalorder %s16, 0
      %p230 = por %p228, %p229
      %p231 = scmp.ne.s32.totalorder %s223, %s225
      %p232 = scmp.eq.s32.totalorder %s21, 3
      %p233 = por %p231, %p232
      %p234 = scmp.ne.s32.totalorder %s225, %s226
      %p235 = scmp.eq.s32.totalorder %s21, 0
      %p236 = por %p234, %p235
      %p237 = scmp.ne.s32.totalorder %s225, %s226
      %p238 = scmp.eq.s32.totalorder %s22, 3
      %p239 = por %p237, %p238
      %p241 = scmp.ne.s32.totalorder %s226, %s240
      %p242 = scmp.eq.s32.totalorder %s22, 0
      %p243 = por %p241, %p242
      %s244 = ssub.s32 %s16, %s23
      %p245 = scmp.eq.s32.totalorder %s244, 0
      %s247 = sadd.s32 %s246, 1
      %s248 = scalar_select %p245, %s246, %s247
      %p251 = pneg %p245
      %p252 = scmp.eq.s32.totalorder %s16, 3
      %p253 = por %p251, %p252
      %p254 = scmp.ne.s32.totalorder %s246, %s249
      %p255 = scmp.eq.s32.totalorder %s16, 0
      %p256 = por %p254, %p255
      %p257 = scmp.ne.s32.totalorder %s246, %s249
      %p258 = scmp.eq.s32.totalorder %s21, 3
      %p259 = por %p257, %p258
      %p260 = scmp.ne.s32.totalorder %s249, %s250
      %p261 = scmp.eq.s32.totalorder %s21, 0
      %p262 = por %p260, %p261
      %p263 = scmp.ne.s32.totalorder %s249, %s250
      %p264 = scmp.eq.s32.totalorder %s22, 3
      %p265 = por %p263, %p264
      %p267 = scmp.ne.s32.totalorder %s250, %s266
      %p268 = scmp.eq.s32.totalorder %s22, 0
      %p269 = por %p267, %p268
      %p270 = scmp.le.s32.totalorder 1, %s16
      %p271 = scmp.lt.s32.totalorder %s16, 5
      %p272 = pnand %p270, %p271
      %p273 = pneg %p272
      // Predicated region
      $region9: #{mlp_render_forward.1} parent=5 // pred_check
        _
      $region10: #{mlp_render_forward.1} parent=5 // pred_check_branch
        %275 = sbr.rel (%p272) target = $region12
      $region11: #{mlp_render_forward.1} parent=5 // pred_region
        %s276 = ssub.s32 %s16, 1
        // Predicated region
        $region13: #{mlp_render_forward.1} parent=11 // pred_check
          %p277 = pneg %p89
        $region14: #{mlp_render_forward.1} parent=11 // pred_check_branch
          %279 = sbr.rel (%p277) target = $region16
        $region15: #{mlp_render_forward.1} parent=11 // pred_region
          _
        $region16: #{mlp_render_forward.1} parent=11 // pred_fallthru
          _
        // Predicated region
        $region17: #{mlp_render_forward.1} parent=11 // pred_check
          %p280 = pneg %p110
        $region18: #{mlp_render_forward.1} parent=11 // pred_check_branch
          %282 = sbr.rel (%p280) target = $region20
        $region19: #{mlp_render_forward.1} parent=11 // pred_region
          _
        $region20: #{mlp_render_forward.1} parent=11 // pred_fallthru
          _
        // Predicated region
        $region21: #{mlp_render_forward.1} parent=11 // pred_check
          %p283 = pneg %p131
        $region22: #{mlp_render_forward.1} parent=11 // pred_check_branch
          %285 = sbr.rel (%p283) target = $region24
        $region23: #{mlp_render_forward.1} parent=11 // pred_region
          _
        $region24: #{mlp_render_forward.1} parent=11 // pred_fallthru
          _
        // Predicated region
        $region25: #{mlp_render_forward.1} parent=11 // pred_check
          %p286 = pneg %p152
        $region26: #{mlp_render_forward.1} parent=11 // pred_check_branch
          %288 = sbr.rel (%p286) target = $region28
        $region27: #{mlp_render_forward.1} parent=11 // pred_region
          _
        $region28: #{mlp_render_forward.1} parent=11 // pred_fallthru
          _
        // Predicated region
        $region29: #{mlp_render_forward.1} parent=11 // pred_check
          %p289 = pneg %p173
        $region30: #{mlp_render_forward.1} parent=11 // pred_check_branch
          %291 = sbr.rel (%p289) target = $region32
        $region31: #{mlp_render_forward.1} parent=11 // pred_region
          _
        $region32: #{mlp_render_forward.1} parent=11 // pred_fallthru
          _
        // Predicated region
        $region33: #{mlp_render_forward.1} parent=11 // pred_check
          %p292 = pneg %p194
        $region34: #{mlp_render_forward.1} parent=11 // pred_check_branch
          %294 = sbr.rel (%p292) target = $region36
        $region35: #{mlp_render_forward.1} parent=11 // pred_region
          _
        $region36: #{mlp_render_forward.1} parent=11 // pred_fallthru
          _
        // Predicated region
        $region37: #{mlp_render_forward.1} parent=11 // pred_check
          %p295 = pneg %p215
        $region38: #{mlp_render_forward.1} parent=11 // pred_check_branch
          %297 = sbr.rel (%p295) target = $region40
        $region39: #{mlp_render_forward.1} parent=11 // pred_region
          _
        $region40: #{mlp_render_forward.1} parent=11 // pred_fallthru
          _
        // Predicated region
        $region41: #{mlp_render_forward.1} parent=11 // pred_check
          %p298 = pneg %p236
        $region42: #{mlp_render_forward.1} parent=11 // pred_check_branch
          %300 = sbr.rel (%p298) target = $region44
        $region43: #{mlp_render_forward.1} parent=11 // pred_region
          _
        $region44: #{mlp_render_forward.1} parent=11 // pred_fallthru
          _
      $region12: #{mlp_render_forward.1} parent=5 // pred_fallthru
        _
      %p301 = scmp.lt.s32.totalorder %s16, 4
      // Predicated region
      $region45: #{mlp_render_forward.1} parent=5 // pred_check
        %p302 = pneg %p301
      $region46: #{mlp_render_forward.1} parent=5 // pred_check_branch
        %304 = sbr.rel (%p302) target = $region48
      $region47: #{mlp_render_forward.1} parent=5 // pred_region
        // Predicated region
        $region49: #{mlp_render_forward.1} parent=47 // pred_check
          %p305 = pneg %p36
        $region50: #{mlp_render_forward.1} parent=47 // pred_check_branch
          %307 = sbr.rel (%p305) target = $region52
        $region51: #{mlp_render_forward.1} parent=47 // pred_region
          %s308 = smul.u32 32, %s16
          %s309 = ssub.s32 125, %s308
          %p310 = scmp.lt.s32.totalorder %s309, 32
          %s311 = scalar_select %p310, %s309, 32
          %s312 = smul.u32 128, %s311
          %p313 = scmp.lt.s32.totalorder %s308, 124
          %s314 = scalar_select %p313, %s308, 124
          %s315 = smul.addr %s314, 8
          %s316 = scalar_lea.vmem %s0, %s315
          %s317 = smul.u32 32, %s16
          %s318 = ssub.s32 125, %s317
          %p319 = scmp.lt.s32.totalorder %s318, 32
          %s320 = scalar_select %p319, %s318, 32
          %s321 = smul.u32 128, %s320
        $region52: #{mlp_render_forward.1} parent=47 // pred_fallthru
          _
        // Predicated region
        $region53: #{mlp_render_forward.1} parent=47 // pred_check
          %p322 = pneg %p62
        $region54: #{mlp_render_forward.1} parent=47 // pred_check_branch
          %324 = sbr.rel (%p322) target = $region56
        $region55: #{mlp_render_forward.1} parent=47 // pred_region
          %s325 = smul.u32 32, %s16
          %s326 = ssub.s32 125, %s325
          %p327 = scmp.lt.s32.totalorder %s326, 32
          %s328 = scalar_select %p327, %s326, 32
          %s329 = smul.u32 128, %s328
          %p330 = scmp.lt.s32.totalorder %s325, 124
          %s331 = scalar_select %p330, %s325, 124
          %s332 = smul.addr %s331, 8
          %s333 = scalar_lea.vmem %s1, %s332
          %s334 = smul.u32 32, %s16
          %s335 = ssub.s32 125, %s334
          %p336 = scmp.lt.s32.totalorder %s335, 32
          %s337 = scalar_select %p336, %s335, 32
          %s338 = smul.u32 128, %s337
        $region56: #{mlp_render_forward.1} parent=47 // pred_fallthru
          _
      $region48: #{mlp_render_forward.1} parent=5 // pred_fallthru
        _
      %p339 = scmp.le.s32.totalorder 1, %s16
      %p340 = scmp.lt.s32.totalorder %s16, 5
      %p341 = pnand %p339, %p340
      %p342 = pneg %p341
      // Predicated region
      $region57: #{mlp_render_forward.1} parent=5 // pred_check
        _
      $region58: #{mlp_render_forward.1} parent=5 // pred_check_branch
        %344 = sbr.rel (%p341) target = $region60
      $region59: #{mlp_render_forward.1} parent=5 // pred_region
        %s345 = ssub.s32 %s16, 1
        %s346 = smul.u32 32, %s21
        %s347 = ssub.s32 125, %s346
        %p348 = scmp.lt.s32.totalorder %s347, 32
        %s349 = scalar_select %p348, %s347, 32
        %s350 = smul.u32 128, %s349
        %p351 = scmp.lt.s32.totalorder %s346, 124
        %s352 = scalar_select %p351, %s346, 124
        %s353 = smul.addr %s352, 8
        %s354 = scalar_lea.vmem %s0, %s353
        %p355 = pneg %p42
        %p356 = pneg %p39
        %s357 = smul.u32 32, %s21
        %s358 = ssub.s32 125, %s357
        %p359 = scmp.lt.s32.totalorder %s358, 32
        %s360 = scalar_select %p359, %s358, 32
        %s361 = smul.u32 128, %s360
        %p362 = scmp.lt.s32.totalorder %s357, 124
        %s363 = scalar_select %p362, %s357, 124
        %s364 = smul.addr %s363, 8
        %s365 = scalar_lea.vmem %s1, %s364
        %p366 = pneg %p68
        %p367 = pneg %p65
        %p368 = pneg %p89
        %p369 = pneg %p86
        %p370 = pneg %p110
        %p371 = pneg %p107
        %p372 = pneg %p131
        %p373 = pneg %p128
        %p374 = pneg %p152
        %p375 = pneg %p149
        %p376 = pneg %p173
        %p377 = pneg %p170
        %p378 = pneg %p194
        %p379 = pneg %p191
        %p380 = pneg %p215
        %p381 = pneg %p212
        %p382 = pneg %p236
        %p383 = pneg %p233
        %p384 = pneg %p262
        %p385 = pneg %p259
        %s386 = sand.u32 %s249, 1
        %s387 = sand.u32 %s249, 1
        %s388 = smul.addr %s387, 256
        %s389 = scalar_lea.vmem [#allocation2], %s388
        %s390 = smul.u32 32, %s21
        %s391 = ssub.s32 125, %s390
        %p392 = scmp.lt.s32.totalorder %s391, 32
        %s393 = scalar_select %p392, %s391, 32
        %s394 = smul.u32 128, %s393
        %p395 = scmp.lt.s32.totalorder %s390, 124
        %s396 = scalar_select %p395, %s390, 124
        %s397 = smul.addr %s396, 8
        %s398 = scalar_lea.vmem %s0, %s397
        %s399 = smul.u32 32, %s21
        %s400 = ssub.s32 125, %s399
        %p401 = scmp.lt.s32.totalorder %s400, 32
        %s402 = scalar_select %p401, %s400, 32
        %s403 = smul.u32 128, %s402
        %s404 = smul.u32 32, %s21
        %s405 = ssub.s32 125, %s404
        %p406 = scmp.lt.s32.totalorder %s405, 32
        %s407 = scalar_select %p406, %s405, 32
        %s408 = smul.u32 128, %s407
        %p409 = scmp.lt.s32.totalorder %s404, 124
        %s410 = scalar_select %p409, %s404, 124
        %s411 = smul.addr %s410, 8
        %s412 = scalar_lea.vmem %s1, %s411
        %s413 = smul.u32 32, %s21
        %s414 = ssub.s32 125, %s413
        %p415 = scmp.lt.s32.totalorder %s414, 32
        %s416 = scalar_select %p415, %s414, 32
        %s417 = smul.u32 128, %s416
        %s418 = smul.u32 32, %s21
        %s419 = ssub.s32 125, %s418
        %p420 = scmp.lt.s32.totalorder %s419, 32
        %s421 = scalar_select %p420, %s419, 32
        %s422 = smul.u32 128, %s421
        %v424 = vld [vmem:[%s398] sm:$0xff]
        %v425 = vld [vmem:[%s398 + $0x8] sm:$0xff]
        %v426 = vld [vmem:[%s398 + $0x10] sm:$0xff]
        %v427 = vld [vmem:[%s398 + $0x18] sm:$0xff]
        %v428 = vld [vmem:[%s398 + $0x20] sm:$0xff]
        %v429 = vld [vmem:[%s398 + $0x28] sm:$0xff]
        %v430 = vld [vmem:[%s398 + $0x30] sm:$0xff]
        %v431 = vld [vmem:[%s398 + $0x38] sm:$0xff]
        %v432 = vld [vmem:[%s398 + $0x40] sm:$0xff]
        %v433 = vld [vmem:[%s398 + $0x48] sm:$0xff]
        %v434 = vld [vmem:[%s398 + $0x50] sm:$0xff]
        %v435 = vld [vmem:[%s398 + $0x58] sm:$0xff]
        %v436 = vld [vmem:[%s398 + $0x60] sm:$0xff]
        %v437 = vld [vmem:[%s398 + $0x68] sm:$0xff]
        %v438 = vld [vmem:[%s398 + $0x70] sm:$0xff]
        %v439 = vld [vmem:[%s398 + $0x78] sm:$0xff]
        %v440 = vld [vmem:[%s398 + $0x80] sm:$0xff]
        %v441 = vld [vmem:[%s398 + $0x88] sm:$0xff]
        %v442 = vld [vmem:[%s398 + $0x90] sm:$0xff]
        %v443 = vld [vmem:[%s398 + $0x98] sm:$0xff]
        %v444 = vld [vmem:[%s398 + $0xa0] sm:$0xff]
        %v445 = vld [vmem:[%s398 + $0xa8] sm:$0xff]
        %v446 = vld [vmem:[%s398 + $0xb0] sm:$0xff]
        %v447 = vld [vmem:[%s398 + $0xb8] sm:$0xff]
        %v448 = vld [vmem:[%s398 + $0xc0] sm:$0xff]
        %v449 = vld [vmem:[%s398 + $0xc8] sm:$0xff]
        %v450 = vld [vmem:[%s398 + $0xd0] sm:$0xff]
        %v451 = vld [vmem:[%s398 + $0xd8] sm:$0xff]
        %v452 = vld [vmem:[%s398 + $0xe0] sm:$0xff]
        %v453 = vld [vmem:[%s398 + $0xe8] sm:$0xff]
        %v454 = vld [vmem:[%s398 + $0xf0] sm:$0xff]
        %v455 = vld [vmem:[%s398 + $0xf8] sm:$0xff]
        %v456 = vld [vmem:[%s412] sm:$0xff]
        %v457 = vld [vmem:[%s412 + $0x8] sm:$0xff]
        %v458 = vld [vmem:[%s412 + $0x10] sm:$0xff]
        %v459 = vld [vmem:[%s412 + $0x18] sm:$0xff]
        %v460 = vld [vmem:[%s412 + $0x20] sm:$0xff]
        %v461 = vld [vmem:[%s412 + $0x28] sm:$0xff]
        %v462 = vld [vmem:[%s412 + $0x30] sm:$0xff]
        %v463 = vld [vmem:[%s412 + $0x38] sm:$0xff]
        %v464 = vld [vmem:[%s412 + $0x40] sm:$0xff]
        %v465 = vld [vmem:[%s412 + $0x48] sm:$0xff]
        %v466 = vld [vmem:[%s412 + $0x50] sm:$0xff]
        %v467 = vld [vmem:[%s412 + $0x58] sm:$0xff]
        %v468 = vld [vmem:[%s412 + $0x60] sm:$0xff]
        %v469 = vld [vmem:[%s412 + $0x68] sm:$0xff]
        %v470 = vld [vmem:[%s412 + $0x70] sm:$0xff]
        %v471 = vld [vmem:[%s412 + $0x78] sm:$0xff]
        %v472 = vld [vmem:[%s412 + $0x80] sm:$0xff]
        %v473 = vld [vmem:[%s412 + $0x88] sm:$0xff]
        %v474 = vld [vmem:[%s412 + $0x90] sm:$0xff]
        %v475 = vld [vmem:[%s412 + $0x98] sm:$0xff]
        %v476 = vld [vmem:[%s412 + $0xa0] sm:$0xff]
        %v477 = vld [vmem:[%s412 + $0xa8] sm:$0xff]
        %v478 = vld [vmem:[%s412 + $0xb0] sm:$0xff]
        %v479 = vld [vmem:[%s412 + $0xb8] sm:$0xff]
        %v480 = vld [vmem:[%s412 + $0xc0] sm:$0xff]
        %v481 = vld [vmem:[%s412 + $0xc8] sm:$0xff]
        %v482 = vld [vmem:[%s412 + $0xd0] sm:$0xff]
        %v483 = vld [vmem:[%s412 + $0xd8] sm:$0xff]
        %v484 = vld [vmem:[%s412 + $0xe0] sm:$0xff]
        %v485 = vld [vmem:[%s412 + $0xe8] sm:$0xff]
        %v486 = vld [vmem:[%s412 + $0xf0] sm:$0xff]
        %v487 = vld [vmem:[%s412 + $0xf8] sm:$0xff]
        %v488 = vpack.c.bf16 %v457, %v456
        %v489 = vpack.c.bf16 %v459, %v458
        %v490 = vpack.c.bf16 %v461, %v460
        %v491 = vpack.c.bf16 %v463, %v462
        %v492 = vpack.c.bf16 %v465, %v464
        %v493 = vpack.c.bf16 %v467, %v466
        %v494 = vpack.c.bf16 %v469, %v468
        %v495 = vpack.c.bf16 %v471, %v470
        %v496 = vpack.c.bf16 %v473, %v472
        %v497 = vpack.c.bf16 %v475, %v474
        %v498 = vpack.c.bf16 %v477, %v476
        %v499 = vpack.c.bf16 %v479, %v478
        %v500 = vpack.c.bf16 %v481, %v480
        %v501 = vpack.c.bf16 %v483, %v482
        %v502 = vpack.c.bf16 %v485, %v484
        %v503 = vpack.c.bf16 %v487, %v486
        %v504 = vld [vmem:[%s2] sm:$0x7]
        %506 = vset.pattern.permute.xlu0 0
        %507 = vperm.xlu0 %506, %v424
        %v508 = vpop.permute.xlu0 %507
        %511 = vset.pattern.permute.xlu0 0
        %512 = vperm.xlu0 %511, %v425
        %v513 = vpop.permute.xlu0 %512
        %516 = vset.pattern.permute.xlu0 0
        %517 = vperm.xlu0 %516, %v426
        %v518 = vpop.permute.xlu0 %517
        %521 = vset.pattern.permute.xlu0 0
        %522 = vperm.xlu0 %521, %v427
        %v523 = vpop.permute.xlu0 %522
        %526 = vset.pattern.permute.xlu0 0
        %527 = vperm.xlu0 %526, %v428
        %v528 = vpop.permute.xlu0 %527
        %531 = vset.pattern.permute.xlu0 0
        %532 = vperm.xlu0 %531, %v429
        %v533 = vpop.permute.xlu0 %532
        %536 = vset.pattern.permute.xlu0 0
        %537 = vperm.xlu0 %536, %v430
        %v538 = vpop.permute.xlu0 %537
        %541 = vset.pattern.permute.xlu0 0
        %542 = vperm.xlu0 %541, %v431
        %v543 = vpop.permute.xlu0 %542
        %546 = vset.pattern.permute.xlu0 0
        %547 = vperm.xlu0 %546, %v432
        %v548 = vpop.permute.xlu0 %547
        %551 = vset.pattern.permute.xlu0 0
        %552 = vperm.xlu0 %551, %v433
        %v553 = vpop.permute.xlu0 %552
        %556 = vset.pattern.permute.xlu0 0
        %557 = vperm.xlu0 %556, %v434
        %v558 = vpop.permute.xlu0 %557
        %561 = vset.pattern.permute.xlu0 0
        %562 = vperm.xlu0 %561, %v435
        %v563 = vpop.permute.xlu0 %562
        %566 = vset.pattern.permute.xlu0 0
        %567 = vperm.xlu0 %566, %v436
        %v568 = vpop.permute.xlu0 %567
        %571 = vset.pattern.permute.xlu0 0
        %572 = vperm.xlu0 %571, %v437
        %v573 = vpop.permute.xlu0 %572
        %576 = vset.pattern.permute.xlu0 0
        %577 = vperm.xlu0 %576, %v438
        %v578 = vpop.permute.xlu0 %577
        %581 = vset.pattern.permute.xlu0 0
        %582 = vperm.xlu0 %581, %v439
        %v583 = vpop.permute.xlu0 %582
        %586 = vset.pattern.permute.xlu0 0
        %587 = vperm.xlu0 %586, %v440
        %v588 = vpop.permute.xlu0 %587
        %591 = vset.pattern.permute.xlu0 0
        %592 = vperm.xlu0 %591, %v441
        %v593 = vpop.permute.xlu0 %592
        %596 = vset.pattern.permute.xlu0 0
        %597 = vperm.xlu0 %596, %v442
        %v598 = vpop.permute.xlu0 %597
        %601 = vset.pattern.permute.xlu0 0
        %602 = vperm.xlu0 %601, %v443
        %v603 = vpop.permute.xlu0 %602
        %606 = vset.pattern.permute.xlu0 0
        %607 = vperm.xlu0 %606, %v444
        %v608 = vpop.permute.xlu0 %607
        %611 = vset.pattern.permute.xlu0 0
        %612 = vperm.xlu0 %611, %v445
        %v613 = vpop.permute.xlu0 %612
        %616 = vset.pattern.permute.xlu0 0
        %617 = vperm.xlu0 %616, %v446
        %v618 = vpop.permute.xlu0 %617
        %621 = vset.pattern.permute.xlu0 0
        %622 = vperm.xlu0 %621, %v447
        %v623 = vpop.permute.xlu0 %622
        %626 = vset.pattern.permute.xlu0 0
        %627 = vperm.xlu0 %626, %v448
        %v628 = vpop.permute.xlu0 %627
        %631 = vset.pattern.permute.xlu0 0
        %632 = vperm.xlu0 %631, %v449
        %v633 = vpop.permute.xlu0 %632
        %636 = vset.pattern.permute.xlu0 0
        %637 = vperm.xlu0 %636, %v450
        %v638 = vpop.permute.xlu0 %637
        %641 = vset.pattern.permute.xlu0 0
        %642 = vperm.xlu0 %641, %v451
        %v643 = vpop.permute.xlu0 %642
        %646 = vset.pattern.permute.xlu0 0
        %647 = vperm.xlu0 %646, %v452
        %v648 = vpop.permute.xlu0 %647
        %651 = vset.pattern.permute.xlu0 0
        %652 = vperm.xlu0 %651, %v453
        %v653 = vpop.permute.xlu0 %652
        %656 = vset.pattern.permute.xlu0 0
        %657 = vperm.xlu0 %656, %v454
        %v658 = vpop.permute.xlu0 %657
        %661 = vset.pattern.permute.xlu0 0
        %662 = vperm.xlu0 %661, %v455
        %v663 = vpop.permute.xlu0 %662
        %v665 = vlaneseq
        %v666 = vshrl.u32 %v665, 7
        %v667 = vsub.s32 0, %v666
        %v668 = vrot.slane %v504, %v667
        %v669 = vmul.f32 %v508, %v668
        %v670 = vmul.f32 %v513, %v668
        %v671 = vmul.f32 %v518, %v668
        %v672 = vmul.f32 %v523, %v668
        %v673 = vmul.f32 %v528, %v668
        %v674 = vmul.f32 %v533, %v668
        %v675 = vmul.f32 %v538, %v668
        %v676 = vmul.f32 %v543, %v668
        %v677 = vmul.f32 %v548, %v668
        %v678 = vmul.f32 %v553, %v668
        %v679 = vmul.f32 %v558, %v668
        %v680 = vmul.f32 %v563, %v668
        %v681 = vmul.f32 %v568, %v668
        %v682 = vmul.f32 %v573, %v668
        %v683 = vmul.f32 %v578, %v668
        %v684 = vmul.f32 %v583, %v668
        %v685 = vmul.f32 %v588, %v668
        %v686 = vmul.f32 %v593, %v668
        %v687 = vmul.f32 %v598, %v668
        %v688 = vmul.f32 %v603, %v668
        %v689 = vmul.f32 %v608, %v668
        %v690 = vmul.f32 %v613, %v668
        %v691 = vmul.f32 %v618, %v668
        %v692 = vmul.f32 %v623, %v668
        %v693 = vmul.f32 %v628, %v668
        %v694 = vmul.f32 %v633, %v668
        %v695 = vmul.f32 %v638, %v668
        %v696 = vmul.f32 %v643, %v668
        %v697 = vmul.f32 %v648, %v668
        %v698 = vmul.f32 %v653, %v668
        %v699 = vmul.f32 %v658, %v668
        %v700 = vmul.f32 %v663, %v668
        %701 = vset.pattern.permute.xlu0 1
        %702 = vperm.xlu0 %701, %v424
        %v703 = vpop.permute.xlu0 %702
        %705 = vset.pattern.permute.xlu0 1
        %706 = vperm.xlu0 %705, %v425
        %v707 = vpop.permute.xlu0 %706
        %709 = vset.pattern.permute.xlu0 1
        %710 = vperm.xlu0 %709, %v426
        %v711 = vpop.permute.xlu0 %710
        %713 = vset.pattern.permute.xlu0 1
        %714 = vperm.xlu0 %713, %v427
        %v715 = vpop.permute.xlu0 %714
        %717 = vset.pattern.permute.xlu0 1
        %718 = vperm.xlu0 %717, %v428
        %v719 = vpop.permute.xlu0 %718
        %721 = vset.pattern.permute.xlu0 1
        %722 = vperm.xlu0 %721, %v429
        %v723 = vpop.permute.xlu0 %722
        %725 = vset.pattern.permute.xlu0 1
        %726 = vperm.xlu0 %725, %v430
        %v727 = vpop.permute.xlu0 %726
        %729 = vset.pattern.permute.xlu0 1
        %730 = vperm.xlu0 %729, %v431
        %v731 = vpop.permute.xlu0 %730
        %733 = vset.pattern.permute.xlu0 1
        %734 = vperm.xlu0 %733, %v432
        %v735 = vpop.permute.xlu0 %734
        %737 = vset.pattern.permute.xlu0 1
        %738 = vperm.xlu0 %737, %v433
        %v739 = vpop.permute.xlu0 %738
        %741 = vset.pattern.permute.xlu0 1
        %742 = vperm.xlu0 %741, %v434
        %v743 = vpop.permute.xlu0 %742
        %745 = vset.pattern.permute.xlu0 1
        %746 = vperm.xlu0 %745, %v435
        %v747 = vpop.permute.xlu0 %746
        %749 = vset.pattern.permute.xlu0 1
        %750 = vperm.xlu0 %749, %v436
        %v751 = vpop.permute.xlu0 %750
        %753 = vset.pattern.permute.xlu0 1
        %754 = vperm.xlu0 %753, %v437
        %v755 = vpop.permute.xlu0 %754
        %757 = vset.pattern.permute.xlu0 1
        %758 = vperm.xlu0 %757, %v438
        %v759 = vpop.permute.xlu0 %758
        %761 = vset.pattern.permute.xlu0 1
        %762 = vperm.xlu0 %761, %v439
        %v763 = vpop.permute.xlu0 %762
        %765 = vset.pattern.permute.xlu0 1
        %766 = vperm.xlu0 %765, %v440
        %v767 = vpop.permute.xlu0 %766
        %769 = vset.pattern.permute.xlu0 1
        %770 = vperm.xlu0 %769, %v441
        %v771 = vpop.permute.xlu0 %770
        %773 = vset.pattern.permute.xlu0 1
        %774 = vperm.xlu0 %773, %v442
        %v775 = vpop.permute.xlu0 %774
        %777 = vset.pattern.permute.xlu0 1
        %778 = vperm.xlu0 %777, %v443
        %v779 = vpop.permute.xlu0 %778
        %781 = vset.pattern.permute.xlu0 1
        %782 = vperm.xlu0 %781, %v444
        %v783 = vpop.permute.xlu0 %782
        %785 = vset.pattern.permute.xlu0 1
        %786 = vperm.xlu0 %785, %v445
        %v787 = vpop.permute.xlu0 %786
        %789 = vset.pattern.permute.xlu0 1
        %790 = vperm.xlu0 %789, %v446
        %v791 = vpop.permute.xlu0 %790
        %793 = vset.pattern.permute.xlu0 1
        %794 = vperm.xlu0 %793, %v447
        %v795 = vpop.permute.xlu0 %794
        %797 = vset.pattern.permute.xlu0 1
        %798 = vperm.xlu0 %797, %v448
        %v799 = vpop.permute.xlu0 %798
        %801 = vset.pattern.permute.xlu0 1
        %802 = vperm.xlu0 %801, %v449
        %v803 = vpop.permute.xlu0 %802
        %805 = vset.pattern.permute.xlu0 1
        %806 = vperm.xlu0 %805, %v450
        %v807 = vpop.permute.xlu0 %806
        %809 = vset.pattern.permute.xlu0 1
        %810 = vperm.xlu0 %809, %v451
        %v811 = vpop.permute.xlu0 %810
        %813 = vset.pattern.permute.xlu0 1
        %814 = vperm.xlu0 %813, %v452
        %v815 = vpop.permute.xlu0 %814
        %817 = vset.pattern.permute.xlu0 1
        %818 = vperm.xlu0 %817, %v453
        %v819 = vpop.permute.xlu0 %818
        %821 = vset.pattern.permute.xlu0 1
        %822 = vperm.xlu0 %821, %v454
        %v823 = vpop.permute.xlu0 %822
        %825 = vset.pattern.permute.xlu0 1
        %826 = vperm.xlu0 %825, %v455
        %v827 = vpop.permute.xlu0 %826
        %v829 = vlaneseq
        %v830 = vshrl.u32 %v829, 7
        %v831 = vsub.s32 1, %v830
        %v832 = vrot.slane %v504, %v831
        %v833 = vmul.f32 %v703, %v832
        %v834 = vmul.f32 %v707, %v832
        %v835 = vmul.f32 %v711, %v832
        %v836 = vmul.f32 %v715, %v832
        %v837 = vmul.f32 %v719, %v832
        %v838 = vmul.f32 %v723, %v832
        %v839 = vmul.f32 %v727, %v832
        %v840 = vmul.f32 %v731, %v832
        %v841 = vmul.f32 %v735, %v832
        %v842 = vmul.f32 %v739, %v832
        %v843 = vmul.f32 %v743, %v832
        %v844 = vmul.f32 %v747, %v832
        %v845 = vmul.f32 %v751, %v832
        %v846 = vmul.f32 %v755, %v832
        %v847 = vmul.f32 %v759, %v832
        %v848 = vmul.f32 %v763, %v832
        %v849 = vmul.f32 %v767, %v832
        %v850 = vmul.f32 %v771, %v832
        %v851 = vmul.f32 %v775, %v832
        %v852 = vmul.f32 %v779, %v832
        %v853 = vmul.f32 %v783, %v832
        %v854 = vmul.f32 %v787, %v832
        %v855 = vmul.f32 %v791, %v832
        %v856 = vmul.f32 %v795, %v832
        %v857 = vmul.f32 %v799, %v832
        %v858 = vmul.f32 %v803, %v832
        %v859 = vmul.f32 %v807, %v832
        %v860 = vmul.f32 %v811, %v832
        %v861 = vmul.f32 %v815, %v832
        %v862 = vmul.f32 %v819, %v832
        %v863 = vmul.f32 %v823, %v832
        %v864 = vmul.f32 %v827, %v832
        %v865 = vadd.f32 %v669, %v833
        %v866 = vadd.f32 %v670, %v834
        %v867 = vadd.f32 %v671, %v835
        %v868 = vadd.f32 %v672, %v836
        %v869 = vadd.f32 %v673, %v837
        %v870 = vadd.f32 %v674, %v838
        %v871 = vadd.f32 %v675, %v839
        %v872 = vadd.f32 %v676, %v840
        %v873 = vadd.f32 %v677, %v841
        %v874 = vadd.f32 %v678, %v842
        %v875 = vadd.f32 %v679, %v843
        %v876 = vadd.f32 %v680, %v844
        %v877 = vadd.f32 %v681, %v845
        %v878 = vadd.f32 %v682, %v846
        %v879 = vadd.f32 %v683, %v847
        %v880 = vadd.f32 %v684, %v848
        %v881 = vadd.f32 %v685, %v849
        %v882 = vadd.f32 %v686, %v850
        %v883 = vadd.f32 %v687, %v851
        %v884 = vadd.f32 %v688, %v852
        %v885 = vadd.f32 %v689, %v853
        %v886 = vadd.f32 %v690, %v854
        %v887 = vadd.f32 %v691, %v855
        %v888 = vadd.f32 %v692, %v856
        %v889 = vadd.f32 %v693, %v857
        %v890 = vadd.f32 %v694, %v858
        %v891 = vadd.f32 %v695, %v859
        %v892 = vadd.f32 %v696, %v860
        %v893 = vadd.f32 %v697, %v861
        %v894 = vadd.f32 %v698, %v862
        %v895 = vadd.f32 %v699, %v863
        %v896 = vadd.f32 %v700, %v864
        %897 = vset.pattern.permute.xlu0 2
        %898 = vperm.xlu0 %897, %v424
        %v899 = vpop.permute.xlu0 %898
        %901 = vset.pattern.permute.xlu0 2
        %902 = vperm.xlu0 %901, %v425
        %v903 = vpop.permute.xlu0 %902
        %905 = vset.pattern.permute.xlu0 2
        %906 = vperm.xlu0 %905, %v426
        %v907 = vpop.permute.xlu0 %906
        %909 = vset.pattern.permute.xlu0 2
        %910 = vperm.xlu0 %909, %v427
        %v911 = vpop.permute.xlu0 %910
        %913 = vset.pattern.permute.xlu0 2
        %914 = vperm.xlu0 %913, %v428
        %v915 = vpop.permute.xlu0 %914
        %917 = vset.pattern.permute.xlu0 2
        %918 = vperm.xlu0 %917, %v429
        %v919 = vpop.permute.xlu0 %918
        %921 = vset.pattern.permute.xlu0 2
        %922 = vperm.xlu0 %921, %v430
        %v923 = vpop.permute.xlu0 %922
        %925 = vset.pattern.permute.xlu0 2
        %926 = vperm.xlu0 %925, %v431
        %v927 = vpop.permute.xlu0 %926
        %929 = vset.pattern.permute.xlu0 2
        %930 = vperm.xlu0 %929, %v432
        %v931 = vpop.permute.xlu0 %930
        %933 = vset.pattern.permute.xlu0 2
        %934 = vperm.xlu0 %933, %v433
        %v935 = vpop.permute.xlu0 %934
        %937 = vset.pattern.permute.xlu0 2
        %938 = vperm.xlu0 %937, %v434
        %v939 = vpop.permute.xlu0 %938
        %941 = vset.pattern.permute.xlu0 2
        %942 = vperm.xlu0 %941, %v435
        %v943 = vpop.permute.xlu0 %942
        %945 = vset.pattern.permute.xlu0 2
        %946 = vperm.xlu0 %945, %v436
        %v947 = vpop.permute.xlu0 %946
        %949 = vset.pattern.permute.xlu0 2
        %950 = vperm.xlu0 %949, %v437
        %v951 = vpop.permute.xlu0 %950
        %953 = vset.pattern.permute.xlu0 2
        %954 = vperm.xlu0 %953, %v438
        %v955 = vpop.permute.xlu0 %954
        %957 = vset.pattern.permute.xlu0 2
        %958 = vperm.xlu0 %957, %v439
        %v959 = vpop.permute.xlu0 %958
        %961 = vset.pattern.permute.xlu0 2
        %962 = vperm.xlu0 %961, %v440
        %v963 = vpop.permute.xlu0 %962
        %965 = vset.pattern.permute.xlu0 2
        %966 = vperm.xlu0 %965, %v441
        %v967 = vpop.permute.xlu0 %966
        %969 = vset.pattern.permute.xlu0 2
        %970 = vperm.xlu0 %969, %v442
        %v971 = vpop.permute.xlu0 %970
        %973 = vset.pattern.permute.xlu0 2
        %974 = vperm.xlu0 %973, %v443
        %v975 = vpop.permute.xlu0 %974
        %977 = vset.pattern.permute.xlu0 2
        %978 = vperm.xlu0 %977, %v444
        %v979 = vpop.permute.xlu0 %978
        %981 = vset.pattern.permute.xlu0 2
        %982 = vperm.xlu0 %981, %v445
        %v983 = vpop.permute.xlu0 %982
        %985 = vset.pattern.permute.xlu0 2
        %986 = vperm.xlu0 %985, %v446
        %v987 = vpop.permute.xlu0 %986
        %989 = vset.pattern.permute.xlu0 2
        %990 = vperm.xlu0 %989, %v447
        %v991 = vpop.permute.xlu0 %990
        %993 = vset.pattern.permute.xlu0 2
        %994 = vperm.xlu0 %993, %v448
        %v995 = vpop.permute.xlu0 %994
        %997 = vset.pattern.permute.xlu0 2
        %998 = vperm.xlu0 %997, %v449
        %v999 = vpop.permute.xlu0 %998
        %1001 = vset.pattern.permute.xlu0 2
        %1002 = vperm.xlu0 %1001, %v450
        %v1003 = vpop.permute.xlu0 %1002
        %1005 = vset.pattern.permute.xlu0 2
        %1006 = vperm.xlu0 %1005, %v451
        %v1007 = vpop.permute.xlu0 %1006
        %1009 = vset.pattern.permute.xlu0 2
        %1010 = vperm.xlu0 %1009, %v452
        %v1011 = vpop.permute.xlu0 %1010
        %1013 = vset.pattern.permute.xlu0 2
        %1014 = vperm.xlu0 %1013, %v453
        %v1015 = vpop.permute.xlu0 %1014
        %1017 = vset.pattern.permute.xlu0 2
        %1018 = vperm.xlu0 %1017, %v454
        %v1019 = vpop.permute.xlu0 %1018
        %1021 = vset.pattern.permute.xlu0 2
        %1022 = vperm.xlu0 %1021, %v455
        %v1023 = vpop.permute.xlu0 %1022
        %v1025 = vlaneseq
        %v1026 = vshrl.u32 %v1025, 7
        %v1027 = vsub.s32 2, %v1026
        %v1028 = vrot.slane %v504, %v1027
        %v1029 = vmul.f32 %v899, %v1028
        %v1030 = vmul.f32 %v903, %v1028
        %v1031 = vmul.f32 %v907, %v1028
        %v1032 = vmul.f32 %v911, %v1028
        %v1033 = vmul.f32 %v915, %v1028
        %v1034 = vmul.f32 %v919, %v1028
        %v1035 = vmul.f32 %v923, %v1028
        %v1036 = vmul.f32 %v927, %v1028
        %v1037 = vmul.f32 %v931, %v1028
        %v1038 = vmul.f32 %v935, %v1028
        %v1039 = vmul.f32 %v939, %v1028
        %v1040 = vmul.f32 %v943, %v1028
        %v1041 = vmul.f32 %v947, %v1028
        %v1042 = vmul.f32 %v951, %v1028
        %v1043 = vmul.f32 %v955, %v1028
        %v1044 = vmul.f32 %v959, %v1028
        %v1045 = vmul.f32 %v963, %v1028
        %v1046 = vmul.f32 %v967, %v1028
        %v1047 = vmul.f32 %v971, %v1028
        %v1048 = vmul.f32 %v975, %v1028
        %v1049 = vmul.f32 %v979, %v1028
        %v1050 = vmul.f32 %v983, %v1028
        %v1051 = vmul.f32 %v987, %v1028
        %v1052 = vmul.f32 %v991, %v1028
        %v1053 = vmul.f32 %v995, %v1028
        %v1054 = vmul.f32 %v999, %v1028
        %v1055 = vmul.f32 %v1003, %v1028
        %v1056 = vmul.f32 %v1007, %v1028
        %v1057 = vmul.f32 %v1011, %v1028
        %v1058 = vmul.f32 %v1015, %v1028
        %v1059 = vmul.f32 %v1019, %v1028
        %v1060 = vmul.f32 %v1023, %v1028
        %v1061 = vadd.f32 %v865, %v1029
        %v1062 = vadd.f32 %v866, %v1030
        %v1063 = vadd.f32 %v867, %v1031
        %v1064 = vadd.f32 %v868, %v1032
        %v1065 = vadd.f32 %v869, %v1033
        %v1066 = vadd.f32 %v870, %v1034
        %v1067 = vadd.f32 %v871, %v1035
        %v1068 = vadd.f32 %v872, %v1036
        %v1069 = vadd.f32 %v873, %v1037
        %v1070 = vadd.f32 %v874, %v1038
        %v1071 = vadd.f32 %v875, %v1039
        %v1072 = vadd.f32 %v876, %v1040
        %v1073 = vadd.f32 %v877, %v1041
        %v1074 = vadd.f32 %v878, %v1042
        %v1075 = vadd.f32 %v879, %v1043
        %v1076 = vadd.f32 %v880, %v1044
        %v1077 = vadd.f32 %v881, %v1045
        %v1078 = vadd.f32 %v882, %v1046
        %v1079 = vadd.f32 %v883, %v1047
        %v1080 = vadd.f32 %v884, %v1048
        %v1081 = vadd.f32 %v885, %v1049
        %v1082 = vadd.f32 %v886, %v1050
        %v1083 = vadd.f32 %v887, %v1051
        %v1084 = vadd.f32 %v888, %v1052
        %v1085 = vadd.f32 %v889, %v1053
        %v1086 = vadd.f32 %v890, %v1054
        %v1087 = vadd.f32 %v891, %v1055
        %v1088 = vadd.f32 %v892, %v1056
        %v1089 = vadd.f32 %v893, %v1057
        %v1090 = vadd.f32 %v894, %v1058
        %v1091 = vadd.f32 %v895, %v1059
        %v1092 = vadd.f32 %v896, %v1060
        %v1093 = vlaneseq
        %v1094 = vand.u32 %v1093, 127
        %vm1095 = vcmp.lt.s32.totalorder %v1094, 3
        %vm1096 = vcmp.lt.s32.totalorder %v1094, 21
        %v1097 = vand.u32 2147483647, %v1061
        %vm1098 = vcmp.le.f32.partialorder %v1097, 0.7853982
        %vm1099 = vcmp.lt.s32.totalorder %v1061, 0
        %v1100 = vand.u32 %v1061, 2139095040
        %v1101 = vshrl.u32 %v1100, 23
        %v1102 = vsub.s32 %v1101, 127
        %v1103 = vand.u32 2147483647, %v1061
        %v1104 = vand.u32 %v1103, 8388607
        %v1105 = vor.u32 %v1104, 8388608
        %v1106 = vsub.s32 0, %v1105
        %v1107 = vadd.s32 %v1102, 1
        %vm1108 = vcmp.gt.s32.totalorder %v1107, 0
        %v1109 = vsel %vm1108, %v1107, 0
        %v1110 = vshrl.u32 %v1109, 5
        %v1111 = vand.u32 %v1109, 31
        %v1112 = vsub.s32 32, %v1111
        %v1113 = vshrl.u32 683565275, %v1112
        %v1114 = vshll.u32 683565275, %v1111
        %v1115 = vshrl.u32 2475754826, %v1112
        %v1116 = vor.u32 %v1114, %v1115
        %v1117 = vshll.u32 2475754826, %v1111
        %v1118 = vshrl.u32 2131351028, %v1112
        %v1119 = vor.u32 %v1117, %v1118
        %v1120 = vshll.u32 2131351028, %v1111
        %v1121 = vshrl.u32 2102212464, %v1112
        %v1122 = vor.u32 %v1120, %v1121
        %v1123 = vshll.u32 2102212464, %v1111
        %v1124 = vshrl.u32 920167782, %v1112
        %v1125 = vor.u32 %v1123, %v1124
        %v1126 = vshll.u32 920167782, %v1111
        %v1127 = vshrl.u32 1326507024, %v1112
        %v1128 = vor.u32 %v1126, %v1127
        %vm1129 = vcmp.lt.s32.totalorder %v1110, 1
        %vm1130 = vcmp.lt.s32.totalorder %v1110, 2
        %vm1131 = vcmp.lt.s32.totalorder %v1110, 3
        %vm1132 = vcmp.lt.s32.totalorder %v1110, 4
        %v1133 = vsel %vm1129, %v1113, %v1116
        %v1134 = vsel %vm1132, %v1122, 2102212464
        %v1135 = vsel %vm1131, %v1119, %v1134
        %v1136 = vsel %vm1130, %v1133, %v1135
        %v1137 = vsel %vm1129, %v1116, %v1119
        %v1138 = vsel %vm1132, %v1125, 920167782
        %v1139 = vsel %vm1131, %v1122, %v1138
        %v1140 = vsel %vm1130, %v1137, %v1139
        %v1141 = vsel %vm1129, %v1119, %v1122
        %v1142 = vsel %vm1132, %v1128, 1326507024
        %v1143 = vsel %vm1131, %v1125, %v1142
        %v1144 = vsel %vm1130, %v1141, %v1143
        %v1145 = vshll.u32 %v1105, 8
        %v1146 = vmul.u32.u64.compose %v1145, %v1144
        %v1147 = vextract.low.u32 %v1146
        %v1148 = vextract.high.u32 %v1146
        %v1149 = vmul.u32.u64.compose %v1145, %v1140
        %v1150 = vextract.low.u32 %v1149
        %v1151 = vextract.high.u32 %v1149
        %v1152 = vmul.u32 %v1145, %v1136
        %v1153 = vadd.s32 %v1148, %v1150
        %vm1154 = vc.u32 %v1148, %v1150
        %v1155 = vadd.s32 %v1151, 1
        %v1156 = vsel %vm1154, %v1155, %v1151
        %v1157 = vadd.s32 %v1152, %v1156
        %v1158 = vadd.s32 %v1157, 536870912
        %v1159 = vshrl.u32 %v1158, 30
        %v1160 = vshll.u32 %v1159, 30
        %v1161 = vsub.s32 %v1157, %v1160
        %vm1162 = vcmp.lt.s32.totalorder %v1161, 0
        %v1163 = vsub.s32 0, %v1161
        %v1164 = vsel %vm1162, %v1163, %v1161
        %v1165 = vclz %v1164
        %v1166 = vsub.s32 %v1165, 2
        %vm1167 = vcmp.gt.s32.totalorder 0, %v1166
        %v1168 = vsel %vm1167, 0, %v1166
        %v1169 = vsub.s32 32, %v1168
        %v1170 = vshll.u32 %v1161, %v1168
        %v1171 = vshrl.u32 %v1153, %v1169
        %v1172 = vor.u32 %v1170, %v1171
        %v1173 = vsub.s32 4294967266, %v1168
        %v1174 = vadd.s32 %v1173, 127
        %v1175 = vshll.u32 %v1174, 23
        %v1176 = vor.u32 4788187, %v1175
        %v1177 = vand.u32 2147483647, %v1176
        %v1179 = vcvt.s32.f32 %v1172
        %v1180 = vmul.f32 %v1179, %v1177
        %v1181 = vxor.u32 %v1180, 2147483648
        %v1182 = vsel %vm1099, %v1181, %v1180
        %v1183 = vsub.s32 4, %v1159
        %v1184 = vsel %vm1099, %v1183, %v1159
        %v1185 = vsel %vm1098, %v1061, %v1182
        %v1186 = vsel %vm1098, 0, %v1184
        %v1187 = vcosq.f32.pop %v1185
        %v1188 = vsinq.f32.pop %v1185
        %vm1189 = vweird.f32 %v1061
        %v1190 = vadd.s32 %v1186, 3
        %v1191 = vand.u32 %v1190, 3
        %vm1192 = vcmp.lt.s32.totalorder %v1191, 2
        %vm1193 = vcmp.eq.s32.totalorder %v1191, 0
        %v1194 = vxor.u32 %v1188, 2147483648
        %v1195 = vsel %vm1193, %v1187, %v1194
        %vm1196 = vcmp.eq.s32.totalorder %v1191, 2
        %v1197 = vxor.u32 %v1187, 2147483648
        %v1198 = vsel %vm1196, %v1197, %v1188
        %v1199 = vsel %vm1192, %v1195, %v1198
        %v1200 = vsel %vm1189, nan, %v1199
        %v1201 = vand.u32 2147483647, %v1062
        %vm1202 = vcmp.le.f32.partialorder %v1201, 0.7853982
        %vm1203 = vcmp.lt.s32.totalorder %v1062, 0
        %v1204 = vand.u32 %v1062, 2139095040
        %v1205 = vshrl.u32 %v1204, 23
        %v1206 = vsub.s32 %v1205, 127
        %v1207 = vand.u32 2147483647, %v1062
        %v1208 = vand.u32 %v1207, 8388607
        %v1209 = vor.u32 %v1208, 8388608
        %v1210 = vsub.s32 0, %v1209
        %v1211 = vadd.s32 %v1206, 1
        %vm1212 = vcmp.gt.s32.totalorder %v1211, 0
        %v1213 = vsel %vm1212, %v1211, 0
        %v1214 = vshrl.u32 %v1213, 5
        %v1215 = vand.u32 %v1213, 31
        %v1216 = vsub.s32 32, %v1215
        %v1217 = vshrl.u32 683565275, %v1216
        %v1218 = vshll.u32 683565275, %v1215
        %v1219 = vshrl.u32 2475754826, %v1216
        %v1220 = vor.u32 %v1218, %v1219
        %v1221 = vshll.u32 2475754826, %v1215
        %v1222 = vshrl.u32 2131351028, %v1216
        %v1223 = vor.u32 %v1221, %v1222
        %v1224 = vshll.u32 2131351028, %v1215
        %v1225 = vshrl.u32 2102212464, %v1216
        %v1226 = vor.u32 %v1224, %v1225
        %v1227 = vshll.u32 2102212464, %v1215
        %v1228 = vshrl.u32 920167782, %v1216
        %v1229 = vor.u32 %v1227, %v1228
        %v1230 = vshll.u32 920167782, %v1215
        %v1231 = vshrl.u32 1326507024, %v1216
        %v1232 = vor.u32 %v1230, %v1231
        %vm1233 = vcmp.lt.s32.totalorder %v1214, 1
        %vm1234 = vcmp.lt.s32.totalorder %v1214, 2
        %vm1235 = vcmp.lt.s32.totalorder %v1214, 3
        %vm1236 = vcmp.lt.s32.totalorder %v1214, 4
        %v1237 = vsel %vm1233, %v1217, %v1220
        %v1238 = vsel %vm1236, %v1226, 2102212464
        %v1239 = vsel %vm1235, %v1223, %v1238
        %v1240 = vsel %vm1234, %v1237, %v1239
        %v1241 = vsel %vm1233, %v1220, %v1223
        %v1242 = vsel %vm1236, %v1229, 920167782
        %v1243 = vsel %vm1235, %v1226, %v1242
        %v1244 = vsel %vm1234, %v1241, %v1243
        %v1245 = vsel %vm1233, %v1223, %v1226
        %v1246 = vsel %vm1236, %v1232, 1326507024
        %v1247 = vsel %vm1235, %v1229, %v1246
        %v1248 = vsel %vm1234, %v1245, %v1247
        %v1249 = vshll.u32 %v1209, 8
        %v1250 = vmul.u32.u64.compose %v1249, %v1248
        %v1251 = vextract.low.u32 %v1250
        %v1252 = vextract.high.u32 %v1250
        %v1253 = vmul.u32.u64.compose %v1249, %v1244
        %v1254 = vextract.low.u32 %v1253
        %v1255 = vextract.high.u32 %v1253
        %v1256 = vmul.u32 %v1249, %v1240
        %v1257 = vadd.s32 %v1252, %v1254
        %vm1258 = vc.u32 %v1252, %v1254
        %v1259 = vadd.s32 %v1255, 1
        %v1260 = vsel %vm1258, %v1259, %v1255
        %v1261 = vadd.s32 %v1256, %v1260
        %v1262 = vadd.s32 %v1261, 536870912
        %v1263 = vshrl.u32 %v1262, 30
        %v1264 = vshll.u32 %v1263, 30
        %v1265 = vsub.s32 %v1261, %v1264
        %vm1266 = vcmp.lt.s32.totalorder %v1265, 0
        %v1267 = vsub.s32 0, %v1265
        %v1268 = vsel %vm1266, %v1267, %v1265
        %v1269 = vclz %v1268
        %v1270 = vsub.s32 %v1269, 2
        %vm1271 = vcmp.gt.s32.totalorder 0, %v1270
        %v1272 = vsel %vm1271, 0, %v1270
        %v1273 = vsub.s32 32, %v1272
        %v1274 = vshll.u32 %v1265, %v1272
        %v1275 = vshrl.u32 %v1257, %v1273
        %v1276 = vor.u32 %v1274, %v1275
        %v1277 = vsub.s32 4294967266, %v1272
        %v1278 = vadd.s32 %v1277, 127
        %v1279 = vshll.u32 %v1278, 23
        %v1280 = vor.u32 4788187, %v1279
        %v1281 = vand.u32 2147483647, %v1280
        %v1283 = vcvt.s32.f32 %v1276
        %v1284 = vmul.f32 %v1283, %v1281
        %v1285 = vxor.u32 %v1284, 2147483648
        %v1286 = vsel %vm1203, %v1285, %v1284
        %v1287 = vsub.s32 4, %v1263
        %v1288 = vsel %vm1203, %v1287, %v1263
        %v1289 = vsel %vm1202, %v1062, %v1286
        %v1290 = vsel %vm1202, 0, %v1288
        %v1291 = vcosq.f32.pop %v1289
        %v1292 = vsinq.f32.pop %v1289
        %vm1293 = vweird.f32 %v1062
        %v1294 = vadd.s32 %v1290, 3
        %v1295 = vand.u32 %v1294, 3
        %vm1296 = vcmp.lt.s32.totalorder %v1295, 2
        %vm1297 = vcmp.eq.s32.totalorder %v1295, 0
        %v1298 = vxor.u32 %v1292, 2147483648
        %v1299 = vsel %vm1297, %v1291, %v1298
        %vm1300 = vcmp.eq.s32.totalorder %v1295, 2
        %v1301 = vxor.u32 %v1291, 2147483648
        %v1302 = vsel %vm1300, %v1301, %v1292
        %v1303 = vsel %vm1296, %v1299, %v1302
        %v1304 = vsel %vm1293, nan, %v1303
        %v1305 = vand.u32 2147483647, %v1063
        %vm1306 = vcmp.le.f32.partialorder %v1305, 0.7853982
        %vm1307 = vcmp.lt.s32.totalorder %v1063, 0
        %v1308 = vand.u32 %v1063, 2139095040
        %v1309 = vshrl.u32 %v1308, 23
        %v1310 = vsub.s32 %v1309, 127
        %v1311 = vand.u32 2147483647, %v1063
        %v1312 = vand.u32 %v1311, 8388607
        %v1313 = vor.u32 %v1312, 8388608
        %v1314 = vsub.s32 0, %v1313
        %v1315 = vadd.s32 %v1310, 1
        %vm1316 = vcmp.gt.s32.totalorder %v1315, 0
        %v1317 = vsel %vm1316, %v1315, 0
        %v1318 = vshrl.u32 %v1317, 5
        %v1319 = vand.u32 %v1317, 31
        %v1320 = vsub.s32 32, %v1319
        %v1321 = vshrl.u32 683565275, %v1320
        %v1322 = vshll.u32 683565275, %v1319
        %v1323 = vshrl.u32 2475754826, %v1320
        %v1324 = vor.u32 %v1322, %v1323
        %v1325 = vshll.u32 2475754826, %v1319
        %v1326 = vshrl.u32 2131351028, %v1320
        %v1327 = vor.u32 %v1325, %v1326
        %v1328 = vshll.u32 2131351028, %v1319
        %v1329 = vshrl.u32 2102212464, %v1320
        %v1330 = vor.u32 %v1328, %v1329
        %v1331 = vshll.u32 2102212464, %v1319
        %v1332 = vshrl.u32 920167782, %v1320
        %v1333 = vor.u32 %v1331, %v1332
        %v1334 = vshll.u32 920167782, %v1319
        %v1335 = vshrl.u32 1326507024, %v1320
        %v1336 = vor.u32 %v1334, %v1335
        %vm1337 = vcmp.lt.s32.totalorder %v1318, 1
        %vm1338 = vcmp.lt.s32.totalorder %v1318, 2
        %vm1339 = vcmp.lt.s32.totalorder %v1318, 3
        %vm1340 = vcmp.lt.s32.totalorder %v1318, 4
        %v1341 = vsel %vm1337, %v1321, %v1324
        %v1342 = vsel %vm1340, %v1330, 2102212464
        %v1343 = vsel %vm1339, %v1327, %v1342
        %v1344 = vsel %vm1338, %v1341, %v1343
        %v1345 = vsel %vm1337, %v1324, %v1327
        %v1346 = vsel %vm1340, %v1333, 920167782
        %v1347 = vsel %vm1339, %v1330, %v1346
        %v1348 = vsel %vm1338, %v1345, %v1347
        %v1349 = vsel %vm1337, %v1327, %v1330
        %v1350 = vsel %vm1340, %v1336, 1326507024
        %v1351 = vsel %vm1339, %v1333, %v1350
        %v1352 = vsel %vm1338, %v1349, %v1351
        %v1353 = vshll.u32 %v1313, 8
        %v1354 = vmul.u32.u64.compose %v1353, %v1352
        %v1355 = vextract.low.u32 %v1354
        %v1356 = vextract.high.u32 %v1354
        %v1357 = vmul.u32.u64.compose %v1353, %v1348
        %v1358 = vextract.low.u32 %v1357
        %v1359 = vextract.high.u32 %v1357
        %v1360 = vmul.u32 %v1353, %v1344
        %v1361 = vadd.s32 %v1356, %v1358
        %vm1362 = vc.u32 %v1356, %v1358
        %v1363 = vadd.s32 %v1359, 1
        %v1364 = vsel %vm1362, %v1363, %v1359
        %v1365 = vadd.s32 %v1360, %v1364
        %v1366 = vadd.s32 %v1365, 536870912
        %v1367 = vshrl.u32 %v1366, 30
        %v1368 = vshll.u32 %v1367, 30
        %v1369 = vsub.s32 %v1365, %v1368
        %vm1370 = vcmp.lt.s32.totalorder %v1369, 0
        %v1371 = vsub.s32 0, %v1369
        %v1372 = vsel %vm1370, %v1371, %v1369
        %v1373 = vclz %v1372
        %v1374 = vsub.s32 %v1373, 2
        %vm1375 = vcmp.gt.s32.totalorder 0, %v1374
        %v1376 = vsel %vm1375, 0, %v1374
        %v1377 = vsub.s32 32, %v1376
        %v1378 = vshll.u32 %v1369, %v1376
        %v1379 = vshrl.u32 %v1361, %v1377
        %v1380 = vor.u32 %v1378, %v1379
        %v1381 = vsub.s32 4294967266, %v1376
        %v1382 = vadd.s32 %v1381, 127
        %v1383 = vshll.u32 %v1382, 23
        %v1384 = vor.u32 4788187, %v1383
        %v1385 = vand.u32 2147483647, %v1384
        %v1387 = vcvt.s32.f32 %v1380
        %v1388 = vmul.f32 %v1387, %v1385
        %v1389 = vxor.u32 %v1388, 2147483648
        %v1390 = vsel %vm1307, %v1389, %v1388
        %v1391 = vsub.s32 4, %v1367
        %v1392 = vsel %vm1307, %v1391, %v1367
        %v1393 = vsel %vm1306, %v1063, %v1390
        %v1394 = vsel %vm1306, 0, %v1392
        %v1395 = vcosq.f32.pop %v1393
        %v1396 = vsinq.f32.pop %v1393
        %vm1397 = vweird.f32 %v1063
        %v1398 = vadd.s32 %v1394, 3
        %v1399 = vand.u32 %v1398, 3
        %vm1400 = vcmp.lt.s32.totalorder %v1399, 2
        %vm1401 = vcmp.eq.s32.totalorder %v1399, 0
        %v1402 = vxor.u32 %v1396, 2147483648
        %v1403 = vsel %vm1401, %v1395, %v1402
        %vm1404 = vcmp.eq.s32.totalorder %v1399, 2
        %v1405 = vxor.u32 %v1395, 2147483648
        %v1406 = vsel %vm1404, %v1405, %v1396
        %v1407 = vsel %vm1400, %v1403, %v1406
        %v1408 = vsel %vm1397, nan, %v1407
        %v1409 = vand.u32 2147483647, %v1064
        %vm1410 = vcmp.le.f32.partialorder %v1409, 0.7853982
        %vm1411 = vcmp.lt.s32.totalorder %v1064, 0
        %v1412 = vand.u32 %v1064, 2139095040
        %v1413 = vshrl.u32 %v1412, 23
        %v1414 = vsub.s32 %v1413, 127
        %v1415 = vand.u32 2147483647, %v1064
        %v1416 = vand.u32 %v1415, 8388607
        %v1417 = vor.u32 %v1416, 8388608
        %v1418 = vsub.s32 0, %v1417
        %v1419 = vadd.s32 %v1414, 1
        %vm1420 = vcmp.gt.s32.totalorder %v1419, 0
        %v1421 = vsel %vm1420, %v1419, 0
        %v1422 = vshrl.u32 %v1421, 5
        %v1423 = vand.u32 %v1421, 31
        %v1424 = vsub.s32 32, %v1423
        %v1425 = vshrl.u32 683565275, %v1424
        %v1426 = vshll.u32 683565275, %v1423
        %v1427 = vshrl.u32 2475754826, %v1424
        %v1428 = vor.u32 %v1426, %v1427
        %v1429 = vshll.u32 2475754826, %v1423
        %v1430 = vshrl.u32 2131351028, %v1424
        %v1431 = vor.u32 %v1429, %v1430
        %v1432 = vshll.u32 2131351028, %v1423
        %v1433 = vshrl.u32 2102212464, %v1424
        %v1434 = vor.u32 %v1432, %v1433
        %v1435 = vshll.u32 2102212464, %v1423
        %v1436 = vshrl.u32 920167782, %v1424
        %v1437 = vor.u32 %v1435, %v1436
        %v1438 = vshll.u32 920167782, %v1423
        %v1439 = vshrl.u32 1326507024, %v1424
        %v1440 = vor.u32 %v1438, %v1439
        %vm1441 = vcmp.lt.s32.totalorder %v1422, 1
        %vm1442 = vcmp.lt.s32.totalorder %v1422, 2
        %vm1443 = vcmp.lt.s32.totalorder %v1422, 3
        %vm1444 = vcmp.lt.s32.totalorder %v1422, 4
        %v1445 = vsel %vm1441, %v1425, %v1428
        %v1446 = vsel %vm1444, %v1434, 2102212464
        %v1447 = vsel %vm1443, %v1431, %v1446
        %v1448 = vsel %vm1442, %v1445, %v1447
        %v1449 = vsel %vm1441, %v1428, %v1431
        %v1450 = vsel %vm1444, %v1437, 920167782
        %v1451 = vsel %vm1443, %v1434, %v1450
        %v1452 = vsel %vm1442, %v1449, %v1451
        %v1453 = vsel %vm1441, %v1431, %v1434
        %v1454 = vsel %vm1444, %v1440, 1326507024
        %v1455 = vsel %vm1443, %v1437, %v1454
        %v1456 = vsel %vm1442, %v1453, %v1455
        %v1457 = vshll.u32 %v1417, 8
        %v1458 = vmul.u32.u64.compose %v1457, %v1456
        %v1459 = vextract.low.u32 %v1458
        %v1460 = vextract.high.u32 %v1458
        %v1461 = vmul.u32.u64.compose %v1457, %v1452
        %v1462 = vextract.low.u32 %v1461
        %v1463 = vextract.high.u32 %v1461
        %v1464 = vmul.u32 %v1457, %v1448
        %v1465 = vadd.s32 %v1460, %v1462
        %vm1466 = vc.u32 %v1460, %v1462
        %v1467 = vadd.s32 %v1463, 1
        %v1468 = vsel %vm1466, %v1467, %v1463
        %v1469 = vadd.s32 %v1464, %v1468
        %v1470 = vadd.s32 %v1469, 536870912
        %v1471 = vshrl.u32 %v1470, 30
        %v1472 = vshll.u32 %v1471, 30
        %v1473 = vsub.s32 %v1469, %v1472
        %vm1474 = vcmp.lt.s32.totalorder %v1473, 0
        %v1475 = vsub.s32 0, %v1473
        %v1476 = vsel %vm1474, %v1475, %v1473
        %v1477 = vclz %v1476
        %v1478 = vsub.s32 %v1477, 2
        %vm1479 = vcmp.gt.s32.totalorder 0, %v1478
        %v1480 = vsel %vm1479, 0, %v1478
        %v1481 = vsub.s32 32, %v1480
        %v1482 = vshll.u32 %v1473, %v1480
        %v1483 = vshrl.u32 %v1465, %v1481
        %v1484 = vor.u32 %v1482, %v1483
        %v1485 = vsub.s32 4294967266, %v1480
        %v1486 = vadd.s32 %v1485, 127
        %v1487 = vshll.u32 %v1486, 23
        %v1488 = vor.u32 4788187, %v1487
        %v1489 = vand.u32 2147483647, %v1488
        %v1491 = vcvt.s32.f32 %v1484
        %v1492 = vmul.f32 %v1491, %v1489
        %v1493 = vxor.u32 %v1492, 2147483648
        %v1494 = vsel %vm1411, %v1493, %v1492
        %v1495 = vsub.s32 4, %v1471
        %v1496 = vsel %vm1411, %v1495, %v1471
        %v1497 = vsel %vm1410, %v1064, %v1494
        %v1498 = vsel %vm1410, 0, %v1496
        %v1499 = vcosq.f32.pop %v1497
        %v1500 = vsinq.f32.pop %v1497
        %vm1501 = vweird.f32 %v1064
        %v1502 = vadd.s32 %v1498, 3
        %v1503 = vand.u32 %v1502, 3
        %vm1504 = vcmp.lt.s32.totalorder %v1503, 2
        %vm1505 = vcmp.eq.s32.totalorder %v1503, 0
        %v1506 = vxor.u32 %v1500, 2147483648
        %v1507 = vsel %vm1505, %v1499, %v1506
        %vm1508 = vcmp.eq.s32.totalorder %v1503, 2
        %v1509 = vxor.u32 %v1499, 2147483648
        %v1510 = vsel %vm1508, %v1509, %v1500
        %v1511 = vsel %vm1504, %v1507, %v1510
        %v1512 = vsel %vm1501, nan, %v1511
        %v1513 = vand.u32 2147483647, %v1065
        %vm1514 = vcmp.le.f32.partialorder %v1513, 0.7853982
        %vm1515 = vcmp.lt.s32.totalorder %v1065, 0
        %v1516 = vand.u32 %v1065, 2139095040
        %v1517 = vshrl.u32 %v1516, 23
        %v1518 = vsub.s32 %v1517, 127
        %v1519 = vand.u32 2147483647, %v1065
        %v1520 = vand.u32 %v1519, 8388607
        %v1521 = vor.u32 %v1520, 8388608
        %v1522 = vsub.s32 0, %v1521
        %v1523 = vadd.s32 %v1518, 1
        %vm1524 = vcmp.gt.s32.totalorder %v1523, 0
        %v1525 = vsel %vm1524, %v1523, 0
        %v1526 = vshrl.u32 %v1525, 5
        %v1527 = vand.u32 %v1525, 31
        %v1528 = vsub.s32 32, %v1527
        %v1529 = vshrl.u32 683565275, %v1528
        %v1530 = vshll.u32 683565275, %v1527
        %v1531 = vshrl.u32 2475754826, %v1528
        %v1532 = vor.u32 %v1530, %v1531
        %v1533 = vshll.u32 2475754826, %v1527
        %v1534 = vshrl.u32 2131351028, %v1528
        %v1535 = vor.u32 %v1533, %v1534
        %v1536 = vshll.u32 2131351028, %v1527
        %v1537 = vshrl.u32 2102212464, %v1528
        %v1538 = vor.u32 %v1536, %v1537
        %v1539 = vshll.u32 2102212464, %v1527
        %v1540 = vshrl.u32 920167782, %v1528
        %v1541 = vor.u32 %v1539, %v1540
        %v1542 = vshll.u32 920167782, %v1527
        %v1543 = vshrl.u32 1326507024, %v1528
        %v1544 = vor.u32 %v1542, %v1543
        %vm1545 = vcmp.lt.s32.totalorder %v1526, 1
        %vm1546 = vcmp.lt.s32.totalorder %v1526, 2
        %vm1547 = vcmp.lt.s32.totalorder %v1526, 3
        %vm1548 = vcmp.lt.s32.totalorder %v1526, 4
        %v1549 = vsel %vm1545, %v1529, %v1532
        %v1550 = vsel %vm1548, %v1538, 2102212464
        %v1551 = vsel %vm1547, %v1535, %v1550
        %v1552 = vsel %vm1546, %v1549, %v1551
        %v1553 = vsel %vm1545, %v1532, %v1535
        %v1554 = vsel %vm1548, %v1541, 920167782
        %v1555 = vsel %vm1547, %v1538, %v1554
        %v1556 = vsel %vm1546, %v1553, %v1555
        %v1557 = vsel %vm1545, %v1535, %v1538
        %v1558 = vsel %vm1548, %v1544, 1326507024
        %v1559 = vsel %vm1547, %v1541, %v1558
        %v1560 = vsel %vm1546, %v1557, %v1559
        %v1561 = vshll.u32 %v1521, 8
        %v1562 = vmul.u32.u64.compose %v1561, %v1560
        %v1563 = vextract.low.u32 %v1562
        %v1564 = vextract.high.u32 %v1562
        %v1565 = vmul.u32.u64.compose %v1561, %v1556
        %v1566 = vextract.low.u32 %v1565
        %v1567 = vextract.high.u32 %v1565
        %v1568 = vmul.u32 %v1561, %v1552
        %v1569 = vadd.s32 %v1564, %v1566
        %vm1570 = vc.u32 %v1564, %v1566
        %v1571 = vadd.s32 %v1567, 1
        %v1572 = vsel %vm1570, %v1571, %v1567
        %v1573 = vadd.s32 %v1568, %v1572
        %v1574 = vadd.s32 %v1573, 536870912
        %v1575 = vshrl.u32 %v1574, 30
        %v1576 = vshll.u32 %v1575, 30
        %v1577 = vsub.s32 %v1573, %v1576
        %vm1578 = vcmp.lt.s32.totalorder %v1577, 0
        %v1579 = vsub.s32 0, %v1577
        %v1580 = vsel %vm1578, %v1579, %v1577
        %v1581 = vclz %v1580
        %v1582 = vsub.s32 %v1581, 2
        %vm1583 = vcmp.gt.s32.totalorder 0, %v1582
        %v1584 = vsel %vm1583, 0, %v1582
        %v1585 = vsub.s32 32, %v1584
        %v1586 = vshll.u32 %v1577, %v1584
        %v1587 = vshrl.u32 %v1569, %v1585
        %v1588 = vor.u32 %v1586, %v1587
        %v1589 = vsub.s32 4294967266, %v1584
        %v1590 = vadd.s32 %v1589, 127
        %v1591 = vshll.u32 %v1590, 23
        %v1592 = vor.u32 4788187, %v1591
        %v1593 = vand.u32 2147483647, %v1592
        %v1595 = vcvt.s32.f32 %v1588
        %v1596 = vmul.f32 %v1595, %v1593
        %v1597 = vxor.u32 %v1596, 2147483648
        %v1598 = vsel %vm1515, %v1597, %v1596
        %v1599 = vsub.s32 4, %v1575
        %v1600 = vsel %vm1515, %v1599, %v1575
        %v1601 = vsel %vm1514, %v1065, %v1598
        %v1602 = vsel %vm1514, 0, %v1600
        %v1603 = vcosq.f32.pop %v1601
        %v1604 = vsinq.f32.pop %v1601
        %vm1605 = vweird.f32 %v1065
        %v1606 = vadd.s32 %v1602, 3
        %v1607 = vand.u32 %v1606, 3
        %vm1608 = vcmp.lt.s32.totalorder %v1607, 2
        %vm1609 = vcmp.eq.s32.totalorder %v1607, 0
        %v1610 = vxor.u32 %v1604, 2147483648
        %v1611 = vsel %vm1609, %v1603, %v1610
        %vm1612 = vcmp.eq.s32.totalorder %v1607, 2
        %v1613 = vxor.u32 %v1603, 2147483648
        %v1614 = vsel %vm1612, %v1613, %v1604
        %v1615 = vsel %vm1608, %v1611, %v1614
        %v1616 = vsel %vm1605, nan, %v1615
        %v1617 = vand.u32 2147483647, %v1066
        %vm1618 = vcmp.le.f32.partialorder %v1617, 0.7853982
        %vm1619 = vcmp.lt.s32.totalorder %v1066, 0
        %v1620 = vand.u32 %v1066, 2139095040
        %v1621 = vshrl.u32 %v1620, 23
        %v1622 = vsub.s32 %v1621, 127
        %v1623 = vand.u32 2147483647, %v1066
        %v1624 = vand.u32 %v1623, 8388607
        %v1625 = vor.u32 %v1624, 8388608
        %v1626 = vsub.s32 0, %v1625
        %v1627 = vadd.s32 %v1622, 1
        %vm1628 = vcmp.gt.s32.totalorder %v1627, 0
        %v1629 = vsel %vm1628, %v1627, 0
        %v1630 = vshrl.u32 %v1629, 5
        %v1631 = vand.u32 %v1629, 31
        %v1632 = vsub.s32 32, %v1631
        %v1633 = vshrl.u32 683565275, %v1632
        %v1634 = vshll.u32 683565275, %v1631
        %v1635 = vshrl.u32 2475754826, %v1632
        %v1636 = vor.u32 %v1634, %v1635
        %v1637 = vshll.u32 2475754826, %v1631
        %v1638 = vshrl.u32 2131351028, %v1632
        %v1639 = vor.u32 %v1637, %v1638
        %v1640 = vshll.u32 2131351028, %v1631
        %v1641 = vshrl.u32 2102212464, %v1632
        %v1642 = vor.u32 %v1640, %v1641
        %v1643 = vshll.u32 2102212464, %v1631
        %v1644 = vshrl.u32 920167782, %v1632
        %v1645 = vor.u32 %v1643, %v1644
        %v1646 = vshll.u32 920167782, %v1631
        %v1647 = vshrl.u32 1326507024, %v1632
        %v1648 = vor.u32 %v1646, %v1647
        %vm1649 = vcmp.lt.s32.totalorder %v1630, 1
        %vm1650 = vcmp.lt.s32.totalorder %v1630, 2
        %vm1651 = vcmp.lt.s32.totalorder %v1630, 3
        %vm1652 = vcmp.lt.s32.totalorder %v1630, 4
        %v1653 = vsel %vm1649, %v1633, %v1636
        %v1654 = vsel %vm1652, %v1642, 2102212464
        %v1655 = vsel %vm1651, %v1639, %v1654
        %v1656 = vsel %vm1650, %v1653, %v1655
        %v1657 = vsel %vm1649, %v1636, %v1639
        %v1658 = vsel %vm1652, %v1645, 920167782
        %v1659 = vsel %vm1651, %v1642, %v1658
        %v1660 = vsel %vm1650, %v1657, %v1659
        %v1661 = vsel %vm1649, %v1639, %v1642
        %v1662 = vsel %vm1652, %v1648, 1326507024
        %v1663 = vsel %vm1651, %v1645, %v1662
        %v1664 = vsel %vm1650, %v1661, %v1663
        %v1665 = vshll.u32 %v1625, 8
        %v1666 = vmul.u32.u64.compose %v1665, %v1664
        %v1667 = vextract.low.u32 %v1666
        %v1668 = vextract.high.u32 %v1666
        %v1669 = vmul.u32.u64.compose %v1665, %v1660
        %v1670 = vextract.low.u32 %v1669
        %v1671 = vextract.high.u32 %v1669
        %v1672 = vmul.u32 %v1665, %v1656
        %v1673 = vadd.s32 %v1668, %v1670
        %vm1674 = vc.u32 %v1668, %v1670
        %v1675 = vadd.s32 %v1671, 1
        %v1676 = vsel %vm1674, %v1675, %v1671
        %v1677 = vadd.s32 %v1672, %v1676
        %v1678 = vadd.s32 %v1677, 536870912
        %v1679 = vshrl.u32 %v1678, 30
        %v1680 = vshll.u32 %v1679, 30
        %v1681 = vsub.s32 %v1677, %v1680
        %vm1682 = vcmp.lt.s32.totalorder %v1681, 0
        %v1683 = vsub.s32 0, %v1681
        %v1684 = vsel %vm1682, %v1683, %v1681
        %v1685 = vclz %v1684
        %v1686 = vsub.s32 %v1685, 2
        %vm1687 = vcmp.gt.s32.totalorder 0, %v1686
        %v1688 = vsel %vm1687, 0, %v1686
        %v1689 = vsub.s32 32, %v1688
        %v1690 = vshll.u32 %v1681, %v1688
        %v1691 = vshrl.u32 %v1673, %v1689
        %v1692 = vor.u32 %v1690, %v1691
        %v1693 = vsub.s32 4294967266, %v1688
        %v1694 = vadd.s32 %v1693, 127
        %v1695 = vshll.u32 %v1694, 23
        %v1696 = vor.u32 4788187, %v1695
        %v1697 = vand.u32 2147483647, %v1696
        %v1699 = vcvt.s32.f32 %v1692
        %v1700 = vmul.f32 %v1699, %v1697
        %v1701 = vxor.u32 %v1700, 2147483648
        %v1702 = vsel %vm1619, %v1701, %v1700
        %v1703 = vsub.s32 4, %v1679
        %v1704 = vsel %vm1619, %v1703, %v1679
        %v1705 = vsel %vm1618, %v1066, %v1702
        %v1706 = vsel %vm1618, 0, %v1704
        %v1707 = vcosq.f32.pop %v1705
        %v1708 = vsinq.f32.pop %v1705
        %vm1709 = vweird.f32 %v1066
        %v1710 = vadd.s32 %v1706, 3
        %v1711 = vand.u32 %v1710, 3
        %vm1712 = vcmp.lt.s32.totalorder %v1711, 2
        %vm1713 = vcmp.eq.s32.totalorder %v1711, 0
        %v1714 = vxor.u32 %v1708, 2147483648
        %v1715 = vsel %vm1713, %v1707, %v1714
        %vm1716 = vcmp.eq.s32.totalorder %v1711, 2
        %v1717 = vxor.u32 %v1707, 2147483648
        %v1718 = vsel %vm1716, %v1717, %v1708
        %v1719 = vsel %vm1712, %v1715, %v1718
        %v1720 = vsel %vm1709, nan, %v1719
        %v1721 = vand.u32 2147483647, %v1067
        %vm1722 = vcmp.le.f32.partialorder %v1721, 0.7853982
        %vm1723 = vcmp.lt.s32.totalorder %v1067, 0
        %v1724 = vand.u32 %v1067, 2139095040
        %v1725 = vshrl.u32 %v1724, 23
        %v1726 = vsub.s32 %v1725, 127
        %v1727 = vand.u32 2147483647, %v1067
        %v1728 = vand.u32 %v1727, 8388607
        %v1729 = vor.u32 %v1728, 8388608
        %v1730 = vsub.s32 0, %v1729
        %v1731 = vadd.s32 %v1726, 1
        %vm1732 = vcmp.gt.s32.totalorder %v1731, 0
        %v1733 = vsel %vm1732, %v1731, 0
        %v1734 = vshrl.u32 %v1733, 5
        %v1735 = vand.u32 %v1733, 31
        %v1736 = vsub.s32 32, %v1735
        %v1737 = vshrl.u32 683565275, %v1736
        %v1738 = vshll.u32 683565275, %v1735
        %v1739 = vshrl.u32 2475754826, %v1736
        %v1740 = vor.u32 %v1738, %v1739
        %v1741 = vshll.u32 2475754826, %v1735
        %v1742 = vshrl.u32 2131351028, %v1736
        %v1743 = vor.u32 %v1741, %v1742
        %v1744 = vshll.u32 2131351028, %v1735
        %v1745 = vshrl.u32 2102212464, %v1736
        %v1746 = vor.u32 %v1744, %v1745
        %v1747 = vshll.u32 2102212464, %v1735
        %v1748 = vshrl.u32 920167782, %v1736
        %v1749 = vor.u32 %v1747, %v1748
        %v1750 = vshll.u32 920167782, %v1735
        %v1751 = vshrl.u32 1326507024, %v1736
        %v1752 = vor.u32 %v1750, %v1751
        %vm1753 = vcmp.lt.s32.totalorder %v1734, 1
        %vm1754 = vcmp.lt.s32.totalorder %v1734, 2
        %vm1755 = vcmp.lt.s32.totalorder %v1734, 3
        %vm1756 = vcmp.lt.s32.totalorder %v1734, 4
        %v1757 = vsel %vm1753, %v1737, %v1740
        %v1758 = vsel %vm1756, %v1746, 2102212464
        %v1759 = vsel %vm1755, %v1743, %v1758
        %v1760 = vsel %vm1754, %v1757, %v1759
        %v1761 = vsel %vm1753, %v1740, %v1743
        %v1762 = vsel %vm1756, %v1749, 920167782
        %v1763 = vsel %vm1755, %v1746, %v1762
        %v1764 = vsel %vm1754, %v1761, %v1763
        %v1765 = vsel %vm1753, %v1743, %v1746
        %v1766 = vsel %vm1756, %v1752, 1326507024
        %v1767 = vsel %vm1755, %v1749, %v1766
        %v1768 = vsel %vm1754, %v1765, %v1767
        %v1769 = vshll.u32 %v1729, 8
        %v1770 = vmul.u32.u64.compose %v1769, %v1768
        %v1771 = vextract.low.u32 %v1770
        %v1772 = vextract.high.u32 %v1770
        %v1773 = vmul.u32.u64.compose %v1769, %v1764
        %v1774 = vextract.low.u32 %v1773
        %v1775 = vextract.high.u32 %v1773
        %v1776 = vmul.u32 %v1769, %v1760
        %v1777 = vadd.s32 %v1772, %v1774
        %vm1778 = vc.u32 %v1772, %v1774
        %v1779 = vadd.s32 %v1775, 1
        %v1780 = vsel %vm1778, %v1779, %v1775
        %v1781 = vadd.s32 %v1776, %v1780
        %v1782 = vadd.s32 %v1781, 536870912
        %v1783 = vshrl.u32 %v1782, 30
        %v1784 = vshll.u32 %v1783, 30
        %v1785 = vsub.s32 %v1781, %v1784
        %vm1786 = vcmp.lt.s32.totalorder %v1785, 0
        %v1787 = vsub.s32 0, %v1785
        %v1788 = vsel %vm1786, %v1787, %v1785
        %v1789 = vclz %v1788
        %v1790 = vsub.s32 %v1789, 2
        %vm1791 = vcmp.gt.s32.totalorder 0, %v1790
        %v1792 = vsel %vm1791, 0, %v1790
        %v1793 = vsub.s32 32, %v1792
        %v1794 = vshll.u32 %v1785, %v1792
        %v1795 = vshrl.u32 %v1777, %v1793
        %v1796 = vor.u32 %v1794, %v1795
        %v1797 = vsub.s32 4294967266, %v1792
        %v1798 = vadd.s32 %v1797, 127
        %v1799 = vshll.u32 %v1798, 23
        %v1800 = vor.u32 4788187, %v1799
        %v1801 = vand.u32 2147483647, %v1800
        %v1803 = vcvt.s32.f32 %v1796
        %v1804 = vmul.f32 %v1803, %v1801
        %v1805 = vxor.u32 %v1804, 2147483648
        %v1806 = vsel %vm1723, %v1805, %v1804
        %v1807 = vsub.s32 4, %v1783
        %v1808 = vsel %vm1723, %v1807, %v1783
        %v1809 = vsel %vm1722, %v1067, %v1806
        %v1810 = vsel %vm1722, 0, %v1808
        %v1811 = vcosq.f32.pop %v1809
        %v1812 = vsinq.f32.pop %v1809
        %vm1813 = vweird.f32 %v1067
        %v1814 = vadd.s32 %v1810, 3
        %v1815 = vand.u32 %v1814, 3
        %vm1816 = vcmp.lt.s32.totalorder %v1815, 2
        %vm1817 = vcmp.eq.s32.totalorder %v1815, 0
        %v1818 = vxor.u32 %v1812, 2147483648
        %v1819 = vsel %vm1817, %v1811, %v1818
        %vm1820 = vcmp.eq.s32.totalorder %v1815, 2
        %v1821 = vxor.u32 %v1811, 2147483648
        %v1822 = vsel %vm1820, %v1821, %v1812
        %v1823 = vsel %vm1816, %v1819, %v1822
        %v1824 = vsel %vm1813, nan, %v1823
        %v1825 = vand.u32 2147483647, %v1068
        %vm1826 = vcmp.le.f32.partialorder %v1825, 0.7853982
        %vm1827 = vcmp.lt.s32.totalorder %v1068, 0
        %v1828 = vand.u32 %v1068, 2139095040
        %v1829 = vshrl.u32 %v1828, 23
        %v1830 = vsub.s32 %v1829, 127
        %v1831 = vand.u32 2147483647, %v1068
        %v1832 = vand.u32 %v1831, 8388607
        %v1833 = vor.u32 %v1832, 8388608
        %v1834 = vsub.s32 0, %v1833
        %v1835 = vadd.s32 %v1830, 1
        %vm1836 = vcmp.gt.s32.totalorder %v1835, 0
        %v1837 = vsel %vm1836, %v1835, 0
        %v1838 = vshrl.u32 %v1837, 5
        %v1839 = vand.u32 %v1837, 31
        %v1840 = vsub.s32 32, %v1839
        %v1841 = vshrl.u32 683565275, %v1840
        %v1842 = vshll.u32 683565275, %v1839
        %v1843 = vshrl.u32 2475754826, %v1840
        %v1844 = vor.u32 %v1842, %v1843
        %v1845 = vshll.u32 2475754826, %v1839
        %v1846 = vshrl.u32 2131351028, %v1840
        %v1847 = vor.u32 %v1845, %v1846
        %v1848 = vshll.u32 2131351028, %v1839
        %v1849 = vshrl.u32 2102212464, %v1840
        %v1850 = vor.u32 %v1848, %v1849
        %v1851 = vshll.u32 2102212464, %v1839
        %v1852 = vshrl.u32 920167782, %v1840
        %v1853 = vor.u32 %v1851, %v1852
        %v1854 = vshll.u32 920167782, %v1839
        %v1855 = vshrl.u32 1326507024, %v1840
        %v1856 = vor.u32 %v1854, %v1855
        %vm1857 = vcmp.lt.s32.totalorder %v1838, 1
        %vm1858 = vcmp.lt.s32.totalorder %v1838, 2
        %vm1859 = vcmp.lt.s32.totalorder %v1838, 3
        %vm1860 = vcmp.lt.s32.totalorder %v1838, 4
        %v1861 = vsel %vm1857, %v1841, %v1844
        %v1862 = vsel %vm1860, %v1850, 2102212464
        %v1863 = vsel %vm1859, %v1847, %v1862
        %v1864 = vsel %vm1858, %v1861, %v1863
        %v1865 = vsel %vm1857, %v1844, %v1847
        %v1866 = vsel %vm1860, %v1853, 920167782
        %v1867 = vsel %vm1859, %v1850, %v1866
        %v1868 = vsel %vm1858, %v1865, %v1867
        %v1869 = vsel %vm1857, %v1847, %v1850
        %v1870 = vsel %vm1860, %v1856, 1326507024
        %v1871 = vsel %vm1859, %v1853, %v1870
        %v1872 = vsel %vm1858, %v1869, %v1871
        %v1873 = vshll.u32 %v1833, 8
        %v1874 = vmul.u32.u64.compose %v1873, %v1872
        %v1875 = vextract.low.u32 %v1874
        %v1876 = vextract.high.u32 %v1874
        %v1877 = vmul.u32.u64.compose %v1873, %v1868
        %v1878 = vextract.low.u32 %v1877
        %v1879 = vextract.high.u32 %v1877
        %v1880 = vmul.u32 %v1873, %v1864
        %v1881 = vadd.s32 %v1876, %v1878
        %vm1882 = vc.u32 %v1876, %v1878
        %v1883 = vadd.s32 %v1879, 1
        %v1884 = vsel %vm1882, %v1883, %v1879
        %v1885 = vadd.s32 %v1880, %v1884
        %v1886 = vadd.s32 %v1885, 536870912
        %v1887 = vshrl.u32 %v1886, 30
        %v1888 = vshll.u32 %v1887, 30
        %v1889 = vsub.s32 %v1885, %v1888
        %vm1890 = vcmp.lt.s32.totalorder %v1889, 0
        %v1891 = vsub.s32 0, %v1889
        %v1892 = vsel %vm1890, %v1891, %v1889
        %v1893 = vclz %v1892
        %v1894 = vsub.s32 %v1893, 2
        %vm1895 = vcmp.gt.s32.totalorder 0, %v1894
        %v1896 = vsel %vm1895, 0, %v1894
        %v1897 = vsub.s32 32, %v1896
        %v1898 = vshll.u32 %v1889, %v1896
        %v1899 = vshrl.u32 %v1881, %v1897
        %v1900 = vor.u32 %v1898, %v1899
        %v1901 = vsub.s32 4294967266, %v1896
        %v1902 = vadd.s32 %v1901, 127
        %v1903 = vshll.u32 %v1902, 23
        %v1904 = vor.u32 4788187, %v1903
        %v1905 = vand.u32 2147483647, %v1904
        %v1907 = vcvt.s32.f32 %v1900
        %v1908 = vmul.f32 %v1907, %v1905
        %v1909 = vxor.u32 %v1908, 2147483648
        %v1910 = vsel %vm1827, %v1909, %v1908
        %v1911 = vsub.s32 4, %v1887
        %v1912 = vsel %vm1827, %v1911, %v1887
        %v1913 = vsel %vm1826, %v1068, %v1910
        %v1914 = vsel %vm1826, 0, %v1912
        %v1915 = vcosq.f32.pop %v1913
        %v1916 = vsinq.f32.pop %v1913
        %vm1917 = vweird.f32 %v1068
        %v1918 = vadd.s32 %v1914, 3
        %v1919 = vand.u32 %v1918, 3
        %vm1920 = vcmp.lt.s32.totalorder %v1919, 2
        %vm1921 = vcmp.eq.s32.totalorder %v1919, 0
        %v1922 = vxor.u32 %v1916, 2147483648
        %v1923 = vsel %vm1921, %v1915, %v1922
        %vm1924 = vcmp.eq.s32.totalorder %v1919, 2
        %v1925 = vxor.u32 %v1915, 2147483648
        %v1926 = vsel %vm1924, %v1925, %v1916
        %v1927 = vsel %vm1920, %v1923, %v1926
        %v1928 = vsel %vm1917, nan, %v1927
        %v1929 = vand.u32 2147483647, %v1069
        %vm1930 = vcmp.le.f32.partialorder %v1929, 0.7853982
        %vm1931 = vcmp.lt.s32.totalorder %v1069, 0
        %v1932 = vand.u32 %v1069, 2139095040
        %v1933 = vshrl.u32 %v1932, 23
        %v1934 = vsub.s32 %v1933, 127
        %v1935 = vand.u32 2147483647, %v1069
        %v1936 = vand.u32 %v1935, 8388607
        %v1937 = vor.u32 %v1936, 8388608
        %v1938 = vsub.s32 0, %v1937
        %v1939 = vadd.s32 %v1934, 1
        %vm1940 = vcmp.gt.s32.totalorder %v1939, 0
        %v1941 = vsel %vm1940, %v1939, 0
        %v1942 = vshrl.u32 %v1941, 5
        %v1943 = vand.u32 %v1941, 31
        %v1944 = vsub.s32 32, %v1943
        %v1945 = vshrl.u32 683565275, %v1944
        %v1946 = vshll.u32 683565275, %v1943
        %v1947 = vshrl.u32 2475754826, %v1944
        %v1948 = vor.u32 %v1946, %v1947
        %v1949 = vshll.u32 2475754826, %v1943
        %v1950 = vshrl.u32 2131351028, %v1944
        %v1951 = vor.u32 %v1949, %v1950
        %v1952 = vshll.u32 2131351028, %v1943
        %v1953 = vshrl.u32 2102212464, %v1944
        %v1954 = vor.u32 %v1952, %v1953
        %v1955 = vshll.u32 2102212464, %v1943
        %v1956 = vshrl.u32 920167782, %v1944
        %v1957 = vor.u32 %v1955, %v1956
        %v1958 = vshll.u32 920167782, %v1943
        %v1959 = vshrl.u32 1326507024, %v1944
        %v1960 = vor.u32 %v1958, %v1959
        %vm1961 = vcmp.lt.s32.totalorder %v1942, 1
        %vm1962 = vcmp.lt.s32.totalorder %v1942, 2
        %vm1963 = vcmp.lt.s32.totalorder %v1942, 3
        %vm1964 = vcmp.lt.s32.totalorder %v1942, 4
        %v1965 = vsel %vm1961, %v1945, %v1948
        %v1966 = vsel %vm1964, %v1954, 2102212464
        %v1967 = vsel %vm1963, %v1951, %v1966
        %v1968 = vsel %vm1962, %v1965, %v1967
        %v1969 = vsel %vm1961, %v1948, %v1951
        %v1970 = vsel %vm1964, %v1957, 920167782
        %v1971 = vsel %vm1963, %v1954, %v1970
        %v1972 = vsel %vm1962, %v1969, %v1971
        %v1973 = vsel %vm1961, %v1951, %v1954
        %v1974 = vsel %vm1964, %v1960, 1326507024
        %v1975 = vsel %vm1963, %v1957, %v1974
        %v1976 = vsel %vm1962, %v1973, %v1975
        %v1977 = vshll.u32 %v1937, 8
        %v1978 = vmul.u32.u64.compose %v1977, %v1976
        %v1979 = vextract.low.u32 %v1978
        %v1980 = vextract.high.u32 %v1978
        %v1981 = vmul.u32.u64.compose %v1977, %v1972
        %v1982 = vextract.low.u32 %v1981
        %v1983 = vextract.high.u32 %v1981
        %v1984 = vmul.u32 %v1977, %v1968
        %v1985 = vadd.s32 %v1980, %v1982
        %vm1986 = vc.u32 %v1980, %v1982
        %v1987 = vadd.s32 %v1983, 1
        %v1988 = vsel %vm1986, %v1987, %v1983
        %v1989 = vadd.s32 %v1984, %v1988
        %v1990 = vadd.s32 %v1989, 536870912
        %v1991 = vshrl.u32 %v1990, 30
        %v1992 = vshll.u32 %v1991, 30
        %v1993 = vsub.s32 %v1989, %v1992
        %vm1994 = vcmp.lt.s32.totalorder %v1993, 0
        %v1995 = vsub.s32 0, %v1993
        %v1996 = vsel %vm1994, %v1995, %v1993
        %v1997 = vclz %v1996
        %v1998 = vsub.s32 %v1997, 2
        %vm1999 = vcmp.gt.s32.totalorder 0, %v1998
        %v2000 = vsel %vm1999, 0, %v1998
        %v2001 = vsub.s32 32, %v2000
        %v2002 = vshll.u32 %v1993, %v2000
        %v2003 = vshrl.u32 %v1985, %v2001
        %v2004 = vor.u32 %v2002, %v2003
        %v2005 = vsub.s32 4294967266, %v2000
        %v2006 = vadd.s32 %v2005, 127
        %v2007 = vshll.u32 %v2006, 23
        %v2008 = vor.u32 4788187, %v2007
        %v2009 = vand.u32 2147483647, %v2008
        %v2011 = vcvt.s32.f32 %v2004
        %v2012 = vmul.f32 %v2011, %v2009
        %v2013 = vxor.u32 %v2012, 2147483648
        %v2014 = vsel %vm1931, %v2013, %v2012
        %v2015 = vsub.s32 4, %v1991
        %v2016 = vsel %vm1931, %v2015, %v1991
        %v2017 = vsel %vm1930, %v1069, %v2014
        %v2018 = vsel %vm1930, 0, %v2016
        %v2019 = vcosq.f32.pop %v2017
        %v2020 = vsinq.f32.pop %v2017
        %vm2021 = vweird.f32 %v1069
        %v2022 = vadd.s32 %v2018, 3
        %v2023 = vand.u32 %v2022, 3
        %vm2024 = vcmp.lt.s32.totalorder %v2023, 2
        %vm2025 = vcmp.eq.s32.totalorder %v2023, 0
        %v2026 = vxor.u32 %v2020, 2147483648
        %v2027 = vsel %vm2025, %v2019, %v2026
        %vm2028 = vcmp.eq.s32.totalorder %v2023, 2
        %v2029 = vxor.u32 %v2019, 2147483648
        %v2030 = vsel %vm2028, %v2029, %v2020
        %v2031 = vsel %vm2024, %v2027, %v2030
        %v2032 = vsel %vm2021, nan, %v2031
        %v2033 = vand.u32 2147483647, %v1070
        %vm2034 = vcmp.le.f32.partialorder %v2033, 0.7853982
        %vm2035 = vcmp.lt.s32.totalorder %v1070, 0
        %v2036 = vand.u32 %v1070, 2139095040
        %v2037 = vshrl.u32 %v2036, 23
        %v2038 = vsub.s32 %v2037, 127
        %v2039 = vand.u32 2147483647, %v1070
        %v2040 = vand.u32 %v2039, 8388607
        %v2041 = vor.u32 %v2040, 8388608
        %v2042 = vsub.s32 0, %v2041
        %v2043 = vadd.s32 %v2038, 1
        %vm2044 = vcmp.gt.s32.totalorder %v2043, 0
        %v2045 = vsel %vm2044, %v2043, 0
        %v2046 = vshrl.u32 %v2045, 5
        %v2047 = vand.u32 %v2045, 31
        %v2048 = vsub.s32 32, %v2047
        %v2049 = vshrl.u32 683565275, %v2048
        %v2050 = vshll.u32 683565275, %v2047
        %v2051 = vshrl.u32 2475754826, %v2048
        %v2052 = vor.u32 %v2050, %v2051
        %v2053 = vshll.u32 2475754826, %v2047
        %v2054 = vshrl.u32 2131351028, %v2048
        %v2055 = vor.u32 %v2053, %v2054
        %v2056 = vshll.u32 2131351028, %v2047
        %v2057 = vshrl.u32 2102212464, %v2048
        %v2058 = vor.u32 %v2056, %v2057
        %v2059 = vshll.u32 2102212464, %v2047
        %v2060 = vshrl.u32 920167782, %v2048
        %v2061 = vor.u32 %v2059, %v2060
        %v2062 = vshll.u32 920167782, %v2047
        %v2063 = vshrl.u32 1326507024, %v2048
        %v2064 = vor.u32 %v2062, %v2063
        %vm2065 = vcmp.lt.s32.totalorder %v2046, 1
        %vm2066 = vcmp.lt.s32.totalorder %v2046, 2
        %vm2067 = vcmp.lt.s32.totalorder %v2046, 3
        %vm2068 = vcmp.lt.s32.totalorder %v2046, 4
        %v2069 = vsel %vm2065, %v2049, %v2052
        %v2070 = vsel %vm2068, %v2058, 2102212464
        %v2071 = vsel %vm2067, %v2055, %v2070
        %v2072 = vsel %vm2066, %v2069, %v2071
        %v2073 = vsel %vm2065, %v2052, %v2055
        %v2074 = vsel %vm2068, %v2061, 920167782
        %v2075 = vsel %vm2067, %v2058, %v2074
        %v2076 = vsel %vm2066, %v2073, %v2075
        %v2077 = vsel %vm2065, %v2055, %v2058
        %v2078 = vsel %vm2068, %v2064, 1326507024
        %v2079 = vsel %vm2067, %v2061, %v2078
        %v2080 = vsel %vm2066, %v2077, %v2079
        %v2081 = vshll.u32 %v2041, 8
        %v2082 = vmul.u32.u64.compose %v2081, %v2080
        %v2083 = vextract.low.u32 %v2082
        %v2084 = vextract.high.u32 %v2082
        %v2085 = vmul.u32.u64.compose %v2081, %v2076
        %v2086 = vextract.low.u32 %v2085
        %v2087 = vextract.high.u32 %v2085
        %v2088 = vmul.u32 %v2081, %v2072
        %v2089 = vadd.s32 %v2084, %v2086
        %vm2090 = vc.u32 %v2084, %v2086
        %v2091 = vadd.s32 %v2087, 1
        %v2092 = vsel %vm2090, %v2091, %v2087
        %v2093 = vadd.s32 %v2088, %v2092
        %v2094 = vadd.s32 %v2093, 536870912
        %v2095 = vshrl.u32 %v2094, 30
        %v2096 = vshll.u32 %v2095, 30
        %v2097 = vsub.s32 %v2093, %v2096
        %vm2098 = vcmp.lt.s32.totalorder %v2097, 0
        %v2099 = vsub.s32 0, %v2097
        %v2100 = vsel %vm2098, %v2099, %v2097
        %v2101 = vclz %v2100
        %v2102 = vsub.s32 %v2101, 2
        %vm2103 = vcmp.gt.s32.totalorder 0, %v2102
        %v2104 = vsel %vm2103, 0, %v2102
        %v2105 = vsub.s32 32, %v2104
        %v2106 = vshll.u32 %v2097, %v2104
        %v2107 = vshrl.u32 %v2089, %v2105
        %v2108 = vor.u32 %v2106, %v2107
        %v2109 = vsub.s32 4294967266, %v2104
        %v2110 = vadd.s32 %v2109, 127
        %v2111 = vshll.u32 %v2110, 23
        %v2112 = vor.u32 4788187, %v2111
        %v2113 = vand.u32 2147483647, %v2112
        %v2115 = vcvt.s32.f32 %v2108
        %v2116 = vmul.f32 %v2115, %v2113
        %v2117 = vxor.u32 %v2116, 2147483648
        %v2118 = vsel %vm2035, %v2117, %v2116
        %v2119 = vsub.s32 4, %v2095
        %v2120 = vsel %vm2035, %v2119, %v2095
        %v2121 = vsel %vm2034, %v1070, %v2118
        %v2122 = vsel %vm2034, 0, %v2120
        %v2123 = vcosq.f32.pop %v2121
        %v2124 = vsinq.f32.pop %v2121
        %vm2125 = vweird.f32 %v1070
        %v2126 = vadd.s32 %v2122, 3
        %v2127 = vand.u32 %v2126, 3
        %vm2128 = vcmp.lt.s32.totalorder %v2127, 2
        %vm2129 = vcmp.eq.s32.totalorder %v2127, 0
        %v2130 = vxor.u32 %v2124, 2147483648
        %v2131 = vsel %vm2129, %v2123, %v2130
        %vm2132 = vcmp.eq.s32.totalorder %v2127, 2
        %v2133 = vxor.u32 %v2123, 2147483648
        %v2134 = vsel %vm2132, %v2133, %v2124
        %v2135 = vsel %vm2128, %v2131, %v2134
        %v2136 = vsel %vm2125, nan, %v2135
        %v2137 = vand.u32 2147483647, %v1071
        %vm2138 = vcmp.le.f32.partialorder %v2137, 0.7853982
        %vm2139 = vcmp.lt.s32.totalorder %v1071, 0
        %v2140 = vand.u32 %v1071, 2139095040
        %v2141 = vshrl.u32 %v2140, 23
        %v2142 = vsub.s32 %v2141, 127
        %v2143 = vand.u32 2147483647, %v1071
        %v2144 = vand.u32 %v2143, 8388607
        %v2145 = vor.u32 %v2144, 8388608
        %v2146 = vsub.s32 0, %v2145
        %v2147 = vadd.s32 %v2142, 1
        %vm2148 = vcmp.gt.s32.totalorder %v2147, 0
        %v2149 = vsel %vm2148, %v2147, 0
        %v2150 = vshrl.u32 %v2149, 5
        %v2151 = vand.u32 %v2149, 31
        %v2152 = vsub.s32 32, %v2151
        %v2153 = vshrl.u32 683565275, %v2152
        %v2154 = vshll.u32 683565275, %v2151
        %v2155 = vshrl.u32 2475754826, %v2152
        %v2156 = vor.u32 %v2154, %v2155
        %v2157 = vshll.u32 2475754826, %v2151
        %v2158 = vshrl.u32 2131351028, %v2152
        %v2159 = vor.u32 %v2157, %v2158
        %v2160 = vshll.u32 2131351028, %v2151
        %v2161 = vshrl.u32 2102212464, %v2152
        %v2162 = vor.u32 %v2160, %v2161
        %v2163 = vshll.u32 2102212464, %v2151
        %v2164 = vshrl.u32 920167782, %v2152
        %v2165 = vor.u32 %v2163, %v2164
        %v2166 = vshll.u32 920167782, %v2151
        %v2167 = vshrl.u32 1326507024, %v2152
        %v2168 = vor.u32 %v2166, %v2167
        %vm2169 = vcmp.lt.s32.totalorder %v2150, 1
        %vm2170 = vcmp.lt.s32.totalorder %v2150, 2
        %vm2171 = vcmp.lt.s32.totalorder %v2150, 3
        %vm2172 = vcmp.lt.s32.totalorder %v2150, 4
        %v2173 = vsel %vm2169, %v2153, %v2156
        %v2174 = vsel %vm2172, %v2162, 2102212464
        %v2175 = vsel %vm2171, %v2159, %v2174
        %v2176 = vsel %vm2170, %v2173, %v2175
        %v2177 = vsel %vm2169, %v2156, %v2159
        %v2178 = vsel %vm2172, %v2165, 920167782
        %v2179 = vsel %vm2171, %v2162, %v2178
        %v2180 = vsel %vm2170, %v2177, %v2179
        %v2181 = vsel %vm2169, %v2159, %v2162
        %v2182 = vsel %vm2172, %v2168, 1326507024
        %v2183 = vsel %vm2171, %v2165, %v2182
        %v2184 = vsel %vm2170, %v2181, %v2183
        %v2185 = vshll.u32 %v2145, 8
        %v2186 = vmul.u32.u64.compose %v2185, %v2184
        %v2187 = vextract.low.u32 %v2186
        %v2188 = vextract.high.u32 %v2186
        %v2189 = vmul.u32.u64.compose %v2185, %v2180
        %v2190 = vextract.low.u32 %v2189
        %v2191 = vextract.high.u32 %v2189
        %v2192 = vmul.u32 %v2185, %v2176
        %v2193 = vadd.s32 %v2188, %v2190
        %vm2194 = vc.u32 %v2188, %v2190
        %v2195 = vadd.s32 %v2191, 1
        %v2196 = vsel %vm2194, %v2195, %v2191
        %v2197 = vadd.s32 %v2192, %v2196
        %v2198 = vadd.s32 %v2197, 536870912
        %v2199 = vshrl.u32 %v2198, 30
        %v2200 = vshll.u32 %v2199, 30
        %v2201 = vsub.s32 %v2197, %v2200
        %vm2202 = vcmp.lt.s32.totalorder %v2201, 0
        %v2203 = vsub.s32 0, %v2201
        %v2204 = vsel %vm2202, %v2203, %v2201
        %v2205 = vclz %v2204
        %v2206 = vsub.s32 %v2205, 2
        %vm2207 = vcmp.gt.s32.totalorder 0, %v2206
        %v2208 = vsel %vm2207, 0, %v2206
        %v2209 = vsub.s32 32, %v2208
        %v2210 = vshll.u32 %v2201, %v2208
        %v2211 = vshrl.u32 %v2193, %v2209
        %v2212 = vor.u32 %v2210, %v2211
        %v2213 = vsub.s32 4294967266, %v2208
        %v2214 = vadd.s32 %v2213, 127
        %v2215 = vshll.u32 %v2214, 23
        %v2216 = vor.u32 4788187, %v2215
        %v2217 = vand.u32 2147483647, %v2216
        %v2219 = vcvt.s32.f32 %v2212
        %v2220 = vmul.f32 %v2219, %v2217
        %v2221 = vxor.u32 %v2220, 2147483648
        %v2222 = vsel %vm2139, %v2221, %v2220
        %v2223 = vsub.s32 4, %v2199
        %v2224 = vsel %vm2139, %v2223, %v2199
        %v2225 = vsel %vm2138, %v1071, %v2222
        %v2226 = vsel %vm2138, 0, %v2224
        %v2227 = vcosq.f32.pop %v2225
        %v2228 = vsinq.f32.pop %v2225
        %vm2229 = vweird.f32 %v1071
        %v2230 = vadd.s32 %v2226, 3
        %v2231 = vand.u32 %v2230, 3
        %vm2232 = vcmp.lt.s32.totalorder %v2231, 2
        %vm2233 = vcmp.eq.s32.totalorder %v2231, 0
        %v2234 = vxor.u32 %v2228, 2147483648
        %v2235 = vsel %vm2233, %v2227, %v2234
        %vm2236 = vcmp.eq.s32.totalorder %v2231, 2
        %v2237 = vxor.u32 %v2227, 2147483648
        %v2238 = vsel %vm2236, %v2237, %v2228
        %v2239 = vsel %vm2232, %v2235, %v2238
        %v2240 = vsel %vm2229, nan, %v2239
        %v2241 = vand.u32 2147483647, %v1072
        %vm2242 = vcmp.le.f32.partialorder %v2241, 0.7853982
        %vm2243 = vcmp.lt.s32.totalorder %v1072, 0
        %v2244 = vand.u32 %v1072, 2139095040
        %v2245 = vshrl.u32 %v2244, 23
        %v2246 = vsub.s32 %v2245, 127
        %v2247 = vand.u32 2147483647, %v1072
        %v2248 = vand.u32 %v2247, 8388607
        %v2249 = vor.u32 %v2248, 8388608
        %v2250 = vsub.s32 0, %v2249
        %v2251 = vadd.s32 %v2246, 1
        %vm2252 = vcmp.gt.s32.totalorder %v2251, 0
        %v2253 = vsel %vm2252, %v2251, 0
        %v2254 = vshrl.u32 %v2253, 5
        %v2255 = vand.u32 %v2253, 31
        %v2256 = vsub.s32 32, %v2255
        %v2257 = vshrl.u32 683565275, %v2256
        %v2258 = vshll.u32 683565275, %v2255
        %v2259 = vshrl.u32 2475754826, %v2256
        %v2260 = vor.u32 %v2258, %v2259
        %v2261 = vshll.u32 2475754826, %v2255
        %v2262 = vshrl.u32 2131351028, %v2256
        %v2263 = vor.u32 %v2261, %v2262
        %v2264 = vshll.u32 2131351028, %v2255
        %v2265 = vshrl.u32 2102212464, %v2256
        %v2266 = vor.u32 %v2264, %v2265
        %v2267 = vshll.u32 2102212464, %v2255
        %v2268 = vshrl.u32 920167782, %v2256
        %v2269 = vor.u32 %v2267, %v2268
        %v2270 = vshll.u32 920167782, %v2255
        %v2271 = vshrl.u32 1326507024, %v2256
        %v2272 = vor.u32 %v2270, %v2271
        %vm2273 = vcmp.lt.s32.totalorder %v2254, 1
        %vm2274 = vcmp.lt.s32.totalorder %v2254, 2
        %vm2275 = vcmp.lt.s32.totalorder %v2254, 3
        %vm2276 = vcmp.lt.s32.totalorder %v2254, 4
        %v2277 = vsel %vm2273, %v2257, %v2260
        %v2278 = vsel %vm2276, %v2266, 2102212464
        %v2279 = vsel %vm2275, %v2263, %v2278
        %v2280 = vsel %vm2274, %v2277, %v2279
        %v2281 = vsel %vm2273, %v2260, %v2263
        %v2282 = vsel %vm2276, %v2269, 920167782
        %v2283 = vsel %vm2275, %v2266, %v2282
        %v2284 = vsel %vm2274, %v2281, %v2283
        %v2285 = vsel %vm2273, %v2263, %v2266
        %v2286 = vsel %vm2276, %v2272, 1326507024
        %v2287 = vsel %vm2275, %v2269, %v2286
        %v2288 = vsel %vm2274, %v2285, %v2287
        %v2289 = vshll.u32 %v2249, 8
        %v2290 = vmul.u32.u64.compose %v2289, %v2288
        %v2291 = vextract.low.u32 %v2290
        %v2292 = vextract.high.u32 %v2290
        %v2293 = vmul.u32.u64.compose %v2289, %v2284
        %v2294 = vextract.low.u32 %v2293
        %v2295 = vextract.high.u32 %v2293
        %v2296 = vmul.u32 %v2289, %v2280
        %v2297 = vadd.s32 %v2292, %v2294
        %vm2298 = vc.u32 %v2292, %v2294
        %v2299 = vadd.s32 %v2295, 1
        %v2300 = vsel %vm2298, %v2299, %v2295
        %v2301 = vadd.s32 %v2296, %v2300
        %v2302 = vadd.s32 %v2301, 536870912
        %v2303 = vshrl.u32 %v2302, 30
        %v2304 = vshll.u32 %v2303, 30
        %v2305 = vsub.s32 %v2301, %v2304
        %vm2306 = vcmp.lt.s32.totalorder %v2305, 0
        %v2307 = vsub.s32 0, %v2305
        %v2308 = vsel %vm2306, %v2307, %v2305
        %v2309 = vclz %v2308
        %v2310 = vsub.s32 %v2309, 2
        %vm2311 = vcmp.gt.s32.totalorder 0, %v2310
        %v2312 = vsel %vm2311, 0, %v2310
        %v2313 = vsub.s32 32, %v2312
        %v2314 = vshll.u32 %v2305, %v2312
        %v2315 = vshrl.u32 %v2297, %v2313
        %v2316 = vor.u32 %v2314, %v2315
        %v2317 = vsub.s32 4294967266, %v2312
        %v2318 = vadd.s32 %v2317, 127
        %v2319 = vshll.u32 %v2318, 23
        %v2320 = vor.u32 4788187, %v2319
        %v2321 = vand.u32 2147483647, %v2320
        %v2323 = vcvt.s32.f32 %v2316
        %v2324 = vmul.f32 %v2323, %v2321
        %v2325 = vxor.u32 %v2324, 2147483648
        %v2326 = vsel %vm2243, %v2325, %v2324
        %v2327 = vsub.s32 4, %v2303
        %v2328 = vsel %vm2243, %v2327, %v2303
        %v2329 = vsel %vm2242, %v1072, %v2326
        %v2330 = vsel %vm2242, 0, %v2328
        %v2331 = vcosq.f32.pop %v2329
        %v2332 = vsinq.f32.pop %v2329
        %vm2333 = vweird.f32 %v1072
        %v2334 = vadd.s32 %v2330, 3
        %v2335 = vand.u32 %v2334, 3
        %vm2336 = vcmp.lt.s32.totalorder %v2335, 2
        %vm2337 = vcmp.eq.s32.totalorder %v2335, 0
        %v2338 = vxor.u32 %v2332, 2147483648
        %v2339 = vsel %vm2337, %v2331, %v2338
        %vm2340 = vcmp.eq.s32.totalorder %v2335, 2
        %v2341 = vxor.u32 %v2331, 2147483648
        %v2342 = vsel %vm2340, %v2341, %v2332
        %v2343 = vsel %vm2336, %v2339, %v2342
        %v2344 = vsel %vm2333, nan, %v2343
        %v2345 = vand.u32 2147483647, %v1073
        %vm2346 = vcmp.le.f32.partialorder %v2345, 0.7853982
        %vm2347 = vcmp.lt.s32.totalorder %v1073, 0
        %v2348 = vand.u32 %v1073, 2139095040
        %v2349 = vshrl.u32 %v2348, 23
        %v2350 = vsub.s32 %v2349, 127
        %v2351 = vand.u32 2147483647, %v1073
        %v2352 = vand.u32 %v2351, 8388607
        %v2353 = vor.u32 %v2352, 8388608
        %v2354 = vsub.s32 0, %v2353
        %v2355 = vadd.s32 %v2350, 1
        %vm2356 = vcmp.gt.s32.totalorder %v2355, 0
        %v2357 = vsel %vm2356, %v2355, 0
        %v2358 = vshrl.u32 %v2357, 5
        %v2359 = vand.u32 %v2357, 31
        %v2360 = vsub.s32 32, %v2359
        %v2361 = vshrl.u32 683565275, %v2360
        %v2362 = vshll.u32 683565275, %v2359
        %v2363 = vshrl.u32 2475754826, %v2360
        %v2364 = vor.u32 %v2362, %v2363
        %v2365 = vshll.u32 2475754826, %v2359
        %v2366 = vshrl.u32 2131351028, %v2360
        %v2367 = vor.u32 %v2365, %v2366
        %v2368 = vshll.u32 2131351028, %v2359
        %v2369 = vshrl.u32 2102212464, %v2360
        %v2370 = vor.u32 %v2368, %v2369
        %v2371 = vshll.u32 2102212464, %v2359
        %v2372 = vshrl.u32 920167782, %v2360
        %v2373 = vor.u32 %v2371, %v2372
        %v2374 = vshll.u32 920167782, %v2359
        %v2375 = vshrl.u32 1326507024, %v2360
        %v2376 = vor.u32 %v2374, %v2375
        %vm2377 = vcmp.lt.s32.totalorder %v2358, 1
        %vm2378 = vcmp.lt.s32.totalorder %v2358, 2
        %vm2379 = vcmp.lt.s32.totalorder %v2358, 3
        %vm2380 = vcmp.lt.s32.totalorder %v2358, 4
        %v2381 = vsel %vm2377, %v2361, %v2364
        %v2382 = vsel %vm2380, %v2370, 2102212464
        %v2383 = vsel %vm2379, %v2367, %v2382
        %v2384 = vsel %vm2378, %v2381, %v2383
        %v2385 = vsel %vm2377, %v2364, %v2367
        %v2386 = vsel %vm2380, %v2373, 920167782
        %v2387 = vsel %vm2379, %v2370, %v2386
        %v2388 = vsel %vm2378, %v2385, %v2387
        %v2389 = vsel %vm2377, %v2367, %v2370
        %v2390 = vsel %vm2380, %v2376, 1326507024
        %v2391 = vsel %vm2379, %v2373, %v2390
        %v2392 = vsel %vm2378, %v2389, %v2391
        %v2393 = vshll.u32 %v2353, 8
        %v2394 = vmul.u32.u64.compose %v2393, %v2392
        %v2395 = vextract.low.u32 %v2394
        %v2396 = vextract.high.u32 %v2394
        %v2397 = vmul.u32.u64.compose %v2393, %v2388
        %v2398 = vextract.low.u32 %v2397
        %v2399 = vextract.high.u32 %v2397
        %v2400 = vmul.u32 %v2393, %v2384
        %v2401 = vadd.s32 %v2396, %v2398
        %vm2402 = vc.u32 %v2396, %v2398
        %v2403 = vadd.s32 %v2399, 1
        %v2404 = vsel %vm2402, %v2403, %v2399
        %v2405 = vadd.s32 %v2400, %v2404
        %v2406 = vadd.s32 %v2405, 536870912
        %v2407 = vshrl.u32 %v2406, 30
        %v2408 = vshll.u32 %v2407, 30
        %v2409 = vsub.s32 %v2405, %v2408
        %vm2410 = vcmp.lt.s32.totalorder %v2409, 0
        %v2411 = vsub.s32 0, %v2409
        %v2412 = vsel %vm2410, %v2411, %v2409
        %v2413 = vclz %v2412
        %v2414 = vsub.s32 %v2413, 2
        %vm2415 = vcmp.gt.s32.totalorder 0, %v2414
        %v2416 = vsel %vm2415, 0, %v2414
        %v2417 = vsub.s32 32, %v2416
        %v2418 = vshll.u32 %v2409, %v2416
        %v2419 = vshrl.u32 %v2401, %v2417
        %v2420 = vor.u32 %v2418, %v2419
        %v2421 = vsub.s32 4294967266, %v2416
        %v2422 = vadd.s32 %v2421, 127
        %v2423 = vshll.u32 %v2422, 23
        %v2424 = vor.u32 4788187, %v2423
        %v2425 = vand.u32 2147483647, %v2424
        %v2427 = vcvt.s32.f32 %v2420
        %v2428 = vmul.f32 %v2427, %v2425
        %v2429 = vxor.u32 %v2428, 2147483648
        %v2430 = vsel %vm2347, %v2429, %v2428
        %v2431 = vsub.s32 4, %v2407
        %v2432 = vsel %vm2347, %v2431, %v2407
        %v2433 = vsel %vm2346, %v1073, %v2430
        %v2434 = vsel %vm2346, 0, %v2432
        %v2435 = vcosq.f32.pop %v2433
        %v2436 = vsinq.f32.pop %v2433
        %vm2437 = vweird.f32 %v1073
        %v2438 = vadd.s32 %v2434, 3
        %v2439 = vand.u32 %v2438, 3
        %vm2440 = vcmp.lt.s32.totalorder %v2439, 2
        %vm2441 = vcmp.eq.s32.totalorder %v2439, 0
        %v2442 = vxor.u32 %v2436, 2147483648
        %v2443 = vsel %vm2441, %v2435, %v2442
        %vm2444 = vcmp.eq.s32.totalorder %v2439, 2
        %v2445 = vxor.u32 %v2435, 2147483648
        %v2446 = vsel %vm2444, %v2445, %v2436
        %v2447 = vsel %vm2440, %v2443, %v2446
        %v2448 = vsel %vm2437, nan, %v2447
        %v2449 = vand.u32 2147483647, %v1074
        %vm2450 = vcmp.le.f32.partialorder %v2449, 0.7853982
        %vm2451 = vcmp.lt.s32.totalorder %v1074, 0
        %v2452 = vand.u32 %v1074, 2139095040
        %v2453 = vshrl.u32 %v2452, 23
        %v2454 = vsub.s32 %v2453, 127
        %v2455 = vand.u32 2147483647, %v1074
        %v2456 = vand.u32 %v2455, 8388607
        %v2457 = vor.u32 %v2456, 8388608
        %v2458 = vsub.s32 0, %v2457
        %v2459 = vadd.s32 %v2454, 1
        %vm2460 = vcmp.gt.s32.totalorder %v2459, 0
        %v2461 = vsel %vm2460, %v2459, 0
        %v2462 = vshrl.u32 %v2461, 5
        %v2463 = vand.u32 %v2461, 31
        %v2464 = vsub.s32 32, %v2463
        %v2465 = vshrl.u32 683565275, %v2464
        %v2466 = vshll.u32 683565275, %v2463
        %v2467 = vshrl.u32 2475754826, %v2464
        %v2468 = vor.u32 %v2466, %v2467
        %v2469 = vshll.u32 2475754826, %v2463
        %v2470 = vshrl.u32 2131351028, %v2464
        %v2471 = vor.u32 %v2469, %v2470
        %v2472 = vshll.u32 2131351028, %v2463
        %v2473 = vshrl.u32 2102212464, %v2464
        %v2474 = vor.u32 %v2472, %v2473
        %v2475 = vshll.u32 2102212464, %v2463
        %v2476 = vshrl.u32 920167782, %v2464
        %v2477 = vor.u32 %v2475, %v2476
        %v2478 = vshll.u32 920167782, %v2463
        %v2479 = vshrl.u32 1326507024, %v2464
        %v2480 = vor.u32 %v2478, %v2479
        %vm2481 = vcmp.lt.s32.totalorder %v2462, 1
        %vm2482 = vcmp.lt.s32.totalorder %v2462, 2
        %vm2483 = vcmp.lt.s32.totalorder %v2462, 3
        %vm2484 = vcmp.lt.s32.totalorder %v2462, 4
        %v2485 = vsel %vm2481, %v2465, %v2468
        %v2486 = vsel %vm2484, %v2474, 2102212464
        %v2487 = vsel %vm2483, %v2471, %v2486
        %v2488 = vsel %vm2482, %v2485, %v2487
        %v2489 = vsel %vm2481, %v2468, %v2471
        %v2490 = vsel %vm2484, %v2477, 920167782
        %v2491 = vsel %vm2483, %v2474, %v2490
        %v2492 = vsel %vm2482, %v2489, %v2491
        %v2493 = vsel %vm2481, %v2471, %v2474
        %v2494 = vsel %vm2484, %v2480, 1326507024
        %v2495 = vsel %vm2483, %v2477, %v2494
        %v2496 = vsel %vm2482, %v2493, %v2495
        %v2497 = vshll.u32 %v2457, 8
        %v2498 = vmul.u32.u64.compose %v2497, %v2496
        %v2499 = vextract.low.u32 %v2498
        %v2500 = vextract.high.u32 %v2498
        %v2501 = vmul.u32.u64.compose %v2497, %v2492
        %v2502 = vextract.low.u32 %v2501
        %v2503 = vextract.high.u32 %v2501
        %v2504 = vmul.u32 %v2497, %v2488
        %v2505 = vadd.s32 %v2500, %v2502
        %vm2506 = vc.u32 %v2500, %v2502
        %v2507 = vadd.s32 %v2503, 1
        %v2508 = vsel %vm2506, %v2507, %v2503
        %v2509 = vadd.s32 %v2504, %v2508
        %v2510 = vadd.s32 %v2509, 536870912
        %v2511 = vshrl.u32 %v2510, 30
        %v2512 = vshll.u32 %v2511, 30
        %v2513 = vsub.s32 %v2509, %v2512
        %vm2514 = vcmp.lt.s32.totalorder %v2513, 0
        %v2515 = vsub.s32 0, %v2513
        %v2516 = vsel %vm2514, %v2515, %v2513
        %v2517 = vclz %v2516
        %v2518 = vsub.s32 %v2517, 2
        %vm2519 = vcmp.gt.s32.totalorder 0, %v2518
        %v2520 = vsel %vm2519, 0, %v2518
        %v2521 = vsub.s32 32, %v2520
        %v2522 = vshll.u32 %v2513, %v2520
        %v2523 = vshrl.u32 %v2505, %v2521
        %v2524 = vor.u32 %v2522, %v2523
        %v2525 = vsub.s32 4294967266, %v2520
        %v2526 = vadd.s32 %v2525, 127
        %v2527 = vshll.u32 %v2526, 23
        %v2528 = vor.u32 4788187, %v2527
        %v2529 = vand.u32 2147483647, %v2528
        %v2531 = vcvt.s32.f32 %v2524
        %v2532 = vmul.f32 %v2531, %v2529
        %v2533 = vxor.u32 %v2532, 2147483648
        %v2534 = vsel %vm2451, %v2533, %v2532
        %v2535 = vsub.s32 4, %v2511
        %v2536 = vsel %vm2451, %v2535, %v2511
        %v2537 = vsel %vm2450, %v1074, %v2534
        %v2538 = vsel %vm2450, 0, %v2536
        %v2539 = vcosq.f32.pop %v2537
        %v2540 = vsinq.f32.pop %v2537
        %vm2541 = vweird.f32 %v1074
        %v2542 = vadd.s32 %v2538, 3
        %v2543 = vand.u32 %v2542, 3
        %vm2544 = vcmp.lt.s32.totalorder %v2543, 2
        %vm2545 = vcmp.eq.s32.totalorder %v2543, 0
        %v2546 = vxor.u32 %v2540, 2147483648
        %v2547 = vsel %vm2545, %v2539, %v2546
        %vm2548 = vcmp.eq.s32.totalorder %v2543, 2
        %v2549 = vxor.u32 %v2539, 2147483648
        %v2550 = vsel %vm2548, %v2549, %v2540
        %v2551 = vsel %vm2544, %v2547, %v2550
        %v2552 = vsel %vm2541, nan, %v2551
        %v2553 = vand.u32 2147483647, %v1075
        %vm2554 = vcmp.le.f32.partialorder %v2553, 0.7853982
        %vm2555 = vcmp.lt.s32.totalorder %v1075, 0
        %v2556 = vand.u32 %v1075, 2139095040
        %v2557 = vshrl.u32 %v2556, 23
        %v2558 = vsub.s32 %v2557, 127
        %v2559 = vand.u32 2147483647, %v1075
        %v2560 = vand.u32 %v2559, 8388607
        %v2561 = vor.u32 %v2560, 8388608
        %v2562 = vsub.s32 0, %v2561
        %v2563 = vadd.s32 %v2558, 1
        %vm2564 = vcmp.gt.s32.totalorder %v2563, 0
        %v2565 = vsel %vm2564, %v2563, 0
        %v2566 = vshrl.u32 %v2565, 5
        %v2567 = vand.u32 %v2565, 31
        %v2568 = vsub.s32 32, %v2567
        %v2569 = vshrl.u32 683565275, %v2568
        %v2570 = vshll.u32 683565275, %v2567
        %v2571 = vshrl.u32 2475754826, %v2568
        %v2572 = vor.u32 %v2570, %v2571
        %v2573 = vshll.u32 2475754826, %v2567
        %v2574 = vshrl.u32 2131351028, %v2568
        %v2575 = vor.u32 %v2573, %v2574
        %v2576 = vshll.u32 2131351028, %v2567
        %v2577 = vshrl.u32 2102212464, %v2568
        %v2578 = vor.u32 %v2576, %v2577
        %v2579 = vshll.u32 2102212464, %v2567
        %v2580 = vshrl.u32 920167782, %v2568
        %v2581 = vor.u32 %v2579, %v2580
        %v2582 = vshll.u32 920167782, %v2567
        %v2583 = vshrl.u32 1326507024, %v2568
        %v2584 = vor.u32 %v2582, %v2583
        %vm2585 = vcmp.lt.s32.totalorder %v2566, 1
        %vm2586 = vcmp.lt.s32.totalorder %v2566, 2
        %vm2587 = vcmp.lt.s32.totalorder %v2566, 3
        %vm2588 = vcmp.lt.s32.totalorder %v2566, 4
        %v2589 = vsel %vm2585, %v2569, %v2572
        %v2590 = vsel %vm2588, %v2578, 2102212464
        %v2591 = vsel %vm2587, %v2575, %v2590
        %v2592 = vsel %vm2586, %v2589, %v2591
        %v2593 = vsel %vm2585, %v2572, %v2575
        %v2594 = vsel %vm2588, %v2581, 920167782
        %v2595 = vsel %vm2587, %v2578, %v2594
        %v2596 = vsel %vm2586, %v2593, %v2595
        %v2597 = vsel %vm2585, %v2575, %v2578
        %v2598 = vsel %vm2588, %v2584, 1326507024
        %v2599 = vsel %vm2587, %v2581, %v2598
        %v2600 = vsel %vm2586, %v2597, %v2599
        %v2601 = vshll.u32 %v2561, 8
        %v2602 = vmul.u32.u64.compose %v2601, %v2600
        %v2603 = vextract.low.u32 %v2602
        %v2604 = vextract.high.u32 %v2602
        %v2605 = vmul.u32.u64.compose %v2601, %v2596
        %v2606 = vextract.low.u32 %v2605
        %v2607 = vextract.high.u32 %v2605
        %v2608 = vmul.u32 %v2601, %v2592
        %v2609 = vadd.s32 %v2604, %v2606
        %vm2610 = vc.u32 %v2604, %v2606
        %v2611 = vadd.s32 %v2607, 1
        %v2612 = vsel %vm2610, %v2611, %v2607
        %v2613 = vadd.s32 %v2608, %v2612
        %v2614 = vadd.s32 %v2613, 536870912
        %v2615 = vshrl.u32 %v2614, 30
        %v2616 = vshll.u32 %v2615, 30
        %v2617 = vsub.s32 %v2613, %v2616
        %vm2618 = vcmp.lt.s32.totalorder %v2617, 0
        %v2619 = vsub.s32 0, %v2617
        %v2620 = vsel %vm2618, %v2619, %v2617
        %v2621 = vclz %v2620
        %v2622 = vsub.s32 %v2621, 2
        %vm2623 = vcmp.gt.s32.totalorder 0, %v2622
        %v2624 = vsel %vm2623, 0, %v2622
        %v2625 = vsub.s32 32, %v2624
        %v2626 = vshll.u32 %v2617, %v2624
        %v2627 = vshrl.u32 %v2609, %v2625
        %v2628 = vor.u32 %v2626, %v2627
        %v2629 = vsub.s32 4294967266, %v2624
        %v2630 = vadd.s32 %v2629, 127
        %v2631 = vshll.u32 %v2630, 23
        %v2632 = vor.u32 4788187, %v2631
        %v2633 = vand.u32 2147483647, %v2632
        %v2635 = vcvt.s32.f32 %v2628
        %v2636 = vmul.f32 %v2635, %v2633
        %v2637 = vxor.u32 %v2636, 2147483648
        %v2638 = vsel %vm2555, %v2637, %v2636
        %v2639 = vsub.s32 4, %v2615
        %v2640 = vsel %vm2555, %v2639, %v2615
        %v2641 = vsel %vm2554, %v1075, %v2638
        %v2642 = vsel %vm2554, 0, %v2640
        %v2643 = vcosq.f32.pop %v2641
        %v2644 = vsinq.f32.pop %v2641
        %vm2645 = vweird.f32 %v1075
        %v2646 = vadd.s32 %v2642, 3
        %v2647 = vand.u32 %v2646, 3
        %vm2648 = vcmp.lt.s32.totalorder %v2647, 2
        %vm2649 = vcmp.eq.s32.totalorder %v2647, 0
        %v2650 = vxor.u32 %v2644, 2147483648
        %v2651 = vsel %vm2649, %v2643, %v2650
        %vm2652 = vcmp.eq.s32.totalorder %v2647, 2
        %v2653 = vxor.u32 %v2643, 2147483648
        %v2654 = vsel %vm2652, %v2653, %v2644
        %v2655 = vsel %vm2648, %v2651, %v2654
        %v2656 = vsel %vm2645, nan, %v2655
        %v2657 = vand.u32 2147483647, %v1076
        %vm2658 = vcmp.le.f32.partialorder %v2657, 0.7853982
        %vm2659 = vcmp.lt.s32.totalorder %v1076, 0
        %v2660 = vand.u32 %v1076, 2139095040
        %v2661 = vshrl.u32 %v2660, 23
        %v2662 = vsub.s32 %v2661, 127
        %v2663 = vand.u32 2147483647, %v1076
        %v2664 = vand.u32 %v2663, 8388607
        %v2665 = vor.u32 %v2664, 8388608
        %v2666 = vsub.s32 0, %v2665
        %v2667 = vadd.s32 %v2662, 1
        %vm2668 = vcmp.gt.s32.totalorder %v2667, 0
        %v2669 = vsel %vm2668, %v2667, 0
        %v2670 = vshrl.u32 %v2669, 5
        %v2671 = vand.u32 %v2669, 31
        %v2672 = vsub.s32 32, %v2671
        %v2673 = vshrl.u32 683565275, %v2672
        %v2674 = vshll.u32 683565275, %v2671
        %v2675 = vshrl.u32 2475754826, %v2672
        %v2676 = vor.u32 %v2674, %v2675
        %v2677 = vshll.u32 2475754826, %v2671
        %v2678 = vshrl.u32 2131351028, %v2672
        %v2679 = vor.u32 %v2677, %v2678
        %v2680 = vshll.u32 2131351028, %v2671
        %v2681 = vshrl.u32 2102212464, %v2672
        %v2682 = vor.u32 %v2680, %v2681
        %v2683 = vshll.u32 2102212464, %v2671
        %v2684 = vshrl.u32 920167782, %v2672
        %v2685 = vor.u32 %v2683, %v2684
        %v2686 = vshll.u32 920167782, %v2671
        %v2687 = vshrl.u32 1326507024, %v2672
        %v2688 = vor.u32 %v2686, %v2687
        %vm2689 = vcmp.lt.s32.totalorder %v2670, 1
        %vm2690 = vcmp.lt.s32.totalorder %v2670, 2
        %vm2691 = vcmp.lt.s32.totalorder %v2670, 3
        %vm2692 = vcmp.lt.s32.totalorder %v2670, 4
        %v2693 = vsel %vm2689, %v2673, %v2676
        %v2694 = vsel %vm2692, %v2682, 2102212464
        %v2695 = vsel %vm2691, %v2679, %v2694
        %v2696 = vsel %vm2690, %v2693, %v2695
        %v2697 = vsel %vm2689, %v2676, %v2679
        %v2698 = vsel %vm2692, %v2685, 920167782
        %v2699 = vsel %vm2691, %v2682, %v2698
        %v2700 = vsel %vm2690, %v2697, %v2699
        %v2701 = vsel %vm2689, %v2679, %v2682
        %v2702 = vsel %vm2692, %v2688, 1326507024
        %v2703 = vsel %vm2691, %v2685, %v2702
        %v2704 = vsel %vm2690, %v2701, %v2703
        %v2705 = vshll.u32 %v2665, 8
        %v2706 = vmul.u32.u64.compose %v2705, %v2704
        %v2707 = vextract.low.u32 %v2706
        %v2708 = vextract.high.u32 %v2706
        %v2709 = vmul.u32.u64.compose %v2705, %v2700
        %v2710 = vextract.low.u32 %v2709
        %v2711 = vextract.high.u32 %v2709
        %v2712 = vmul.u32 %v2705, %v2696
        %v2713 = vadd.s32 %v2708, %v2710
        %vm2714 = vc.u32 %v2708, %v2710
        %v2715 = vadd.s32 %v2711, 1
        %v2716 = vsel %vm2714, %v2715, %v2711
        %v2717 = vadd.s32 %v2712, %v2716
        %v2718 = vadd.s32 %v2717, 536870912
        %v2719 = vshrl.u32 %v2718, 30
        %v2720 = vshll.u32 %v2719, 30
        %v2721 = vsub.s32 %v2717, %v2720
        %vm2722 = vcmp.lt.s32.totalorder %v2721, 0
        %v2723 = vsub.s32 0, %v2721
        %v2724 = vsel %vm2722, %v2723, %v2721
        %v2725 = vclz %v2724
        %v2726 = vsub.s32 %v2725, 2
        %vm2727 = vcmp.gt.s32.totalorder 0, %v2726
        %v2728 = vsel %vm2727, 0, %v2726
        %v2729 = vsub.s32 32, %v2728
        %v2730 = vshll.u32 %v2721, %v2728
        %v2731 = vshrl.u32 %v2713, %v2729
        %v2732 = vor.u32 %v2730, %v2731
        %v2733 = vsub.s32 4294967266, %v2728
        %v2734 = vadd.s32 %v2733, 127
        %v2735 = vshll.u32 %v2734, 23
        %v2736 = vor.u32 4788187, %v2735
        %v2737 = vand.u32 2147483647, %v2736
        %v2739 = vcvt.s32.f32 %v2732
        %v2740 = vmul.f32 %v2739, %v2737
        %v2741 = vxor.u32 %v2740, 2147483648
        %v2742 = vsel %vm2659, %v2741, %v2740
        %v2743 = vsub.s32 4, %v2719
        %v2744 = vsel %vm2659, %v2743, %v2719
        %v2745 = vsel %vm2658, %v1076, %v2742
        %v2746 = vsel %vm2658, 0, %v2744
        %v2747 = vcosq.f32.pop %v2745
        %v2748 = vsinq.f32.pop %v2745
        %vm2749 = vweird.f32 %v1076
        %v2750 = vadd.s32 %v2746, 3
        %v2751 = vand.u32 %v2750, 3
        %vm2752 = vcmp.lt.s32.totalorder %v2751, 2
        %vm2753 = vcmp.eq.s32.totalorder %v2751, 0
        %v2754 = vxor.u32 %v2748, 2147483648
        %v2755 = vsel %vm2753, %v2747, %v2754
        %vm2756 = vcmp.eq.s32.totalorder %v2751, 2
        %v2757 = vxor.u32 %v2747, 2147483648
        %v2758 = vsel %vm2756, %v2757, %v2748
        %v2759 = vsel %vm2752, %v2755, %v2758
        %v2760 = vsel %vm2749, nan, %v2759
        %v2761 = vand.u32 2147483647, %v1077
        %vm2762 = vcmp.le.f32.partialorder %v2761, 0.7853982
        %vm2763 = vcmp.lt.s32.totalorder %v1077, 0
        %v2764 = vand.u32 %v1077, 2139095040
        %v2765 = vshrl.u32 %v2764, 23
        %v2766 = vsub.s32 %v2765, 127
        %v2767 = vand.u32 2147483647, %v1077
        %v2768 = vand.u32 %v2767, 8388607
        %v2769 = vor.u32 %v2768, 8388608
        %v2770 = vsub.s32 0, %v2769
        %v2771 = vadd.s32 %v2766, 1
        %vm2772 = vcmp.gt.s32.totalorder %v2771, 0
        %v2773 = vsel %vm2772, %v2771, 0
        %v2774 = vshrl.u32 %v2773, 5
        %v2775 = vand.u32 %v2773, 31
        %v2776 = vsub.s32 32, %v2775
        %v2777 = vshrl.u32 683565275, %v2776
        %v2778 = vshll.u32 683565275, %v2775
        %v2779 = vshrl.u32 2475754826, %v2776
        %v2780 = vor.u32 %v2778, %v2779
        %v2781 = vshll.u32 2475754826, %v2775
        %v2782 = vshrl.u32 2131351028, %v2776
        %v2783 = vor.u32 %v2781, %v2782
        %v2784 = vshll.u32 2131351028, %v2775
        %v2785 = vshrl.u32 2102212464, %v2776
        %v2786 = vor.u32 %v2784, %v2785
        %v2787 = vshll.u32 2102212464, %v2775
        %v2788 = vshrl.u32 920167782, %v2776
        %v2789 = vor.u32 %v2787, %v2788
        %v2790 = vshll.u32 920167782, %v2775
        %v2791 = vshrl.u32 1326507024, %v2776
        %v2792 = vor.u32 %v2790, %v2791
        %vm2793 = vcmp.lt.s32.totalorder %v2774, 1
        %vm2794 = vcmp.lt.s32.totalorder %v2774, 2
        %vm2795 = vcmp.lt.s32.totalorder %v2774, 3
        %vm2796 = vcmp.lt.s32.totalorder %v2774, 4
        %v2797 = vsel %vm2793, %v2777, %v2780
        %v2798 = vsel %vm2796, %v2786, 2102212464
        %v2799 = vsel %vm2795, %v2783, %v2798
        %v2800 = vsel %vm2794, %v2797, %v2799
        %v2801 = vsel %vm2793, %v2780, %v2783
        %v2802 = vsel %vm2796, %v2789, 920167782
        %v2803 = vsel %vm2795, %v2786, %v2802
        %v2804 = vsel %vm2794, %v2801, %v2803
        %v2805 = vsel %vm2793, %v2783, %v2786
        %v2806 = vsel %vm2796, %v2792, 1326507024
        %v2807 = vsel %vm2795, %v2789, %v2806
        %v2808 = vsel %vm2794, %v2805, %v2807
        %v2809 = vshll.u32 %v2769, 8
        %v2810 = vmul.u32.u64.compose %v2809, %v2808
        %v2811 = vextract.low.u32 %v2810
        %v2812 = vextract.high.u32 %v2810
        %v2813 = vmul.u32.u64.compose %v2809, %v2804
        %v2814 = vextract.low.u32 %v2813
        %v2815 = vextract.high.u32 %v2813
        %v2816 = vmul.u32 %v2809, %v2800
        %v2817 = vadd.s32 %v2812, %v2814
        %vm2818 = vc.u32 %v2812, %v2814
        %v2819 = vadd.s32 %v2815, 1
        %v2820 = vsel %vm2818, %v2819, %v2815
        %v2821 = vadd.s32 %v2816, %v2820
        %v2822 = vadd.s32 %v2821, 536870912
        %v2823 = vshrl.u32 %v2822, 30
        %v2824 = vshll.u32 %v2823, 30
        %v2825 = vsub.s32 %v2821, %v2824
        %vm2826 = vcmp.lt.s32.totalorder %v2825, 0
        %v2827 = vsub.s32 0, %v2825
        %v2828 = vsel %vm2826, %v2827, %v2825
        %v2829 = vclz %v2828
        %v2830 = vsub.s32 %v2829, 2
        %vm2831 = vcmp.gt.s32.totalorder 0, %v2830
        %v2832 = vsel %vm2831, 0, %v2830
        %v2833 = vsub.s32 32, %v2832
        %v2834 = vshll.u32 %v2825, %v2832
        %v2835 = vshrl.u32 %v2817, %v2833
        %v2836 = vor.u32 %v2834, %v2835
        %v2837 = vsub.s32 4294967266, %v2832
        %v2838 = vadd.s32 %v2837, 127
        %v2839 = vshll.u32 %v2838, 23
        %v2840 = vor.u32 4788187, %v2839
        %v2841 = vand.u32 2147483647, %v2840
        %v2843 = vcvt.s32.f32 %v2836
        %v2844 = vmul.f32 %v2843, %v2841
        %v2845 = vxor.u32 %v2844, 2147483648
        %v2846 = vsel %vm2763, %v2845, %v2844
        %v2847 = vsub.s32 4, %v2823
        %v2848 = vsel %vm2763, %v2847, %v2823
        %v2849 = vsel %vm2762, %v1077, %v2846
        %v2850 = vsel %vm2762, 0, %v2848
        %v2851 = vcosq.f32.pop %v2849
        %v2852 = vsinq.f32.pop %v2849
        %vm2853 = vweird.f32 %v1077
        %v2854 = vadd.s32 %v2850, 3
        %v2855 = vand.u32 %v2854, 3
        %vm2856 = vcmp.lt.s32.totalorder %v2855, 2
        %vm2857 = vcmp.eq.s32.totalorder %v2855, 0
        %v2858 = vxor.u32 %v2852, 2147483648
        %v2859 = vsel %vm2857, %v2851, %v2858
        %vm2860 = vcmp.eq.s32.totalorder %v2855, 2
        %v2861 = vxor.u32 %v2851, 2147483648
        %v2862 = vsel %vm2860, %v2861, %v2852
        %v2863 = vsel %vm2856, %v2859, %v2862
        %v2864 = vsel %vm2853, nan, %v2863
        %v2865 = vand.u32 2147483647, %v1078
        %vm2866 = vcmp.le.f32.partialorder %v2865, 0.7853982
        %vm2867 = vcmp.lt.s32.totalorder %v1078, 0
        %v2868 = vand.u32 %v1078, 2139095040
        %v2869 = vshrl.u32 %v2868, 23
        %v2870 = vsub.s32 %v2869, 127
        %v2871 = vand.u32 2147483647, %v1078
        %v2872 = vand.u32 %v2871, 8388607
        %v2873 = vor.u32 %v2872, 8388608
        %v2874 = vsub.s32 0, %v2873
        %v2875 = vadd.s32 %v2870, 1
        %vm2876 = vcmp.gt.s32.totalorder %v2875, 0
        %v2877 = vsel %vm2876, %v2875, 0
        %v2878 = vshrl.u32 %v2877, 5
        %v2879 = vand.u32 %v2877, 31
        %v2880 = vsub.s32 32, %v2879
        %v2881 = vshrl.u32 683565275, %v2880
        %v2882 = vshll.u32 683565275, %v2879
        %v2883 = vshrl.u32 2475754826, %v2880
        %v2884 = vor.u32 %v2882, %v2883
        %v2885 = vshll.u32 2475754826, %v2879
        %v2886 = vshrl.u32 2131351028, %v2880
        %v2887 = vor.u32 %v2885, %v2886
        %v2888 = vshll.u32 2131351028, %v2879
        %v2889 = vshrl.u32 2102212464, %v2880
        %v2890 = vor.u32 %v2888, %v2889
        %v2891 = vshll.u32 2102212464, %v2879
        %v2892 = vshrl.u32 920167782, %v2880
        %v2893 = vor.u32 %v2891, %v2892
        %v2894 = vshll.u32 920167782, %v2879
        %v2895 = vshrl.u32 1326507024, %v2880
        %v2896 = vor.u32 %v2894, %v2895
        %vm2897 = vcmp.lt.s32.totalorder %v2878, 1
        %vm2898 = vcmp.lt.s32.totalorder %v2878, 2
        %vm2899 = vcmp.lt.s32.totalorder %v2878, 3
        %vm2900 = vcmp.lt.s32.totalorder %v2878, 4
        %v2901 = vsel %vm2897, %v2881, %v2884
        %v2902 = vsel %vm2900, %v2890, 2102212464
        %v2903 = vsel %vm2899, %v2887, %v2902
        %v2904 = vsel %vm2898, %v2901, %v2903
        %v2905 = vsel %vm2897, %v2884, %v2887
        %v2906 = vsel %vm2900, %v2893, 920167782
        %v2907 = vsel %vm2899, %v2890, %v2906
        %v2908 = vsel %vm2898, %v2905, %v2907
        %v2909 = vsel %vm2897, %v2887, %v2890
        %v2910 = vsel %vm2900, %v2896, 1326507024
        %v2911 = vsel %vm2899, %v2893, %v2910
        %v2912 = vsel %vm2898, %v2909, %v2911
        %v2913 = vshll.u32 %v2873, 8
        %v2914 = vmul.u32.u64.compose %v2913, %v2912
        %v2915 = vextract.low.u32 %v2914
        %v2916 = vextract.high.u32 %v2914
        %v2917 = vmul.u32.u64.compose %v2913, %v2908
        %v2918 = vextract.low.u32 %v2917
        %v2919 = vextract.high.u32 %v2917
        %v2920 = vmul.u32 %v2913, %v2904
        %v2921 = vadd.s32 %v2916, %v2918
        %vm2922 = vc.u32 %v2916, %v2918
        %v2923 = vadd.s32 %v2919, 1
        %v2924 = vsel %vm2922, %v2923, %v2919
        %v2925 = vadd.s32 %v2920, %v2924
        %v2926 = vadd.s32 %v2925, 536870912
        %v2927 = vshrl.u32 %v2926, 30
        %v2928 = vshll.u32 %v2927, 30
        %v2929 = vsub.s32 %v2925, %v2928
        %vm2930 = vcmp.lt.s32.totalorder %v2929, 0
        %v2931 = vsub.s32 0, %v2929
        %v2932 = vsel %vm2930, %v2931, %v2929
        %v2933 = vclz %v2932
        %v2934 = vsub.s32 %v2933, 2
        %vm2935 = vcmp.gt.s32.totalorder 0, %v2934
        %v2936 = vsel %vm2935, 0, %v2934
        %v2937 = vsub.s32 32, %v2936
        %v2938 = vshll.u32 %v2929, %v2936
        %v2939 = vshrl.u32 %v2921, %v2937
        %v2940 = vor.u32 %v2938, %v2939
        %v2941 = vsub.s32 4294967266, %v2936
        %v2942 = vadd.s32 %v2941, 127
        %v2943 = vshll.u32 %v2942, 23
        %v2944 = vor.u32 4788187, %v2943
        %v2945 = vand.u32 2147483647, %v2944
        %v2947 = vcvt.s32.f32 %v2940
        %v2948 = vmul.f32 %v2947, %v2945
        %v2949 = vxor.u32 %v2948, 2147483648
        %v2950 = vsel %vm2867, %v2949, %v2948
        %v2951 = vsub.s32 4, %v2927
        %v2952 = vsel %vm2867, %v2951, %v2927
        %v2953 = vsel %vm2866, %v1078, %v2950
        %v2954 = vsel %vm2866, 0, %v2952
        %v2955 = vcosq.f32.pop %v2953
        %v2956 = vsinq.f32.pop %v2953
        %vm2957 = vweird.f32 %v1078
        %v2958 = vadd.s32 %v2954, 3
        %v2959 = vand.u32 %v2958, 3
        %vm2960 = vcmp.lt.s32.totalorder %v2959, 2
        %vm2961 = vcmp.eq.s32.totalorder %v2959, 0
        %v2962 = vxor.u32 %v2956, 2147483648
        %v2963 = vsel %vm2961, %v2955, %v2962
        %vm2964 = vcmp.eq.s32.totalorder %v2959, 2
        %v2965 = vxor.u32 %v2955, 2147483648
        %v2966 = vsel %vm2964, %v2965, %v2956
        %v2967 = vsel %vm2960, %v2963, %v2966
        %v2968 = vsel %vm2957, nan, %v2967
        %v2969 = vand.u32 2147483647, %v1079
        %vm2970 = vcmp.le.f32.partialorder %v2969, 0.7853982
        %vm2971 = vcmp.lt.s32.totalorder %v1079, 0
        %v2972 = vand.u32 %v1079, 2139095040
        %v2973 = vshrl.u32 %v2972, 23
        %v2974 = vsub.s32 %v2973, 127
        %v2975 = vand.u32 2147483647, %v1079
        %v2976 = vand.u32 %v2975, 8388607
        %v2977 = vor.u32 %v2976, 8388608
        %v2978 = vsub.s32 0, %v2977
        %v2979 = vadd.s32 %v2974, 1
        %vm2980 = vcmp.gt.s32.totalorder %v2979, 0
        %v2981 = vsel %vm2980, %v2979, 0
        %v2982 = vshrl.u32 %v2981, 5
        %v2983 = vand.u32 %v2981, 31
        %v2984 = vsub.s32 32, %v2983
        %v2985 = vshrl.u32 683565275, %v2984
        %v2986 = vshll.u32 683565275, %v2983
        %v2987 = vshrl.u32 2475754826, %v2984
        %v2988 = vor.u32 %v2986, %v2987
        %v2989 = vshll.u32 2475754826, %v2983
        %v2990 = vshrl.u32 2131351028, %v2984
        %v2991 = vor.u32 %v2989, %v2990
        %v2992 = vshll.u32 2131351028, %v2983
        %v2993 = vshrl.u32 2102212464, %v2984
        %v2994 = vor.u32 %v2992, %v2993
        %v2995 = vshll.u32 2102212464, %v2983
        %v2996 = vshrl.u32 920167782, %v2984
        %v2997 = vor.u32 %v2995, %v2996
        %v2998 = vshll.u32 920167782, %v2983
        %v2999 = vshrl.u32 1326507024, %v2984
        %v3000 = vor.u32 %v2998, %v2999
        %vm3001 = vcmp.lt.s32.totalorder %v2982, 1
        %vm3002 = vcmp.lt.s32.totalorder %v2982, 2
        %vm3003 = vcmp.lt.s32.totalorder %v2982, 3
        %vm3004 = vcmp.lt.s32.totalorder %v2982, 4
        %v3005 = vsel %vm3001, %v2985, %v2988
        %v3006 = vsel %vm3004, %v2994, 2102212464
        %v3007 = vsel %vm3003, %v2991, %v3006
        %v3008 = vsel %vm3002, %v3005, %v3007
        %v3009 = vsel %vm3001, %v2988, %v2991
        %v3010 = vsel %vm3004, %v2997, 920167782
        %v3011 = vsel %vm3003, %v2994, %v3010
        %v3012 = vsel %vm3002, %v3009, %v3011
        %v3013 = vsel %vm3001, %v2991, %v2994
        %v3014 = vsel %vm3004, %v3000, 1326507024
        %v3015 = vsel %vm3003, %v2997, %v3014
        %v3016 = vsel %vm3002, %v3013, %v3015
        %v3017 = vshll.u32 %v2977, 8
        %v3018 = vmul.u32.u64.compose %v3017, %v3016
        %v3019 = vextract.low.u32 %v3018
        %v3020 = vextract.high.u32 %v3018
        %v3021 = vmul.u32.u64.compose %v3017, %v3012
        %v3022 = vextract.low.u32 %v3021
        %v3023 = vextract.high.u32 %v3021
        %v3024 = vmul.u32 %v3017, %v3008
        %v3025 = vadd.s32 %v3020, %v3022
        %vm3026 = vc.u32 %v3020, %v3022
        %v3027 = vadd.s32 %v3023, 1
        %v3028 = vsel %vm3026, %v3027, %v3023
        %v3029 = vadd.s32 %v3024, %v3028
        %v3030 = vadd.s32 %v3029, 536870912
        %v3031 = vshrl.u32 %v3030, 30
        %v3032 = vshll.u32 %v3031, 30
        %v3033 = vsub.s32 %v3029, %v3032
        %vm3034 = vcmp.lt.s32.totalorder %v3033, 0
        %v3035 = vsub.s32 0, %v3033
        %v3036 = vsel %vm3034, %v3035, %v3033
        %v3037 = vclz %v3036
        %v3038 = vsub.s32 %v3037, 2
        %vm3039 = vcmp.gt.s32.totalorder 0, %v3038
        %v3040 = vsel %vm3039, 0, %v3038
        %v3041 = vsub.s32 32, %v3040
        %v3042 = vshll.u32 %v3033, %v3040
        %v3043 = vshrl.u32 %v3025, %v3041
        %v3044 = vor.u32 %v3042, %v3043
        %v3045 = vsub.s32 4294967266, %v3040
        %v3046 = vadd.s32 %v3045, 127
        %v3047 = vshll.u32 %v3046, 23
        %v3048 = vor.u32 4788187, %v3047
        %v3049 = vand.u32 2147483647, %v3048
        %v3051 = vcvt.s32.f32 %v3044
        %v3052 = vmul.f32 %v3051, %v3049
        %v3053 = vxor.u32 %v3052, 2147483648
        %v3054 = vsel %vm2971, %v3053, %v3052
        %v3055 = vsub.s32 4, %v3031
        %v3056 = vsel %vm2971, %v3055, %v3031
        %v3057 = vsel %vm2970, %v1079, %v3054
        %v3058 = vsel %vm2970, 0, %v3056
        %v3059 = vcosq.f32.pop %v3057
        %v3060 = vsinq.f32.pop %v3057
        %vm3061 = vweird.f32 %v1079
        %v3062 = vadd.s32 %v3058, 3
        %v3063 = vand.u32 %v3062, 3
        %vm3064 = vcmp.lt.s32.totalorder %v3063, 2
        %vm3065 = vcmp.eq.s32.totalorder %v3063, 0
        %v3066 = vxor.u32 %v3060, 2147483648
        %v3067 = vsel %vm3065, %v3059, %v3066
        %vm3068 = vcmp.eq.s32.totalorder %v3063, 2
        %v3069 = vxor.u32 %v3059, 2147483648
        %v3070 = vsel %vm3068, %v3069, %v3060
        %v3071 = vsel %vm3064, %v3067, %v3070
        %v3072 = vsel %vm3061, nan, %v3071
        %v3073 = vand.u32 2147483647, %v1080
        %vm3074 = vcmp.le.f32.partialorder %v3073, 0.7853982
        %vm3075 = vcmp.lt.s32.totalorder %v1080, 0
        %v3076 = vand.u32 %v1080, 2139095040
        %v3077 = vshrl.u32 %v3076, 23
        %v3078 = vsub.s32 %v3077, 127
        %v3079 = vand.u32 2147483647, %v1080
        %v3080 = vand.u32 %v3079, 8388607
        %v3081 = vor.u32 %v3080, 8388608
        %v3082 = vsub.s32 0, %v3081
        %v3083 = vadd.s32 %v3078, 1
        %vm3084 = vcmp.gt.s32.totalorder %v3083, 0
        %v3085 = vsel %vm3084, %v3083, 0
        %v3086 = vshrl.u32 %v3085, 5
        %v3087 = vand.u32 %v3085, 31
        %v3088 = vsub.s32 32, %v3087
        %v3089 = vshrl.u32 683565275, %v3088
        %v3090 = vshll.u32 683565275, %v3087
        %v3091 = vshrl.u32 2475754826, %v3088
        %v3092 = vor.u32 %v3090, %v3091
        %v3093 = vshll.u32 2475754826, %v3087
        %v3094 = vshrl.u32 2131351028, %v3088
        %v3095 = vor.u32 %v3093, %v3094
        %v3096 = vshll.u32 2131351028, %v3087
        %v3097 = vshrl.u32 2102212464, %v3088
        %v3098 = vor.u32 %v3096, %v3097
        %v3099 = vshll.u32 2102212464, %v3087
        %v3100 = vshrl.u32 920167782, %v3088
        %v3101 = vor.u32 %v3099, %v3100
        %v3102 = vshll.u32 920167782, %v3087
        %v3103 = vshrl.u32 1326507024, %v3088
        %v3104 = vor.u32 %v3102, %v3103
        %vm3105 = vcmp.lt.s32.totalorder %v3086, 1
        %vm3106 = vcmp.lt.s32.totalorder %v3086, 2
        %vm3107 = vcmp.lt.s32.totalorder %v3086, 3
        %vm3108 = vcmp.lt.s32.totalorder %v3086, 4
        %v3109 = vsel %vm3105, %v3089, %v3092
        %v3110 = vsel %vm3108, %v3098, 2102212464
        %v3111 = vsel %vm3107, %v3095, %v3110
        %v3112 = vsel %vm3106, %v3109, %v3111
        %v3113 = vsel %vm3105, %v3092, %v3095
        %v3114 = vsel %vm3108, %v3101, 920167782
        %v3115 = vsel %vm3107, %v3098, %v3114
        %v3116 = vsel %vm3106, %v3113, %v3115
        %v3117 = vsel %vm3105, %v3095, %v3098
        %v3118 = vsel %vm3108, %v3104, 1326507024
        %v3119 = vsel %vm3107, %v3101, %v3118
        %v3120 = vsel %vm3106, %v3117, %v3119
        %v3121 = vshll.u32 %v3081, 8
        %v3122 = vmul.u32.u64.compose %v3121, %v3120
        %v3123 = vextract.low.u32 %v3122
        %v3124 = vextract.high.u32 %v3122
        %v3125 = vmul.u32.u64.compose %v3121, %v3116
        %v3126 = vextract.low.u32 %v3125
        %v3127 = vextract.high.u32 %v3125
        %v3128 = vmul.u32 %v3121, %v3112
        %v3129 = vadd.s32 %v3124, %v3126
        %vm3130 = vc.u32 %v3124, %v3126
        %v3131 = vadd.s32 %v3127, 1
        %v3132 = vsel %vm3130, %v3131, %v3127
        %v3133 = vadd.s32 %v3128, %v3132
        %v3134 = vadd.s32 %v3133, 536870912
        %v3135 = vshrl.u32 %v3134, 30
        %v3136 = vshll.u32 %v3135, 30
        %v3137 = vsub.s32 %v3133, %v3136
        %vm3138 = vcmp.lt.s32.totalorder %v3137, 0
        %v3139 = vsub.s32 0, %v3137
        %v3140 = vsel %vm3138, %v3139, %v3137
        %v3141 = vclz %v3140
        %v3142 = vsub.s32 %v3141, 2
        %vm3143 = vcmp.gt.s32.totalorder 0, %v3142
        %v3144 = vsel %vm3143, 0, %v3142
        %v3145 = vsub.s32 32, %v3144
        %v3146 = vshll.u32 %v3137, %v3144
        %v3147 = vshrl.u32 %v3129, %v3145
        %v3148 = vor.u32 %v3146, %v3147
        %v3149 = vsub.s32 4294967266, %v3144
        %v3150 = vadd.s32 %v3149, 127
        %v3151 = vshll.u32 %v3150, 23
        %v3152 = vor.u32 4788187, %v3151
        %v3153 = vand.u32 2147483647, %v3152
        %v3155 = vcvt.s32.f32 %v3148
        %v3156 = vmul.f32 %v3155, %v3153
        %v3157 = vxor.u32 %v3156, 2147483648
        %v3158 = vsel %vm3075, %v3157, %v3156
        %v3159 = vsub.s32 4, %v3135
        %v3160 = vsel %vm3075, %v3159, %v3135
        %v3161 = vsel %vm3074, %v1080, %v3158
        %v3162 = vsel %vm3074, 0, %v3160
        %v3163 = vcosq.f32.pop %v3161
        %v3164 = vsinq.f32.pop %v3161
        %vm3165 = vweird.f32 %v1080
        %v3166 = vadd.s32 %v3162, 3
        %v3167 = vand.u32 %v3166, 3
        %vm3168 = vcmp.lt.s32.totalorder %v3167, 2
        %vm3169 = vcmp.eq.s32.totalorder %v3167, 0
        %v3170 = vxor.u32 %v3164, 2147483648
        %v3171 = vsel %vm3169, %v3163, %v3170
        %vm3172 = vcmp.eq.s32.totalorder %v3167, 2
        %v3173 = vxor.u32 %v3163, 2147483648
        %v3174 = vsel %vm3172, %v3173, %v3164
        %v3175 = vsel %vm3168, %v3171, %v3174
        %v3176 = vsel %vm3165, nan, %v3175
        %v3177 = vand.u32 2147483647, %v1081
        %vm3178 = vcmp.le.f32.partialorder %v3177, 0.7853982
        %vm3179 = vcmp.lt.s32.totalorder %v1081, 0
        %v3180 = vand.u32 %v1081, 2139095040
        %v3181 = vshrl.u32 %v3180, 23
        %v3182 = vsub.s32 %v3181, 127
        %v3183 = vand.u32 2147483647, %v1081
        %v3184 = vand.u32 %v3183, 8388607
        %v3185 = vor.u32 %v3184, 8388608
        %v3186 = vsub.s32 0, %v3185
        %v3187 = vadd.s32 %v3182, 1
        %vm3188 = vcmp.gt.s32.totalorder %v3187, 0
        %v3189 = vsel %vm3188, %v3187, 0
        %v3190 = vshrl.u32 %v3189, 5
        %v3191 = vand.u32 %v3189, 31
        %v3192 = vsub.s32 32, %v3191
        %v3193 = vshrl.u32 683565275, %v3192
        %v3194 = vshll.u32 683565275, %v3191
        %v3195 = vshrl.u32 2475754826, %v3192
        %v3196 = vor.u32 %v3194, %v3195
        %v3197 = vshll.u32 2475754826, %v3191
        %v3198 = vshrl.u32 2131351028, %v3192
        %v3199 = vor.u32 %v3197, %v3198
        %v3200 = vshll.u32 2131351028, %v3191
        %v3201 = vshrl.u32 2102212464, %v3192
        %v3202 = vor.u32 %v3200, %v3201
        %v3203 = vshll.u32 2102212464, %v3191
        %v3204 = vshrl.u32 920167782, %v3192
        %v3205 = vor.u32 %v3203, %v3204
        %v3206 = vshll.u32 920167782, %v3191
        %v3207 = vshrl.u32 1326507024, %v3192
        %v3208 = vor.u32 %v3206, %v3207
        %vm3209 = vcmp.lt.s32.totalorder %v3190, 1
        %vm3210 = vcmp.lt.s32.totalorder %v3190, 2
        %vm3211 = vcmp.lt.s32.totalorder %v3190, 3
        %vm3212 = vcmp.lt.s32.totalorder %v3190, 4
        %v3213 = vsel %vm3209, %v3193, %v3196
        %v3214 = vsel %vm3212, %v3202, 2102212464
        %v3215 = vsel %vm3211, %v3199, %v3214
        %v3216 = vsel %vm3210, %v3213, %v3215
        %v3217 = vsel %vm3209, %v3196, %v3199
        %v3218 = vsel %vm3212, %v3205, 920167782
        %v3219 = vsel %vm3211, %v3202, %v3218
        %v3220 = vsel %vm3210, %v3217, %v3219
        %v3221 = vsel %vm3209, %v3199, %v3202
        %v3222 = vsel %vm3212, %v3208, 1326507024
        %v3223 = vsel %vm3211, %v3205, %v3222
        %v3224 = vsel %vm3210, %v3221, %v3223
        %v3225 = vshll.u32 %v3185, 8
        %v3226 = vmul.u32.u64.compose %v3225, %v3224
        %v3227 = vextract.low.u32 %v3226
        %v3228 = vextract.high.u32 %v3226
        %v3229 = vmul.u32.u64.compose %v3225, %v3220
        %v3230 = vextract.low.u32 %v3229
        %v3231 = vextract.high.u32 %v3229
        %v3232 = vmul.u32 %v3225, %v3216
        %v3233 = vadd.s32 %v3228, %v3230
        %vm3234 = vc.u32 %v3228, %v3230
        %v3235 = vadd.s32 %v3231, 1
        %v3236 = vsel %vm3234, %v3235, %v3231
        %v3237 = vadd.s32 %v3232, %v3236
        %v3238 = vadd.s32 %v3237, 536870912
        %v3239 = vshrl.u32 %v3238, 30
        %v3240 = vshll.u32 %v3239, 30
        %v3241 = vsub.s32 %v3237, %v3240
        %vm3242 = vcmp.lt.s32.totalorder %v3241, 0
        %v3243 = vsub.s32 0, %v3241
        %v3244 = vsel %vm3242, %v3243, %v3241
        %v3245 = vclz %v3244
        %v3246 = vsub.s32 %v3245, 2
        %vm3247 = vcmp.gt.s32.totalorder 0, %v3246
        %v3248 = vsel %vm3247, 0, %v3246
        %v3249 = vsub.s32 32, %v3248
        %v3250 = vshll.u32 %v3241, %v3248
        %v3251 = vshrl.u32 %v3233, %v3249
        %v3252 = vor.u32 %v3250, %v3251
        %v3253 = vsub.s32 4294967266, %v3248
        %v3254 = vadd.s32 %v3253, 127
        %v3255 = vshll.u32 %v3254, 23
        %v3256 = vor.u32 4788187, %v3255
        %v3257 = vand.u32 2147483647, %v3256
        %v3259 = vcvt.s32.f32 %v3252
        %v3260 = vmul.f32 %v3259, %v3257
        %v3261 = vxor.u32 %v3260, 2147483648
        %v3262 = vsel %vm3179, %v3261, %v3260
        %v3263 = vsub.s32 4, %v3239
        %v3264 = vsel %vm3179, %v3263, %v3239
        %v3265 = vsel %vm3178, %v1081, %v3262
        %v3266 = vsel %vm3178, 0, %v3264
        %v3267 = vcosq.f32.pop %v3265
        %v3268 = vsinq.f32.pop %v3265
        %vm3269 = vweird.f32 %v1081
        %v3270 = vadd.s32 %v3266, 3
        %v3271 = vand.u32 %v3270, 3
        %vm3272 = vcmp.lt.s32.totalorder %v3271, 2
        %vm3273 = vcmp.eq.s32.totalorder %v3271, 0
        %v3274 = vxor.u32 %v3268, 2147483648
        %v3275 = vsel %vm3273, %v3267, %v3274
        %vm3276 = vcmp.eq.s32.totalorder %v3271, 2
        %v3277 = vxor.u32 %v3267, 2147483648
        %v3278 = vsel %vm3276, %v3277, %v3268
        %v3279 = vsel %vm3272, %v3275, %v3278
        %v3280 = vsel %vm3269, nan, %v3279
        %v3281 = vand.u32 2147483647, %v1082
        %vm3282 = vcmp.le.f32.partialorder %v3281, 0.7853982
        %vm3283 = vcmp.lt.s32.totalorder %v1082, 0
        %v3284 = vand.u32 %v1082, 2139095040
        %v3285 = vshrl.u32 %v3284, 23
        %v3286 = vsub.s32 %v3285, 127
        %v3287 = vand.u32 2147483647, %v1082
        %v3288 = vand.u32 %v3287, 8388607
        %v3289 = vor.u32 %v3288, 8388608
        %v3290 = vsub.s32 0, %v3289
        %v3291 = vadd.s32 %v3286, 1
        %vm3292 = vcmp.gt.s32.totalorder %v3291, 0
        %v3293 = vsel %vm3292, %v3291, 0
        %v3294 = vshrl.u32 %v3293, 5
        %v3295 = vand.u32 %v3293, 31
        %v3296 = vsub.s32 32, %v3295
        %v3297 = vshrl.u32 683565275, %v3296
        %v3298 = vshll.u32 683565275, %v3295
        %v3299 = vshrl.u32 2475754826, %v3296
        %v3300 = vor.u32 %v3298, %v3299
        %v3301 = vshll.u32 2475754826, %v3295
        %v3302 = vshrl.u32 2131351028, %v3296
        %v3303 = vor.u32 %v3301, %v3302
        %v3304 = vshll.u32 2131351028, %v3295
        %v3305 = vshrl.u32 2102212464, %v3296
        %v3306 = vor.u32 %v3304, %v3305
        %v3307 = vshll.u32 2102212464, %v3295
        %v3308 = vshrl.u32 920167782, %v3296
        %v3309 = vor.u32 %v3307, %v3308
        %v3310 = vshll.u32 920167782, %v3295
        %v3311 = vshrl.u32 1326507024, %v3296
        %v3312 = vor.u32 %v3310, %v3311
        %vm3313 = vcmp.lt.s32.totalorder %v3294, 1
        %vm3314 = vcmp.lt.s32.totalorder %v3294, 2
        %vm3315 = vcmp.lt.s32.totalorder %v3294, 3
        %vm3316 = vcmp.lt.s32.totalorder %v3294, 4
        %v3317 = vsel %vm3313, %v3297, %v3300
        %v3318 = vsel %vm3316, %v3306, 2102212464
        %v3319 = vsel %vm3315, %v3303, %v3318
        %v3320 = vsel %vm3314, %v3317, %v3319
        %v3321 = vsel %vm3313, %v3300, %v3303
        %v3322 = vsel %vm3316, %v3309, 920167782
        %v3323 = vsel %vm3315, %v3306, %v3322
        %v3324 = vsel %vm3314, %v3321, %v3323
        %v3325 = vsel %vm3313, %v3303, %v3306
        %v3326 = vsel %vm3316, %v3312, 1326507024
        %v3327 = vsel %vm3315, %v3309, %v3326
        %v3328 = vsel %vm3314, %v3325, %v3327
        %v3329 = vshll.u32 %v3289, 8
        %v3330 = vmul.u32.u64.compose %v3329, %v3328
        %v3331 = vextract.low.u32 %v3330
        %v3332 = vextract.high.u32 %v3330
        %v3333 = vmul.u32.u64.compose %v3329, %v3324
        %v3334 = vextract.low.u32 %v3333
        %v3335 = vextract.high.u32 %v3333
        %v3336 = vmul.u32 %v3329, %v3320
        %v3337 = vadd.s32 %v3332, %v3334
        %vm3338 = vc.u32 %v3332, %v3334
        %v3339 = vadd.s32 %v3335, 1
        %v3340 = vsel %vm3338, %v3339, %v3335
        %v3341 = vadd.s32 %v3336, %v3340
        %v3342 = vadd.s32 %v3341, 536870912
        %v3343 = vshrl.u32 %v3342, 30
        %v3344 = vshll.u32 %v3343, 30
        %v3345 = vsub.s32 %v3341, %v3344
        %vm3346 = vcmp.lt.s32.totalorder %v3345, 0
        %v3347 = vsub.s32 0, %v3345
        %v3348 = vsel %vm3346, %v3347, %v3345
        %v3349 = vclz %v3348
        %v3350 = vsub.s32 %v3349, 2
        %vm3351 = vcmp.gt.s32.totalorder 0, %v3350
        %v3352 = vsel %vm3351, 0, %v3350
        %v3353 = vsub.s32 32, %v3352
        %v3354 = vshll.u32 %v3345, %v3352
        %v3355 = vshrl.u32 %v3337, %v3353
        %v3356 = vor.u32 %v3354, %v3355
        %v3357 = vsub.s32 4294967266, %v3352
        %v3358 = vadd.s32 %v3357, 127
        %v3359 = vshll.u32 %v3358, 23
        %v3360 = vor.u32 4788187, %v3359
        %v3361 = vand.u32 2147483647, %v3360
        %v3363 = vcvt.s32.f32 %v3356
        %v3364 = vmul.f32 %v3363, %v3361
        %v3365 = vxor.u32 %v3364, 2147483648
        %v3366 = vsel %vm3283, %v3365, %v3364
        %v3367 = vsub.s32 4, %v3343
        %v3368 = vsel %vm3283, %v3367, %v3343
        %v3369 = vsel %vm3282, %v1082, %v3366
        %v3370 = vsel %vm3282, 0, %v3368
        %v3371 = vcosq.f32.pop %v3369
        %v3372 = vsinq.f32.pop %v3369
        %vm3373 = vweird.f32 %v1082
        %v3374 = vadd.s32 %v3370, 3
        %v3375 = vand.u32 %v3374, 3
        %vm3376 = vcmp.lt.s32.totalorder %v3375, 2
        %vm3377 = vcmp.eq.s32.totalorder %v3375, 0
        %v3378 = vxor.u32 %v3372, 2147483648
        %v3379 = vsel %vm3377, %v3371, %v3378
        %vm3380 = vcmp.eq.s32.totalorder %v3375, 2
        %v3381 = vxor.u32 %v3371, 2147483648
        %v3382 = vsel %vm3380, %v3381, %v3372
        %v3383 = vsel %vm3376, %v3379, %v3382
        %v3384 = vsel %vm3373, nan, %v3383
        %v3385 = vand.u32 2147483647, %v1083
        %vm3386 = vcmp.le.f32.partialorder %v3385, 0.7853982
        %vm3387 = vcmp.lt.s32.totalorder %v1083, 0
        %v3388 = vand.u32 %v1083, 2139095040
        %v3389 = vshrl.u32 %v3388, 23
        %v3390 = vsub.s32 %v3389, 127
        %v3391 = vand.u32 2147483647, %v1083
        %v3392 = vand.u32 %v3391, 8388607
        %v3393 = vor.u32 %v3392, 8388608
        %v3394 = vsub.s32 0, %v3393
        %v3395 = vadd.s32 %v3390, 1
        %vm3396 = vcmp.gt.s32.totalorder %v3395, 0
        %v3397 = vsel %vm3396, %v3395, 0
        %v3398 = vshrl.u32 %v3397, 5
        %v3399 = vand.u32 %v3397, 31
        %v3400 = vsub.s32 32, %v3399
        %v3401 = vshrl.u32 683565275, %v3400
        %v3402 = vshll.u32 683565275, %v3399
        %v3403 = vshrl.u32 2475754826, %v3400
        %v3404 = vor.u32 %v3402, %v3403
        %v3405 = vshll.u32 2475754826, %v3399
        %v3406 = vshrl.u32 2131351028, %v3400
        %v3407 = vor.u32 %v3405, %v3406
        %v3408 = vshll.u32 2131351028, %v3399
        %v3409 = vshrl.u32 2102212464, %v3400
        %v3410 = vor.u32 %v3408, %v3409
        %v3411 = vshll.u32 2102212464, %v3399
        %v3412 = vshrl.u32 920167782, %v3400
        %v3413 = vor.u32 %v3411, %v3412
        %v3414 = vshll.u32 920167782, %v3399
        %v3415 = vshrl.u32 1326507024, %v3400
        %v3416 = vor.u32 %v3414, %v3415
        %vm3417 = vcmp.lt.s32.totalorder %v3398, 1
        %vm3418 = vcmp.lt.s32.totalorder %v3398, 2
        %vm3419 = vcmp.lt.s32.totalorder %v3398, 3
        %vm3420 = vcmp.lt.s32.totalorder %v3398, 4
        %v3421 = vsel %vm3417, %v3401, %v3404
        %v3422 = vsel %vm3420, %v3410, 2102212464
        %v3423 = vsel %vm3419, %v3407, %v3422
        %v3424 = vsel %vm3418, %v3421, %v3423
        %v3425 = vsel %vm3417, %v3404, %v3407
        %v3426 = vsel %vm3420, %v3413, 920167782
        %v3427 = vsel %vm3419, %v3410, %v3426
        %v3428 = vsel %vm3418, %v3425, %v3427
        %v3429 = vsel %vm3417, %v3407, %v3410
        %v3430 = vsel %vm3420, %v3416, 1326507024
        %v3431 = vsel %vm3419, %v3413, %v3430
        %v3432 = vsel %vm3418, %v3429, %v3431
        %v3433 = vshll.u32 %v3393, 8
        %v3434 = vmul.u32.u64.compose %v3433, %v3432
        %v3435 = vextract.low.u32 %v3434
        %v3436 = vextract.high.u32 %v3434
        %v3437 = vmul.u32.u64.compose %v3433, %v3428
        %v3438 = vextract.low.u32 %v3437
        %v3439 = vextract.high.u32 %v3437
        %v3440 = vmul.u32 %v3433, %v3424
        %v3441 = vadd.s32 %v3436, %v3438
        %vm3442 = vc.u32 %v3436, %v3438
        %v3443 = vadd.s32 %v3439, 1
        %v3444 = vsel %vm3442, %v3443, %v3439
        %v3445 = vadd.s32 %v3440, %v3444
        %v3446 = vadd.s32 %v3445, 536870912
        %v3447 = vshrl.u32 %v3446, 30
        %v3448 = vshll.u32 %v3447, 30
        %v3449 = vsub.s32 %v3445, %v3448
        %vm3450 = vcmp.lt.s32.totalorder %v3449, 0
        %v3451 = vsub.s32 0, %v3449
        %v3452 = vsel %vm3450, %v3451, %v3449
        %v3453 = vclz %v3452
        %v3454 = vsub.s32 %v3453, 2
        %vm3455 = vcmp.gt.s32.totalorder 0, %v3454
        %v3456 = vsel %vm3455, 0, %v3454
        %v3457 = vsub.s32 32, %v3456
        %v3458 = vshll.u32 %v3449, %v3456
        %v3459 = vshrl.u32 %v3441, %v3457
        %v3460 = vor.u32 %v3458, %v3459
        %v3461 = vsub.s32 4294967266, %v3456
        %v3462 = vadd.s32 %v3461, 127
        %v3463 = vshll.u32 %v3462, 23
        %v3464 = vor.u32 4788187, %v3463
        %v3465 = vand.u32 2147483647, %v3464
        %v3467 = vcvt.s32.f32 %v3460
        %v3468 = vmul.f32 %v3467, %v3465
        %v3469 = vxor.u32 %v3468, 2147483648
        %v3470 = vsel %vm3387, %v3469, %v3468
        %v3471 = vsub.s32 4, %v3447
        %v3472 = vsel %vm3387, %v3471, %v3447
        %v3473 = vsel %vm3386, %v1083, %v3470
        %v3474 = vsel %vm3386, 0, %v3472
        %v3475 = vcosq.f32.pop %v3473
        %v3476 = vsinq.f32.pop %v3473
        %vm3477 = vweird.f32 %v1083
        %v3478 = vadd.s32 %v3474, 3
        %v3479 = vand.u32 %v3478, 3
        %vm3480 = vcmp.lt.s32.totalorder %v3479, 2
        %vm3481 = vcmp.eq.s32.totalorder %v3479, 0
        %v3482 = vxor.u32 %v3476, 2147483648
        %v3483 = vsel %vm3481, %v3475, %v3482
        %vm3484 = vcmp.eq.s32.totalorder %v3479, 2
        %v3485 = vxor.u32 %v3475, 2147483648
        %v3486 = vsel %vm3484, %v3485, %v3476
        %v3487 = vsel %vm3480, %v3483, %v3486
        %v3488 = vsel %vm3477, nan, %v3487
        %v3489 = vand.u32 2147483647, %v1084
        %vm3490 = vcmp.le.f32.partialorder %v3489, 0.7853982
        %vm3491 = vcmp.lt.s32.totalorder %v1084, 0
        %v3492 = vand.u32 %v1084, 2139095040
        %v3493 = vshrl.u32 %v3492, 23
        %v3494 = vsub.s32 %v3493, 127
        %v3495 = vand.u32 2147483647, %v1084
        %v3496 = vand.u32 %v3495, 8388607
        %v3497 = vor.u32 %v3496, 8388608
        %v3498 = vsub.s32 0, %v3497
        %v3499 = vadd.s32 %v3494, 1
        %vm3500 = vcmp.gt.s32.totalorder %v3499, 0
        %v3501 = vsel %vm3500, %v3499, 0
        %v3502 = vshrl.u32 %v3501, 5
        %v3503 = vand.u32 %v3501, 31
        %v3504 = vsub.s32 32, %v3503
        %v3505 = vshrl.u32 683565275, %v3504
        %v3506 = vshll.u32 683565275, %v3503
        %v3507 = vshrl.u32 2475754826, %v3504
        %v3508 = vor.u32 %v3506, %v3507
        %v3509 = vshll.u32 2475754826, %v3503
        %v3510 = vshrl.u32 2131351028, %v3504
        %v3511 = vor.u32 %v3509, %v3510
        %v3512 = vshll.u32 2131351028, %v3503
        %v3513 = vshrl.u32 2102212464, %v3504
        %v3514 = vor.u32 %v3512, %v3513
        %v3515 = vshll.u32 2102212464, %v3503
        %v3516 = vshrl.u32 920167782, %v3504
        %v3517 = vor.u32 %v3515, %v3516
        %v3518 = vshll.u32 920167782, %v3503
        %v3519 = vshrl.u32 1326507024, %v3504
        %v3520 = vor.u32 %v3518, %v3519
        %vm3521 = vcmp.lt.s32.totalorder %v3502, 1
        %vm3522 = vcmp.lt.s32.totalorder %v3502, 2
        %vm3523 = vcmp.lt.s32.totalorder %v3502, 3
        %vm3524 = vcmp.lt.s32.totalorder %v3502, 4
        %v3525 = vsel %vm3521, %v3505, %v3508
        %v3526 = vsel %vm3524, %v3514, 2102212464
        %v3527 = vsel %vm3523, %v3511, %v3526
        %v3528 = vsel %vm3522, %v3525, %v3527
        %v3529 = vsel %vm3521, %v3508, %v3511
        %v3530 = vsel %vm3524, %v3517, 920167782
        %v3531 = vsel %vm3523, %v3514, %v3530
        %v3532 = vsel %vm3522, %v3529, %v3531
        %v3533 = vsel %vm3521, %v3511, %v3514
        %v3534 = vsel %vm3524, %v3520, 1326507024
        %v3535 = vsel %vm3523, %v3517, %v3534
        %v3536 = vsel %vm3522, %v3533, %v3535
        %v3537 = vshll.u32 %v3497, 8
        %v3538 = vmul.u32.u64.compose %v3537, %v3536
        %v3539 = vextract.low.u32 %v3538
        %v3540 = vextract.high.u32 %v3538
        %v3541 = vmul.u32.u64.compose %v3537, %v3532
        %v3542 = vextract.low.u32 %v3541
        %v3543 = vextract.high.u32 %v3541
        %v3544 = vmul.u32 %v3537, %v3528
        %v3545 = vadd.s32 %v3540, %v3542
        %vm3546 = vc.u32 %v3540, %v3542
        %v3547 = vadd.s32 %v3543, 1
        %v3548 = vsel %vm3546, %v3547, %v3543
        %v3549 = vadd.s32 %v3544, %v3548
        %v3550 = vadd.s32 %v3549, 536870912
        %v3551 = vshrl.u32 %v3550, 30
        %v3552 = vshll.u32 %v3551, 30
        %v3553 = vsub.s32 %v3549, %v3552
        %vm3554 = vcmp.lt.s32.totalorder %v3553, 0
        %v3555 = vsub.s32 0, %v3553
        %v3556 = vsel %vm3554, %v3555, %v3553
        %v3557 = vclz %v3556
        %v3558 = vsub.s32 %v3557, 2
        %vm3559 = vcmp.gt.s32.totalorder 0, %v3558
        %v3560 = vsel %vm3559, 0, %v3558
        %v3561 = vsub.s32 32, %v3560
        %v3562 = vshll.u32 %v3553, %v3560
        %v3563 = vshrl.u32 %v3545, %v3561
        %v3564 = vor.u32 %v3562, %v3563
        %v3565 = vsub.s32 4294967266, %v3560
        %v3566 = vadd.s32 %v3565, 127
        %v3567 = vshll.u32 %v3566, 23
        %v3568 = vor.u32 4788187, %v3567
        %v3569 = vand.u32 2147483647, %v3568
        %v3571 = vcvt.s32.f32 %v3564
        %v3572 = vmul.f32 %v3571, %v3569
        %v3573 = vxor.u32 %v3572, 2147483648
        %v3574 = vsel %vm3491, %v3573, %v3572
        %v3575 = vsub.s32 4, %v3551
        %v3576 = vsel %vm3491, %v3575, %v3551
        %v3577 = vsel %vm3490, %v1084, %v3574
        %v3578 = vsel %vm3490, 0, %v3576
        %v3579 = vcosq.f32.pop %v3577
        %v3580 = vsinq.f32.pop %v3577
        %vm3581 = vweird.f32 %v1084
        %v3582 = vadd.s32 %v3578, 3
        %v3583 = vand.u32 %v3582, 3
        %vm3584 = vcmp.lt.s32.totalorder %v3583, 2
        %vm3585 = vcmp.eq.s32.totalorder %v3583, 0
        %v3586 = vxor.u32 %v3580, 2147483648
        %v3587 = vsel %vm3585, %v3579, %v3586
        %vm3588 = vcmp.eq.s32.totalorder %v3583, 2
        %v3589 = vxor.u32 %v3579, 2147483648
        %v3590 = vsel %vm3588, %v3589, %v3580
        %v3591 = vsel %vm3584, %v3587, %v3590
        %v3592 = vsel %vm3581, nan, %v3591
        %v3593 = vand.u32 2147483647, %v1085
        %vm3594 = vcmp.le.f32.partialorder %v3593, 0.7853982
        %vm3595 = vcmp.lt.s32.totalorder %v1085, 0
        %v3596 = vand.u32 %v1085, 2139095040
        %v3597 = vshrl.u32 %v3596, 23
        %v3598 = vsub.s32 %v3597, 127
        %v3599 = vand.u32 2147483647, %v1085
        %v3600 = vand.u32 %v3599, 8388607
        %v3601 = vor.u32 %v3600, 8388608
        %v3602 = vsub.s32 0, %v3601
        %v3603 = vadd.s32 %v3598, 1
        %vm3604 = vcmp.gt.s32.totalorder %v3603, 0
        %v3605 = vsel %vm3604, %v3603, 0
        %v3606 = vshrl.u32 %v3605, 5
        %v3607 = vand.u32 %v3605, 31
        %v3608 = vsub.s32 32, %v3607
        %v3609 = vshrl.u32 683565275, %v3608
        %v3610 = vshll.u32 683565275, %v3607
        %v3611 = vshrl.u32 2475754826, %v3608
        %v3612 = vor.u32 %v3610, %v3611
        %v3613 = vshll.u32 2475754826, %v3607
        %v3614 = vshrl.u32 2131351028, %v3608
        %v3615 = vor.u32 %v3613, %v3614
        %v3616 = vshll.u32 2131351028, %v3607
        %v3617 = vshrl.u32 2102212464, %v3608
        %v3618 = vor.u32 %v3616, %v3617
        %v3619 = vshll.u32 2102212464, %v3607
        %v3620 = vshrl.u32 920167782, %v3608
        %v3621 = vor.u32 %v3619, %v3620
        %v3622 = vshll.u32 920167782, %v3607
        %v3623 = vshrl.u32 1326507024, %v3608
        %v3624 = vor.u32 %v3622, %v3623
        %vm3625 = vcmp.lt.s32.totalorder %v3606, 1
        %vm3626 = vcmp.lt.s32.totalorder %v3606, 2
        %vm3627 = vcmp.lt.s32.totalorder %v3606, 3
        %vm3628 = vcmp.lt.s32.totalorder %v3606, 4
        %v3629 = vsel %vm3625, %v3609, %v3612
        %v3630 = vsel %vm3628, %v3618, 2102212464
        %v3631 = vsel %vm3627, %v3615, %v3630
        %v3632 = vsel %vm3626, %v3629, %v3631
        %v3633 = vsel %vm3625, %v3612, %v3615
        %v3634 = vsel %vm3628, %v3621, 920167782
        %v3635 = vsel %vm3627, %v3618, %v3634
        %v3636 = vsel %vm3626, %v3633, %v3635
        %v3637 = vsel %vm3625, %v3615, %v3618
        %v3638 = vsel %vm3628, %v3624, 1326507024
        %v3639 = vsel %vm3627, %v3621, %v3638
        %v3640 = vsel %vm3626, %v3637, %v3639
        %v3641 = vshll.u32 %v3601, 8
        %v3642 = vmul.u32.u64.compose %v3641, %v3640
        %v3643 = vextract.low.u32 %v3642
        %v3644 = vextract.high.u32 %v3642
        %v3645 = vmul.u32.u64.compose %v3641, %v3636
        %v3646 = vextract.low.u32 %v3645
        %v3647 = vextract.high.u32 %v3645
        %v3648 = vmul.u32 %v3641, %v3632
        %v3649 = vadd.s32 %v3644, %v3646
        %vm3650 = vc.u32 %v3644, %v3646
        %v3651 = vadd.s32 %v3647, 1
        %v3652 = vsel %vm3650, %v3651, %v3647
        %v3653 = vadd.s32 %v3648, %v3652
        %v3654 = vadd.s32 %v3653, 536870912
        %v3655 = vshrl.u32 %v3654, 30
        %v3656 = vshll.u32 %v3655, 30
        %v3657 = vsub.s32 %v3653, %v3656
        %vm3658 = vcmp.lt.s32.totalorder %v3657, 0
        %v3659 = vsub.s32 0, %v3657
        %v3660 = vsel %vm3658, %v3659, %v3657
        %v3661 = vclz %v3660
        %v3662 = vsub.s32 %v3661, 2
        %vm3663 = vcmp.gt.s32.totalorder 0, %v3662
        %v3664 = vsel %vm3663, 0, %v3662
        %v3665 = vsub.s32 32, %v3664
        %v3666 = vshll.u32 %v3657, %v3664
        %v3667 = vshrl.u32 %v3649, %v3665
        %v3668 = vor.u32 %v3666, %v3667
        %v3669 = vsub.s32 4294967266, %v3664
        %v3670 = vadd.s32 %v3669, 127
        %v3671 = vshll.u32 %v3670, 23
        %v3672 = vor.u32 4788187, %v3671
        %v3673 = vand.u32 2147483647, %v3672
        %v3675 = vcvt.s32.f32 %v3668
        %v3676 = vmul.f32 %v3675, %v3673
        %v3677 = vxor.u32 %v3676, 2147483648
        %v3678 = vsel %vm3595, %v3677, %v3676
        %v3679 = vsub.s32 4, %v3655
        %v3680 = vsel %vm3595, %v3679, %v3655
        %v3681 = vsel %vm3594, %v1085, %v3678
        %v3682 = vsel %vm3594, 0, %v3680
        %v3683 = vcosq.f32.pop %v3681
        %v3684 = vsinq.f32.pop %v3681
        %vm3685 = vweird.f32 %v1085
        %v3686 = vadd.s32 %v3682, 3
        %v3687 = vand.u32 %v3686, 3
        %vm3688 = vcmp.lt.s32.totalorder %v3687, 2
        %vm3689 = vcmp.eq.s32.totalorder %v3687, 0
        %v3690 = vxor.u32 %v3684, 2147483648
        %v3691 = vsel %vm3689, %v3683, %v3690
        %vm3692 = vcmp.eq.s32.totalorder %v3687, 2
        %v3693 = vxor.u32 %v3683, 2147483648
        %v3694 = vsel %vm3692, %v3693, %v3684
        %v3695 = vsel %vm3688, %v3691, %v3694
        %v3696 = vsel %vm3685, nan, %v3695
        %v3697 = vand.u32 2147483647, %v1086
        %vm3698 = vcmp.le.f32.partialorder %v3697, 0.7853982
        %vm3699 = vcmp.lt.s32.totalorder %v1086, 0
        %v3700 = vand.u32 %v1086, 2139095040
        %v3701 = vshrl.u32 %v3700, 23
        %v3702 = vsub.s32 %v3701, 127
        %v3703 = vand.u32 2147483647, %v1086
        %v3704 = vand.u32 %v3703, 8388607
        %v3705 = vor.u32 %v3704, 8388608
        %v3706 = vsub.s32 0, %v3705
        %v3707 = vadd.s32 %v3702, 1
        %vm3708 = vcmp.gt.s32.totalorder %v3707, 0
        %v3709 = vsel %vm3708, %v3707, 0
        %v3710 = vshrl.u32 %v3709, 5
        %v3711 = vand.u32 %v3709, 31
        %v3712 = vsub.s32 32, %v3711
        %v3713 = vshrl.u32 683565275, %v3712
        %v3714 = vshll.u32 683565275, %v3711
        %v3715 = vshrl.u32 2475754826, %v3712
        %v3716 = vor.u32 %v3714, %v3715
        %v3717 = vshll.u32 2475754826, %v3711
        %v3718 = vshrl.u32 2131351028, %v3712
        %v3719 = vor.u32 %v3717, %v3718
        %v3720 = vshll.u32 2131351028, %v3711
        %v3721 = vshrl.u32 2102212464, %v3712
        %v3722 = vor.u32 %v3720, %v3721
        %v3723 = vshll.u32 2102212464, %v3711
        %v3724 = vshrl.u32 920167782, %v3712
        %v3725 = vor.u32 %v3723, %v3724
        %v3726 = vshll.u32 920167782, %v3711
        %v3727 = vshrl.u32 1326507024, %v3712
        %v3728 = vor.u32 %v3726, %v3727
        %vm3729 = vcmp.lt.s32.totalorder %v3710, 1
        %vm3730 = vcmp.lt.s32.totalorder %v3710, 2
        %vm3731 = vcmp.lt.s32.totalorder %v3710, 3
        %vm3732 = vcmp.lt.s32.totalorder %v3710, 4
        %v3733 = vsel %vm3729, %v3713, %v3716
        %v3734 = vsel %vm3732, %v3722, 2102212464
        %v3735 = vsel %vm3731, %v3719, %v3734
        %v3736 = vsel %vm3730, %v3733, %v3735
        %v3737 = vsel %vm3729, %v3716, %v3719
        %v3738 = vsel %vm3732, %v3725, 920167782
        %v3739 = vsel %vm3731, %v3722, %v3738
        %v3740 = vsel %vm3730, %v3737, %v3739
        %v3741 = vsel %vm3729, %v3719, %v3722
        %v3742 = vsel %vm3732, %v3728, 1326507024
        %v3743 = vsel %vm3731, %v3725, %v3742
        %v3744 = vsel %vm3730, %v3741, %v3743
        %v3745 = vshll.u32 %v3705, 8
        %v3746 = vmul.u32.u64.compose %v3745, %v3744
        %v3747 = vextract.low.u32 %v3746
        %v3748 = vextract.high.u32 %v3746
        %v3749 = vmul.u32.u64.compose %v3745, %v3740
        %v3750 = vextract.low.u32 %v3749
        %v3751 = vextract.high.u32 %v3749
        %v3752 = vmul.u32 %v3745, %v3736
        %v3753 = vadd.s32 %v3748, %v3750
        %vm3754 = vc.u32 %v3748, %v3750
        %v3755 = vadd.s32 %v3751, 1
        %v3756 = vsel %vm3754, %v3755, %v3751
        %v3757 = vadd.s32 %v3752, %v3756
        %v3758 = vadd.s32 %v3757, 536870912
        %v3759 = vshrl.u32 %v3758, 30
        %v3760 = vshll.u32 %v3759, 30
        %v3761 = vsub.s32 %v3757, %v3760
        %vm3762 = vcmp.lt.s32.totalorder %v3761, 0
        %v3763 = vsub.s32 0, %v3761
        %v3764 = vsel %vm3762, %v3763, %v3761
        %v3765 = vclz %v3764
        %v3766 = vsub.s32 %v3765, 2
        %vm3767 = vcmp.gt.s32.totalorder 0, %v3766
        %v3768 = vsel %vm3767, 0, %v3766
        %v3769 = vsub.s32 32, %v3768
        %v3770 = vshll.u32 %v3761, %v3768
        %v3771 = vshrl.u32 %v3753, %v3769
        %v3772 = vor.u32 %v3770, %v3771
        %v3773 = vsub.s32 4294967266, %v3768
        %v3774 = vadd.s32 %v3773, 127
        %v3775 = vshll.u32 %v3774, 23
        %v3776 = vor.u32 4788187, %v3775
        %v3777 = vand.u32 2147483647, %v3776
        %v3779 = vcvt.s32.f32 %v3772
        %v3780 = vmul.f32 %v3779, %v3777
        %v3781 = vxor.u32 %v3780, 2147483648
        %v3782 = vsel %vm3699, %v3781, %v3780
        %v3783 = vsub.s32 4, %v3759
        %v3784 = vsel %vm3699, %v3783, %v3759
        %v3785 = vsel %vm3698, %v1086, %v3782
        %v3786 = vsel %vm3698, 0, %v3784
        %v3787 = vcosq.f32.pop %v3785
        %v3788 = vsinq.f32.pop %v3785
        %vm3789 = vweird.f32 %v1086
        %v3790 = vadd.s32 %v3786, 3
        %v3791 = vand.u32 %v3790, 3
        %vm3792 = vcmp.lt.s32.totalorder %v3791, 2
        %vm3793 = vcmp.eq.s32.totalorder %v3791, 0
        %v3794 = vxor.u32 %v3788, 2147483648
        %v3795 = vsel %vm3793, %v3787, %v3794
        %vm3796 = vcmp.eq.s32.totalorder %v3791, 2
        %v3797 = vxor.u32 %v3787, 2147483648
        %v3798 = vsel %vm3796, %v3797, %v3788
        %v3799 = vsel %vm3792, %v3795, %v3798
        %v3800 = vsel %vm3789, nan, %v3799
        %v3801 = vand.u32 2147483647, %v1087
        %vm3802 = vcmp.le.f32.partialorder %v3801, 0.7853982
        %vm3803 = vcmp.lt.s32.totalorder %v1087, 0
        %v3804 = vand.u32 %v1087, 2139095040
        %v3805 = vshrl.u32 %v3804, 23
        %v3806 = vsub.s32 %v3805, 127
        %v3807 = vand.u32 2147483647, %v1087
        %v3808 = vand.u32 %v3807, 8388607
        %v3809 = vor.u32 %v3808, 8388608
        %v3810 = vsub.s32 0, %v3809
        %v3811 = vadd.s32 %v3806, 1
        %vm3812 = vcmp.gt.s32.totalorder %v3811, 0
        %v3813 = vsel %vm3812, %v3811, 0
        %v3814 = vshrl.u32 %v3813, 5
        %v3815 = vand.u32 %v3813, 31
        %v3816 = vsub.s32 32, %v3815
        %v3817 = vshrl.u32 683565275, %v3816
        %v3818 = vshll.u32 683565275, %v3815
        %v3819 = vshrl.u32 2475754826, %v3816
        %v3820 = vor.u32 %v3818, %v3819
        %v3821 = vshll.u32 2475754826, %v3815
        %v3822 = vshrl.u32 2131351028, %v3816
        %v3823 = vor.u32 %v3821, %v3822
        %v3824 = vshll.u32 2131351028, %v3815
        %v3825 = vshrl.u32 2102212464, %v3816
        %v3826 = vor.u32 %v3824, %v3825
        %v3827 = vshll.u32 2102212464, %v3815
        %v3828 = vshrl.u32 920167782, %v3816
        %v3829 = vor.u32 %v3827, %v3828
        %v3830 = vshll.u32 920167782, %v3815
        %v3831 = vshrl.u32 1326507024, %v3816
        %v3832 = vor.u32 %v3830, %v3831
        %vm3833 = vcmp.lt.s32.totalorder %v3814, 1
        %vm3834 = vcmp.lt.s32.totalorder %v3814, 2
        %vm3835 = vcmp.lt.s32.totalorder %v3814, 3
        %vm3836 = vcmp.lt.s32.totalorder %v3814, 4
        %v3837 = vsel %vm3833, %v3817, %v3820
        %v3838 = vsel %vm3836, %v3826, 2102212464
        %v3839 = vsel %vm3835, %v3823, %v3838
        %v3840 = vsel %vm3834, %v3837, %v3839
        %v3841 = vsel %vm3833, %v3820, %v3823
        %v3842 = vsel %vm3836, %v3829, 920167782
        %v3843 = vsel %vm3835, %v3826, %v3842
        %v3844 = vsel %vm3834, %v3841, %v3843
        %v3845 = vsel %vm3833, %v3823, %v3826
        %v3846 = vsel %vm3836, %v3832, 1326507024
        %v3847 = vsel %vm3835, %v3829, %v3846
        %v3848 = vsel %vm3834, %v3845, %v3847
        %v3849 = vshll.u32 %v3809, 8
        %v3850 = vmul.u32.u64.compose %v3849, %v3848
        %v3851 = vextract.low.u32 %v3850
        %v3852 = vextract.high.u32 %v3850
        %v3853 = vmul.u32.u64.compose %v3849, %v3844
        %v3854 = vextract.low.u32 %v3853
        %v3855 = vextract.high.u32 %v3853
        %v3856 = vmul.u32 %v3849, %v3840
        %v3857 = vadd.s32 %v3852, %v3854
        %vm3858 = vc.u32 %v3852, %v3854
        %v3859 = vadd.s32 %v3855, 1
        %v3860 = vsel %vm3858, %v3859, %v3855
        %v3861 = vadd.s32 %v3856, %v3860
        %v3862 = vadd.s32 %v3861, 536870912
        %v3863 = vshrl.u32 %v3862, 30
        %v3864 = vshll.u32 %v3863, 30
        %v3865 = vsub.s32 %v3861, %v3864
        %vm3866 = vcmp.lt.s32.totalorder %v3865, 0
        %v3867 = vsub.s32 0, %v3865
        %v3868 = vsel %vm3866, %v3867, %v3865
        %v3869 = vclz %v3868
        %v3870 = vsub.s32 %v3869, 2
        %vm3871 = vcmp.gt.s32.totalorder 0, %v3870
        %v3872 = vsel %vm3871, 0, %v3870
        %v3873 = vsub.s32 32, %v3872
        %v3874 = vshll.u32 %v3865, %v3872
        %v3875 = vshrl.u32 %v3857, %v3873
        %v3876 = vor.u32 %v3874, %v3875
        %v3877 = vsub.s32 4294967266, %v3872
        %v3878 = vadd.s32 %v3877, 127
        %v3879 = vshll.u32 %v3878, 23
        %v3880 = vor.u32 4788187, %v3879
        %v3881 = vand.u32 2147483647, %v3880
        %v3883 = vcvt.s32.f32 %v3876
        %v3884 = vmul.f32 %v3883, %v3881
        %v3885 = vxor.u32 %v3884, 2147483648
        %v3886 = vsel %vm3803, %v3885, %v3884
        %v3887 = vsub.s32 4, %v3863
        %v3888 = vsel %vm3803, %v3887, %v3863
        %v3889 = vsel %vm3802, %v1087, %v3886
        %v3890 = vsel %vm3802, 0, %v3888
        %v3891 = vcosq.f32.pop %v3889
        %v3892 = vsinq.f32.pop %v3889
        %vm3893 = vweird.f32 %v1087
        %v3894 = vadd.s32 %v3890, 3
        %v3895 = vand.u32 %v3894, 3
        %vm3896 = vcmp.lt.s32.totalorder %v3895, 2
        %vm3897 = vcmp.eq.s32.totalorder %v3895, 0
        %v3898 = vxor.u32 %v3892, 2147483648
        %v3899 = vsel %vm3897, %v3891, %v3898
        %vm3900 = vcmp.eq.s32.totalorder %v3895, 2
        %v3901 = vxor.u32 %v3891, 2147483648
        %v3902 = vsel %vm3900, %v3901, %v3892
        %v3903 = vsel %vm3896, %v3899, %v3902
        %v3904 = vsel %vm3893, nan, %v3903
        %v3905 = vand.u32 2147483647, %v1088
        %vm3906 = vcmp.le.f32.partialorder %v3905, 0.7853982
        %vm3907 = vcmp.lt.s32.totalorder %v1088, 0
        %v3908 = vand.u32 %v1088, 2139095040
        %v3909 = vshrl.u32 %v3908, 23
        %v3910 = vsub.s32 %v3909, 127
        %v3911 = vand.u32 2147483647, %v1088
        %v3912 = vand.u32 %v3911, 8388607
        %v3913 = vor.u32 %v3912, 8388608
        %v3914 = vsub.s32 0, %v3913
        %v3915 = vadd.s32 %v3910, 1
        %vm3916 = vcmp.gt.s32.totalorder %v3915, 0
        %v3917 = vsel %vm3916, %v3915, 0
        %v3918 = vshrl.u32 %v3917, 5
        %v3919 = vand.u32 %v3917, 31
        %v3920 = vsub.s32 32, %v3919
        %v3921 = vshrl.u32 683565275, %v3920
        %v3922 = vshll.u32 683565275, %v3919
        %v3923 = vshrl.u32 2475754826, %v3920
        %v3924 = vor.u32 %v3922, %v3923
        %v3925 = vshll.u32 2475754826, %v3919
        %v3926 = vshrl.u32 2131351028, %v3920
        %v3927 = vor.u32 %v3925, %v3926
        %v3928 = vshll.u32 2131351028, %v3919
        %v3929 = vshrl.u32 2102212464, %v3920
        %v3930 = vor.u32 %v3928, %v3929
        %v3931 = vshll.u32 2102212464, %v3919
        %v3932 = vshrl.u32 920167782, %v3920
        %v3933 = vor.u32 %v3931, %v3932
        %v3934 = vshll.u32 920167782, %v3919
        %v3935 = vshrl.u32 1326507024, %v3920
        %v3936 = vor.u32 %v3934, %v3935
        %vm3937 = vcmp.lt.s32.totalorder %v3918, 1
        %vm3938 = vcmp.lt.s32.totalorder %v3918, 2
        %vm3939 = vcmp.lt.s32.totalorder %v3918, 3
        %vm3940 = vcmp.lt.s32.totalorder %v3918, 4
        %v3941 = vsel %vm3937, %v3921, %v3924
        %v3942 = vsel %vm3940, %v3930, 2102212464
        %v3943 = vsel %vm3939, %v3927, %v3942
        %v3944 = vsel %vm3938, %v3941, %v3943
        %v3945 = vsel %vm3937, %v3924, %v3927
        %v3946 = vsel %vm3940, %v3933, 920167782
        %v3947 = vsel %vm3939, %v3930, %v3946
        %v3948 = vsel %vm3938, %v3945, %v3947
        %v3949 = vsel %vm3937, %v3927, %v3930
        %v3950 = vsel %vm3940, %v3936, 1326507024
        %v3951 = vsel %vm3939, %v3933, %v3950
        %v3952 = vsel %vm3938, %v3949, %v3951
        %v3953 = vshll.u32 %v3913, 8
        %v3954 = vmul.u32.u64.compose %v3953, %v3952
        %v3955 = vextract.low.u32 %v3954
        %v3956 = vextract.high.u32 %v3954
        %v3957 = vmul.u32.u64.compose %v3953, %v3948
        %v3958 = vextract.low.u32 %v3957
        %v3959 = vextract.high.u32 %v3957
        %v3960 = vmul.u32 %v3953, %v3944
        %v3961 = vadd.s32 %v3956, %v3958
        %vm3962 = vc.u32 %v3956, %v3958
        %v3963 = vadd.s32 %v3959, 1
        %v3964 = vsel %vm3962, %v3963, %v3959
        %v3965 = vadd.s32 %v3960, %v3964
        %v3966 = vadd.s32 %v3965, 536870912
        %v3967 = vshrl.u32 %v3966, 30
        %v3968 = vshll.u32 %v3967, 30
        %v3969 = vsub.s32 %v3965, %v3968
        %vm3970 = vcmp.lt.s32.totalorder %v3969, 0
        %v3971 = vsub.s32 0, %v3969
        %v3972 = vsel %vm3970, %v3971, %v3969
        %v3973 = vclz %v3972
        %v3974 = vsub.s32 %v3973, 2
        %vm3975 = vcmp.gt.s32.totalorder 0, %v3974
        %v3976 = vsel %vm3975, 0, %v3974
        %v3977 = vsub.s32 32, %v3976
        %v3978 = vshll.u32 %v3969, %v3976
        %v3979 = vshrl.u32 %v3961, %v3977
        %v3980 = vor.u32 %v3978, %v3979
        %v3981 = vsub.s32 4294967266, %v3976
        %v3982 = vadd.s32 %v3981, 127
        %v3983 = vshll.u32 %v3982, 23
        %v3984 = vor.u32 4788187, %v3983
        %v3985 = vand.u32 2147483647, %v3984
        %v3987 = vcvt.s32.f32 %v3980
        %v3988 = vmul.f32 %v3987, %v3985
        %v3989 = vxor.u32 %v3988, 2147483648
        %v3990 = vsel %vm3907, %v3989, %v3988
        %v3991 = vsub.s32 4, %v3967
        %v3992 = vsel %vm3907, %v3991, %v3967
        %v3993 = vsel %vm3906, %v1088, %v3990
        %v3994 = vsel %vm3906, 0, %v3992
        %v3995 = vcosq.f32.pop %v3993
        %v3996 = vsinq.f32.pop %v3993
        %vm3997 = vweird.f32 %v1088
        %v3998 = vadd.s32 %v3994, 3
        %v3999 = vand.u32 %v3998, 3
        %vm4000 = vcmp.lt.s32.totalorder %v3999, 2
        %vm4001 = vcmp.eq.s32.totalorder %v3999, 0
        %v4002 = vxor.u32 %v3996, 2147483648
        %v4003 = vsel %vm4001, %v3995, %v4002
        %vm4004 = vcmp.eq.s32.totalorder %v3999, 2
        %v4005 = vxor.u32 %v3995, 2147483648
        %v4006 = vsel %vm4004, %v4005, %v3996
        %v4007 = vsel %vm4000, %v4003, %v4006
        %v4008 = vsel %vm3997, nan, %v4007
        %v4009 = vand.u32 2147483647, %v1089
        %vm4010 = vcmp.le.f32.partialorder %v4009, 0.7853982
        %vm4011 = vcmp.lt.s32.totalorder %v1089, 0
        %v4012 = vand.u32 %v1089, 2139095040
        %v4013 = vshrl.u32 %v4012, 23
        %v4014 = vsub.s32 %v4013, 127
        %v4015 = vand.u32 2147483647, %v1089
        %v4016 = vand.u32 %v4015, 8388607
        %v4017 = vor.u32 %v4016, 8388608
        %v4018 = vsub.s32 0, %v4017
        %v4019 = vadd.s32 %v4014, 1
        %vm4020 = vcmp.gt.s32.totalorder %v4019, 0
        %v4021 = vsel %vm4020, %v4019, 0
        %v4022 = vshrl.u32 %v4021, 5
        %v4023 = vand.u32 %v4021, 31
        %v4024 = vsub.s32 32, %v4023
        %v4025 = vshrl.u32 683565275, %v4024
        %v4026 = vshll.u32 683565275, %v4023
        %v4027 = vshrl.u32 2475754826, %v4024
        %v4028 = vor.u32 %v4026, %v4027
        %v4029 = vshll.u32 2475754826, %v4023
        %v4030 = vshrl.u32 2131351028, %v4024
        %v4031 = vor.u32 %v4029, %v4030
        %v4032 = vshll.u32 2131351028, %v4023
        %v4033 = vshrl.u32 2102212464, %v4024
        %v4034 = vor.u32 %v4032, %v4033
        %v4035 = vshll.u32 2102212464, %v4023
        %v4036 = vshrl.u32 920167782, %v4024
        %v4037 = vor.u32 %v4035, %v4036
        %v4038 = vshll.u32 920167782, %v4023
        %v4039 = vshrl.u32 1326507024, %v4024
        %v4040 = vor.u32 %v4038, %v4039
        %vm4041 = vcmp.lt.s32.totalorder %v4022, 1
        %vm4042 = vcmp.lt.s32.totalorder %v4022, 2
        %vm4043 = vcmp.lt.s32.totalorder %v4022, 3
        %vm4044 = vcmp.lt.s32.totalorder %v4022, 4
        %v4045 = vsel %vm4041, %v4025, %v4028
        %v4046 = vsel %vm4044, %v4034, 2102212464
        %v4047 = vsel %vm4043, %v4031, %v4046
        %v4048 = vsel %vm4042, %v4045, %v4047
        %v4049 = vsel %vm4041, %v4028, %v4031
        %v4050 = vsel %vm4044, %v4037, 920167782
        %v4051 = vsel %vm4043, %v4034, %v4050
        %v4052 = vsel %vm4042, %v4049, %v4051
        %v4053 = vsel %vm4041, %v4031, %v4034
        %v4054 = vsel %vm4044, %v4040, 1326507024
        %v4055 = vsel %vm4043, %v4037, %v4054
        %v4056 = vsel %vm4042, %v4053, %v4055
        %v4057 = vshll.u32 %v4017, 8
        %v4058 = vmul.u32.u64.compose %v4057, %v4056
        %v4059 = vextract.low.u32 %v4058
        %v4060 = vextract.high.u32 %v4058
        %v4061 = vmul.u32.u64.compose %v4057, %v4052
        %v4062 = vextract.low.u32 %v4061
        %v4063 = vextract.high.u32 %v4061
        %v4064 = vmul.u32 %v4057, %v4048
        %v4065 = vadd.s32 %v4060, %v4062
        %vm4066 = vc.u32 %v4060, %v4062
        %v4067 = vadd.s32 %v4063, 1
        %v4068 = vsel %vm4066, %v4067, %v4063
        %v4069 = vadd.s32 %v4064, %v4068
        %v4070 = vadd.s32 %v4069, 536870912
        %v4071 = vshrl.u32 %v4070, 30
        %v4072 = vshll.u32 %v4071, 30
        %v4073 = vsub.s32 %v4069, %v4072
        %vm4074 = vcmp.lt.s32.totalorder %v4073, 0
        %v4075 = vsub.s32 0, %v4073
        %v4076 = vsel %vm4074, %v4075, %v4073
        %v4077 = vclz %v4076
        %v4078 = vsub.s32 %v4077, 2
        %vm4079 = vcmp.gt.s32.totalorder 0, %v4078
        %v4080 = vsel %vm4079, 0, %v4078
        %v4081 = vsub.s32 32, %v4080
        %v4082 = vshll.u32 %v4073, %v4080
        %v4083 = vshrl.u32 %v4065, %v4081
        %v4084 = vor.u32 %v4082, %v4083
        %v4085 = vsub.s32 4294967266, %v4080
        %v4086 = vadd.s32 %v4085, 127
        %v4087 = vshll.u32 %v4086, 23
        %v4088 = vor.u32 4788187, %v4087
        %v4089 = vand.u32 2147483647, %v4088
        %v4091 = vcvt.s32.f32 %v4084
        %v4092 = vmul.f32 %v4091, %v4089
        %v4093 = vxor.u32 %v4092, 2147483648
        %v4094 = vsel %vm4011, %v4093, %v4092
        %v4095 = vsub.s32 4, %v4071
        %v4096 = vsel %vm4011, %v4095, %v4071
        %v4097 = vsel %vm4010, %v1089, %v4094
        %v4098 = vsel %vm4010, 0, %v4096
        %v4099 = vcosq.f32.pop %v4097
        %v4100 = vsinq.f32.pop %v4097
        %vm4101 = vweird.f32 %v1089
        %v4102 = vadd.s32 %v4098, 3
        %v4103 = vand.u32 %v4102, 3
        %vm4104 = vcmp.lt.s32.totalorder %v4103, 2
        %vm4105 = vcmp.eq.s32.totalorder %v4103, 0
        %v4106 = vxor.u32 %v4100, 2147483648
        %v4107 = vsel %vm4105, %v4099, %v4106
        %vm4108 = vcmp.eq.s32.totalorder %v4103, 2
        %v4109 = vxor.u32 %v4099, 2147483648
        %v4110 = vsel %vm4108, %v4109, %v4100
        %v4111 = vsel %vm4104, %v4107, %v4110
        %v4112 = vsel %vm4101, nan, %v4111
        %v4113 = vand.u32 2147483647, %v1090
        %vm4114 = vcmp.le.f32.partialorder %v4113, 0.7853982
        %vm4115 = vcmp.lt.s32.totalorder %v1090, 0
        %v4116 = vand.u32 %v1090, 2139095040
        %v4117 = vshrl.u32 %v4116, 23
        %v4118 = vsub.s32 %v4117, 127
        %v4119 = vand.u32 2147483647, %v1090
        %v4120 = vand.u32 %v4119, 8388607
        %v4121 = vor.u32 %v4120, 8388608
        %v4122 = vsub.s32 0, %v4121
        %v4123 = vadd.s32 %v4118, 1
        %vm4124 = vcmp.gt.s32.totalorder %v4123, 0
        %v4125 = vsel %vm4124, %v4123, 0
        %v4126 = vshrl.u32 %v4125, 5
        %v4127 = vand.u32 %v4125, 31
        %v4128 = vsub.s32 32, %v4127
        %v4129 = vshrl.u32 683565275, %v4128
        %v4130 = vshll.u32 683565275, %v4127
        %v4131 = vshrl.u32 2475754826, %v4128
        %v4132 = vor.u32 %v4130, %v4131
        %v4133 = vshll.u32 2475754826, %v4127
        %v4134 = vshrl.u32 2131351028, %v4128
        %v4135 = vor.u32 %v4133, %v4134
        %v4136 = vshll.u32 2131351028, %v4127
        %v4137 = vshrl.u32 2102212464, %v4128
        %v4138 = vor.u32 %v4136, %v4137
        %v4139 = vshll.u32 2102212464, %v4127
        %v4140 = vshrl.u32 920167782, %v4128
        %v4141 = vor.u32 %v4139, %v4140
        %v4142 = vshll.u32 920167782, %v4127
        %v4143 = vshrl.u32 1326507024, %v4128
        %v4144 = vor.u32 %v4142, %v4143
        %vm4145 = vcmp.lt.s32.totalorder %v4126, 1
        %vm4146 = vcmp.lt.s32.totalorder %v4126, 2
        %vm4147 = vcmp.lt.s32.totalorder %v4126, 3
        %vm4148 = vcmp.lt.s32.totalorder %v4126, 4
        %v4149 = vsel %vm4145, %v4129, %v4132
        %v4150 = vsel %vm4148, %v4138, 2102212464
        %v4151 = vsel %vm4147, %v4135, %v4150
        %v4152 = vsel %vm4146, %v4149, %v4151
        %v4153 = vsel %vm4145, %v4132, %v4135
        %v4154 = vsel %vm4148, %v4141, 920167782
        %v4155 = vsel %vm4147, %v4138, %v4154
        %v4156 = vsel %vm4146, %v4153, %v4155
        %v4157 = vsel %vm4145, %v4135, %v4138
        %v4158 = vsel %vm4148, %v4144, 1326507024
        %v4159 = vsel %vm4147, %v4141, %v4158
        %v4160 = vsel %vm4146, %v4157, %v4159
        %v4161 = vshll.u32 %v4121, 8
        %v4162 = vmul.u32.u64.compose %v4161, %v4160
        %v4163 = vextract.low.u32 %v4162
        %v4164 = vextract.high.u32 %v4162
        %v4165 = vmul.u32.u64.compose %v4161, %v4156
        %v4166 = vextract.low.u32 %v4165
        %v4167 = vextract.high.u32 %v4165
        %v4168 = vmul.u32 %v4161, %v4152
        %v4169 = vadd.s32 %v4164, %v4166
        %vm4170 = vc.u32 %v4164, %v4166
        %v4171 = vadd.s32 %v4167, 1
        %v4172 = vsel %vm4170, %v4171, %v4167
        %v4173 = vadd.s32 %v4168, %v4172
        %v4174 = vadd.s32 %v4173, 536870912
        %v4175 = vshrl.u32 %v4174, 30
        %v4176 = vshll.u32 %v4175, 30
        %v4177 = vsub.s32 %v4173, %v4176
        %vm4178 = vcmp.lt.s32.totalorder %v4177, 0
        %v4179 = vsub.s32 0, %v4177
        %v4180 = vsel %vm4178, %v4179, %v4177
        %v4181 = vclz %v4180
        %v4182 = vsub.s32 %v4181, 2
        %vm4183 = vcmp.gt.s32.totalorder 0, %v4182
        %v4184 = vsel %vm4183, 0, %v4182
        %v4185 = vsub.s32 32, %v4184
        %v4186 = vshll.u32 %v4177, %v4184
        %v4187 = vshrl.u32 %v4169, %v4185
        %v4188 = vor.u32 %v4186, %v4187
        %v4189 = vsub.s32 4294967266, %v4184
        %v4190 = vadd.s32 %v4189, 127
        %v4191 = vshll.u32 %v4190, 23
        %v4192 = vor.u32 4788187, %v4191
        %v4193 = vand.u32 2147483647, %v4192
        %v4195 = vcvt.s32.f32 %v4188
        %v4196 = vmul.f32 %v4195, %v4193
        %v4197 = vxor.u32 %v4196, 2147483648
        %v4198 = vsel %vm4115, %v4197, %v4196
        %v4199 = vsub.s32 4, %v4175
        %v4200 = vsel %vm4115, %v4199, %v4175
        %v4201 = vsel %vm4114, %v1090, %v4198
        %v4202 = vsel %vm4114, 0, %v4200
        %v4203 = vcosq.f32.pop %v4201
        %v4204 = vsinq.f32.pop %v4201
        %vm4205 = vweird.f32 %v1090
        %v4206 = vadd.s32 %v4202, 3
        %v4207 = vand.u32 %v4206, 3
        %vm4208 = vcmp.lt.s32.totalorder %v4207, 2
        %vm4209 = vcmp.eq.s32.totalorder %v4207, 0
        %v4210 = vxor.u32 %v4204, 2147483648
        %v4211 = vsel %vm4209, %v4203, %v4210
        %vm4212 = vcmp.eq.s32.totalorder %v4207, 2
        %v4213 = vxor.u32 %v4203, 2147483648
        %v4214 = vsel %vm4212, %v4213, %v4204
        %v4215 = vsel %vm4208, %v4211, %v4214
        %v4216 = vsel %vm4205, nan, %v4215
        %v4217 = vand.u32 2147483647, %v1091
        %vm4218 = vcmp.le.f32.partialorder %v4217, 0.7853982
        %vm4219 = vcmp.lt.s32.totalorder %v1091, 0
        %v4220 = vand.u32 %v1091, 2139095040
        %v4221 = vshrl.u32 %v4220, 23
        %v4222 = vsub.s32 %v4221, 127
        %v4223 = vand.u32 2147483647, %v1091
        %v4224 = vand.u32 %v4223, 8388607
        %v4225 = vor.u32 %v4224, 8388608
        %v4226 = vsub.s32 0, %v4225
        %v4227 = vadd.s32 %v4222, 1
        %vm4228 = vcmp.gt.s32.totalorder %v4227, 0
        %v4229 = vsel %vm4228, %v4227, 0
        %v4230 = vshrl.u32 %v4229, 5
        %v4231 = vand.u32 %v4229, 31
        %v4232 = vsub.s32 32, %v4231
        %v4233 = vshrl.u32 683565275, %v4232
        %v4234 = vshll.u32 683565275, %v4231
        %v4235 = vshrl.u32 2475754826, %v4232
        %v4236 = vor.u32 %v4234, %v4235
        %v4237 = vshll.u32 2475754826, %v4231
        %v4238 = vshrl.u32 2131351028, %v4232
        %v4239 = vor.u32 %v4237, %v4238
        %v4240 = vshll.u32 2131351028, %v4231
        %v4241 = vshrl.u32 2102212464, %v4232
        %v4242 = vor.u32 %v4240, %v4241
        %v4243 = vshll.u32 2102212464, %v4231
        %v4244 = vshrl.u32 920167782, %v4232
        %v4245 = vor.u32 %v4243, %v4244
        %v4246 = vshll.u32 920167782, %v4231
        %v4247 = vshrl.u32 1326507024, %v4232
        %v4248 = vor.u32 %v4246, %v4247
        %vm4249 = vcmp.lt.s32.totalorder %v4230, 1
        %vm4250 = vcmp.lt.s32.totalorder %v4230, 2
        %vm4251 = vcmp.lt.s32.totalorder %v4230, 3
        %vm4252 = vcmp.lt.s32.totalorder %v4230, 4
        %v4253 = vsel %vm4249, %v4233, %v4236
        %v4254 = vsel %vm4252, %v4242, 2102212464
        %v4255 = vsel %vm4251, %v4239, %v4254
        %v4256 = vsel %vm4250, %v4253, %v4255
        %v4257 = vsel %vm4249, %v4236, %v4239
        %v4258 = vsel %vm4252, %v4245, 920167782
        %v4259 = vsel %vm4251, %v4242, %v4258
        %v4260 = vsel %vm4250, %v4257, %v4259
        %v4261 = vsel %vm4249, %v4239, %v4242
        %v4262 = vsel %vm4252, %v4248, 1326507024
        %v4263 = vsel %vm4251, %v4245, %v4262
        %v4264 = vsel %vm4250, %v4261, %v4263
        %v4265 = vshll.u32 %v4225, 8
        %v4266 = vmul.u32.u64.compose %v4265, %v4264
        %v4267 = vextract.low.u32 %v4266
        %v4268 = vextract.high.u32 %v4266
        %v4269 = vmul.u32.u64.compose %v4265, %v4260
        %v4270 = vextract.low.u32 %v4269
        %v4271 = vextract.high.u32 %v4269
        %v4272 = vmul.u32 %v4265, %v4256
        %v4273 = vadd.s32 %v4268, %v4270
        %vm4274 = vc.u32 %v4268, %v4270
        %v4275 = vadd.s32 %v4271, 1
        %v4276 = vsel %vm4274, %v4275, %v4271
        %v4277 = vadd.s32 %v4272, %v4276
        %v4278 = vadd.s32 %v4277, 536870912
        %v4279 = vshrl.u32 %v4278, 30
        %v4280 = vshll.u32 %v4279, 30
        %v4281 = vsub.s32 %v4277, %v4280
        %vm4282 = vcmp.lt.s32.totalorder %v4281, 0
        %v4283 = vsub.s32 0, %v4281
        %v4284 = vsel %vm4282, %v4283, %v4281
        %v4285 = vclz %v4284
        %v4286 = vsub.s32 %v4285, 2
        %vm4287 = vcmp.gt.s32.totalorder 0, %v4286
        %v4288 = vsel %vm4287, 0, %v4286
        %v4289 = vsub.s32 32, %v4288
        %v4290 = vshll.u32 %v4281, %v4288
        %v4291 = vshrl.u32 %v4273, %v4289
        %v4292 = vor.u32 %v4290, %v4291
        %v4293 = vsub.s32 4294967266, %v4288
        %v4294 = vadd.s32 %v4293, 127
        %v4295 = vshll.u32 %v4294, 23
        %v4296 = vor.u32 4788187, %v4295
        %v4297 = vand.u32 2147483647, %v4296
        %v4299 = vcvt.s32.f32 %v4292
        %v4300 = vmul.f32 %v4299, %v4297
        %v4301 = vxor.u32 %v4300, 2147483648
        %v4302 = vsel %vm4219, %v4301, %v4300
        %v4303 = vsub.s32 4, %v4279
        %v4304 = vsel %vm4219, %v4303, %v4279
        %v4305 = vsel %vm4218, %v1091, %v4302
        %v4306 = vsel %vm4218, 0, %v4304
        %v4307 = vcosq.f32.pop %v4305
        %v4308 = vsinq.f32.pop %v4305
        %vm4309 = vweird.f32 %v1091
        %v4310 = vadd.s32 %v4306, 3
        %v4311 = vand.u32 %v4310, 3
        %vm4312 = vcmp.lt.s32.totalorder %v4311, 2
        %vm4313 = vcmp.eq.s32.totalorder %v4311, 0
        %v4314 = vxor.u32 %v4308, 2147483648
        %v4315 = vsel %vm4313, %v4307, %v4314
        %vm4316 = vcmp.eq.s32.totalorder %v4311, 2
        %v4317 = vxor.u32 %v4307, 2147483648
        %v4318 = vsel %vm4316, %v4317, %v4308
        %v4319 = vsel %vm4312, %v4315, %v4318
        %v4320 = vsel %vm4309, nan, %v4319
        %v4321 = vand.u32 2147483647, %v1092
        %vm4322 = vcmp.le.f32.partialorder %v4321, 0.7853982
        %vm4323 = vcmp.lt.s32.totalorder %v1092, 0
        %v4324 = vand.u32 %v1092, 2139095040
        %v4325 = vshrl.u32 %v4324, 23
        %v4326 = vsub.s32 %v4325, 127
        %v4327 = vand.u32 2147483647, %v1092
        %v4328 = vand.u32 %v4327, 8388607
        %v4329 = vor.u32 %v4328, 8388608
        %v4330 = vsub.s32 0, %v4329
        %v4331 = vadd.s32 %v4326, 1
        %vm4332 = vcmp.gt.s32.totalorder %v4331, 0
        %v4333 = vsel %vm4332, %v4331, 0
        %v4334 = vshrl.u32 %v4333, 5
        %v4335 = vand.u32 %v4333, 31
        %v4336 = vsub.s32 32, %v4335
        %v4337 = vshrl.u32 683565275, %v4336
        %v4338 = vshll.u32 683565275, %v4335
        %v4339 = vshrl.u32 2475754826, %v4336
        %v4340 = vor.u32 %v4338, %v4339
        %v4341 = vshll.u32 2475754826, %v4335
        %v4342 = vshrl.u32 2131351028, %v4336
        %v4343 = vor.u32 %v4341, %v4342
        %v4344 = vshll.u32 2131351028, %v4335
        %v4345 = vshrl.u32 2102212464, %v4336
        %v4346 = vor.u32 %v4344, %v4345
        %v4347 = vshll.u32 2102212464, %v4335
        %v4348 = vshrl.u32 920167782, %v4336
        %v4349 = vor.u32 %v4347, %v4348
        %v4350 = vshll.u32 920167782, %v4335
        %v4351 = vshrl.u32 1326507024, %v4336
        %v4352 = vor.u32 %v4350, %v4351
        %vm4353 = vcmp.lt.s32.totalorder %v4334, 1
        %vm4354 = vcmp.lt.s32.totalorder %v4334, 2
        %vm4355 = vcmp.lt.s32.totalorder %v4334, 3
        %vm4356 = vcmp.lt.s32.totalorder %v4334, 4
        %v4357 = vsel %vm4353, %v4337, %v4340
        %v4358 = vsel %vm4356, %v4346, 2102212464
        %v4359 = vsel %vm4355, %v4343, %v4358
        %v4360 = vsel %vm4354, %v4357, %v4359
        %v4361 = vsel %vm4353, %v4340, %v4343
        %v4362 = vsel %vm4356, %v4349, 920167782
        %v4363 = vsel %vm4355, %v4346, %v4362
        %v4364 = vsel %vm4354, %v4361, %v4363
        %v4365 = vsel %vm4353, %v4343, %v4346
        %v4366 = vsel %vm4356, %v4352, 1326507024
        %v4367 = vsel %vm4355, %v4349, %v4366
        %v4368 = vsel %vm4354, %v4365, %v4367
        %v4369 = vshll.u32 %v4329, 8
        %v4370 = vmul.u32.u64.compose %v4369, %v4368
        %v4371 = vextract.low.u32 %v4370
        %v4372 = vextract.high.u32 %v4370
        %v4373 = vmul.u32.u64.compose %v4369, %v4364
        %v4374 = vextract.low.u32 %v4373
        %v4375 = vextract.high.u32 %v4373
        %v4376 = vmul.u32 %v4369, %v4360
        %v4377 = vadd.s32 %v4372, %v4374
        %vm4378 = vc.u32 %v4372, %v4374
        %v4379 = vadd.s32 %v4375, 1
        %v4380 = vsel %vm4378, %v4379, %v4375
        %v4381 = vadd.s32 %v4376, %v4380
        %v4382 = vadd.s32 %v4381, 536870912
        %v4383 = vshrl.u32 %v4382, 30
        %v4384 = vshll.u32 %v4383, 30
        %v4385 = vsub.s32 %v4381, %v4384
        %vm4386 = vcmp.lt.s32.totalorder %v4385, 0
        %v4387 = vsub.s32 0, %v4385
        %v4388 = vsel %vm4386, %v4387, %v4385
        %v4389 = vclz %v4388
        %v4390 = vsub.s32 %v4389, 2
        %vm4391 = vcmp.gt.s32.totalorder 0, %v4390
        %v4392 = vsel %vm4391, 0, %v4390
        %v4393 = vsub.s32 32, %v4392
        %v4394 = vshll.u32 %v4385, %v4392
        %v4395 = vshrl.u32 %v4377, %v4393
        %v4396 = vor.u32 %v4394, %v4395
        %v4397 = vsub.s32 4294967266, %v4392
        %v4398 = vadd.s32 %v4397, 127
        %v4399 = vshll.u32 %v4398, 23
        %v4400 = vor.u32 4788187, %v4399
        %v4401 = vand.u32 2147483647, %v4400
        %v4403 = vcvt.s32.f32 %v4396
        %v4404 = vmul.f32 %v4403, %v4401
        %v4405 = vxor.u32 %v4404, 2147483648
        %v4406 = vsel %vm4323, %v4405, %v4404
        %v4407 = vsub.s32 4, %v4383
        %v4408 = vsel %vm4323, %v4407, %v4383
        %v4409 = vsel %vm4322, %v1092, %v4406
        %v4410 = vsel %vm4322, 0, %v4408
        %v4411 = vcosq.f32.pop %v4409
        %v4412 = vsinq.f32.pop %v4409
        %vm4413 = vweird.f32 %v1092
        %v4414 = vadd.s32 %v4410, 3
        %v4415 = vand.u32 %v4414, 3
        %vm4416 = vcmp.lt.s32.totalorder %v4415, 2
        %vm4417 = vcmp.eq.s32.totalorder %v4415, 0
        %v4418 = vxor.u32 %v4412, 2147483648
        %v4419 = vsel %vm4417, %v4411, %v4418
        %vm4420 = vcmp.eq.s32.totalorder %v4415, 2
        %v4421 = vxor.u32 %v4411, 2147483648
        %v4422 = vsel %vm4420, %v4421, %v4412
        %v4423 = vsel %vm4416, %v4419, %v4422
        %v4424 = vsel %vm4413, nan, %v4423
        %v4425 = vand.u32 2147483647, %v1061
        %vm4426 = vcmp.le.f32.partialorder %v4425, 0.7853982
        %vm4427 = vcmp.lt.s32.totalorder %v1061, 0
        %v4428 = vand.u32 %v1061, 2139095040
        %v4429 = vshrl.u32 %v4428, 23
        %v4430 = vsub.s32 %v4429, 127
        %v4431 = vand.u32 2147483647, %v1061
        %v4432 = vand.u32 %v4431, 8388607
        %v4433 = vor.u32 %v4432, 8388608
        %v4434 = vsub.s32 0, %v4433
        %v4435 = vadd.s32 %v4430, 1
        %vm4436 = vcmp.gt.s32.totalorder %v4435, 0
        %v4437 = vsel %vm4436, %v4435, 0
        %v4438 = vshrl.u32 %v4437, 5
        %v4439 = vand.u32 %v4437, 31
        %v4440 = vsub.s32 32, %v4439
        %v4441 = vshrl.u32 683565275, %v4440
        %v4442 = vshll.u32 683565275, %v4439
        %v4443 = vshrl.u32 2475754826, %v4440
        %v4444 = vor.u32 %v4442, %v4443
        %v4445 = vshll.u32 2475754826, %v4439
        %v4446 = vshrl.u32 2131351028, %v4440
        %v4447 = vor.u32 %v4445, %v4446
        %v4448 = vshll.u32 2131351028, %v4439
        %v4449 = vshrl.u32 2102212464, %v4440
        %v4450 = vor.u32 %v4448, %v4449
        %v4451 = vshll.u32 2102212464, %v4439
        %v4452 = vshrl.u32 920167782, %v4440
        %v4453 = vor.u32 %v4451, %v4452
        %v4454 = vshll.u32 920167782, %v4439
        %v4455 = vshrl.u32 1326507024, %v4440
        %v4456 = vor.u32 %v4454, %v4455
        %vm4457 = vcmp.lt.s32.totalorder %v4438, 1
        %vm4458 = vcmp.lt.s32.totalorder %v4438, 2
        %vm4459 = vcmp.lt.s32.totalorder %v4438, 3
        %vm4460 = vcmp.lt.s32.totalorder %v4438, 4
        %v4461 = vsel %vm4457, %v4441, %v4444
        %v4462 = vsel %vm4460, %v4450, 2102212464
        %v4463 = vsel %vm4459, %v4447, %v4462
        %v4464 = vsel %vm4458, %v4461, %v4463
        %v4465 = vsel %vm4457, %v4444, %v4447
        %v4466 = vsel %vm4460, %v4453, 920167782
        %v4467 = vsel %vm4459, %v4450, %v4466
        %v4468 = vsel %vm4458, %v4465, %v4467
        %v4469 = vsel %vm4457, %v4447, %v4450
        %v4470 = vsel %vm4460, %v4456, 1326507024
        %v4471 = vsel %vm4459, %v4453, %v4470
        %v4472 = vsel %vm4458, %v4469, %v4471
        %v4473 = vshll.u32 %v4433, 8
        %v4474 = vmul.u32.u64.compose %v4473, %v4472
        %v4475 = vextract.low.u32 %v4474
        %v4476 = vextract.high.u32 %v4474
        %v4477 = vmul.u32.u64.compose %v4473, %v4468
        %v4478 = vextract.low.u32 %v4477
        %v4479 = vextract.high.u32 %v4477
        %v4480 = vmul.u32 %v4473, %v4464
        %v4481 = vadd.s32 %v4476, %v4478
        %vm4482 = vc.u32 %v4476, %v4478
        %v4483 = vadd.s32 %v4479, 1
        %v4484 = vsel %vm4482, %v4483, %v4479
        %v4485 = vadd.s32 %v4480, %v4484
        %v4486 = vadd.s32 %v4485, 536870912
        %v4487 = vshrl.u32 %v4486, 30
        %v4488 = vshll.u32 %v4487, 30
        %v4489 = vsub.s32 %v4485, %v4488
        %vm4490 = vcmp.lt.s32.totalorder %v4489, 0
        %v4491 = vsub.s32 0, %v4489
        %v4492 = vsel %vm4490, %v4491, %v4489
        %v4493 = vclz %v4492
        %v4494 = vsub.s32 %v4493, 2
        %vm4495 = vcmp.gt.s32.totalorder 0, %v4494
        %v4496 = vsel %vm4495, 0, %v4494
        %v4497 = vsub.s32 32, %v4496
        %v4498 = vshll.u32 %v4489, %v4496
        %v4499 = vshrl.u32 %v4481, %v4497
        %v4500 = vor.u32 %v4498, %v4499
        %v4501 = vsub.s32 4294967266, %v4496
        %v4502 = vadd.s32 %v4501, 127
        %v4503 = vshll.u32 %v4502, 23
        %v4504 = vor.u32 4788187, %v4503
        %v4505 = vand.u32 2147483647, %v4504
        %v4507 = vcvt.s32.f32 %v4500
        %v4508 = vmul.f32 %v4507, %v4505
        %v4509 = vxor.u32 %v4508, 2147483648
        %v4510 = vsel %vm4427, %v4509, %v4508
        %v4511 = vsub.s32 4, %v4487
        %v4512 = vsel %vm4427, %v4511, %v4487
        %v4513 = vsel %vm4426, %v1061, %v4510
        %v4514 = vsel %vm4426, 0, %v4512
        %v4515 = vcosq.f32.pop %v4513
        %v4516 = vsinq.f32.pop %v4513
        %vm4517 = vweird.f32 %v1061
        %v4518 = vand.u32 %v4514, 3
        %vm4519 = vcmp.lt.s32.totalorder %v4518, 2
        %vm4520 = vcmp.eq.s32.totalorder %v4518, 0
        %v4521 = vxor.u32 %v4516, 2147483648
        %v4522 = vsel %vm4520, %v4515, %v4521
        %vm4523 = vcmp.eq.s32.totalorder %v4518, 2
        %v4524 = vxor.u32 %v4515, 2147483648
        %v4525 = vsel %vm4523, %v4524, %v4516
        %v4526 = vsel %vm4519, %v4522, %v4525
        %v4527 = vsel %vm4517, nan, %v4526
        %v4528 = vand.u32 2147483647, %v1062
        %vm4529 = vcmp.le.f32.partialorder %v4528, 0.7853982
        %vm4530 = vcmp.lt.s32.totalorder %v1062, 0
        %v4531 = vand.u32 %v1062, 2139095040
        %v4532 = vshrl.u32 %v4531, 23
        %v4533 = vsub.s32 %v4532, 127
        %v4534 = vand.u32 2147483647, %v1062
        %v4535 = vand.u32 %v4534, 8388607
        %v4536 = vor.u32 %v4535, 8388608
        %v4537 = vsub.s32 0, %v4536
        %v4538 = vadd.s32 %v4533, 1
        %vm4539 = vcmp.gt.s32.totalorder %v4538, 0
        %v4540 = vsel %vm4539, %v4538, 0
        %v4541 = vshrl.u32 %v4540, 5
        %v4542 = vand.u32 %v4540, 31
        %v4543 = vsub.s32 32, %v4542
        %v4544 = vshrl.u32 683565275, %v4543
        %v4545 = vshll.u32 683565275, %v4542
        %v4546 = vshrl.u32 2475754826, %v4543
        %v4547 = vor.u32 %v4545, %v4546
        %v4548 = vshll.u32 2475754826, %v4542
        %v4549 = vshrl.u32 2131351028, %v4543
        %v4550 = vor.u32 %v4548, %v4549
        %v4551 = vshll.u32 2131351028, %v4542
        %v4552 = vshrl.u32 2102212464, %v4543
        %v4553 = vor.u32 %v4551, %v4552
        %v4554 = vshll.u32 2102212464, %v4542
        %v4555 = vshrl.u32 920167782, %v4543
        %v4556 = vor.u32 %v4554, %v4555
        %v4557 = vshll.u32 920167782, %v4542
        %v4558 = vshrl.u32 1326507024, %v4543
        %v4559 = vor.u32 %v4557, %v4558
        %vm4560 = vcmp.lt.s32.totalorder %v4541, 1
        %vm4561 = vcmp.lt.s32.totalorder %v4541, 2
        %vm4562 = vcmp.lt.s32.totalorder %v4541, 3
        %vm4563 = vcmp.lt.s32.totalorder %v4541, 4
        %v4564 = vsel %vm4560, %v4544, %v4547
        %v4565 = vsel %vm4563, %v4553, 2102212464
        %v4566 = vsel %vm4562, %v4550, %v4565
        %v4567 = vsel %vm4561, %v4564, %v4566
        %v4568 = vsel %vm4560, %v4547, %v4550
        %v4569 = vsel %vm4563, %v4556, 920167782
        %v4570 = vsel %vm4562, %v4553, %v4569
        %v4571 = vsel %vm4561, %v4568, %v4570
        %v4572 = vsel %vm4560, %v4550, %v4553
        %v4573 = vsel %vm4563, %v4559, 1326507024
        %v4574 = vsel %vm4562, %v4556, %v4573
        %v4575 = vsel %vm4561, %v4572, %v4574
        %v4576 = vshll.u32 %v4536, 8
        %v4577 = vmul.u32.u64.compose %v4576, %v4575
        %v4578 = vextract.low.u32 %v4577
        %v4579 = vextract.high.u32 %v4577
        %v4580 = vmul.u32.u64.compose %v4576, %v4571
        %v4581 = vextract.low.u32 %v4580
        %v4582 = vextract.high.u32 %v4580
        %v4583 = vmul.u32 %v4576, %v4567
        %v4584 = vadd.s32 %v4579, %v4581
        %vm4585 = vc.u32 %v4579, %v4581
        %v4586 = vadd.s32 %v4582, 1
        %v4587 = vsel %vm4585, %v4586, %v4582
        %v4588 = vadd.s32 %v4583, %v4587
        %v4589 = vadd.s32 %v4588, 536870912
        %v4590 = vshrl.u32 %v4589, 30
        %v4591 = vshll.u32 %v4590, 30
        %v4592 = vsub.s32 %v4588, %v4591
        %vm4593 = vcmp.lt.s32.totalorder %v4592, 0
        %v4594 = vsub.s32 0, %v4592
        %v4595 = vsel %vm4593, %v4594, %v4592
        %v4596 = vclz %v4595
        %v4597 = vsub.s32 %v4596, 2
        %vm4598 = vcmp.gt.s32.totalorder 0, %v4597
        %v4599 = vsel %vm4598, 0, %v4597
        %v4600 = vsub.s32 32, %v4599
        %v4601 = vshll.u32 %v4592, %v4599
        %v4602 = vshrl.u32 %v4584, %v4600
        %v4603 = vor.u32 %v4601, %v4602
        %v4604 = vsub.s32 4294967266, %v4599
        %v4605 = vadd.s32 %v4604, 127
        %v4606 = vshll.u32 %v4605, 23
        %v4607 = vor.u32 4788187, %v4606
        %v4608 = vand.u32 2147483647, %v4607
        %v4610 = vcvt.s32.f32 %v4603
        %v4611 = vmul.f32 %v4610, %v4608
        %v4612 = vxor.u32 %v4611, 2147483648
        %v4613 = vsel %vm4530, %v4612, %v4611
        %v4614 = vsub.s32 4, %v4590
        %v4615 = vsel %vm4530, %v4614, %v4590
        %v4616 = vsel %vm4529, %v1062, %v4613
        %v4617 = vsel %vm4529, 0, %v4615
        %v4618 = vcosq.f32.pop %v4616
        %v4619 = vsinq.f32.pop %v4616
        %vm4620 = vweird.f32 %v1062
        %v4621 = vand.u32 %v4617, 3
        %vm4622 = vcmp.lt.s32.totalorder %v4621, 2
        %vm4623 = vcmp.eq.s32.totalorder %v4621, 0
        %v4624 = vxor.u32 %v4619, 2147483648
        %v4625 = vsel %vm4623, %v4618, %v4624
        %vm4626 = vcmp.eq.s32.totalorder %v4621, 2
        %v4627 = vxor.u32 %v4618, 2147483648
        %v4628 = vsel %vm4626, %v4627, %v4619
        %v4629 = vsel %vm4622, %v4625, %v4628
        %v4630 = vsel %vm4620, nan, %v4629
        %v4631 = vand.u32 2147483647, %v1063
        %vm4632 = vcmp.le.f32.partialorder %v4631, 0.7853982
        %vm4633 = vcmp.lt.s32.totalorder %v1063, 0
        %v4634 = vand.u32 %v1063, 2139095040
        %v4635 = vshrl.u32 %v4634, 23
        %v4636 = vsub.s32 %v4635, 127
        %v4637 = vand.u32 2147483647, %v1063
        %v4638 = vand.u32 %v4637, 8388607
        %v4639 = vor.u32 %v4638, 8388608
        %v4640 = vsub.s32 0, %v4639
        %v4641 = vadd.s32 %v4636, 1
        %vm4642 = vcmp.gt.s32.totalorder %v4641, 0
        %v4643 = vsel %vm4642, %v4641, 0
        %v4644 = vshrl.u32 %v4643, 5
        %v4645 = vand.u32 %v4643, 31
        %v4646 = vsub.s32 32, %v4645
        %v4647 = vshrl.u32 683565275, %v4646
        %v4648 = vshll.u32 683565275, %v4645
        %v4649 = vshrl.u32 2475754826, %v4646
        %v4650 = vor.u32 %v4648, %v4649
        %v4651 = vshll.u32 2475754826, %v4645
        %v4652 = vshrl.u32 2131351028, %v4646
        %v4653 = vor.u32 %v4651, %v4652
        %v4654 = vshll.u32 2131351028, %v4645
        %v4655 = vshrl.u32 2102212464, %v4646
        %v4656 = vor.u32 %v4654, %v4655
        %v4657 = vshll.u32 2102212464, %v4645
        %v4658 = vshrl.u32 920167782, %v4646
        %v4659 = vor.u32 %v4657, %v4658
        %v4660 = vshll.u32 920167782, %v4645
        %v4661 = vshrl.u32 1326507024, %v4646
        %v4662 = vor.u32 %v4660, %v4661
        %vm4663 = vcmp.lt.s32.totalorder %v4644, 1
        %vm4664 = vcmp.lt.s32.totalorder %v4644, 2
        %vm4665 = vcmp.lt.s32.totalorder %v4644, 3
        %vm4666 = vcmp.lt.s32.totalorder %v4644, 4
        %v4667 = vsel %vm4663, %v4647, %v4650
        %v4668 = vsel %vm4666, %v4656, 2102212464
        %v4669 = vsel %vm4665, %v4653, %v4668
        %v4670 = vsel %vm4664, %v4667, %v4669
        %v4671 = vsel %vm4663, %v4650, %v4653
        %v4672 = vsel %vm4666, %v4659, 920167782
        %v4673 = vsel %vm4665, %v4656, %v4672
        %v4674 = vsel %vm4664, %v4671, %v4673
        %v4675 = vsel %vm4663, %v4653, %v4656
        %v4676 = vsel %vm4666, %v4662, 1326507024
        %v4677 = vsel %vm4665, %v4659, %v4676
        %v4678 = vsel %vm4664, %v4675, %v4677
        %v4679 = vshll.u32 %v4639, 8
        %v4680 = vmul.u32.u64.compose %v4679, %v4678
        %v4681 = vextract.low.u32 %v4680
        %v4682 = vextract.high.u32 %v4680
        %v4683 = vmul.u32.u64.compose %v4679, %v4674
        %v4684 = vextract.low.u32 %v4683
        %v4685 = vextract.high.u32 %v4683
        %v4686 = vmul.u32 %v4679, %v4670
        %v4687 = vadd.s32 %v4682, %v4684
        %vm4688 = vc.u32 %v4682, %v4684
        %v4689 = vadd.s32 %v4685, 1
        %v4690 = vsel %vm4688, %v4689, %v4685
        %v4691 = vadd.s32 %v4686, %v4690
        %v4692 = vadd.s32 %v4691, 536870912
        %v4693 = vshrl.u32 %v4692, 30
        %v4694 = vshll.u32 %v4693, 30
        %v4695 = vsub.s32 %v4691, %v4694
        %vm4696 = vcmp.lt.s32.totalorder %v4695, 0
        %v4697 = vsub.s32 0, %v4695
        %v4698 = vsel %vm4696, %v4697, %v4695
        %v4699 = vclz %v4698
        %v4700 = vsub.s32 %v4699, 2
        %vm4701 = vcmp.gt.s32.totalorder 0, %v4700
        %v4702 = vsel %vm4701, 0, %v4700
        %v4703 = vsub.s32 32, %v4702
        %v4704 = vshll.u32 %v4695, %v4702
        %v4705 = vshrl.u32 %v4687, %v4703
        %v4706 = vor.u32 %v4704, %v4705
        %v4707 = vsub.s32 4294967266, %v4702
        %v4708 = vadd.s32 %v4707, 127
        %v4709 = vshll.u32 %v4708, 23
        %v4710 = vor.u32 4788187, %v4709
        %v4711 = vand.u32 2147483647, %v4710
        %v4713 = vcvt.s32.f32 %v4706
        %v4714 = vmul.f32 %v4713, %v4711
        %v4715 = vxor.u32 %v4714, 2147483648
        %v4716 = vsel %vm4633, %v4715, %v4714
        %v4717 = vsub.s32 4, %v4693
        %v4718 = vsel %vm4633, %v4717, %v4693
        %v4719 = vsel %vm4632, %v1063, %v4716
        %v4720 = vsel %vm4632, 0, %v4718
        %v4721 = vcosq.f32.pop %v4719
        %v4722 = vsinq.f32.pop %v4719
        %vm4723 = vweird.f32 %v1063
        %v4724 = vand.u32 %v4720, 3
        %vm4725 = vcmp.lt.s32.totalorder %v4724, 2
        %vm4726 = vcmp.eq.s32.totalorder %v4724, 0
        %v4727 = vxor.u32 %v4722, 2147483648
        %v4728 = vsel %vm4726, %v4721, %v4727
        %vm4729 = vcmp.eq.s32.totalorder %v4724, 2
        %v4730 = vxor.u32 %v4721, 2147483648
        %v4731 = vsel %vm4729, %v4730, %v4722
        %v4732 = vsel %vm4725, %v4728, %v4731
        %v4733 = vsel %vm4723, nan, %v4732
        %v4734 = vand.u32 2147483647, %v1064
        %vm4735 = vcmp.le.f32.partialorder %v4734, 0.7853982
        %vm4736 = vcmp.lt.s32.totalorder %v1064, 0
        %v4737 = vand.u32 %v1064, 2139095040
        %v4738 = vshrl.u32 %v4737, 23
        %v4739 = vsub.s32 %v4738, 127
        %v4740 = vand.u32 2147483647, %v1064
        %v4741 = vand.u32 %v4740, 8388607
        %v4742 = vor.u32 %v4741, 8388608
        %v4743 = vsub.s32 0, %v4742
        %v4744 = vadd.s32 %v4739, 1
        %vm4745 = vcmp.gt.s32.totalorder %v4744, 0
        %v4746 = vsel %vm4745, %v4744, 0
        %v4747 = vshrl.u32 %v4746, 5
        %v4748 = vand.u32 %v4746, 31
        %v4749 = vsub.s32 32, %v4748
        %v4750 = vshrl.u32 683565275, %v4749
        %v4751 = vshll.u32 683565275, %v4748
        %v4752 = vshrl.u32 2475754826, %v4749
        %v4753 = vor.u32 %v4751, %v4752
        %v4754 = vshll.u32 2475754826, %v4748
        %v4755 = vshrl.u32 2131351028, %v4749
        %v4756 = vor.u32 %v4754, %v4755
        %v4757 = vshll.u32 2131351028, %v4748
        %v4758 = vshrl.u32 2102212464, %v4749
        %v4759 = vor.u32 %v4757, %v4758
        %v4760 = vshll.u32 2102212464, %v4748
        %v4761 = vshrl.u32 920167782, %v4749
        %v4762 = vor.u32 %v4760, %v4761
        %v4763 = vshll.u32 920167782, %v4748
        %v4764 = vshrl.u32 1326507024, %v4749
        %v4765 = vor.u32 %v4763, %v4764
        %vm4766 = vcmp.lt.s32.totalorder %v4747, 1
        %vm4767 = vcmp.lt.s32.totalorder %v4747, 2
        %vm4768 = vcmp.lt.s32.totalorder %v4747, 3
        %vm4769 = vcmp.lt.s32.totalorder %v4747, 4
        %v4770 = vsel %vm4766, %v4750, %v4753
        %v4771 = vsel %vm4769, %v4759, 2102212464
        %v4772 = vsel %vm4768, %v4756, %v4771
        %v4773 = vsel %vm4767, %v4770, %v4772
        %v4774 = vsel %vm4766, %v4753, %v4756
        %v4775 = vsel %vm4769, %v4762, 920167782
        %v4776 = vsel %vm4768, %v4759, %v4775
        %v4777 = vsel %vm4767, %v4774, %v4776
        %v4778 = vsel %vm4766, %v4756, %v4759
        %v4779 = vsel %vm4769, %v4765, 1326507024
        %v4780 = vsel %vm4768, %v4762, %v4779
        %v4781 = vsel %vm4767, %v4778, %v4780
        %v4782 = vshll.u32 %v4742, 8
        %v4783 = vmul.u32.u64.compose %v4782, %v4781
        %v4784 = vextract.low.u32 %v4783
        %v4785 = vextract.high.u32 %v4783
        %v4786 = vmul.u32.u64.compose %v4782, %v4777
        %v4787 = vextract.low.u32 %v4786
        %v4788 = vextract.high.u32 %v4786
        %v4789 = vmul.u32 %v4782, %v4773
        %v4790 = vadd.s32 %v4785, %v4787
        %vm4791 = vc.u32 %v4785, %v4787
        %v4792 = vadd.s32 %v4788, 1
        %v4793 = vsel %vm4791, %v4792, %v4788
        %v4794 = vadd.s32 %v4789, %v4793
        %v4795 = vadd.s32 %v4794, 536870912
        %v4796 = vshrl.u32 %v4795, 30
        %v4797 = vshll.u32 %v4796, 30
        %v4798 = vsub.s32 %v4794, %v4797
        %vm4799 = vcmp.lt.s32.totalorder %v4798, 0
        %v4800 = vsub.s32 0, %v4798
        %v4801 = vsel %vm4799, %v4800, %v4798
        %v4802 = vclz %v4801
        %v4803 = vsub.s32 %v4802, 2
        %vm4804 = vcmp.gt.s32.totalorder 0, %v4803
        %v4805 = vsel %vm4804, 0, %v4803
        %v4806 = vsub.s32 32, %v4805
        %v4807 = vshll.u32 %v4798, %v4805
        %v4808 = vshrl.u32 %v4790, %v4806
        %v4809 = vor.u32 %v4807, %v4808
        %v4810 = vsub.s32 4294967266, %v4805
        %v4811 = vadd.s32 %v4810, 127
        %v4812 = vshll.u32 %v4811, 23
        %v4813 = vor.u32 4788187, %v4812
        %v4814 = vand.u32 2147483647, %v4813
        %v4816 = vcvt.s32.f32 %v4809
        %v4817 = vmul.f32 %v4816, %v4814
        %v4818 = vxor.u32 %v4817, 2147483648
        %v4819 = vsel %vm4736, %v4818, %v4817
        %v4820 = vsub.s32 4, %v4796
        %v4821 = vsel %vm4736, %v4820, %v4796
        %v4822 = vsel %vm4735, %v1064, %v4819
        %v4823 = vsel %vm4735, 0, %v4821
        %v4824 = vcosq.f32.pop %v4822
        %v4825 = vsinq.f32.pop %v4822
        %vm4826 = vweird.f32 %v1064
        %v4827 = vand.u32 %v4823, 3
        %vm4828 = vcmp.lt.s32.totalorder %v4827, 2
        %vm4829 = vcmp.eq.s32.totalorder %v4827, 0
        %v4830 = vxor.u32 %v4825, 2147483648
        %v4831 = vsel %vm4829, %v4824, %v4830
        %vm4832 = vcmp.eq.s32.totalorder %v4827, 2
        %v4833 = vxor.u32 %v4824, 2147483648
        %v4834 = vsel %vm4832, %v4833, %v4825
        %v4835 = vsel %vm4828, %v4831, %v4834
        %v4836 = vsel %vm4826, nan, %v4835
        %v4837 = vand.u32 2147483647, %v1065
        %vm4838 = vcmp.le.f32.partialorder %v4837, 0.7853982
        %vm4839 = vcmp.lt.s32.totalorder %v1065, 0
        %v4840 = vand.u32 %v1065, 2139095040
        %v4841 = vshrl.u32 %v4840, 23
        %v4842 = vsub.s32 %v4841, 127
        %v4843 = vand.u32 2147483647, %v1065
        %v4844 = vand.u32 %v4843, 8388607
        %v4845 = vor.u32 %v4844, 8388608
        %v4846 = vsub.s32 0, %v4845
        %v4847 = vadd.s32 %v4842, 1
        %vm4848 = vcmp.gt.s32.totalorder %v4847, 0
        %v4849 = vsel %vm4848, %v4847, 0
        %v4850 = vshrl.u32 %v4849, 5
        %v4851 = vand.u32 %v4849, 31
        %v4852 = vsub.s32 32, %v4851
        %v4853 = vshrl.u32 683565275, %v4852
        %v4854 = vshll.u32 683565275, %v4851
        %v4855 = vshrl.u32 2475754826, %v4852
        %v4856 = vor.u32 %v4854, %v4855
        %v4857 = vshll.u32 2475754826, %v4851
        %v4858 = vshrl.u32 2131351028, %v4852
        %v4859 = vor.u32 %v4857, %v4858
        %v4860 = vshll.u32 2131351028, %v4851
        %v4861 = vshrl.u32 2102212464, %v4852
        %v4862 = vor.u32 %v4860, %v4861
        %v4863 = vshll.u32 2102212464, %v4851
        %v4864 = vshrl.u32 920167782, %v4852
        %v4865 = vor.u32 %v4863, %v4864
        %v4866 = vshll.u32 920167782, %v4851
        %v4867 = vshrl.u32 1326507024, %v4852
        %v4868 = vor.u32 %v4866, %v4867
        %vm4869 = vcmp.lt.s32.totalorder %v4850, 1
        %vm4870 = vcmp.lt.s32.totalorder %v4850, 2
        %vm4871 = vcmp.lt.s32.totalorder %v4850, 3
        %vm4872 = vcmp.lt.s32.totalorder %v4850, 4
        %v4873 = vsel %vm4869, %v4853, %v4856
        %v4874 = vsel %vm4872, %v4862, 2102212464
        %v4875 = vsel %vm4871, %v4859, %v4874
        %v4876 = vsel %vm4870, %v4873, %v4875
        %v4877 = vsel %vm4869, %v4856, %v4859
        %v4878 = vsel %vm4872, %v4865, 920167782
        %v4879 = vsel %vm4871, %v4862, %v4878
        %v4880 = vsel %vm4870, %v4877, %v4879
        %v4881 = vsel %vm4869, %v4859, %v4862
        %v4882 = vsel %vm4872, %v4868, 1326507024
        %v4883 = vsel %vm4871, %v4865, %v4882
        %v4884 = vsel %vm4870, %v4881, %v4883
        %v4885 = vshll.u32 %v4845, 8
        %v4886 = vmul.u32.u64.compose %v4885, %v4884
        %v4887 = vextract.low.u32 %v4886
        %v4888 = vextract.high.u32 %v4886
        %v4889 = vmul.u32.u64.compose %v4885, %v4880
        %v4890 = vextract.low.u32 %v4889
        %v4891 = vextract.high.u32 %v4889
        %v4892 = vmul.u32 %v4885, %v4876
        %v4893 = vadd.s32 %v4888, %v4890
        %vm4894 = vc.u32 %v4888, %v4890
        %v4895 = vadd.s32 %v4891, 1
        %v4896 = vsel %vm4894, %v4895, %v4891
        %v4897 = vadd.s32 %v4892, %v4896
        %v4898 = vadd.s32 %v4897, 536870912
        %v4899 = vshrl.u32 %v4898, 30
        %v4900 = vshll.u32 %v4899, 30
        %v4901 = vsub.s32 %v4897, %v4900
        %vm4902 = vcmp.lt.s32.totalorder %v4901, 0
        %v4903 = vsub.s32 0, %v4901
        %v4904 = vsel %vm4902, %v4903, %v4901
        %v4905 = vclz %v4904
        %v4906 = vsub.s32 %v4905, 2
        %vm4907 = vcmp.gt.s32.totalorder 0, %v4906
        %v4908 = vsel %vm4907, 0, %v4906
        %v4909 = vsub.s32 32, %v4908
        %v4910 = vshll.u32 %v4901, %v4908
        %v4911 = vshrl.u32 %v4893, %v4909
        %v4912 = vor.u32 %v4910, %v4911
        %v4913 = vsub.s32 4294967266, %v4908
        %v4914 = vadd.s32 %v4913, 127
        %v4915 = vshll.u32 %v4914, 23
        %v4916 = vor.u32 4788187, %v4915
        %v4917 = vand.u32 2147483647, %v4916
        %v4919 = vcvt.s32.f32 %v4912
        %v4920 = vmul.f32 %v4919, %v4917
        %v4921 = vxor.u32 %v4920, 2147483648
        %v4922 = vsel %vm4839, %v4921, %v4920
        %v4923 = vsub.s32 4, %v4899
        %v4924 = vsel %vm4839, %v4923, %v4899
        %v4925 = vsel %vm4838, %v1065, %v4922
        %v4926 = vsel %vm4838, 0, %v4924
        %v4927 = vcosq.f32.pop %v4925
        %v4928 = vsinq.f32.pop %v4925
        %vm4929 = vweird.f32 %v1065
        %v4930 = vand.u32 %v4926, 3
        %vm4931 = vcmp.lt.s32.totalorder %v4930, 2
        %vm4932 = vcmp.eq.s32.totalorder %v4930, 0
        %v4933 = vxor.u32 %v4928, 2147483648
        %v4934 = vsel %vm4932, %v4927, %v4933
        %vm4935 = vcmp.eq.s32.totalorder %v4930, 2
        %v4936 = vxor.u32 %v4927, 2147483648
        %v4937 = vsel %vm4935, %v4936, %v4928
        %v4938 = vsel %vm4931, %v4934, %v4937
        %v4939 = vsel %vm4929, nan, %v4938
        %v4940 = vand.u32 2147483647, %v1066
        %vm4941 = vcmp.le.f32.partialorder %v4940, 0.7853982
        %vm4942 = vcmp.lt.s32.totalorder %v1066, 0
        %v4943 = vand.u32 %v1066, 2139095040
        %v4944 = vshrl.u32 %v4943, 23
        %v4945 = vsub.s32 %v4944, 127
        %v4946 = vand.u32 2147483647, %v1066
        %v4947 = vand.u32 %v4946, 8388607
        %v4948 = vor.u32 %v4947, 8388608
        %v4949 = vsub.s32 0, %v4948
        %v4950 = vadd.s32 %v4945, 1
        %vm4951 = vcmp.gt.s32.totalorder %v4950, 0
        %v4952 = vsel %vm4951, %v4950, 0
        %v4953 = vshrl.u32 %v4952, 5
        %v4954 = vand.u32 %v4952, 31
        %v4955 = vsub.s32 32, %v4954
        %v4956 = vshrl.u32 683565275, %v4955
        %v4957 = vshll.u32 683565275, %v4954
        %v4958 = vshrl.u32 2475754826, %v4955
        %v4959 = vor.u32 %v4957, %v4958
        %v4960 = vshll.u32 2475754826, %v4954
        %v4961 = vshrl.u32 2131351028, %v4955
        %v4962 = vor.u32 %v4960, %v4961
        %v4963 = vshll.u32 2131351028, %v4954
        %v4964 = vshrl.u32 2102212464, %v4955
        %v4965 = vor.u32 %v4963, %v4964
        %v4966 = vshll.u32 2102212464, %v4954
        %v4967 = vshrl.u32 920167782, %v4955
        %v4968 = vor.u32 %v4966, %v4967
        %v4969 = vshll.u32 920167782, %v4954
        %v4970 = vshrl.u32 1326507024, %v4955
        %v4971 = vor.u32 %v4969, %v4970
        %vm4972 = vcmp.lt.s32.totalorder %v4953, 1
        %vm4973 = vcmp.lt.s32.totalorder %v4953, 2
        %vm4974 = vcmp.lt.s32.totalorder %v4953, 3
        %vm4975 = vcmp.lt.s32.totalorder %v4953, 4
        %v4976 = vsel %vm4972, %v4956, %v4959
        %v4977 = vsel %vm4975, %v4965, 2102212464
        %v4978 = vsel %vm4974, %v4962, %v4977
        %v4979 = vsel %vm4973, %v4976, %v4978
        %v4980 = vsel %vm4972, %v4959, %v4962
        %v4981 = vsel %vm4975, %v4968, 920167782
        %v4982 = vsel %vm4974, %v4965, %v4981
        %v4983 = vsel %vm4973, %v4980, %v4982
        %v4984 = vsel %vm4972, %v4962, %v4965
        %v4985 = vsel %vm4975, %v4971, 1326507024
        %v4986 = vsel %vm4974, %v4968, %v4985
        %v4987 = vsel %vm4973, %v4984, %v4986
        %v4988 = vshll.u32 %v4948, 8
        %v4989 = vmul.u32.u64.compose %v4988, %v4987
        %v4990 = vextract.low.u32 %v4989
        %v4991 = vextract.high.u32 %v4989
        %v4992 = vmul.u32.u64.compose %v4988, %v4983
        %v4993 = vextract.low.u32 %v4992
        %v4994 = vextract.high.u32 %v4992
        %v4995 = vmul.u32 %v4988, %v4979
        %v4996 = vadd.s32 %v4991, %v4993
        %vm4997 = vc.u32 %v4991, %v4993
        %v4998 = vadd.s32 %v4994, 1
        %v4999 = vsel %vm4997, %v4998, %v4994
        %v5000 = vadd.s32 %v4995, %v4999
        %v5001 = vadd.s32 %v5000, 536870912
        %v5002 = vshrl.u32 %v5001, 30
        %v5003 = vshll.u32 %v5002, 30
        %v5004 = vsub.s32 %v5000, %v5003
        %vm5005 = vcmp.lt.s32.totalorder %v5004, 0
        %v5006 = vsub.s32 0, %v5004
        %v5007 = vsel %vm5005, %v5006, %v5004
        %v5008 = vclz %v5007
        %v5009 = vsub.s32 %v5008, 2
        %vm5010 = vcmp.gt.s32.totalorder 0, %v5009
        %v5011 = vsel %vm5010, 0, %v5009
        %v5012 = vsub.s32 32, %v5011
        %v5013 = vshll.u32 %v5004, %v5011
        %v5014 = vshrl.u32 %v4996, %v5012
        %v5015 = vor.u32 %v5013, %v5014
        %v5016 = vsub.s32 4294967266, %v5011
        %v5017 = vadd.s32 %v5016, 127
        %v5018 = vshll.u32 %v5017, 23
        %v5019 = vor.u32 4788187, %v5018
        %v5020 = vand.u32 2147483647, %v5019
        %v5022 = vcvt.s32.f32 %v5015
        %v5023 = vmul.f32 %v5022, %v5020
        %v5024 = vxor.u32 %v5023, 2147483648
        %v5025 = vsel %vm4942, %v5024, %v5023
        %v5026 = vsub.s32 4, %v5002
        %v5027 = vsel %vm4942, %v5026, %v5002
        %v5028 = vsel %vm4941, %v1066, %v5025
        %v5029 = vsel %vm4941, 0, %v5027
        %v5030 = vcosq.f32.pop %v5028
        %v5031 = vsinq.f32.pop %v5028
        %vm5032 = vweird.f32 %v1066
        %v5033 = vand.u32 %v5029, 3
        %vm5034 = vcmp.lt.s32.totalorder %v5033, 2
        %vm5035 = vcmp.eq.s32.totalorder %v5033, 0
        %v5036 = vxor.u32 %v5031, 2147483648
        %v5037 = vsel %vm5035, %v5030, %v5036
        %vm5038 = vcmp.eq.s32.totalorder %v5033, 2
        %v5039 = vxor.u32 %v5030, 2147483648
        %v5040 = vsel %vm5038, %v5039, %v5031
        %v5041 = vsel %vm5034, %v5037, %v5040
        %v5042 = vsel %vm5032, nan, %v5041
        %v5043 = vand.u32 2147483647, %v1067
        %vm5044 = vcmp.le.f32.partialorder %v5043, 0.7853982
        %vm5045 = vcmp.lt.s32.totalorder %v1067, 0
        %v5046 = vand.u32 %v1067, 2139095040
        %v5047 = vshrl.u32 %v5046, 23
        %v5048 = vsub.s32 %v5047, 127
        %v5049 = vand.u32 2147483647, %v1067
        %v5050 = vand.u32 %v5049, 8388607
        %v5051 = vor.u32 %v5050, 8388608
        %v5052 = vsub.s32 0, %v5051
        %v5053 = vadd.s32 %v5048, 1
        %vm5054 = vcmp.gt.s32.totalorder %v5053, 0
        %v5055 = vsel %vm5054, %v5053, 0
        %v5056 = vshrl.u32 %v5055, 5
        %v5057 = vand.u32 %v5055, 31
        %v5058 = vsub.s32 32, %v5057
        %v5059 = vshrl.u32 683565275, %v5058
        %v5060 = vshll.u32 683565275, %v5057
        %v5061 = vshrl.u32 2475754826, %v5058
        %v5062 = vor.u32 %v5060, %v5061
        %v5063 = vshll.u32 2475754826, %v5057
        %v5064 = vshrl.u32 2131351028, %v5058
        %v5065 = vor.u32 %v5063, %v5064
        %v5066 = vshll.u32 2131351028, %v5057
        %v5067 = vshrl.u32 2102212464, %v5058
        %v5068 = vor.u32 %v5066, %v5067
        %v5069 = vshll.u32 2102212464, %v5057
        %v5070 = vshrl.u32 920167782, %v5058
        %v5071 = vor.u32 %v5069, %v5070
        %v5072 = vshll.u32 920167782, %v5057
        %v5073 = vshrl.u32 1326507024, %v5058
        %v5074 = vor.u32 %v5072, %v5073
        %vm5075 = vcmp.lt.s32.totalorder %v5056, 1
        %vm5076 = vcmp.lt.s32.totalorder %v5056, 2
        %vm5077 = vcmp.lt.s32.totalorder %v5056, 3
        %vm5078 = vcmp.lt.s32.totalorder %v5056, 4
        %v5079 = vsel %vm5075, %v5059, %v5062
        %v5080 = vsel %vm5078, %v5068, 2102212464
        %v5081 = vsel %vm5077, %v5065, %v5080
        %v5082 = vsel %vm5076, %v5079, %v5081
        %v5083 = vsel %vm5075, %v5062, %v5065
        %v5084 = vsel %vm5078, %v5071, 920167782
        %v5085 = vsel %vm5077, %v5068, %v5084
        %v5086 = vsel %vm5076, %v5083, %v5085
        %v5087 = vsel %vm5075, %v5065, %v5068
        %v5088 = vsel %vm5078, %v5074, 1326507024
        %v5089 = vsel %vm5077, %v5071, %v5088
        %v5090 = vsel %vm5076, %v5087, %v5089
        %v5091 = vshll.u32 %v5051, 8
        %v5092 = vmul.u32.u64.compose %v5091, %v5090
        %v5093 = vextract.low.u32 %v5092
        %v5094 = vextract.high.u32 %v5092
        %v5095 = vmul.u32.u64.compose %v5091, %v5086
        %v5096 = vextract.low.u32 %v5095
        %v5097 = vextract.high.u32 %v5095
        %v5098 = vmul.u32 %v5091, %v5082
        %v5099 = vadd.s32 %v5094, %v5096
        %vm5100 = vc.u32 %v5094, %v5096
        %v5101 = vadd.s32 %v5097, 1
        %v5102 = vsel %vm5100, %v5101, %v5097
        %v5103 = vadd.s32 %v5098, %v5102
        %v5104 = vadd.s32 %v5103, 536870912
        %v5105 = vshrl.u32 %v5104, 30
        %v5106 = vshll.u32 %v5105, 30
        %v5107 = vsub.s32 %v5103, %v5106
        %vm5108 = vcmp.lt.s32.totalorder %v5107, 0
        %v5109 = vsub.s32 0, %v5107
        %v5110 = vsel %vm5108, %v5109, %v5107
        %v5111 = vclz %v5110
        %v5112 = vsub.s32 %v5111, 2
        %vm5113 = vcmp.gt.s32.totalorder 0, %v5112
        %v5114 = vsel %vm5113, 0, %v5112
        %v5115 = vsub.s32 32, %v5114
        %v5116 = vshll.u32 %v5107, %v5114
        %v5117 = vshrl.u32 %v5099, %v5115
        %v5118 = vor.u32 %v5116, %v5117
        %v5119 = vsub.s32 4294967266, %v5114
        %v5120 = vadd.s32 %v5119, 127
        %v5121 = vshll.u32 %v5120, 23
        %v5122 = vor.u32 4788187, %v5121
        %v5123 = vand.u32 2147483647, %v5122
        %v5125 = vcvt.s32.f32 %v5118
        %v5126 = vmul.f32 %v5125, %v5123
        %v5127 = vxor.u32 %v5126, 2147483648
        %v5128 = vsel %vm5045, %v5127, %v5126
        %v5129 = vsub.s32 4, %v5105
        %v5130 = vsel %vm5045, %v5129, %v5105
        %v5131 = vsel %vm5044, %v1067, %v5128
        %v5132 = vsel %vm5044, 0, %v5130
        %v5133 = vcosq.f32.pop %v5131
        %v5134 = vsinq.f32.pop %v5131
        %vm5135 = vweird.f32 %v1067
        %v5136 = vand.u32 %v5132, 3
        %vm5137 = vcmp.lt.s32.totalorder %v5136, 2
        %vm5138 = vcmp.eq.s32.totalorder %v5136, 0
        %v5139 = vxor.u32 %v5134, 2147483648
        %v5140 = vsel %vm5138, %v5133, %v5139
        %vm5141 = vcmp.eq.s32.totalorder %v5136, 2
        %v5142 = vxor.u32 %v5133, 2147483648
        %v5143 = vsel %vm5141, %v5142, %v5134
        %v5144 = vsel %vm5137, %v5140, %v5143
        %v5145 = vsel %vm5135, nan, %v5144
        %v5146 = vand.u32 2147483647, %v1068
        %vm5147 = vcmp.le.f32.partialorder %v5146, 0.7853982
        %vm5148 = vcmp.lt.s32.totalorder %v1068, 0
        %v5149 = vand.u32 %v1068, 2139095040
        %v5150 = vshrl.u32 %v5149, 23
        %v5151 = vsub.s32 %v5150, 127
        %v5152 = vand.u32 2147483647, %v1068
        %v5153 = vand.u32 %v5152, 8388607
        %v5154 = vor.u32 %v5153, 8388608
        %v5155 = vsub.s32 0, %v5154
        %v5156 = vadd.s32 %v5151, 1
        %vm5157 = vcmp.gt.s32.totalorder %v5156, 0
        %v5158 = vsel %vm5157, %v5156, 0
        %v5159 = vshrl.u32 %v5158, 5
        %v5160 = vand.u32 %v5158, 31
        %v5161 = vsub.s32 32, %v5160
        %v5162 = vshrl.u32 683565275, %v5161
        %v5163 = vshll.u32 683565275, %v5160
        %v5164 = vshrl.u32 2475754826, %v5161
        %v5165 = vor.u32 %v5163, %v5164
        %v5166 = vshll.u32 2475754826, %v5160
        %v5167 = vshrl.u32 2131351028, %v5161
        %v5168 = vor.u32 %v5166, %v5167
        %v5169 = vshll.u32 2131351028, %v5160
        %v5170 = vshrl.u32 2102212464, %v5161
        %v5171 = vor.u32 %v5169, %v5170
        %v5172 = vshll.u32 2102212464, %v5160
        %v5173 = vshrl.u32 920167782, %v5161
        %v5174 = vor.u32 %v5172, %v5173
        %v5175 = vshll.u32 920167782, %v5160
        %v5176 = vshrl.u32 1326507024, %v5161
        %v5177 = vor.u32 %v5175, %v5176
        %vm5178 = vcmp.lt.s32.totalorder %v5159, 1
        %vm5179 = vcmp.lt.s32.totalorder %v5159, 2
        %vm5180 = vcmp.lt.s32.totalorder %v5159, 3
        %vm5181 = vcmp.lt.s32.totalorder %v5159, 4
        %v5182 = vsel %vm5178, %v5162, %v5165
        %v5183 = vsel %vm5181, %v5171, 2102212464
        %v5184 = vsel %vm5180, %v5168, %v5183
        %v5185 = vsel %vm5179, %v5182, %v5184
        %v5186 = vsel %vm5178, %v5165, %v5168
        %v5187 = vsel %vm5181, %v5174, 920167782
        %v5188 = vsel %vm5180, %v5171, %v5187
        %v5189 = vsel %vm5179, %v5186, %v5188
        %v5190 = vsel %vm5178, %v5168, %v5171
        %v5191 = vsel %vm5181, %v5177, 1326507024
        %v5192 = vsel %vm5180, %v5174, %v5191
        %v5193 = vsel %vm5179, %v5190, %v5192
        %v5194 = vshll.u32 %v5154, 8
        %v5195 = vmul.u32.u64.compose %v5194, %v5193
        %v5196 = vextract.low.u32 %v5195
        %v5197 = vextract.high.u32 %v5195
        %v5198 = vmul.u32.u64.compose %v5194, %v5189
        %v5199 = vextract.low.u32 %v5198
        %v5200 = vextract.high.u32 %v5198
        %v5201 = vmul.u32 %v5194, %v5185
        %v5202 = vadd.s32 %v5197, %v5199
        %vm5203 = vc.u32 %v5197, %v5199
        %v5204 = vadd.s32 %v5200, 1
        %v5205 = vsel %vm5203, %v5204, %v5200
        %v5206 = vadd.s32 %v5201, %v5205
        %v5207 = vadd.s32 %v5206, 536870912
        %v5208 = vshrl.u32 %v5207, 30
        %v5209 = vshll.u32 %v5208, 30
        %v5210 = vsub.s32 %v5206, %v5209
        %vm5211 = vcmp.lt.s32.totalorder %v5210, 0
        %v5212 = vsub.s32 0, %v5210
        %v5213 = vsel %vm5211, %v5212, %v5210
        %v5214 = vclz %v5213
        %v5215 = vsub.s32 %v5214, 2
        %vm5216 = vcmp.gt.s32.totalorder 0, %v5215
        %v5217 = vsel %vm5216, 0, %v5215
        %v5218 = vsub.s32 32, %v5217
        %v5219 = vshll.u32 %v5210, %v5217
        %v5220 = vshrl.u32 %v5202, %v5218
        %v5221 = vor.u32 %v5219, %v5220
        %v5222 = vsub.s32 4294967266, %v5217
        %v5223 = vadd.s32 %v5222, 127
        %v5224 = vshll.u32 %v5223, 23
        %v5225 = vor.u32 4788187, %v5224
        %v5226 = vand.u32 2147483647, %v5225
        %v5228 = vcvt.s32.f32 %v5221
        %v5229 = vmul.f32 %v5228, %v5226
        %v5230 = vxor.u32 %v5229, 2147483648
        %v5231 = vsel %vm5148, %v5230, %v5229
        %v5232 = vsub.s32 4, %v5208
        %v5233 = vsel %vm5148, %v5232, %v5208
        %v5234 = vsel %vm5147, %v1068, %v5231
        %v5235 = vsel %vm5147, 0, %v5233
        %v5236 = vcosq.f32.pop %v5234
        %v5237 = vsinq.f32.pop %v5234
        %vm5238 = vweird.f32 %v1068
        %v5239 = vand.u32 %v5235, 3
        %vm5240 = vcmp.lt.s32.totalorder %v5239, 2
        %vm5241 = vcmp.eq.s32.totalorder %v5239, 0
        %v5242 = vxor.u32 %v5237, 2147483648
        %v5243 = vsel %vm5241, %v5236, %v5242
        %vm5244 = vcmp.eq.s32.totalorder %v5239, 2
        %v5245 = vxor.u32 %v5236, 2147483648
        %v5246 = vsel %vm5244, %v5245, %v5237
        %v5247 = vsel %vm5240, %v5243, %v5246
        %v5248 = vsel %vm5238, nan, %v5247
        %v5249 = vand.u32 2147483647, %v1069
        %vm5250 = vcmp.le.f32.partialorder %v5249, 0.7853982
        %vm5251 = vcmp.lt.s32.totalorder %v1069, 0
        %v5252 = vand.u32 %v1069, 2139095040
        %v5253 = vshrl.u32 %v5252, 23
        %v5254 = vsub.s32 %v5253, 127
        %v5255 = vand.u32 2147483647, %v1069
        %v5256 = vand.u32 %v5255, 8388607
        %v5257 = vor.u32 %v5256, 8388608
        %v5258 = vsub.s32 0, %v5257
        %v5259 = vadd.s32 %v5254, 1
        %vm5260 = vcmp.gt.s32.totalorder %v5259, 0
        %v5261 = vsel %vm5260, %v5259, 0
        %v5262 = vshrl.u32 %v5261, 5
        %v5263 = vand.u32 %v5261, 31
        %v5264 = vsub.s32 32, %v5263
        %v5265 = vshrl.u32 683565275, %v5264
        %v5266 = vshll.u32 683565275, %v5263
        %v5267 = vshrl.u32 2475754826, %v5264
        %v5268 = vor.u32 %v5266, %v5267
        %v5269 = vshll.u32 2475754826, %v5263
        %v5270 = vshrl.u32 2131351028, %v5264
        %v5271 = vor.u32 %v5269, %v5270
        %v5272 = vshll.u32 2131351028, %v5263
        %v5273 = vshrl.u32 2102212464, %v5264
        %v5274 = vor.u32 %v5272, %v5273
        %v5275 = vshll.u32 2102212464, %v5263
        %v5276 = vshrl.u32 920167782, %v5264
        %v5277 = vor.u32 %v5275, %v5276
        %v5278 = vshll.u32 920167782, %v5263
        %v5279 = vshrl.u32 1326507024, %v5264
        %v5280 = vor.u32 %v5278, %v5279
        %vm5281 = vcmp.lt.s32.totalorder %v5262, 1
        %vm5282 = vcmp.lt.s32.totalorder %v5262, 2
        %vm5283 = vcmp.lt.s32.totalorder %v5262, 3
        %vm5284 = vcmp.lt.s32.totalorder %v5262, 4
        %v5285 = vsel %vm5281, %v5265, %v5268
        %v5286 = vsel %vm5284, %v5274, 2102212464
        %v5287 = vsel %vm5283, %v5271, %v5286
        %v5288 = vsel %vm5282, %v5285, %v5287
        %v5289 = vsel %vm5281, %v5268, %v5271
        %v5290 = vsel %vm5284, %v5277, 920167782
        %v5291 = vsel %vm5283, %v5274, %v5290
        %v5292 = vsel %vm5282, %v5289, %v5291
        %v5293 = vsel %vm5281, %v5271, %v5274
        %v5294 = vsel %vm5284, %v5280, 1326507024
        %v5295 = vsel %vm5283, %v5277, %v5294
        %v5296 = vsel %vm5282, %v5293, %v5295
        %v5297 = vshll.u32 %v5257, 8
        %v5298 = vmul.u32.u64.compose %v5297, %v5296
        %v5299 = vextract.low.u32 %v5298
        %v5300 = vextract.high.u32 %v5298
        %v5301 = vmul.u32.u64.compose %v5297, %v5292
        %v5302 = vextract.low.u32 %v5301
        %v5303 = vextract.high.u32 %v5301
        %v5304 = vmul.u32 %v5297, %v5288
        %v5305 = vadd.s32 %v5300, %v5302
        %vm5306 = vc.u32 %v5300, %v5302
        %v5307 = vadd.s32 %v5303, 1
        %v5308 = vsel %vm5306, %v5307, %v5303
        %v5309 = vadd.s32 %v5304, %v5308
        %v5310 = vadd.s32 %v5309, 536870912
        %v5311 = vshrl.u32 %v5310, 30
        %v5312 = vshll.u32 %v5311, 30
        %v5313 = vsub.s32 %v5309, %v5312
        %vm5314 = vcmp.lt.s32.totalorder %v5313, 0
        %v5315 = vsub.s32 0, %v5313
        %v5316 = vsel %vm5314, %v5315, %v5313
        %v5317 = vclz %v5316
        %v5318 = vsub.s32 %v5317, 2
        %vm5319 = vcmp.gt.s32.totalorder 0, %v5318
        %v5320 = vsel %vm5319, 0, %v5318
        %v5321 = vsub.s32 32, %v5320
        %v5322 = vshll.u32 %v5313, %v5320
        %v5323 = vshrl.u32 %v5305, %v5321
        %v5324 = vor.u32 %v5322, %v5323
        %v5325 = vsub.s32 4294967266, %v5320
        %v5326 = vadd.s32 %v5325, 127
        %v5327 = vshll.u32 %v5326, 23
        %v5328 = vor.u32 4788187, %v5327
        %v5329 = vand.u32 2147483647, %v5328
        %v5331 = vcvt.s32.f32 %v5324
        %v5332 = vmul.f32 %v5331, %v5329
        %v5333 = vxor.u32 %v5332, 2147483648
        %v5334 = vsel %vm5251, %v5333, %v5332
        %v5335 = vsub.s32 4, %v5311
        %v5336 = vsel %vm5251, %v5335, %v5311
        %v5337 = vsel %vm5250, %v1069, %v5334
        %v5338 = vsel %vm5250, 0, %v5336
        %v5339 = vcosq.f32.pop %v5337
        %v5340 = vsinq.f32.pop %v5337
        %vm5341 = vweird.f32 %v1069
        %v5342 = vand.u32 %v5338, 3
        %vm5343 = vcmp.lt.s32.totalorder %v5342, 2
        %vm5344 = vcmp.eq.s32.totalorder %v5342, 0
        %v5345 = vxor.u32 %v5340, 2147483648
        %v5346 = vsel %vm5344, %v5339, %v5345
        %vm5347 = vcmp.eq.s32.totalorder %v5342, 2
        %v5348 = vxor.u32 %v5339, 2147483648
        %v5349 = vsel %vm5347, %v5348, %v5340
        %v5350 = vsel %vm5343, %v5346, %v5349
        %v5351 = vsel %vm5341, nan, %v5350
        %v5352 = vand.u32 2147483647, %v1070
        %vm5353 = vcmp.le.f32.partialorder %v5352, 0.7853982
        %vm5354 = vcmp.lt.s32.totalorder %v1070, 0
        %v5355 = vand.u32 %v1070, 2139095040
        %v5356 = vshrl.u32 %v5355, 23
        %v5357 = vsub.s32 %v5356, 127
        %v5358 = vand.u32 2147483647, %v1070
        %v5359 = vand.u32 %v5358, 8388607
        %v5360 = vor.u32 %v5359, 8388608
        %v5361 = vsub.s32 0, %v5360
        %v5362 = vadd.s32 %v5357, 1
        %vm5363 = vcmp.gt.s32.totalorder %v5362, 0
        %v5364 = vsel %vm5363, %v5362, 0
        %v5365 = vshrl.u32 %v5364, 5
        %v5366 = vand.u32 %v5364, 31
        %v5367 = vsub.s32 32, %v5366
        %v5368 = vshrl.u32 683565275, %v5367
        %v5369 = vshll.u32 683565275, %v5366
        %v5370 = vshrl.u32 2475754826, %v5367
        %v5371 = vor.u32 %v5369, %v5370
        %v5372 = vshll.u32 2475754826, %v5366
        %v5373 = vshrl.u32 2131351028, %v5367
        %v5374 = vor.u32 %v5372, %v5373
        %v5375 = vshll.u32 2131351028, %v5366
        %v5376 = vshrl.u32 2102212464, %v5367
        %v5377 = vor.u32 %v5375, %v5376
        %v5378 = vshll.u32 2102212464, %v5366
        %v5379 = vshrl.u32 920167782, %v5367
        %v5380 = vor.u32 %v5378, %v5379
        %v5381 = vshll.u32 920167782, %v5366
        %v5382 = vshrl.u32 1326507024, %v5367
        %v5383 = vor.u32 %v5381, %v5382
        %vm5384 = vcmp.lt.s32.totalorder %v5365, 1
        %vm5385 = vcmp.lt.s32.totalorder %v5365, 2
        %vm5386 = vcmp.lt.s32.totalorder %v5365, 3
        %vm5387 = vcmp.lt.s32.totalorder %v5365, 4
        %v5388 = vsel %vm5384, %v5368, %v5371
        %v5389 = vsel %vm5387, %v5377, 2102212464
        %v5390 = vsel %vm5386, %v5374, %v5389
        %v5391 = vsel %vm5385, %v5388, %v5390
        %v5392 = vsel %vm5384, %v5371, %v5374
        %v5393 = vsel %vm5387, %v5380, 920167782
        %v5394 = vsel %vm5386, %v5377, %v5393
        %v5395 = vsel %vm5385, %v5392, %v5394
        %v5396 = vsel %vm5384, %v5374, %v5377
        %v5397 = vsel %vm5387, %v5383, 1326507024
        %v5398 = vsel %vm5386, %v5380, %v5397
        %v5399 = vsel %vm5385, %v5396, %v5398
        %v5400 = vshll.u32 %v5360, 8
        %v5401 = vmul.u32.u64.compose %v5400, %v5399
        %v5402 = vextract.low.u32 %v5401
        %v5403 = vextract.high.u32 %v5401
        %v5404 = vmul.u32.u64.compose %v5400, %v5395
        %v5405 = vextract.low.u32 %v5404
        %v5406 = vextract.high.u32 %v5404
        %v5407 = vmul.u32 %v5400, %v5391
        %v5408 = vadd.s32 %v5403, %v5405
        %vm5409 = vc.u32 %v5403, %v5405
        %v5410 = vadd.s32 %v5406, 1
        %v5411 = vsel %vm5409, %v5410, %v5406
        %v5412 = vadd.s32 %v5407, %v5411
        %v5413 = vadd.s32 %v5412, 536870912
        %v5414 = vshrl.u32 %v5413, 30
        %v5415 = vshll.u32 %v5414, 30
        %v5416 = vsub.s32 %v5412, %v5415
        %vm5417 = vcmp.lt.s32.totalorder %v5416, 0
        %v5418 = vsub.s32 0, %v5416
        %v5419 = vsel %vm5417, %v5418, %v5416
        %v5420 = vclz %v5419
        %v5421 = vsub.s32 %v5420, 2
        %vm5422 = vcmp.gt.s32.totalorder 0, %v5421
        %v5423 = vsel %vm5422, 0, %v5421
        %v5424 = vsub.s32 32, %v5423
        %v5425 = vshll.u32 %v5416, %v5423
        %v5426 = vshrl.u32 %v5408, %v5424
        %v5427 = vor.u32 %v5425, %v5426
        %v5428 = vsub.s32 4294967266, %v5423
        %v5429 = vadd.s32 %v5428, 127
        %v5430 = vshll.u32 %v5429, 23
        %v5431 = vor.u32 4788187, %v5430
        %v5432 = vand.u32 2147483647, %v5431
        %v5434 = vcvt.s32.f32 %v5427
        %v5435 = vmul.f32 %v5434, %v5432
        %v5436 = vxor.u32 %v5435, 2147483648
        %v5437 = vsel %vm5354, %v5436, %v5435
        %v5438 = vsub.s32 4, %v5414
        %v5439 = vsel %vm5354, %v5438, %v5414
        %v5440 = vsel %vm5353, %v1070, %v5437
        %v5441 = vsel %vm5353, 0, %v5439
        %v5442 = vcosq.f32.pop %v5440
        %v5443 = vsinq.f32.pop %v5440
        %vm5444 = vweird.f32 %v1070
        %v5445 = vand.u32 %v5441, 3
        %vm5446 = vcmp.lt.s32.totalorder %v5445, 2
        %vm5447 = vcmp.eq.s32.totalorder %v5445, 0
        %v5448 = vxor.u32 %v5443, 2147483648
        %v5449 = vsel %vm5447, %v5442, %v5448
        %vm5450 = vcmp.eq.s32.totalorder %v5445, 2
        %v5451 = vxor.u32 %v5442, 2147483648
        %v5452 = vsel %vm5450, %v5451, %v5443
        %v5453 = vsel %vm5446, %v5449, %v5452
        %v5454 = vsel %vm5444, nan, %v5453
        %v5455 = vand.u32 2147483647, %v1071
        %vm5456 = vcmp.le.f32.partialorder %v5455, 0.7853982
        %vm5457 = vcmp.lt.s32.totalorder %v1071, 0
        %v5458 = vand.u32 %v1071, 2139095040
        %v5459 = vshrl.u32 %v5458, 23
        %v5460 = vsub.s32 %v5459, 127
        %v5461 = vand.u32 2147483647, %v1071
        %v5462 = vand.u32 %v5461, 8388607
        %v5463 = vor.u32 %v5462, 8388608
        %v5464 = vsub.s32 0, %v5463
        %v5465 = vadd.s32 %v5460, 1
        %vm5466 = vcmp.gt.s32.totalorder %v5465, 0
        %v5467 = vsel %vm5466, %v5465, 0
        %v5468 = vshrl.u32 %v5467, 5
        %v5469 = vand.u32 %v5467, 31
        %v5470 = vsub.s32 32, %v5469
        %v5471 = vshrl.u32 683565275, %v5470
        %v5472 = vshll.u32 683565275, %v5469
        %v5473 = vshrl.u32 2475754826, %v5470
        %v5474 = vor.u32 %v5472, %v5473
        %v5475 = vshll.u32 2475754826, %v5469
        %v5476 = vshrl.u32 2131351028, %v5470
        %v5477 = vor.u32 %v5475, %v5476
        %v5478 = vshll.u32 2131351028, %v5469
        %v5479 = vshrl.u32 2102212464, %v5470
        %v5480 = vor.u32 %v5478, %v5479
        %v5481 = vshll.u32 2102212464, %v5469
        %v5482 = vshrl.u32 920167782, %v5470
        %v5483 = vor.u32 %v5481, %v5482
        %v5484 = vshll.u32 920167782, %v5469
        %v5485 = vshrl.u32 1326507024, %v5470
        %v5486 = vor.u32 %v5484, %v5485
        %vm5487 = vcmp.lt.s32.totalorder %v5468, 1
        %vm5488 = vcmp.lt.s32.totalorder %v5468, 2
        %vm5489 = vcmp.lt.s32.totalorder %v5468, 3
        %vm5490 = vcmp.lt.s32.totalorder %v5468, 4
        %v5491 = vsel %vm5487, %v5471, %v5474
        %v5492 = vsel %vm5490, %v5480, 2102212464
        %v5493 = vsel %vm5489, %v5477, %v5492
        %v5494 = vsel %vm5488, %v5491, %v5493
        %v5495 = vsel %vm5487, %v5474, %v5477
        %v5496 = vsel %vm5490, %v5483, 920167782
        %v5497 = vsel %vm5489, %v5480, %v5496
        %v5498 = vsel %vm5488, %v5495, %v5497
        %v5499 = vsel %vm5487, %v5477, %v5480
        %v5500 = vsel %vm5490, %v5486, 1326507024
        %v5501 = vsel %vm5489, %v5483, %v5500
        %v5502 = vsel %vm5488, %v5499, %v5501
        %v5503 = vshll.u32 %v5463, 8
        %v5504 = vmul.u32.u64.compose %v5503, %v5502
        %v5505 = vextract.low.u32 %v5504
        %v5506 = vextract.high.u32 %v5504
        %v5507 = vmul.u32.u64.compose %v5503, %v5498
        %v5508 = vextract.low.u32 %v5507
        %v5509 = vextract.high.u32 %v5507
        %v5510 = vmul.u32 %v5503, %v5494
        %v5511 = vadd.s32 %v5506, %v5508
        %vm5512 = vc.u32 %v5506, %v5508
        %v5513 = vadd.s32 %v5509, 1
        %v5514 = vsel %vm5512, %v5513, %v5509
        %v5515 = vadd.s32 %v5510, %v5514
        %v5516 = vadd.s32 %v5515, 536870912
        %v5517 = vshrl.u32 %v5516, 30
        %v5518 = vshll.u32 %v5517, 30
        %v5519 = vsub.s32 %v5515, %v5518
        %vm5520 = vcmp.lt.s32.totalorder %v5519, 0
        %v5521 = vsub.s32 0, %v5519
        %v5522 = vsel %vm5520, %v5521, %v5519
        %v5523 = vclz %v5522
        %v5524 = vsub.s32 %v5523, 2
        %vm5525 = vcmp.gt.s32.totalorder 0, %v5524
        %v5526 = vsel %vm5525, 0, %v5524
        %v5527 = vsub.s32 32, %v5526
        %v5528 = vshll.u32 %v5519, %v5526
        %v5529 = vshrl.u32 %v5511, %v5527
        %v5530 = vor.u32 %v5528, %v5529
        %v5531 = vsub.s32 4294967266, %v5526
        %v5532 = vadd.s32 %v5531, 127
        %v5533 = vshll.u32 %v5532, 23
        %v5534 = vor.u32 4788187, %v5533
        %v5535 = vand.u32 2147483647, %v5534
        %v5537 = vcvt.s32.f32 %v5530
        %v5538 = vmul.f32 %v5537, %v5535
        %v5539 = vxor.u32 %v5538, 2147483648
        %v5540 = vsel %vm5457, %v5539, %v5538
        %v5541 = vsub.s32 4, %v5517
        %v5542 = vsel %vm5457, %v5541, %v5517
        %v5543 = vsel %vm5456, %v1071, %v5540
        %v5544 = vsel %vm5456, 0, %v5542
        %v5545 = vcosq.f32.pop %v5543
        %v5546 = vsinq.f32.pop %v5543
        %vm5547 = vweird.f32 %v1071
        %v5548 = vand.u32 %v5544, 3
        %vm5549 = vcmp.lt.s32.totalorder %v5548, 2
        %vm5550 = vcmp.eq.s32.totalorder %v5548, 0
        %v5551 = vxor.u32 %v5546, 2147483648
        %v5552 = vsel %vm5550, %v5545, %v5551
        %vm5553 = vcmp.eq.s32.totalorder %v5548, 2
        %v5554 = vxor.u32 %v5545, 2147483648
        %v5555 = vsel %vm5553, %v5554, %v5546
        %v5556 = vsel %vm5549, %v5552, %v5555
        %v5557 = vsel %vm5547, nan, %v5556
        %v5558 = vand.u32 2147483647, %v1072
        %vm5559 = vcmp.le.f32.partialorder %v5558, 0.7853982
        %vm5560 = vcmp.lt.s32.totalorder %v1072, 0
        %v5561 = vand.u32 %v1072, 2139095040
        %v5562 = vshrl.u32 %v5561, 23
        %v5563 = vsub.s32 %v5562, 127
        %v5564 = vand.u32 2147483647, %v1072
        %v5565 = vand.u32 %v5564, 8388607
        %v5566 = vor.u32 %v5565, 8388608
        %v5567 = vsub.s32 0, %v5566
        %v5568 = vadd.s32 %v5563, 1
        %vm5569 = vcmp.gt.s32.totalorder %v5568, 0
        %v5570 = vsel %vm5569, %v5568, 0
        %v5571 = vshrl.u32 %v5570, 5
        %v5572 = vand.u32 %v5570, 31
        %v5573 = vsub.s32 32, %v5572
        %v5574 = vshrl.u32 683565275, %v5573
        %v5575 = vshll.u32 683565275, %v5572
        %v5576 = vshrl.u32 2475754826, %v5573
        %v5577 = vor.u32 %v5575, %v5576
        %v5578 = vshll.u32 2475754826, %v5572
        %v5579 = vshrl.u32 2131351028, %v5573
        %v5580 = vor.u32 %v5578, %v5579
        %v5581 = vshll.u32 2131351028, %v5572
        %v5582 = vshrl.u32 2102212464, %v5573
        %v5583 = vor.u32 %v5581, %v5582
        %v5584 = vshll.u32 2102212464, %v5572
        %v5585 = vshrl.u32 920167782, %v5573
        %v5586 = vor.u32 %v5584, %v5585
        %v5587 = vshll.u32 920167782, %v5572
        %v5588 = vshrl.u32 1326507024, %v5573
        %v5589 = vor.u32 %v5587, %v5588
        %vm5590 = vcmp.lt.s32.totalorder %v5571, 1
        %vm5591 = vcmp.lt.s32.totalorder %v5571, 2
        %vm5592 = vcmp.lt.s32.totalorder %v5571, 3
        %vm5593 = vcmp.lt.s32.totalorder %v5571, 4
        %v5594 = vsel %vm5590, %v5574, %v5577
        %v5595 = vsel %vm5593, %v5583, 2102212464
        %v5596 = vsel %vm5592, %v5580, %v5595
        %v5597 = vsel %vm5591, %v5594, %v5596
        %v5598 = vsel %vm5590, %v5577, %v5580
        %v5599 = vsel %vm5593, %v5586, 920167782
        %v5600 = vsel %vm5592, %v5583, %v5599
        %v5601 = vsel %vm5591, %v5598, %v5600
        %v5602 = vsel %vm5590, %v5580, %v5583
        %v5603 = vsel %vm5593, %v5589, 1326507024
        %v5604 = vsel %vm5592, %v5586, %v5603
        %v5605 = vsel %vm5591, %v5602, %v5604
        %v5606 = vshll.u32 %v5566, 8
        %v5607 = vmul.u32.u64.compose %v5606, %v5605
        %v5608 = vextract.low.u32 %v5607
        %v5609 = vextract.high.u32 %v5607
        %v5610 = vmul.u32.u64.compose %v5606, %v5601
        %v5611 = vextract.low.u32 %v5610
        %v5612 = vextract.high.u32 %v5610
        %v5613 = vmul.u32 %v5606, %v5597
        %v5614 = vadd.s32 %v5609, %v5611
        %vm5615 = vc.u32 %v5609, %v5611
        %v5616 = vadd.s32 %v5612, 1
        %v5617 = vsel %vm5615, %v5616, %v5612
        %v5618 = vadd.s32 %v5613, %v5617
        %v5619 = vadd.s32 %v5618, 536870912
        %v5620 = vshrl.u32 %v5619, 30
        %v5621 = vshll.u32 %v5620, 30
        %v5622 = vsub.s32 %v5618, %v5621
        %vm5623 = vcmp.lt.s32.totalorder %v5622, 0
        %v5624 = vsub.s32 0, %v5622
        %v5625 = vsel %vm5623, %v5624, %v5622
        %v5626 = vclz %v5625
        %v5627 = vsub.s32 %v5626, 2
        %vm5628 = vcmp.gt.s32.totalorder 0, %v5627
        %v5629 = vsel %vm5628, 0, %v5627
        %v5630 = vsub.s32 32, %v5629
        %v5631 = vshll.u32 %v5622, %v5629
        %v5632 = vshrl.u32 %v5614, %v5630
        %v5633 = vor.u32 %v5631, %v5632
        %v5634 = vsub.s32 4294967266, %v5629
        %v5635 = vadd.s32 %v5634, 127
        %v5636 = vshll.u32 %v5635, 23
        %v5637 = vor.u32 4788187, %v5636
        %v5638 = vand.u32 2147483647, %v5637
        %v5640 = vcvt.s32.f32 %v5633
        %v5641 = vmul.f32 %v5640, %v5638
        %v5642 = vxor.u32 %v5641, 2147483648
        %v5643 = vsel %vm5560, %v5642, %v5641
        %v5644 = vsub.s32 4, %v5620
        %v5645 = vsel %vm5560, %v5644, %v5620
        %v5646 = vsel %vm5559, %v1072, %v5643
        %v5647 = vsel %vm5559, 0, %v5645
        %v5648 = vcosq.f32.pop %v5646
        %v5649 = vsinq.f32.pop %v5646
        %vm5650 = vweird.f32 %v1072
        %v5651 = vand.u32 %v5647, 3
        %vm5652 = vcmp.lt.s32.totalorder %v5651, 2
        %vm5653 = vcmp.eq.s32.totalorder %v5651, 0
        %v5654 = vxor.u32 %v5649, 2147483648
        %v5655 = vsel %vm5653, %v5648, %v5654
        %vm5656 = vcmp.eq.s32.totalorder %v5651, 2
        %v5657 = vxor.u32 %v5648, 2147483648
        %v5658 = vsel %vm5656, %v5657, %v5649
        %v5659 = vsel %vm5652, %v5655, %v5658
        %v5660 = vsel %vm5650, nan, %v5659
        %v5661 = vand.u32 2147483647, %v1073
        %vm5662 = vcmp.le.f32.partialorder %v5661, 0.7853982
        %vm5663 = vcmp.lt.s32.totalorder %v1073, 0
        %v5664 = vand.u32 %v1073, 2139095040
        %v5665 = vshrl.u32 %v5664, 23
        %v5666 = vsub.s32 %v5665, 127
        %v5667 = vand.u32 2147483647, %v1073
        %v5668 = vand.u32 %v5667, 8388607
        %v5669 = vor.u32 %v5668, 8388608
        %v5670 = vsub.s32 0, %v5669
        %v5671 = vadd.s32 %v5666, 1
        %vm5672 = vcmp.gt.s32.totalorder %v5671, 0
        %v5673 = vsel %vm5672, %v5671, 0
        %v5674 = vshrl.u32 %v5673, 5
        %v5675 = vand.u32 %v5673, 31
        %v5676 = vsub.s32 32, %v5675
        %v5677 = vshrl.u32 683565275, %v5676
        %v5678 = vshll.u32 683565275, %v5675
        %v5679 = vshrl.u32 2475754826, %v5676
        %v5680 = vor.u32 %v5678, %v5679
        %v5681 = vshll.u32 2475754826, %v5675
        %v5682 = vshrl.u32 2131351028, %v5676
        %v5683 = vor.u32 %v5681, %v5682
        %v5684 = vshll.u32 2131351028, %v5675
        %v5685 = vshrl.u32 2102212464, %v5676
        %v5686 = vor.u32 %v5684, %v5685
        %v5687 = vshll.u32 2102212464, %v5675
        %v5688 = vshrl.u32 920167782, %v5676
        %v5689 = vor.u32 %v5687, %v5688
        %v5690 = vshll.u32 920167782, %v5675
        %v5691 = vshrl.u32 1326507024, %v5676
        %v5692 = vor.u32 %v5690, %v5691
        %vm5693 = vcmp.lt.s32.totalorder %v5674, 1
        %vm5694 = vcmp.lt.s32.totalorder %v5674, 2
        %vm5695 = vcmp.lt.s32.totalorder %v5674, 3
        %vm5696 = vcmp.lt.s32.totalorder %v5674, 4
        %v5697 = vsel %vm5693, %v5677, %v5680
        %v5698 = vsel %vm5696, %v5686, 2102212464
        %v5699 = vsel %vm5695, %v5683, %v5698
        %v5700 = vsel %vm5694, %v5697, %v5699
        %v5701 = vsel %vm5693, %v5680, %v5683
        %v5702 = vsel %vm5696, %v5689, 920167782
        %v5703 = vsel %vm5695, %v5686, %v5702
        %v5704 = vsel %vm5694, %v5701, %v5703
        %v5705 = vsel %vm5693, %v5683, %v5686
        %v5706 = vsel %vm5696, %v5692, 1326507024
        %v5707 = vsel %vm5695, %v5689, %v5706
        %v5708 = vsel %vm5694, %v5705, %v5707
        %v5709 = vshll.u32 %v5669, 8
        %v5710 = vmul.u32.u64.compose %v5709, %v5708
        %v5711 = vextract.low.u32 %v5710
        %v5712 = vextract.high.u32 %v5710
        %v5713 = vmul.u32.u64.compose %v5709, %v5704
        %v5714 = vextract.low.u32 %v5713
        %v5715 = vextract.high.u32 %v5713
        %v5716 = vmul.u32 %v5709, %v5700
        %v5717 = vadd.s32 %v5712, %v5714
        %vm5718 = vc.u32 %v5712, %v5714
        %v5719 = vadd.s32 %v5715, 1
        %v5720 = vsel %vm5718, %v5719, %v5715
        %v5721 = vadd.s32 %v5716, %v5720
        %v5722 = vadd.s32 %v5721, 536870912
        %v5723 = vshrl.u32 %v5722, 30
        %v5724 = vshll.u32 %v5723, 30
        %v5725 = vsub.s32 %v5721, %v5724
        %vm5726 = vcmp.lt.s32.totalorder %v5725, 0
        %v5727 = vsub.s32 0, %v5725
        %v5728 = vsel %vm5726, %v5727, %v5725
        %v5729 = vclz %v5728
        %v5730 = vsub.s32 %v5729, 2
        %vm5731 = vcmp.gt.s32.totalorder 0, %v5730
        %v5732 = vsel %vm5731, 0, %v5730
        %v5733 = vsub.s32 32, %v5732
        %v5734 = vshll.u32 %v5725, %v5732
        %v5735 = vshrl.u32 %v5717, %v5733
        %v5736 = vor.u32 %v5734, %v5735
        %v5737 = vsub.s32 4294967266, %v5732
        %v5738 = vadd.s32 %v5737, 127
        %v5739 = vshll.u32 %v5738, 23
        %v5740 = vor.u32 4788187, %v5739
        %v5741 = vand.u32 2147483647, %v5740
        %v5743 = vcvt.s32.f32 %v5736
        %v5744 = vmul.f32 %v5743, %v5741
        %v5745 = vxor.u32 %v5744, 2147483648
        %v5746 = vsel %vm5663, %v5745, %v5744
        %v5747 = vsub.s32 4, %v5723
        %v5748 = vsel %vm5663, %v5747, %v5723
        %v5749 = vsel %vm5662, %v1073, %v5746
        %v5750 = vsel %vm5662, 0, %v5748
        %v5751 = vcosq.f32.pop %v5749
        %v5752 = vsinq.f32.pop %v5749
        %vm5753 = vweird.f32 %v1073
        %v5754 = vand.u32 %v5750, 3
        %vm5755 = vcmp.lt.s32.totalorder %v5754, 2
        %vm5756 = vcmp.eq.s32.totalorder %v5754, 0
        %v5757 = vxor.u32 %v5752, 2147483648
        %v5758 = vsel %vm5756, %v5751, %v5757
        %vm5759 = vcmp.eq.s32.totalorder %v5754, 2
        %v5760 = vxor.u32 %v5751, 2147483648
        %v5761 = vsel %vm5759, %v5760, %v5752
        %v5762 = vsel %vm5755, %v5758, %v5761
        %v5763 = vsel %vm5753, nan, %v5762
        %v5764 = vand.u32 2147483647, %v1074
        %vm5765 = vcmp.le.f32.partialorder %v5764, 0.7853982
        %vm5766 = vcmp.lt.s32.totalorder %v1074, 0
        %v5767 = vand.u32 %v1074, 2139095040
        %v5768 = vshrl.u32 %v5767, 23
        %v5769 = vsub.s32 %v5768, 127
        %v5770 = vand.u32 2147483647, %v1074
        %v5771 = vand.u32 %v5770, 8388607
        %v5772 = vor.u32 %v5771, 8388608
        %v5773 = vsub.s32 0, %v5772
        %v5774 = vadd.s32 %v5769, 1
        %vm5775 = vcmp.gt.s32.totalorder %v5774, 0
        %v5776 = vsel %vm5775, %v5774, 0
        %v5777 = vshrl.u32 %v5776, 5
        %v5778 = vand.u32 %v5776, 31
        %v5779 = vsub.s32 32, %v5778
        %v5780 = vshrl.u32 683565275, %v5779
        %v5781 = vshll.u32 683565275, %v5778
        %v5782 = vshrl.u32 2475754826, %v5779
        %v5783 = vor.u32 %v5781, %v5782
        %v5784 = vshll.u32 2475754826, %v5778
        %v5785 = vshrl.u32 2131351028, %v5779
        %v5786 = vor.u32 %v5784, %v5785
        %v5787 = vshll.u32 2131351028, %v5778
        %v5788 = vshrl.u32 2102212464, %v5779
        %v5789 = vor.u32 %v5787, %v5788
        %v5790 = vshll.u32 2102212464, %v5778
        %v5791 = vshrl.u32 920167782, %v5779
        %v5792 = vor.u32 %v5790, %v5791
        %v5793 = vshll.u32 920167782, %v5778
        %v5794 = vshrl.u32 1326507024, %v5779
        %v5795 = vor.u32 %v5793, %v5794
        %vm5796 = vcmp.lt.s32.totalorder %v5777, 1
        %vm5797 = vcmp.lt.s32.totalorder %v5777, 2
        %vm5798 = vcmp.lt.s32.totalorder %v5777, 3
        %vm5799 = vcmp.lt.s32.totalorder %v5777, 4
        %v5800 = vsel %vm5796, %v5780, %v5783
        %v5801 = vsel %vm5799, %v5789, 2102212464
        %v5802 = vsel %vm5798, %v5786, %v5801
        %v5803 = vsel %vm5797, %v5800, %v5802
        %v5804 = vsel %vm5796, %v5783, %v5786
        %v5805 = vsel %vm5799, %v5792, 920167782
        %v5806 = vsel %vm5798, %v5789, %v5805
        %v5807 = vsel %vm5797, %v5804, %v5806
        %v5808 = vsel %vm5796, %v5786, %v5789
        %v5809 = vsel %vm5799, %v5795, 1326507024
        %v5810 = vsel %vm5798, %v5792, %v5809
        %v5811 = vsel %vm5797, %v5808, %v5810
        %v5812 = vshll.u32 %v5772, 8
        %v5813 = vmul.u32.u64.compose %v5812, %v5811
        %v5814 = vextract.low.u32 %v5813
        %v5815 = vextract.high.u32 %v5813
        %v5816 = vmul.u32.u64.compose %v5812, %v5807
        %v5817 = vextract.low.u32 %v5816
        %v5818 = vextract.high.u32 %v5816
        %v5819 = vmul.u32 %v5812, %v5803
        %v5820 = vadd.s32 %v5815, %v5817
        %vm5821 = vc.u32 %v5815, %v5817
        %v5822 = vadd.s32 %v5818, 1
        %v5823 = vsel %vm5821, %v5822, %v5818
        %v5824 = vadd.s32 %v5819, %v5823
        %v5825 = vadd.s32 %v5824, 536870912
        %v5826 = vshrl.u32 %v5825, 30
        %v5827 = vshll.u32 %v5826, 30
        %v5828 = vsub.s32 %v5824, %v5827
        %vm5829 = vcmp.lt.s32.totalorder %v5828, 0
        %v5830 = vsub.s32 0, %v5828
        %v5831 = vsel %vm5829, %v5830, %v5828
        %v5832 = vclz %v5831
        %v5833 = vsub.s32 %v5832, 2
        %vm5834 = vcmp.gt.s32.totalorder 0, %v5833
        %v5835 = vsel %vm5834, 0, %v5833
        %v5836 = vsub.s32 32, %v5835
        %v5837 = vshll.u32 %v5828, %v5835
        %v5838 = vshrl.u32 %v5820, %v5836
        %v5839 = vor.u32 %v5837, %v5838
        %v5840 = vsub.s32 4294967266, %v5835
        %v5841 = vadd.s32 %v5840, 127
        %v5842 = vshll.u32 %v5841, 23
        %v5843 = vor.u32 4788187, %v5842
        %v5844 = vand.u32 2147483647, %v5843
        %v5846 = vcvt.s32.f32 %v5839
        %v5847 = vmul.f32 %v5846, %v5844
        %v5848 = vxor.u32 %v5847, 2147483648
        %v5849 = vsel %vm5766, %v5848, %v5847
        %v5850 = vsub.s32 4, %v5826
        %v5851 = vsel %vm5766, %v5850, %v5826
        %v5852 = vsel %vm5765, %v1074, %v5849
        %v5853 = vsel %vm5765, 0, %v5851
        %v5854 = vcosq.f32.pop %v5852
        %v5855 = vsinq.f32.pop %v5852
        %vm5856 = vweird.f32 %v1074
        %v5857 = vand.u32 %v5853, 3
        %vm5858 = vcmp.lt.s32.totalorder %v5857, 2
        %vm5859 = vcmp.eq.s32.totalorder %v5857, 0
        %v5860 = vxor.u32 %v5855, 2147483648
        %v5861 = vsel %vm5859, %v5854, %v5860
        %vm5862 = vcmp.eq.s32.totalorder %v5857, 2
        %v5863 = vxor.u32 %v5854, 2147483648
        %v5864 = vsel %vm5862, %v5863, %v5855
        %v5865 = vsel %vm5858, %v5861, %v5864
        %v5866 = vsel %vm5856, nan, %v5865
        %v5867 = vand.u32 2147483647, %v1075
        %vm5868 = vcmp.le.f32.partialorder %v5867, 0.7853982
        %vm5869 = vcmp.lt.s32.totalorder %v1075, 0
        %v5870 = vand.u32 %v1075, 2139095040
        %v5871 = vshrl.u32 %v5870, 23
        %v5872 = vsub.s32 %v5871, 127
        %v5873 = vand.u32 2147483647, %v1075
        %v5874 = vand.u32 %v5873, 8388607
        %v5875 = vor.u32 %v5874, 8388608
        %v5876 = vsub.s32 0, %v5875
        %v5877 = vadd.s32 %v5872, 1
        %vm5878 = vcmp.gt.s32.totalorder %v5877, 0
        %v5879 = vsel %vm5878, %v5877, 0
        %v5880 = vshrl.u32 %v5879, 5
        %v5881 = vand.u32 %v5879, 31
        %v5882 = vsub.s32 32, %v5881
        %v5883 = vshrl.u32 683565275, %v5882
        %v5884 = vshll.u32 683565275, %v5881
        %v5885 = vshrl.u32 2475754826, %v5882
        %v5886 = vor.u32 %v5884, %v5885
        %v5887 = vshll.u32 2475754826, %v5881
        %v5888 = vshrl.u32 2131351028, %v5882
        %v5889 = vor.u32 %v5887, %v5888
        %v5890 = vshll.u32 2131351028, %v5881
        %v5891 = vshrl.u32 2102212464, %v5882
        %v5892 = vor.u32 %v5890, %v5891
        %v5893 = vshll.u32 2102212464, %v5881
        %v5894 = vshrl.u32 920167782, %v5882
        %v5895 = vor.u32 %v5893, %v5894
        %v5896 = vshll.u32 920167782, %v5881
        %v5897 = vshrl.u32 1326507024, %v5882
        %v5898 = vor.u32 %v5896, %v5897
        %vm5899 = vcmp.lt.s32.totalorder %v5880, 1
        %vm5900 = vcmp.lt.s32.totalorder %v5880, 2
        %vm5901 = vcmp.lt.s32.totalorder %v5880, 3
        %vm5902 = vcmp.lt.s32.totalorder %v5880, 4
        %v5903 = vsel %vm5899, %v5883, %v5886
        %v5904 = vsel %vm5902, %v5892, 2102212464
        %v5905 = vsel %vm5901, %v5889, %v5904
        %v5906 = vsel %vm5900, %v5903, %v5905
        %v5907 = vsel %vm5899, %v5886, %v5889
        %v5908 = vsel %vm5902, %v5895, 920167782
        %v5909 = vsel %vm5901, %v5892, %v5908
        %v5910 = vsel %vm5900, %v5907, %v5909
        %v5911 = vsel %vm5899, %v5889, %v5892
        %v5912 = vsel %vm5902, %v5898, 1326507024
        %v5913 = vsel %vm5901, %v5895, %v5912
        %v5914 = vsel %vm5900, %v5911, %v5913
        %v5915 = vshll.u32 %v5875, 8
        %v5916 = vmul.u32.u64.compose %v5915, %v5914
        %v5917 = vextract.low.u32 %v5916
        %v5918 = vextract.high.u32 %v5916
        %v5919 = vmul.u32.u64.compose %v5915, %v5910
        %v5920 = vextract.low.u32 %v5919
        %v5921 = vextract.high.u32 %v5919
        %v5922 = vmul.u32 %v5915, %v5906
        %v5923 = vadd.s32 %v5918, %v5920
        %vm5924 = vc.u32 %v5918, %v5920
        %v5925 = vadd.s32 %v5921, 1
        %v5926 = vsel %vm5924, %v5925, %v5921
        %v5927 = vadd.s32 %v5922, %v5926
        %v5928 = vadd.s32 %v5927, 536870912
        %v5929 = vshrl.u32 %v5928, 30
        %v5930 = vshll.u32 %v5929, 30
        %v5931 = vsub.s32 %v5927, %v5930
        %vm5932 = vcmp.lt.s32.totalorder %v5931, 0
        %v5933 = vsub.s32 0, %v5931
        %v5934 = vsel %vm5932, %v5933, %v5931
        %v5935 = vclz %v5934
        %v5936 = vsub.s32 %v5935, 2
        %vm5937 = vcmp.gt.s32.totalorder 0, %v5936
        %v5938 = vsel %vm5937, 0, %v5936
        %v5939 = vsub.s32 32, %v5938
        %v5940 = vshll.u32 %v5931, %v5938
        %v5941 = vshrl.u32 %v5923, %v5939
        %v5942 = vor.u32 %v5940, %v5941
        %v5943 = vsub.s32 4294967266, %v5938
        %v5944 = vadd.s32 %v5943, 127
        %v5945 = vshll.u32 %v5944, 23
        %v5946 = vor.u32 4788187, %v5945
        %v5947 = vand.u32 2147483647, %v5946
        %v5949 = vcvt.s32.f32 %v5942
        %v5950 = vmul.f32 %v5949, %v5947
        %v5951 = vxor.u32 %v5950, 2147483648
        %v5952 = vsel %vm5869, %v5951, %v5950
        %v5953 = vsub.s32 4, %v5929
        %v5954 = vsel %vm5869, %v5953, %v5929
        %v5955 = vsel %vm5868, %v1075, %v5952
        %v5956 = vsel %vm5868, 0, %v5954
        %v5957 = vcosq.f32.pop %v5955
        %v5958 = vsinq.f32.pop %v5955
        %vm5959 = vweird.f32 %v1075
        %v5960 = vand.u32 %v5956, 3
        %vm5961 = vcmp.lt.s32.totalorder %v5960, 2
        %vm5962 = vcmp.eq.s32.totalorder %v5960, 0
        %v5963 = vxor.u32 %v5958, 2147483648
        %v5964 = vsel %vm5962, %v5957, %v5963
        %vm5965 = vcmp.eq.s32.totalorder %v5960, 2
        %v5966 = vxor.u32 %v5957, 2147483648
        %v5967 = vsel %vm5965, %v5966, %v5958
        %v5968 = vsel %vm5961, %v5964, %v5967
        %v5969 = vsel %vm5959, nan, %v5968
        %v5970 = vand.u32 2147483647, %v1076
        %vm5971 = vcmp.le.f32.partialorder %v5970, 0.7853982
        %vm5972 = vcmp.lt.s32.totalorder %v1076, 0
        %v5973 = vand.u32 %v1076, 2139095040
        %v5974 = vshrl.u32 %v5973, 23
        %v5975 = vsub.s32 %v5974, 127
        %v5976 = vand.u32 2147483647, %v1076
        %v5977 = vand.u32 %v5976, 8388607
        %v5978 = vor.u32 %v5977, 8388608
        %v5979 = vsub.s32 0, %v5978
        %v5980 = vadd.s32 %v5975, 1
        %vm5981 = vcmp.gt.s32.totalorder %v5980, 0
        %v5982 = vsel %vm5981, %v5980, 0
        %v5983 = vshrl.u32 %v5982, 5
        %v5984 = vand.u32 %v5982, 31
        %v5985 = vsub.s32 32, %v5984
        %v5986 = vshrl.u32 683565275, %v5985
        %v5987 = vshll.u32 683565275, %v5984
        %v5988 = vshrl.u32 2475754826, %v5985
        %v5989 = vor.u32 %v5987, %v5988
        %v5990 = vshll.u32 2475754826, %v5984
        %v5991 = vshrl.u32 2131351028, %v5985
        %v5992 = vor.u32 %v5990, %v5991
        %v5993 = vshll.u32 2131351028, %v5984
        %v5994 = vshrl.u32 2102212464, %v5985
        %v5995 = vor.u32 %v5993, %v5994
        %v5996 = vshll.u32 2102212464, %v5984
        %v5997 = vshrl.u32 920167782, %v5985
        %v5998 = vor.u32 %v5996, %v5997
        %v5999 = vshll.u32 920167782, %v5984
        %v6000 = vshrl.u32 1326507024, %v5985
        %v6001 = vor.u32 %v5999, %v6000
        %vm6002 = vcmp.lt.s32.totalorder %v5983, 1
        %vm6003 = vcmp.lt.s32.totalorder %v5983, 2
        %vm6004 = vcmp.lt.s32.totalorder %v5983, 3
        %vm6005 = vcmp.lt.s32.totalorder %v5983, 4
        %v6006 = vsel %vm6002, %v5986, %v5989
        %v6007 = vsel %vm6005, %v5995, 2102212464
        %v6008 = vsel %vm6004, %v5992, %v6007
        %v6009 = vsel %vm6003, %v6006, %v6008
        %v6010 = vsel %vm6002, %v5989, %v5992
        %v6011 = vsel %vm6005, %v5998, 920167782
        %v6012 = vsel %vm6004, %v5995, %v6011
        %v6013 = vsel %vm6003, %v6010, %v6012
        %v6014 = vsel %vm6002, %v5992, %v5995
        %v6015 = vsel %vm6005, %v6001, 1326507024
        %v6016 = vsel %vm6004, %v5998, %v6015
        %v6017 = vsel %vm6003, %v6014, %v6016
        %v6018 = vshll.u32 %v5978, 8
        %v6019 = vmul.u32.u64.compose %v6018, %v6017
        %v6020 = vextract.low.u32 %v6019
        %v6021 = vextract.high.u32 %v6019
        %v6022 = vmul.u32.u64.compose %v6018, %v6013
        %v6023 = vextract.low.u32 %v6022
        %v6024 = vextract.high.u32 %v6022
        %v6025 = vmul.u32 %v6018, %v6009
        %v6026 = vadd.s32 %v6021, %v6023
        %vm6027 = vc.u32 %v6021, %v6023
        %v6028 = vadd.s32 %v6024, 1
        %v6029 = vsel %vm6027, %v6028, %v6024
        %v6030 = vadd.s32 %v6025, %v6029
        %v6031 = vadd.s32 %v6030, 536870912
        %v6032 = vshrl.u32 %v6031, 30
        %v6033 = vshll.u32 %v6032, 30
        %v6034 = vsub.s32 %v6030, %v6033
        %vm6035 = vcmp.lt.s32.totalorder %v6034, 0
        %v6036 = vsub.s32 0, %v6034
        %v6037 = vsel %vm6035, %v6036, %v6034
        %v6038 = vclz %v6037
        %v6039 = vsub.s32 %v6038, 2
        %vm6040 = vcmp.gt.s32.totalorder 0, %v6039
        %v6041 = vsel %vm6040, 0, %v6039
        %v6042 = vsub.s32 32, %v6041
        %v6043 = vshll.u32 %v6034, %v6041
        %v6044 = vshrl.u32 %v6026, %v6042
        %v6045 = vor.u32 %v6043, %v6044
        %v6046 = vsub.s32 4294967266, %v6041
        %v6047 = vadd.s32 %v6046, 127
        %v6048 = vshll.u32 %v6047, 23
        %v6049 = vor.u32 4788187, %v6048
        %v6050 = vand.u32 2147483647, %v6049
        %v6052 = vcvt.s32.f32 %v6045
        %v6053 = vmul.f32 %v6052, %v6050
        %v6054 = vxor.u32 %v6053, 2147483648
        %v6055 = vsel %vm5972, %v6054, %v6053
        %v6056 = vsub.s32 4, %v6032
        %v6057 = vsel %vm5972, %v6056, %v6032
        %v6058 = vsel %vm5971, %v1076, %v6055
        %v6059 = vsel %vm5971, 0, %v6057
        %v6060 = vcosq.f32.pop %v6058
        %v6061 = vsinq.f32.pop %v6058
        %vm6062 = vweird.f32 %v1076
        %v6063 = vand.u32 %v6059, 3
        %vm6064 = vcmp.lt.s32.totalorder %v6063, 2
        %vm6065 = vcmp.eq.s32.totalorder %v6063, 0
        %v6066 = vxor.u32 %v6061, 2147483648
        %v6067 = vsel %vm6065, %v6060, %v6066
        %vm6068 = vcmp.eq.s32.totalorder %v6063, 2
        %v6069 = vxor.u32 %v6060, 2147483648
        %v6070 = vsel %vm6068, %v6069, %v6061
        %v6071 = vsel %vm6064, %v6067, %v6070
        %v6072 = vsel %vm6062, nan, %v6071
        %v6073 = vand.u32 2147483647, %v1077
        %vm6074 = vcmp.le.f32.partialorder %v6073, 0.7853982
        %vm6075 = vcmp.lt.s32.totalorder %v1077, 0
        %v6076 = vand.u32 %v1077, 2139095040
        %v6077 = vshrl.u32 %v6076, 23
        %v6078 = vsub.s32 %v6077, 127
        %v6079 = vand.u32 2147483647, %v1077
        %v6080 = vand.u32 %v6079, 8388607
        %v6081 = vor.u32 %v6080, 8388608
        %v6082 = vsub.s32 0, %v6081
        %v6083 = vadd.s32 %v6078, 1
        %vm6084 = vcmp.gt.s32.totalorder %v6083, 0
        %v6085 = vsel %vm6084, %v6083, 0
        %v6086 = vshrl.u32 %v6085, 5
        %v6087 = vand.u32 %v6085, 31
        %v6088 = vsub.s32 32, %v6087
        %v6089 = vshrl.u32 683565275, %v6088
        %v6090 = vshll.u32 683565275, %v6087
        %v6091 = vshrl.u32 2475754826, %v6088
        %v6092 = vor.u32 %v6090, %v6091
        %v6093 = vshll.u32 2475754826, %v6087
        %v6094 = vshrl.u32 2131351028, %v6088
        %v6095 = vor.u32 %v6093, %v6094
        %v6096 = vshll.u32 2131351028, %v6087
        %v6097 = vshrl.u32 2102212464, %v6088
        %v6098 = vor.u32 %v6096, %v6097
        %v6099 = vshll.u32 2102212464, %v6087
        %v6100 = vshrl.u32 920167782, %v6088
        %v6101 = vor.u32 %v6099, %v6100
        %v6102 = vshll.u32 920167782, %v6087
        %v6103 = vshrl.u32 1326507024, %v6088
        %v6104 = vor.u32 %v6102, %v6103
        %vm6105 = vcmp.lt.s32.totalorder %v6086, 1
        %vm6106 = vcmp.lt.s32.totalorder %v6086, 2
        %vm6107 = vcmp.lt.s32.totalorder %v6086, 3
        %vm6108 = vcmp.lt.s32.totalorder %v6086, 4
        %v6109 = vsel %vm6105, %v6089, %v6092
        %v6110 = vsel %vm6108, %v6098, 2102212464
        %v6111 = vsel %vm6107, %v6095, %v6110
        %v6112 = vsel %vm6106, %v6109, %v6111
        %v6113 = vsel %vm6105, %v6092, %v6095
        %v6114 = vsel %vm6108, %v6101, 920167782
        %v6115 = vsel %vm6107, %v6098, %v6114
        %v6116 = vsel %vm6106, %v6113, %v6115
        %v6117 = vsel %vm6105, %v6095, %v6098
        %v6118 = vsel %vm6108, %v6104, 1326507024
        %v6119 = vsel %vm6107, %v6101, %v6118
        %v6120 = vsel %vm6106, %v6117, %v6119
        %v6121 = vshll.u32 %v6081, 8
        %v6122 = vmul.u32.u64.compose %v6121, %v6120
        %v6123 = vextract.low.u32 %v6122
        %v6124 = vextract.high.u32 %v6122
        %v6125 = vmul.u32.u64.compose %v6121, %v6116
        %v6126 = vextract.low.u32 %v6125
        %v6127 = vextract.high.u32 %v6125
        %v6128 = vmul.u32 %v6121, %v6112
        %v6129 = vadd.s32 %v6124, %v6126
        %vm6130 = vc.u32 %v6124, %v6126
        %v6131 = vadd.s32 %v6127, 1
        %v6132 = vsel %vm6130, %v6131, %v6127
        %v6133 = vadd.s32 %v6128, %v6132
        %v6134 = vadd.s32 %v6133, 536870912
        %v6135 = vshrl.u32 %v6134, 30
        %v6136 = vshll.u32 %v6135, 30
        %v6137 = vsub.s32 %v6133, %v6136
        %vm6138 = vcmp.lt.s32.totalorder %v6137, 0
        %v6139 = vsub.s32 0, %v6137
        %v6140 = vsel %vm6138, %v6139, %v6137
        %v6141 = vclz %v6140
        %v6142 = vsub.s32 %v6141, 2
        %vm6143 = vcmp.gt.s32.totalorder 0, %v6142
        %v6144 = vsel %vm6143, 0, %v6142
        %v6145 = vsub.s32 32, %v6144
        %v6146 = vshll.u32 %v6137, %v6144
        %v6147 = vshrl.u32 %v6129, %v6145
        %v6148 = vor.u32 %v6146, %v6147
        %v6149 = vsub.s32 4294967266, %v6144
        %v6150 = vadd.s32 %v6149, 127
        %v6151 = vshll.u32 %v6150, 23
        %v6152 = vor.u32 4788187, %v6151
        %v6153 = vand.u32 2147483647, %v6152
        %v6155 = vcvt.s32.f32 %v6148
        %v6156 = vmul.f32 %v6155, %v6153
        %v6157 = vxor.u32 %v6156, 2147483648
        %v6158 = vsel %vm6075, %v6157, %v6156
        %v6159 = vsub.s32 4, %v6135
        %v6160 = vsel %vm6075, %v6159, %v6135
        %v6161 = vsel %vm6074, %v1077, %v6158
        %v6162 = vsel %vm6074, 0, %v6160
        %v6163 = vcosq.f32.pop %v6161
        %v6164 = vsinq.f32.pop %v6161
        %vm6165 = vweird.f32 %v1077
        %v6166 = vand.u32 %v6162, 3
        %vm6167 = vcmp.lt.s32.totalorder %v6166, 2
        %vm6168 = vcmp.eq.s32.totalorder %v6166, 0
        %v6169 = vxor.u32 %v6164, 2147483648
        %v6170 = vsel %vm6168, %v6163, %v6169
        %vm6171 = vcmp.eq.s32.totalorder %v6166, 2
        %v6172 = vxor.u32 %v6163, 2147483648
        %v6173 = vsel %vm6171, %v6172, %v6164
        %v6174 = vsel %vm6167, %v6170, %v6173
        %v6175 = vsel %vm6165, nan, %v6174
        %v6176 = vand.u32 2147483647, %v1078
        %vm6177 = vcmp.le.f32.partialorder %v6176, 0.7853982
        %vm6178 = vcmp.lt.s32.totalorder %v1078, 0
        %v6179 = vand.u32 %v1078, 2139095040
        %v6180 = vshrl.u32 %v6179, 23
        %v6181 = vsub.s32 %v6180, 127
        %v6182 = vand.u32 2147483647, %v1078
        %v6183 = vand.u32 %v6182, 8388607
        %v6184 = vor.u32 %v6183, 8388608
        %v6185 = vsub.s32 0, %v6184
        %v6186 = vadd.s32 %v6181, 1
        %vm6187 = vcmp.gt.s32.totalorder %v6186, 0
        %v6188 = vsel %vm6187, %v6186, 0
        %v6189 = vshrl.u32 %v6188, 5
        %v6190 = vand.u32 %v6188, 31
        %v6191 = vsub.s32 32, %v6190
        %v6192 = vshrl.u32 683565275, %v6191
        %v6193 = vshll.u32 683565275, %v6190
        %v6194 = vshrl.u32 2475754826, %v6191
        %v6195 = vor.u32 %v6193, %v6194
        %v6196 = vshll.u32 2475754826, %v6190
        %v6197 = vshrl.u32 2131351028, %v6191
        %v6198 = vor.u32 %v6196, %v6197
        %v6199 = vshll.u32 2131351028, %v6190
        %v6200 = vshrl.u32 2102212464, %v6191
        %v6201 = vor.u32 %v6199, %v6200
        %v6202 = vshll.u32 2102212464, %v6190
        %v6203 = vshrl.u32 920167782, %v6191
        %v6204 = vor.u32 %v6202, %v6203
        %v6205 = vshll.u32 920167782, %v6190
        %v6206 = vshrl.u32 1326507024, %v6191
        %v6207 = vor.u32 %v6205, %v6206
        %vm6208 = vcmp.lt.s32.totalorder %v6189, 1
        %vm6209 = vcmp.lt.s32.totalorder %v6189, 2
        %vm6210 = vcmp.lt.s32.totalorder %v6189, 3
        %vm6211 = vcmp.lt.s32.totalorder %v6189, 4
        %v6212 = vsel %vm6208, %v6192, %v6195
        %v6213 = vsel %vm6211, %v6201, 2102212464
        %v6214 = vsel %vm6210, %v6198, %v6213
        %v6215 = vsel %vm6209, %v6212, %v6214
        %v6216 = vsel %vm6208, %v6195, %v6198
        %v6217 = vsel %vm6211, %v6204, 920167782
        %v6218 = vsel %vm6210, %v6201, %v6217
        %v6219 = vsel %vm6209, %v6216, %v6218
        %v6220 = vsel %vm6208, %v6198, %v6201
        %v6221 = vsel %vm6211, %v6207, 1326507024
        %v6222 = vsel %vm6210, %v6204, %v6221
        %v6223 = vsel %vm6209, %v6220, %v6222
        %v6224 = vshll.u32 %v6184, 8
        %v6225 = vmul.u32.u64.compose %v6224, %v6223
        %v6226 = vextract.low.u32 %v6225
        %v6227 = vextract.high.u32 %v6225
        %v6228 = vmul.u32.u64.compose %v6224, %v6219
        %v6229 = vextract.low.u32 %v6228
        %v6230 = vextract.high.u32 %v6228
        %v6231 = vmul.u32 %v6224, %v6215
        %v6232 = vadd.s32 %v6227, %v6229
        %vm6233 = vc.u32 %v6227, %v6229
        %v6234 = vadd.s32 %v6230, 1
        %v6235 = vsel %vm6233, %v6234, %v6230
        %v6236 = vadd.s32 %v6231, %v6235
        %v6237 = vadd.s32 %v6236, 536870912
        %v6238 = vshrl.u32 %v6237, 30
        %v6239 = vshll.u32 %v6238, 30
        %v6240 = vsub.s32 %v6236, %v6239
        %vm6241 = vcmp.lt.s32.totalorder %v6240, 0
        %v6242 = vsub.s32 0, %v6240
        %v6243 = vsel %vm6241, %v6242, %v6240
        %v6244 = vclz %v6243
        %v6245 = vsub.s32 %v6244, 2
        %vm6246 = vcmp.gt.s32.totalorder 0, %v6245
        %v6247 = vsel %vm6246, 0, %v6245
        %v6248 = vsub.s32 32, %v6247
        %v6249 = vshll.u32 %v6240, %v6247
        %v6250 = vshrl.u32 %v6232, %v6248
        %v6251 = vor.u32 %v6249, %v6250
        %v6252 = vsub.s32 4294967266, %v6247
        %v6253 = vadd.s32 %v6252, 127
        %v6254 = vshll.u32 %v6253, 23
        %v6255 = vor.u32 4788187, %v6254
        %v6256 = vand.u32 2147483647, %v6255
        %v6258 = vcvt.s32.f32 %v6251
        %v6259 = vmul.f32 %v6258, %v6256
        %v6260 = vxor.u32 %v6259, 2147483648
        %v6261 = vsel %vm6178, %v6260, %v6259
        %v6262 = vsub.s32 4, %v6238
        %v6263 = vsel %vm6178, %v6262, %v6238
        %v6264 = vsel %vm6177, %v1078, %v6261
        %v6265 = vsel %vm6177, 0, %v6263
        %v6266 = vcosq.f32.pop %v6264
        %v6267 = vsinq.f32.pop %v6264
        %vm6268 = vweird.f32 %v1078
        %v6269 = vand.u32 %v6265, 3
        %vm6270 = vcmp.lt.s32.totalorder %v6269, 2
        %vm6271 = vcmp.eq.s32.totalorder %v6269, 0
        %v6272 = vxor.u32 %v6267, 2147483648
        %v6273 = vsel %vm6271, %v6266, %v6272
        %vm6274 = vcmp.eq.s32.totalorder %v6269, 2
        %v6275 = vxor.u32 %v6266, 2147483648
        %v6276 = vsel %vm6274, %v6275, %v6267
        %v6277 = vsel %vm6270, %v6273, %v6276
        %v6278 = vsel %vm6268, nan, %v6277
        %v6279 = vand.u32 2147483647, %v1079
        %vm6280 = vcmp.le.f32.partialorder %v6279, 0.7853982
        %vm6281 = vcmp.lt.s32.totalorder %v1079, 0
        %v6282 = vand.u32 %v1079, 2139095040
        %v6283 = vshrl.u32 %v6282, 23
        %v6284 = vsub.s32 %v6283, 127
        %v6285 = vand.u32 2147483647, %v1079
        %v6286 = vand.u32 %v6285, 8388607
        %v6287 = vor.u32 %v6286, 8388608
        %v6288 = vsub.s32 0, %v6287
        %v6289 = vadd.s32 %v6284, 1
        %vm6290 = vcmp.gt.s32.totalorder %v6289, 0
        %v6291 = vsel %vm6290, %v6289, 0
        %v6292 = vshrl.u32 %v6291, 5
        %v6293 = vand.u32 %v6291, 31
        %v6294 = vsub.s32 32, %v6293
        %v6295 = vshrl.u32 683565275, %v6294
        %v6296 = vshll.u32 683565275, %v6293
        %v6297 = vshrl.u32 2475754826, %v6294
        %v6298 = vor.u32 %v6296, %v6297
        %v6299 = vshll.u32 2475754826, %v6293
        %v6300 = vshrl.u32 2131351028, %v6294
        %v6301 = vor.u32 %v6299, %v6300
        %v6302 = vshll.u32 2131351028, %v6293
        %v6303 = vshrl.u32 2102212464, %v6294
        %v6304 = vor.u32 %v6302, %v6303
        %v6305 = vshll.u32 2102212464, %v6293
        %v6306 = vshrl.u32 920167782, %v6294
        %v6307 = vor.u32 %v6305, %v6306
        %v6308 = vshll.u32 920167782, %v6293
        %v6309 = vshrl.u32 1326507024, %v6294
        %v6310 = vor.u32 %v6308, %v6309
        %vm6311 = vcmp.lt.s32.totalorder %v6292, 1
        %vm6312 = vcmp.lt.s32.totalorder %v6292, 2
        %vm6313 = vcmp.lt.s32.totalorder %v6292, 3
        %vm6314 = vcmp.lt.s32.totalorder %v6292, 4
        %v6315 = vsel %vm6311, %v6295, %v6298
        %v6316 = vsel %vm6314, %v6304, 2102212464
        %v6317 = vsel %vm6313, %v6301, %v6316
        %v6318 = vsel %vm6312, %v6315, %v6317
        %v6319 = vsel %vm6311, %v6298, %v6301
        %v6320 = vsel %vm6314, %v6307, 920167782
        %v6321 = vsel %vm6313, %v6304, %v6320
        %v6322 = vsel %vm6312, %v6319, %v6321
        %v6323 = vsel %vm6311, %v6301, %v6304
        %v6324 = vsel %vm6314, %v6310, 1326507024
        %v6325 = vsel %vm6313, %v6307, %v6324
        %v6326 = vsel %vm6312, %v6323, %v6325
        %v6327 = vshll.u32 %v6287, 8
        %v6328 = vmul.u32.u64.compose %v6327, %v6326
        %v6329 = vextract.low.u32 %v6328
        %v6330 = vextract.high.u32 %v6328
        %v6331 = vmul.u32.u64.compose %v6327, %v6322
        %v6332 = vextract.low.u32 %v6331
        %v6333 = vextract.high.u32 %v6331
        %v6334 = vmul.u32 %v6327, %v6318
        %v6335 = vadd.s32 %v6330, %v6332
        %vm6336 = vc.u32 %v6330, %v6332
        %v6337 = vadd.s32 %v6333, 1
        %v6338 = vsel %vm6336, %v6337, %v6333
        %v6339 = vadd.s32 %v6334, %v6338
        %v6340 = vadd.s32 %v6339, 536870912
        %v6341 = vshrl.u32 %v6340, 30
        %v6342 = vshll.u32 %v6341, 30
        %v6343 = vsub.s32 %v6339, %v6342
        %vm6344 = vcmp.lt.s32.totalorder %v6343, 0
        %v6345 = vsub.s32 0, %v6343
        %v6346 = vsel %vm6344, %v6345, %v6343
        %v6347 = vclz %v6346
        %v6348 = vsub.s32 %v6347, 2
        %vm6349 = vcmp.gt.s32.totalorder 0, %v6348
        %v6350 = vsel %vm6349, 0, %v6348
        %v6351 = vsub.s32 32, %v6350
        %v6352 = vshll.u32 %v6343, %v6350
        %v6353 = vshrl.u32 %v6335, %v6351
        %v6354 = vor.u32 %v6352, %v6353
        %v6355 = vsub.s32 4294967266, %v6350
        %v6356 = vadd.s32 %v6355, 127
        %v6357 = vshll.u32 %v6356, 23
        %v6358 = vor.u32 4788187, %v6357
        %v6359 = vand.u32 2147483647, %v6358
        %v6361 = vcvt.s32.f32 %v6354
        %v6362 = vmul.f32 %v6361, %v6359
        %v6363 = vxor.u32 %v6362, 2147483648
        %v6364 = vsel %vm6281, %v6363, %v6362
        %v6365 = vsub.s32 4, %v6341
        %v6366 = vsel %vm6281, %v6365, %v6341
        %v6367 = vsel %vm6280, %v1079, %v6364
        %v6368 = vsel %vm6280, 0, %v6366
        %v6369 = vcosq.f32.pop %v6367
        %v6370 = vsinq.f32.pop %v6367
        %vm6371 = vweird.f32 %v1079
        %v6372 = vand.u32 %v6368, 3
        %vm6373 = vcmp.lt.s32.totalorder %v6372, 2
        %vm6374 = vcmp.eq.s32.totalorder %v6372, 0
        %v6375 = vxor.u32 %v6370, 2147483648
        %v6376 = vsel %vm6374, %v6369, %v6375
        %vm6377 = vcmp.eq.s32.totalorder %v6372, 2
        %v6378 = vxor.u32 %v6369, 2147483648
        %v6379 = vsel %vm6377, %v6378, %v6370
        %v6380 = vsel %vm6373, %v6376, %v6379
        %v6381 = vsel %vm6371, nan, %v6380
        %v6382 = vand.u32 2147483647, %v1080
        %vm6383 = vcmp.le.f32.partialorder %v6382, 0.7853982
        %vm6384 = vcmp.lt.s32.totalorder %v1080, 0
        %v6385 = vand.u32 %v1080, 2139095040
        %v6386 = vshrl.u32 %v6385, 23
        %v6387 = vsub.s32 %v6386, 127
        %v6388 = vand.u32 2147483647, %v1080
        %v6389 = vand.u32 %v6388, 8388607
        %v6390 = vor.u32 %v6389, 8388608
        %v6391 = vsub.s32 0, %v6390
        %v6392 = vadd.s32 %v6387, 1
        %vm6393 = vcmp.gt.s32.totalorder %v6392, 0
        %v6394 = vsel %vm6393, %v6392, 0
        %v6395 = vshrl.u32 %v6394, 5
        %v6396 = vand.u32 %v6394, 31
        %v6397 = vsub.s32 32, %v6396
        %v6398 = vshrl.u32 683565275, %v6397
        %v6399 = vshll.u32 683565275, %v6396
        %v6400 = vshrl.u32 2475754826, %v6397
        %v6401 = vor.u32 %v6399, %v6400
        %v6402 = vshll.u32 2475754826, %v6396
        %v6403 = vshrl.u32 2131351028, %v6397
        %v6404 = vor.u32 %v6402, %v6403
        %v6405 = vshll.u32 2131351028, %v6396
        %v6406 = vshrl.u32 2102212464, %v6397
        %v6407 = vor.u32 %v6405, %v6406
        %v6408 = vshll.u32 2102212464, %v6396
        %v6409 = vshrl.u32 920167782, %v6397
        %v6410 = vor.u32 %v6408, %v6409
        %v6411 = vshll.u32 920167782, %v6396
        %v6412 = vshrl.u32 1326507024, %v6397
        %v6413 = vor.u32 %v6411, %v6412
        %vm6414 = vcmp.lt.s32.totalorder %v6395, 1
        %vm6415 = vcmp.lt.s32.totalorder %v6395, 2
        %vm6416 = vcmp.lt.s32.totalorder %v6395, 3
        %vm6417 = vcmp.lt.s32.totalorder %v6395, 4
        %v6418 = vsel %vm6414, %v6398, %v6401
        %v6419 = vsel %vm6417, %v6407, 2102212464
        %v6420 = vsel %vm6416, %v6404, %v6419
        %v6421 = vsel %vm6415, %v6418, %v6420
        %v6422 = vsel %vm6414, %v6401, %v6404
        %v6423 = vsel %vm6417, %v6410, 920167782
        %v6424 = vsel %vm6416, %v6407, %v6423
        %v6425 = vsel %vm6415, %v6422, %v6424
        %v6426 = vsel %vm6414, %v6404, %v6407
        %v6427 = vsel %vm6417, %v6413, 1326507024
        %v6428 = vsel %vm6416, %v6410, %v6427
        %v6429 = vsel %vm6415, %v6426, %v6428
        %v6430 = vshll.u32 %v6390, 8
        %v6431 = vmul.u32.u64.compose %v6430, %v6429
        %v6432 = vextract.low.u32 %v6431
        %v6433 = vextract.high.u32 %v6431
        %v6434 = vmul.u32.u64.compose %v6430, %v6425
        %v6435 = vextract.low.u32 %v6434
        %v6436 = vextract.high.u32 %v6434
        %v6437 = vmul.u32 %v6430, %v6421
        %v6438 = vadd.s32 %v6433, %v6435
        %vm6439 = vc.u32 %v6433, %v6435
        %v6440 = vadd.s32 %v6436, 1
        %v6441 = vsel %vm6439, %v6440, %v6436
        %v6442 = vadd.s32 %v6437, %v6441
        %v6443 = vadd.s32 %v6442, 536870912
        %v6444 = vshrl.u32 %v6443, 30
        %v6445 = vshll.u32 %v6444, 30
        %v6446 = vsub.s32 %v6442, %v6445
        %vm6447 = vcmp.lt.s32.totalorder %v6446, 0
        %v6448 = vsub.s32 0, %v6446
        %v6449 = vsel %vm6447, %v6448, %v6446
        %v6450 = vclz %v6449
        %v6451 = vsub.s32 %v6450, 2
        %vm6452 = vcmp.gt.s32.totalorder 0, %v6451
        %v6453 = vsel %vm6452, 0, %v6451
        %v6454 = vsub.s32 32, %v6453
        %v6455 = vshll.u32 %v6446, %v6453
        %v6456 = vshrl.u32 %v6438, %v6454
        %v6457 = vor.u32 %v6455, %v6456
        %v6458 = vsub.s32 4294967266, %v6453
        %v6459 = vadd.s32 %v6458, 127
        %v6460 = vshll.u32 %v6459, 23
        %v6461 = vor.u32 4788187, %v6460
        %v6462 = vand.u32 2147483647, %v6461
        %v6464 = vcvt.s32.f32 %v6457
        %v6465 = vmul.f32 %v6464, %v6462
        %v6466 = vxor.u32 %v6465, 2147483648
        %v6467 = vsel %vm6384, %v6466, %v6465
        %v6468 = vsub.s32 4, %v6444
        %v6469 = vsel %vm6384, %v6468, %v6444
        %v6470 = vsel %vm6383, %v1080, %v6467
        %v6471 = vsel %vm6383, 0, %v6469
        %v6472 = vcosq.f32.pop %v6470
        %v6473 = vsinq.f32.pop %v6470
        %vm6474 = vweird.f32 %v1080
        %v6475 = vand.u32 %v6471, 3
        %vm6476 = vcmp.lt.s32.totalorder %v6475, 2
        %vm6477 = vcmp.eq.s32.totalorder %v6475, 0
        %v6478 = vxor.u32 %v6473, 2147483648
        %v6479 = vsel %vm6477, %v6472, %v6478
        %vm6480 = vcmp.eq.s32.totalorder %v6475, 2
        %v6481 = vxor.u32 %v6472, 2147483648
        %v6482 = vsel %vm6480, %v6481, %v6473
        %v6483 = vsel %vm6476, %v6479, %v6482
        %v6484 = vsel %vm6474, nan, %v6483
        %v6485 = vand.u32 2147483647, %v1081
        %vm6486 = vcmp.le.f32.partialorder %v6485, 0.7853982
        %vm6487 = vcmp.lt.s32.totalorder %v1081, 0
        %v6488 = vand.u32 %v1081, 2139095040
        %v6489 = vshrl.u32 %v6488, 23
        %v6490 = vsub.s32 %v6489, 127
        %v6491 = vand.u32 2147483647, %v1081
        %v6492 = vand.u32 %v6491, 8388607
        %v6493 = vor.u32 %v6492, 8388608
        %v6494 = vsub.s32 0, %v6493
        %v6495 = vadd.s32 %v6490, 1
        %vm6496 = vcmp.gt.s32.totalorder %v6495, 0
        %v6497 = vsel %vm6496, %v6495, 0
        %v6498 = vshrl.u32 %v6497, 5
        %v6499 = vand.u32 %v6497, 31
        %v6500 = vsub.s32 32, %v6499
        %v6501 = vshrl.u32 683565275, %v6500
        %v6502 = vshll.u32 683565275, %v6499
        %v6503 = vshrl.u32 2475754826, %v6500
        %v6504 = vor.u32 %v6502, %v6503
        %v6505 = vshll.u32 2475754826, %v6499
        %v6506 = vshrl.u32 2131351028, %v6500
        %v6507 = vor.u32 %v6505, %v6506
        %v6508 = vshll.u32 2131351028, %v6499
        %v6509 = vshrl.u32 2102212464, %v6500
        %v6510 = vor.u32 %v6508, %v6509
        %v6511 = vshll.u32 2102212464, %v6499
        %v6512 = vshrl.u32 920167782, %v6500
        %v6513 = vor.u32 %v6511, %v6512
        %v6514 = vshll.u32 920167782, %v6499
        %v6515 = vshrl.u32 1326507024, %v6500
        %v6516 = vor.u32 %v6514, %v6515
        %vm6517 = vcmp.lt.s32.totalorder %v6498, 1
        %vm6518 = vcmp.lt.s32.totalorder %v6498, 2
        %vm6519 = vcmp.lt.s32.totalorder %v6498, 3
        %vm6520 = vcmp.lt.s32.totalorder %v6498, 4
        %v6521 = vsel %vm6517, %v6501, %v6504
        %v6522 = vsel %vm6520, %v6510, 2102212464
        %v6523 = vsel %vm6519, %v6507, %v6522
        %v6524 = vsel %vm6518, %v6521, %v6523
        %v6525 = vsel %vm6517, %v6504, %v6507
        %v6526 = vsel %vm6520, %v6513, 920167782
        %v6527 = vsel %vm6519, %v6510, %v6526
        %v6528 = vsel %vm6518, %v6525, %v6527
        %v6529 = vsel %vm6517, %v6507, %v6510
        %v6530 = vsel %vm6520, %v6516, 1326507024
        %v6531 = vsel %vm6519, %v6513, %v6530
        %v6532 = vsel %vm6518, %v6529, %v6531
        %v6533 = vshll.u32 %v6493, 8
        %v6534 = vmul.u32.u64.compose %v6533, %v6532
        %v6535 = vextract.low.u32 %v6534
        %v6536 = vextract.high.u32 %v6534
        %v6537 = vmul.u32.u64.compose %v6533, %v6528
        %v6538 = vextract.low.u32 %v6537
        %v6539 = vextract.high.u32 %v6537
        %v6540 = vmul.u32 %v6533, %v6524
        %v6541 = vadd.s32 %v6536, %v6538
        %vm6542 = vc.u32 %v6536, %v6538
        %v6543 = vadd.s32 %v6539, 1
        %v6544 = vsel %vm6542, %v6543, %v6539
        %v6545 = vadd.s32 %v6540, %v6544
        %v6546 = vadd.s32 %v6545, 536870912
        %v6547 = vshrl.u32 %v6546, 30
        %v6548 = vshll.u32 %v6547, 30
        %v6549 = vsub.s32 %v6545, %v6548
        %vm6550 = vcmp.lt.s32.totalorder %v6549, 0
        %v6551 = vsub.s32 0, %v6549
        %v6552 = vsel %vm6550, %v6551, %v6549
        %v6553 = vclz %v6552
        %v6554 = vsub.s32 %v6553, 2
        %vm6555 = vcmp.gt.s32.totalorder 0, %v6554
        %v6556 = vsel %vm6555, 0, %v6554
        %v6557 = vsub.s32 32, %v6556
        %v6558 = vshll.u32 %v6549, %v6556
        %v6559 = vshrl.u32 %v6541, %v6557
        %v6560 = vor.u32 %v6558, %v6559
        %v6561 = vsub.s32 4294967266, %v6556
        %v6562 = vadd.s32 %v6561, 127
        %v6563 = vshll.u32 %v6562, 23
        %v6564 = vor.u32 4788187, %v6563
        %v6565 = vand.u32 2147483647, %v6564
        %v6567 = vcvt.s32.f32 %v6560
        %v6568 = vmul.f32 %v6567, %v6565
        %v6569 = vxor.u32 %v6568, 2147483648
        %v6570 = vsel %vm6487, %v6569, %v6568
        %v6571 = vsub.s32 4, %v6547
        %v6572 = vsel %vm6487, %v6571, %v6547
        %v6573 = vsel %vm6486, %v1081, %v6570
        %v6574 = vsel %vm6486, 0, %v6572
        %v6575 = vcosq.f32.pop %v6573
        %v6576 = vsinq.f32.pop %v6573
        %vm6577 = vweird.f32 %v1081
        %v6578 = vand.u32 %v6574, 3
        %vm6579 = vcmp.lt.s32.totalorder %v6578, 2
        %vm6580 = vcmp.eq.s32.totalorder %v6578, 0
        %v6581 = vxor.u32 %v6576, 2147483648
        %v6582 = vsel %vm6580, %v6575, %v6581
        %vm6583 = vcmp.eq.s32.totalorder %v6578, 2
        %v6584 = vxor.u32 %v6575, 2147483648
        %v6585 = vsel %vm6583, %v6584, %v6576
        %v6586 = vsel %vm6579, %v6582, %v6585
        %v6587 = vsel %vm6577, nan, %v6586
        %v6588 = vand.u32 2147483647, %v1082
        %vm6589 = vcmp.le.f32.partialorder %v6588, 0.7853982
        %vm6590 = vcmp.lt.s32.totalorder %v1082, 0
        %v6591 = vand.u32 %v1082, 2139095040
        %v6592 = vshrl.u32 %v6591, 23
        %v6593 = vsub.s32 %v6592, 127
        %v6594 = vand.u32 2147483647, %v1082
        %v6595 = vand.u32 %v6594, 8388607
        %v6596 = vor.u32 %v6595, 8388608
        %v6597 = vsub.s32 0, %v6596
        %v6598 = vadd.s32 %v6593, 1
        %vm6599 = vcmp.gt.s32.totalorder %v6598, 0
        %v6600 = vsel %vm6599, %v6598, 0
        %v6601 = vshrl.u32 %v6600, 5
        %v6602 = vand.u32 %v6600, 31
        %v6603 = vsub.s32 32, %v6602
        %v6604 = vshrl.u32 683565275, %v6603
        %v6605 = vshll.u32 683565275, %v6602
        %v6606 = vshrl.u32 2475754826, %v6603
        %v6607 = vor.u32 %v6605, %v6606
        %v6608 = vshll.u32 2475754826, %v6602
        %v6609 = vshrl.u32 2131351028, %v6603
        %v6610 = vor.u32 %v6608, %v6609
        %v6611 = vshll.u32 2131351028, %v6602
        %v6612 = vshrl.u32 2102212464, %v6603
        %v6613 = vor.u32 %v6611, %v6612
        %v6614 = vshll.u32 2102212464, %v6602
        %v6615 = vshrl.u32 920167782, %v6603
        %v6616 = vor.u32 %v6614, %v6615
        %v6617 = vshll.u32 920167782, %v6602
        %v6618 = vshrl.u32 1326507024, %v6603
        %v6619 = vor.u32 %v6617, %v6618
        %vm6620 = vcmp.lt.s32.totalorder %v6601, 1
        %vm6621 = vcmp.lt.s32.totalorder %v6601, 2
        %vm6622 = vcmp.lt.s32.totalorder %v6601, 3
        %vm6623 = vcmp.lt.s32.totalorder %v6601, 4
        %v6624 = vsel %vm6620, %v6604, %v6607
        %v6625 = vsel %vm6623, %v6613, 2102212464
        %v6626 = vsel %vm6622, %v6610, %v6625
        %v6627 = vsel %vm6621, %v6624, %v6626
        %v6628 = vsel %vm6620, %v6607, %v6610
        %v6629 = vsel %vm6623, %v6616, 920167782
        %v6630 = vsel %vm6622, %v6613, %v6629
        %v6631 = vsel %vm6621, %v6628, %v6630
        %v6632 = vsel %vm6620, %v6610, %v6613
        %v6633 = vsel %vm6623, %v6619, 1326507024
        %v6634 = vsel %vm6622, %v6616, %v6633
        %v6635 = vsel %vm6621, %v6632, %v6634
        %v6636 = vshll.u32 %v6596, 8
        %v6637 = vmul.u32.u64.compose %v6636, %v6635
        %v6638 = vextract.low.u32 %v6637
        %v6639 = vextract.high.u32 %v6637
        %v6640 = vmul.u32.u64.compose %v6636, %v6631
        %v6641 = vextract.low.u32 %v6640
        %v6642 = vextract.high.u32 %v6640
        %v6643 = vmul.u32 %v6636, %v6627
        %v6644 = vadd.s32 %v6639, %v6641
        %vm6645 = vc.u32 %v6639, %v6641
        %v6646 = vadd.s32 %v6642, 1
        %v6647 = vsel %vm6645, %v6646, %v6642
        %v6648 = vadd.s32 %v6643, %v6647
        %v6649 = vadd.s32 %v6648, 536870912
        %v6650 = vshrl.u32 %v6649, 30
        %v6651 = vshll.u32 %v6650, 30
        %v6652 = vsub.s32 %v6648, %v6651
        %vm6653 = vcmp.lt.s32.totalorder %v6652, 0
        %v6654 = vsub.s32 0, %v6652
        %v6655 = vsel %vm6653, %v6654, %v6652
        %v6656 = vclz %v6655
        %v6657 = vsub.s32 %v6656, 2
        %vm6658 = vcmp.gt.s32.totalorder 0, %v6657
        %v6659 = vsel %vm6658, 0, %v6657
        %v6660 = vsub.s32 32, %v6659
        %v6661 = vshll.u32 %v6652, %v6659
        %v6662 = vshrl.u32 %v6644, %v6660
        %v6663 = vor.u32 %v6661, %v6662
        %v6664 = vsub.s32 4294967266, %v6659
        %v6665 = vadd.s32 %v6664, 127
        %v6666 = vshll.u32 %v6665, 23
        %v6667 = vor.u32 4788187, %v6666
        %v6668 = vand.u32 2147483647, %v6667
        %v6670 = vcvt.s32.f32 %v6663
        %v6671 = vmul.f32 %v6670, %v6668
        %v6672 = vxor.u32 %v6671, 2147483648
        %v6673 = vsel %vm6590, %v6672, %v6671
        %v6674 = vsub.s32 4, %v6650
        %v6675 = vsel %vm6590, %v6674, %v6650
        %v6676 = vsel %vm6589, %v1082, %v6673
        %v6677 = vsel %vm6589, 0, %v6675
        %v6678 = vcosq.f32.pop %v6676
        %v6679 = vsinq.f32.pop %v6676
        %vm6680 = vweird.f32 %v1082
        %v6681 = vand.u32 %v6677, 3
        %vm6682 = vcmp.lt.s32.totalorder %v6681, 2
        %vm6683 = vcmp.eq.s32.totalorder %v6681, 0
        %v6684 = vxor.u32 %v6679, 2147483648
        %v6685 = vsel %vm6683, %v6678, %v6684
        %vm6686 = vcmp.eq.s32.totalorder %v6681, 2
        %v6687 = vxor.u32 %v6678, 2147483648
        %v6688 = vsel %vm6686, %v6687, %v6679
        %v6689 = vsel %vm6682, %v6685, %v6688
        %v6690 = vsel %vm6680, nan, %v6689
        %v6691 = vand.u32 2147483647, %v1083
        %vm6692 = vcmp.le.f32.partialorder %v6691, 0.7853982
        %vm6693 = vcmp.lt.s32.totalorder %v1083, 0
        %v6694 = vand.u32 %v1083, 2139095040
        %v6695 = vshrl.u32 %v6694, 23
        %v6696 = vsub.s32 %v6695, 127
        %v6697 = vand.u32 2147483647, %v1083
        %v6698 = vand.u32 %v6697, 8388607
        %v6699 = vor.u32 %v6698, 8388608
        %v6700 = vsub.s32 0, %v6699
        %v6701 = vadd.s32 %v6696, 1
        %vm6702 = vcmp.gt.s32.totalorder %v6701, 0
        %v6703 = vsel %vm6702, %v6701, 0
        %v6704 = vshrl.u32 %v6703, 5
        %v6705 = vand.u32 %v6703, 31
        %v6706 = vsub.s32 32, %v6705
        %v6707 = vshrl.u32 683565275, %v6706
        %v6708 = vshll.u32 683565275, %v6705
        %v6709 = vshrl.u32 2475754826, %v6706
        %v6710 = vor.u32 %v6708, %v6709
        %v6711 = vshll.u32 2475754826, %v6705
        %v6712 = vshrl.u32 2131351028, %v6706
        %v6713 = vor.u32 %v6711, %v6712
        %v6714 = vshll.u32 2131351028, %v6705
        %v6715 = vshrl.u32 2102212464, %v6706
        %v6716 = vor.u32 %v6714, %v6715
        %v6717 = vshll.u32 2102212464, %v6705
        %v6718 = vshrl.u32 920167782, %v6706
        %v6719 = vor.u32 %v6717, %v6718
        %v6720 = vshll.u32 920167782, %v6705
        %v6721 = vshrl.u32 1326507024, %v6706
        %v6722 = vor.u32 %v6720, %v6721
        %vm6723 = vcmp.lt.s32.totalorder %v6704, 1
        %vm6724 = vcmp.lt.s32.totalorder %v6704, 2
        %vm6725 = vcmp.lt.s32.totalorder %v6704, 3
        %vm6726 = vcmp.lt.s32.totalorder %v6704, 4
        %v6727 = vsel %vm6723, %v6707, %v6710
        %v6728 = vsel %vm6726, %v6716, 2102212464
        %v6729 = vsel %vm6725, %v6713, %v6728
        %v6730 = vsel %vm6724, %v6727, %v6729
        %v6731 = vsel %vm6723, %v6710, %v6713
        %v6732 = vsel %vm6726, %v6719, 920167782
        %v6733 = vsel %vm6725, %v6716, %v6732
        %v6734 = vsel %vm6724, %v6731, %v6733
        %v6735 = vsel %vm6723, %v6713, %v6716
        %v6736 = vsel %vm6726, %v6722, 1326507024
        %v6737 = vsel %vm6725, %v6719, %v6736
        %v6738 = vsel %vm6724, %v6735, %v6737
        %v6739 = vshll.u32 %v6699, 8
        %v6740 = vmul.u32.u64.compose %v6739, %v6738
        %v6741 = vextract.low.u32 %v6740
        %v6742 = vextract.high.u32 %v6740
        %v6743 = vmul.u32.u64.compose %v6739, %v6734
        %v6744 = vextract.low.u32 %v6743
        %v6745 = vextract.high.u32 %v6743
        %v6746 = vmul.u32 %v6739, %v6730
        %v6747 = vadd.s32 %v6742, %v6744
        %vm6748 = vc.u32 %v6742, %v6744
        %v6749 = vadd.s32 %v6745, 1
        %v6750 = vsel %vm6748, %v6749, %v6745
        %v6751 = vadd.s32 %v6746, %v6750
        %v6752 = vadd.s32 %v6751, 536870912
        %v6753 = vshrl.u32 %v6752, 30
        %v6754 = vshll.u32 %v6753, 30
        %v6755 = vsub.s32 %v6751, %v6754
        %vm6756 = vcmp.lt.s32.totalorder %v6755, 0
        %v6757 = vsub.s32 0, %v6755
        %v6758 = vsel %vm6756, %v6757, %v6755
        %v6759 = vclz %v6758
        %v6760 = vsub.s32 %v6759, 2
        %vm6761 = vcmp.gt.s32.totalorder 0, %v6760
        %v6762 = vsel %vm6761, 0, %v6760
        %v6763 = vsub.s32 32, %v6762
        %v6764 = vshll.u32 %v6755, %v6762
        %v6765 = vshrl.u32 %v6747, %v6763
        %v6766 = vor.u32 %v6764, %v6765
        %v6767 = vsub.s32 4294967266, %v6762
        %v6768 = vadd.s32 %v6767, 127
        %v6769 = vshll.u32 %v6768, 23
        %v6770 = vor.u32 4788187, %v6769
        %v6771 = vand.u32 2147483647, %v6770
        %v6773 = vcvt.s32.f32 %v6766
        %v6774 = vmul.f32 %v6773, %v6771
        %v6775 = vxor.u32 %v6774, 2147483648
        %v6776 = vsel %vm6693, %v6775, %v6774
        %v6777 = vsub.s32 4, %v6753
        %v6778 = vsel %vm6693, %v6777, %v6753
        %v6779 = vsel %vm6692, %v1083, %v6776
        %v6780 = vsel %vm6692, 0, %v6778
        %v6781 = vcosq.f32.pop %v6779
        %v6782 = vsinq.f32.pop %v6779
        %vm6783 = vweird.f32 %v1083
        %v6784 = vand.u32 %v6780, 3
        %vm6785 = vcmp.lt.s32.totalorder %v6784, 2
        %vm6786 = vcmp.eq.s32.totalorder %v6784, 0
        %v6787 = vxor.u32 %v6782, 2147483648
        %v6788 = vsel %vm6786, %v6781, %v6787
        %vm6789 = vcmp.eq.s32.totalorder %v6784, 2
        %v6790 = vxor.u32 %v6781, 2147483648
        %v6791 = vsel %vm6789, %v6790, %v6782
        %v6792 = vsel %vm6785, %v6788, %v6791
        %v6793 = vsel %vm6783, nan, %v6792
        %v6794 = vand.u32 2147483647, %v1084
        %vm6795 = vcmp.le.f32.partialorder %v6794, 0.7853982
        %vm6796 = vcmp.lt.s32.totalorder %v1084, 0
        %v6797 = vand.u32 %v1084, 2139095040
        %v6798 = vshrl.u32 %v6797, 23
        %v6799 = vsub.s32 %v6798, 127
        %v6800 = vand.u32 2147483647, %v1084
        %v6801 = vand.u32 %v6800, 8388607
        %v6802 = vor.u32 %v6801, 8388608
        %v6803 = vsub.s32 0, %v6802
        %v6804 = vadd.s32 %v6799, 1
        %vm6805 = vcmp.gt.s32.totalorder %v6804, 0
        %v6806 = vsel %vm6805, %v6804, 0
        %v6807 = vshrl.u32 %v6806, 5
        %v6808 = vand.u32 %v6806, 31
        %v6809 = vsub.s32 32, %v6808
        %v6810 = vshrl.u32 683565275, %v6809
        %v6811 = vshll.u32 683565275, %v6808
        %v6812 = vshrl.u32 2475754826, %v6809
        %v6813 = vor.u32 %v6811, %v6812
        %v6814 = vshll.u32 2475754826, %v6808
        %v6815 = vshrl.u32 2131351028, %v6809
        %v6816 = vor.u32 %v6814, %v6815
        %v6817 = vshll.u32 2131351028, %v6808
        %v6818 = vshrl.u32 2102212464, %v6809
        %v6819 = vor.u32 %v6817, %v6818
        %v6820 = vshll.u32 2102212464, %v6808
        %v6821 = vshrl.u32 920167782, %v6809
        %v6822 = vor.u32 %v6820, %v6821
        %v6823 = vshll.u32 920167782, %v6808
        %v6824 = vshrl.u32 1326507024, %v6809
        %v6825 = vor.u32 %v6823, %v6824
        %vm6826 = vcmp.lt.s32.totalorder %v6807, 1
        %vm6827 = vcmp.lt.s32.totalorder %v6807, 2
        %vm6828 = vcmp.lt.s32.totalorder %v6807, 3
        %vm6829 = vcmp.lt.s32.totalorder %v6807, 4
        %v6830 = vsel %vm6826, %v6810, %v6813
        %v6831 = vsel %vm6829, %v6819, 2102212464
        %v6832 = vsel %vm6828, %v6816, %v6831
        %v6833 = vsel %vm6827, %v6830, %v6832
        %v6834 = vsel %vm6826, %v6813, %v6816
        %v6835 = vsel %vm6829, %v6822, 920167782
        %v6836 = vsel %vm6828, %v6819, %v6835
        %v6837 = vsel %vm6827, %v6834, %v6836
        %v6838 = vsel %vm6826, %v6816, %v6819
        %v6839 = vsel %vm6829, %v6825, 1326507024
        %v6840 = vsel %vm6828, %v6822, %v6839
        %v6841 = vsel %vm6827, %v6838, %v6840
        %v6842 = vshll.u32 %v6802, 8
        %v6843 = vmul.u32.u64.compose %v6842, %v6841
        %v6844 = vextract.low.u32 %v6843
        %v6845 = vextract.high.u32 %v6843
        %v6846 = vmul.u32.u64.compose %v6842, %v6837
        %v6847 = vextract.low.u32 %v6846
        %v6848 = vextract.high.u32 %v6846
        %v6849 = vmul.u32 %v6842, %v6833
        %v6850 = vadd.s32 %v6845, %v6847
        %vm6851 = vc.u32 %v6845, %v6847
        %v6852 = vadd.s32 %v6848, 1
        %v6853 = vsel %vm6851, %v6852, %v6848
        %v6854 = vadd.s32 %v6849, %v6853
        %v6855 = vadd.s32 %v6854, 536870912
        %v6856 = vshrl.u32 %v6855, 30
        %v6857 = vshll.u32 %v6856, 30
        %v6858 = vsub.s32 %v6854, %v6857
        %vm6859 = vcmp.lt.s32.totalorder %v6858, 0
        %v6860 = vsub.s32 0, %v6858
        %v6861 = vsel %vm6859, %v6860, %v6858
        %v6862 = vclz %v6861
        %v6863 = vsub.s32 %v6862, 2
        %vm6864 = vcmp.gt.s32.totalorder 0, %v6863
        %v6865 = vsel %vm6864, 0, %v6863
        %v6866 = vsub.s32 32, %v6865
        %v6867 = vshll.u32 %v6858, %v6865
        %v6868 = vshrl.u32 %v6850, %v6866
        %v6869 = vor.u32 %v6867, %v6868
        %v6870 = vsub.s32 4294967266, %v6865
        %v6871 = vadd.s32 %v6870, 127
        %v6872 = vshll.u32 %v6871, 23
        %v6873 = vor.u32 4788187, %v6872
        %v6874 = vand.u32 2147483647, %v6873
        %v6876 = vcvt.s32.f32 %v6869
        %v6877 = vmul.f32 %v6876, %v6874
        %v6878 = vxor.u32 %v6877, 2147483648
        %v6879 = vsel %vm6796, %v6878, %v6877
        %v6880 = vsub.s32 4, %v6856
        %v6881 = vsel %vm6796, %v6880, %v6856
        %v6882 = vsel %vm6795, %v1084, %v6879
        %v6883 = vsel %vm6795, 0, %v6881
        %v6884 = vcosq.f32.pop %v6882
        %v6885 = vsinq.f32.pop %v6882
        %vm6886 = vweird.f32 %v1084
        %v6887 = vand.u32 %v6883, 3
        %vm6888 = vcmp.lt.s32.totalorder %v6887, 2
        %vm6889 = vcmp.eq.s32.totalorder %v6887, 0
        %v6890 = vxor.u32 %v6885, 2147483648
        %v6891 = vsel %vm6889, %v6884, %v6890
        %vm6892 = vcmp.eq.s32.totalorder %v6887, 2
        %v6893 = vxor.u32 %v6884, 2147483648
        %v6894 = vsel %vm6892, %v6893, %v6885
        %v6895 = vsel %vm6888, %v6891, %v6894
        %v6896 = vsel %vm6886, nan, %v6895
        %v6897 = vand.u32 2147483647, %v1085
        %vm6898 = vcmp.le.f32.partialorder %v6897, 0.7853982
        %vm6899 = vcmp.lt.s32.totalorder %v1085, 0
        %v6900 = vand.u32 %v1085, 2139095040
        %v6901 = vshrl.u32 %v6900, 23
        %v6902 = vsub.s32 %v6901, 127
        %v6903 = vand.u32 2147483647, %v1085
        %v6904 = vand.u32 %v6903, 8388607
        %v6905 = vor.u32 %v6904, 8388608
        %v6906 = vsub.s32 0, %v6905
        %v6907 = vadd.s32 %v6902, 1
        %vm6908 = vcmp.gt.s32.totalorder %v6907, 0
        %v6909 = vsel %vm6908, %v6907, 0
        %v6910 = vshrl.u32 %v6909, 5
        %v6911 = vand.u32 %v6909, 31
        %v6912 = vsub.s32 32, %v6911
        %v6913 = vshrl.u32 683565275, %v6912
        %v6914 = vshll.u32 683565275, %v6911
        %v6915 = vshrl.u32 2475754826, %v6912
        %v6916 = vor.u32 %v6914, %v6915
        %v6917 = vshll.u32 2475754826, %v6911
        %v6918 = vshrl.u32 2131351028, %v6912
        %v6919 = vor.u32 %v6917, %v6918
        %v6920 = vshll.u32 2131351028, %v6911
        %v6921 = vshrl.u32 2102212464, %v6912
        %v6922 = vor.u32 %v6920, %v6921
        %v6923 = vshll.u32 2102212464, %v6911
        %v6924 = vshrl.u32 920167782, %v6912
        %v6925 = vor.u32 %v6923, %v6924
        %v6926 = vshll.u32 920167782, %v6911
        %v6927 = vshrl.u32 1326507024, %v6912
        %v6928 = vor.u32 %v6926, %v6927
        %vm6929 = vcmp.lt.s32.totalorder %v6910, 1
        %vm6930 = vcmp.lt.s32.totalorder %v6910, 2
        %vm6931 = vcmp.lt.s32.totalorder %v6910, 3
        %vm6932 = vcmp.lt.s32.totalorder %v6910, 4
        %v6933 = vsel %vm6929, %v6913, %v6916
        %v6934 = vsel %vm6932, %v6922, 2102212464
        %v6935 = vsel %vm6931, %v6919, %v6934
        %v6936 = vsel %vm6930, %v6933, %v6935
        %v6937 = vsel %vm6929, %v6916, %v6919
        %v6938 = vsel %vm6932, %v6925, 920167782
        %v6939 = vsel %vm6931, %v6922, %v6938
        %v6940 = vsel %vm6930, %v6937, %v6939
        %v6941 = vsel %vm6929, %v6919, %v6922
        %v6942 = vsel %vm6932, %v6928, 1326507024
        %v6943 = vsel %vm6931, %v6925, %v6942
        %v6944 = vsel %vm6930, %v6941, %v6943
        %v6945 = vshll.u32 %v6905, 8
        %v6946 = vmul.u32.u64.compose %v6945, %v6944
        %v6947 = vextract.low.u32 %v6946
        %v6948 = vextract.high.u32 %v6946
        %v6949 = vmul.u32.u64.compose %v6945, %v6940
        %v6950 = vextract.low.u32 %v6949
        %v6951 = vextract.high.u32 %v6949
        %v6952 = vmul.u32 %v6945, %v6936
        %v6953 = vadd.s32 %v6948, %v6950
        %vm6954 = vc.u32 %v6948, %v6950
        %v6955 = vadd.s32 %v6951, 1
        %v6956 = vsel %vm6954, %v6955, %v6951
        %v6957 = vadd.s32 %v6952, %v6956
        %v6958 = vadd.s32 %v6957, 536870912
        %v6959 = vshrl.u32 %v6958, 30
        %v6960 = vshll.u32 %v6959, 30
        %v6961 = vsub.s32 %v6957, %v6960
        %vm6962 = vcmp.lt.s32.totalorder %v6961, 0
        %v6963 = vsub.s32 0, %v6961
        %v6964 = vsel %vm6962, %v6963, %v6961
        %v6965 = vclz %v6964
        %v6966 = vsub.s32 %v6965, 2
        %vm6967 = vcmp.gt.s32.totalorder 0, %v6966
        %v6968 = vsel %vm6967, 0, %v6966
        %v6969 = vsub.s32 32, %v6968
        %v6970 = vshll.u32 %v6961, %v6968
        %v6971 = vshrl.u32 %v6953, %v6969
        %v6972 = vor.u32 %v6970, %v6971
        %v6973 = vsub.s32 4294967266, %v6968
        %v6974 = vadd.s32 %v6973, 127
        %v6975 = vshll.u32 %v6974, 23
        %v6976 = vor.u32 4788187, %v6975
        %v6977 = vand.u32 2147483647, %v6976
        %v6979 = vcvt.s32.f32 %v6972
        %v6980 = vmul.f32 %v6979, %v6977
        %v6981 = vxor.u32 %v6980, 2147483648
        %v6982 = vsel %vm6899, %v6981, %v6980
        %v6983 = vsub.s32 4, %v6959
        %v6984 = vsel %vm6899, %v6983, %v6959
        %v6985 = vsel %vm6898, %v1085, %v6982
        %v6986 = vsel %vm6898, 0, %v6984
        %v6987 = vcosq.f32.pop %v6985
        %v6988 = vsinq.f32.pop %v6985
        %vm6989 = vweird.f32 %v1085
        %v6990 = vand.u32 %v6986, 3
        %vm6991 = vcmp.lt.s32.totalorder %v6990, 2
        %vm6992 = vcmp.eq.s32.totalorder %v6990, 0
        %v6993 = vxor.u32 %v6988, 2147483648
        %v6994 = vsel %vm6992, %v6987, %v6993
        %vm6995 = vcmp.eq.s32.totalorder %v6990, 2
        %v6996 = vxor.u32 %v6987, 2147483648
        %v6997 = vsel %vm6995, %v6996, %v6988
        %v6998 = vsel %vm6991, %v6994, %v6997
        %v6999 = vsel %vm6989, nan, %v6998
        %v7000 = vand.u32 2147483647, %v1086
        %vm7001 = vcmp.le.f32.partialorder %v7000, 0.7853982
        %vm7002 = vcmp.lt.s32.totalorder %v1086, 0
        %v7003 = vand.u32 %v1086, 2139095040
        %v7004 = vshrl.u32 %v7003, 23
        %v7005 = vsub.s32 %v7004, 127
        %v7006 = vand.u32 2147483647, %v1086
        %v7007 = vand.u32 %v7006, 8388607
        %v7008 = vor.u32 %v7007, 8388608
        %v7009 = vsub.s32 0, %v7008
        %v7010 = vadd.s32 %v7005, 1
        %vm7011 = vcmp.gt.s32.totalorder %v7010, 0
        %v7012 = vsel %vm7011, %v7010, 0
        %v7013 = vshrl.u32 %v7012, 5
        %v7014 = vand.u32 %v7012, 31
        %v7015 = vsub.s32 32, %v7014
        %v7016 = vshrl.u32 683565275, %v7015
        %v7017 = vshll.u32 683565275, %v7014
        %v7018 = vshrl.u32 2475754826, %v7015
        %v7019 = vor.u32 %v7017, %v7018
        %v7020 = vshll.u32 2475754826, %v7014
        %v7021 = vshrl.u32 2131351028, %v7015
        %v7022 = vor.u32 %v7020, %v7021
        %v7023 = vshll.u32 2131351028, %v7014
        %v7024 = vshrl.u32 2102212464, %v7015
        %v7025 = vor.u32 %v7023, %v7024
        %v7026 = vshll.u32 2102212464, %v7014
        %v7027 = vshrl.u32 920167782, %v7015
        %v7028 = vor.u32 %v7026, %v7027
        %v7029 = vshll.u32 920167782, %v7014
        %v7030 = vshrl.u32 1326507024, %v7015
        %v7031 = vor.u32 %v7029, %v7030
        %vm7032 = vcmp.lt.s32.totalorder %v7013, 1
        %vm7033 = vcmp.lt.s32.totalorder %v7013, 2
        %vm7034 = vcmp.lt.s32.totalorder %v7013, 3
        %vm7035 = vcmp.lt.s32.totalorder %v7013, 4
        %v7036 = vsel %vm7032, %v7016, %v7019
        %v7037 = vsel %vm7035, %v7025, 2102212464
        %v7038 = vsel %vm7034, %v7022, %v7037
        %v7039 = vsel %vm7033, %v7036, %v7038
        %v7040 = vsel %vm7032, %v7019, %v7022
        %v7041 = vsel %vm7035, %v7028, 920167782
        %v7042 = vsel %vm7034, %v7025, %v7041
        %v7043 = vsel %vm7033, %v7040, %v7042
        %v7044 = vsel %vm7032, %v7022, %v7025
        %v7045 = vsel %vm7035, %v7031, 1326507024
        %v7046 = vsel %vm7034, %v7028, %v7045
        %v7047 = vsel %vm7033, %v7044, %v7046
        %v7048 = vshll.u32 %v7008, 8
        %v7049 = vmul.u32.u64.compose %v7048, %v7047
        %v7050 = vextract.low.u32 %v7049
        %v7051 = vextract.high.u32 %v7049
        %v7052 = vmul.u32.u64.compose %v7048, %v7043
        %v7053 = vextract.low.u32 %v7052
        %v7054 = vextract.high.u32 %v7052
        %v7055 = vmul.u32 %v7048, %v7039
        %v7056 = vadd.s32 %v7051, %v7053
        %vm7057 = vc.u32 %v7051, %v7053
        %v7058 = vadd.s32 %v7054, 1
        %v7059 = vsel %vm7057, %v7058, %v7054
        %v7060 = vadd.s32 %v7055, %v7059
        %v7061 = vadd.s32 %v7060, 536870912
        %v7062 = vshrl.u32 %v7061, 30
        %v7063 = vshll.u32 %v7062, 30
        %v7064 = vsub.s32 %v7060, %v7063
        %vm7065 = vcmp.lt.s32.totalorder %v7064, 0
        %v7066 = vsub.s32 0, %v7064
        %v7067 = vsel %vm7065, %v7066, %v7064
        %v7068 = vclz %v7067
        %v7069 = vsub.s32 %v7068, 2
        %vm7070 = vcmp.gt.s32.totalorder 0, %v7069
        %v7071 = vsel %vm7070, 0, %v7069
        %v7072 = vsub.s32 32, %v7071
        %v7073 = vshll.u32 %v7064, %v7071
        %v7074 = vshrl.u32 %v7056, %v7072
        %v7075 = vor.u32 %v7073, %v7074
        %v7076 = vsub.s32 4294967266, %v7071
        %v7077 = vadd.s32 %v7076, 127
        %v7078 = vshll.u32 %v7077, 23
        %v7079 = vor.u32 4788187, %v7078
        %v7080 = vand.u32 2147483647, %v7079
        %v7082 = vcvt.s32.f32 %v7075
        %v7083 = vmul.f32 %v7082, %v7080
        %v7084 = vxor.u32 %v7083, 2147483648
        %v7085 = vsel %vm7002, %v7084, %v7083
        %v7086 = vsub.s32 4, %v7062
        %v7087 = vsel %vm7002, %v7086, %v7062
        %v7088 = vsel %vm7001, %v1086, %v7085
        %v7089 = vsel %vm7001, 0, %v7087
        %v7090 = vcosq.f32.pop %v7088
        %v7091 = vsinq.f32.pop %v7088
        %vm7092 = vweird.f32 %v1086
        %v7093 = vand.u32 %v7089, 3
        %vm7094 = vcmp.lt.s32.totalorder %v7093, 2
        %vm7095 = vcmp.eq.s32.totalorder %v7093, 0
        %v7096 = vxor.u32 %v7091, 2147483648
        %v7097 = vsel %vm7095, %v7090, %v7096
        %vm7098 = vcmp.eq.s32.totalorder %v7093, 2
        %v7099 = vxor.u32 %v7090, 2147483648
        %v7100 = vsel %vm7098, %v7099, %v7091
        %v7101 = vsel %vm7094, %v7097, %v7100
        %v7102 = vsel %vm7092, nan, %v7101
        %v7103 = vand.u32 2147483647, %v1087
        %vm7104 = vcmp.le.f32.partialorder %v7103, 0.7853982
        %vm7105 = vcmp.lt.s32.totalorder %v1087, 0
        %v7106 = vand.u32 %v1087, 2139095040
        %v7107 = vshrl.u32 %v7106, 23
        %v7108 = vsub.s32 %v7107, 127
        %v7109 = vand.u32 2147483647, %v1087
        %v7110 = vand.u32 %v7109, 8388607
        %v7111 = vor.u32 %v7110, 8388608
        %v7112 = vsub.s32 0, %v7111
        %v7113 = vadd.s32 %v7108, 1
        %vm7114 = vcmp.gt.s32.totalorder %v7113, 0
        %v7115 = vsel %vm7114, %v7113, 0
        %v7116 = vshrl.u32 %v7115, 5
        %v7117 = vand.u32 %v7115, 31
        %v7118 = vsub.s32 32, %v7117
        %v7119 = vshrl.u32 683565275, %v7118
        %v7120 = vshll.u32 683565275, %v7117
        %v7121 = vshrl.u32 2475754826, %v7118
        %v7122 = vor.u32 %v7120, %v7121
        %v7123 = vshll.u32 2475754826, %v7117
        %v7124 = vshrl.u32 2131351028, %v7118
        %v7125 = vor.u32 %v7123, %v7124
        %v7126 = vshll.u32 2131351028, %v7117
        %v7127 = vshrl.u32 2102212464, %v7118
        %v7128 = vor.u32 %v7126, %v7127
        %v7129 = vshll.u32 2102212464, %v7117
        %v7130 = vshrl.u32 920167782, %v7118
        %v7131 = vor.u32 %v7129, %v7130
        %v7132 = vshll.u32 920167782, %v7117
        %v7133 = vshrl.u32 1326507024, %v7118
        %v7134 = vor.u32 %v7132, %v7133
        %vm7135 = vcmp.lt.s32.totalorder %v7116, 1
        %vm7136 = vcmp.lt.s32.totalorder %v7116, 2
        %vm7137 = vcmp.lt.s32.totalorder %v7116, 3
        %vm7138 = vcmp.lt.s32.totalorder %v7116, 4
        %v7139 = vsel %vm7135, %v7119, %v7122
        %v7140 = vsel %vm7138, %v7128, 2102212464
        %v7141 = vsel %vm7137, %v7125, %v7140
        %v7142 = vsel %vm7136, %v7139, %v7141
        %v7143 = vsel %vm7135, %v7122, %v7125
        %v7144 = vsel %vm7138, %v7131, 920167782
        %v7145 = vsel %vm7137, %v7128, %v7144
        %v7146 = vsel %vm7136, %v7143, %v7145
        %v7147 = vsel %vm7135, %v7125, %v7128
        %v7148 = vsel %vm7138, %v7134, 1326507024
        %v7149 = vsel %vm7137, %v7131, %v7148
        %v7150 = vsel %vm7136, %v7147, %v7149
        %v7151 = vshll.u32 %v7111, 8
        %v7152 = vmul.u32.u64.compose %v7151, %v7150
        %v7153 = vextract.low.u32 %v7152
        %v7154 = vextract.high.u32 %v7152
        %v7155 = vmul.u32.u64.compose %v7151, %v7146
        %v7156 = vextract.low.u32 %v7155
        %v7157 = vextract.high.u32 %v7155
        %v7158 = vmul.u32 %v7151, %v7142
        %v7159 = vadd.s32 %v7154, %v7156
        %vm7160 = vc.u32 %v7154, %v7156
        %v7161 = vadd.s32 %v7157, 1
        %v7162 = vsel %vm7160, %v7161, %v7157
        %v7163 = vadd.s32 %v7158, %v7162
        %v7164 = vadd.s32 %v7163, 536870912
        %v7165 = vshrl.u32 %v7164, 30
        %v7166 = vshll.u32 %v7165, 30
        %v7167 = vsub.s32 %v7163, %v7166
        %vm7168 = vcmp.lt.s32.totalorder %v7167, 0
        %v7169 = vsub.s32 0, %v7167
        %v7170 = vsel %vm7168, %v7169, %v7167
        %v7171 = vclz %v7170
        %v7172 = vsub.s32 %v7171, 2
        %vm7173 = vcmp.gt.s32.totalorder 0, %v7172
        %v7174 = vsel %vm7173, 0, %v7172
        %v7175 = vsub.s32 32, %v7174
        %v7176 = vshll.u32 %v7167, %v7174
        %v7177 = vshrl.u32 %v7159, %v7175
        %v7178 = vor.u32 %v7176, %v7177
        %v7179 = vsub.s32 4294967266, %v7174
        %v7180 = vadd.s32 %v7179, 127
        %v7181 = vshll.u32 %v7180, 23
        %v7182 = vor.u32 4788187, %v7181
        %v7183 = vand.u32 2147483647, %v7182
        %v7185 = vcvt.s32.f32 %v7178
        %v7186 = vmul.f32 %v7185, %v7183
        %v7187 = vxor.u32 %v7186, 2147483648
        %v7188 = vsel %vm7105, %v7187, %v7186
        %v7189 = vsub.s32 4, %v7165
        %v7190 = vsel %vm7105, %v7189, %v7165
        %v7191 = vsel %vm7104, %v1087, %v7188
        %v7192 = vsel %vm7104, 0, %v7190
        %v7193 = vcosq.f32.pop %v7191
        %v7194 = vsinq.f32.pop %v7191
        %vm7195 = vweird.f32 %v1087
        %v7196 = vand.u32 %v7192, 3
        %vm7197 = vcmp.lt.s32.totalorder %v7196, 2
        %vm7198 = vcmp.eq.s32.totalorder %v7196, 0
        %v7199 = vxor.u32 %v7194, 2147483648
        %v7200 = vsel %vm7198, %v7193, %v7199
        %vm7201 = vcmp.eq.s32.totalorder %v7196, 2
        %v7202 = vxor.u32 %v7193, 2147483648
        %v7203 = vsel %vm7201, %v7202, %v7194
        %v7204 = vsel %vm7197, %v7200, %v7203
        %v7205 = vsel %vm7195, nan, %v7204
        %v7206 = vand.u32 2147483647, %v1088
        %vm7207 = vcmp.le.f32.partialorder %v7206, 0.7853982
        %vm7208 = vcmp.lt.s32.totalorder %v1088, 0
        %v7209 = vand.u32 %v1088, 2139095040
        %v7210 = vshrl.u32 %v7209, 23
        %v7211 = vsub.s32 %v7210, 127
        %v7212 = vand.u32 2147483647, %v1088
        %v7213 = vand.u32 %v7212, 8388607
        %v7214 = vor.u32 %v7213, 8388608
        %v7215 = vsub.s32 0, %v7214
        %v7216 = vadd.s32 %v7211, 1
        %vm7217 = vcmp.gt.s32.totalorder %v7216, 0
        %v7218 = vsel %vm7217, %v7216, 0
        %v7219 = vshrl.u32 %v7218, 5
        %v7220 = vand.u32 %v7218, 31
        %v7221 = vsub.s32 32, %v7220
        %v7222 = vshrl.u32 683565275, %v7221
        %v7223 = vshll.u32 683565275, %v7220
        %v7224 = vshrl.u32 2475754826, %v7221
        %v7225 = vor.u32 %v7223, %v7224
        %v7226 = vshll.u32 2475754826, %v7220
        %v7227 = vshrl.u32 2131351028, %v7221
        %v7228 = vor.u32 %v7226, %v7227
        %v7229 = vshll.u32 2131351028, %v7220
        %v7230 = vshrl.u32 2102212464, %v7221
        %v7231 = vor.u32 %v7229, %v7230
        %v7232 = vshll.u32 2102212464, %v7220
        %v7233 = vshrl.u32 920167782, %v7221
        %v7234 = vor.u32 %v7232, %v7233
        %v7235 = vshll.u32 920167782, %v7220
        %v7236 = vshrl.u32 1326507024, %v7221
        %v7237 = vor.u32 %v7235, %v7236
        %vm7238 = vcmp.lt.s32.totalorder %v7219, 1
        %vm7239 = vcmp.lt.s32.totalorder %v7219, 2
        %vm7240 = vcmp.lt.s32.totalorder %v7219, 3
        %vm7241 = vcmp.lt.s32.totalorder %v7219, 4
        %v7242 = vsel %vm7238, %v7222, %v7225
        %v7243 = vsel %vm7241, %v7231, 2102212464
        %v7244 = vsel %vm7240, %v7228, %v7243
        %v7245 = vsel %vm7239, %v7242, %v7244
        %v7246 = vsel %vm7238, %v7225, %v7228
        %v7247 = vsel %vm7241, %v7234, 920167782
        %v7248 = vsel %vm7240, %v7231, %v7247
        %v7249 = vsel %vm7239, %v7246, %v7248
        %v7250 = vsel %vm7238, %v7228, %v7231
        %v7251 = vsel %vm7241, %v7237, 1326507024
        %v7252 = vsel %vm7240, %v7234, %v7251
        %v7253 = vsel %vm7239, %v7250, %v7252
        %v7254 = vshll.u32 %v7214, 8
        %v7255 = vmul.u32.u64.compose %v7254, %v7253
        %v7256 = vextract.low.u32 %v7255
        %v7257 = vextract.high.u32 %v7255
        %v7258 = vmul.u32.u64.compose %v7254, %v7249
        %v7259 = vextract.low.u32 %v7258
        %v7260 = vextract.high.u32 %v7258
        %v7261 = vmul.u32 %v7254, %v7245
        %v7262 = vadd.s32 %v7257, %v7259
        %vm7263 = vc.u32 %v7257, %v7259
        %v7264 = vadd.s32 %v7260, 1
        %v7265 = vsel %vm7263, %v7264, %v7260
        %v7266 = vadd.s32 %v7261, %v7265
        %v7267 = vadd.s32 %v7266, 536870912
        %v7268 = vshrl.u32 %v7267, 30
        %v7269 = vshll.u32 %v7268, 30
        %v7270 = vsub.s32 %v7266, %v7269
        %vm7271 = vcmp.lt.s32.totalorder %v7270, 0
        %v7272 = vsub.s32 0, %v7270
        %v7273 = vsel %vm7271, %v7272, %v7270
        %v7274 = vclz %v7273
        %v7275 = vsub.s32 %v7274, 2
        %vm7276 = vcmp.gt.s32.totalorder 0, %v7275
        %v7277 = vsel %vm7276, 0, %v7275
        %v7278 = vsub.s32 32, %v7277
        %v7279 = vshll.u32 %v7270, %v7277
        %v7280 = vshrl.u32 %v7262, %v7278
        %v7281 = vor.u32 %v7279, %v7280
        %v7282 = vsub.s32 4294967266, %v7277
        %v7283 = vadd.s32 %v7282, 127
        %v7284 = vshll.u32 %v7283, 23
        %v7285 = vor.u32 4788187, %v7284
        %v7286 = vand.u32 2147483647, %v7285
        %v7288 = vcvt.s32.f32 %v7281
        %v7289 = vmul.f32 %v7288, %v7286
        %v7290 = vxor.u32 %v7289, 2147483648
        %v7291 = vsel %vm7208, %v7290, %v7289
        %v7292 = vsub.s32 4, %v7268
        %v7293 = vsel %vm7208, %v7292, %v7268
        %v7294 = vsel %vm7207, %v1088, %v7291
        %v7295 = vsel %vm7207, 0, %v7293
        %v7296 = vcosq.f32.pop %v7294
        %v7297 = vsinq.f32.pop %v7294
        %vm7298 = vweird.f32 %v1088
        %v7299 = vand.u32 %v7295, 3
        %vm7300 = vcmp.lt.s32.totalorder %v7299, 2
        %vm7301 = vcmp.eq.s32.totalorder %v7299, 0
        %v7302 = vxor.u32 %v7297, 2147483648
        %v7303 = vsel %vm7301, %v7296, %v7302
        %vm7304 = vcmp.eq.s32.totalorder %v7299, 2
        %v7305 = vxor.u32 %v7296, 2147483648
        %v7306 = vsel %vm7304, %v7305, %v7297
        %v7307 = vsel %vm7300, %v7303, %v7306
        %v7308 = vsel %vm7298, nan, %v7307
        %v7309 = vand.u32 2147483647, %v1089
        %vm7310 = vcmp.le.f32.partialorder %v7309, 0.7853982
        %vm7311 = vcmp.lt.s32.totalorder %v1089, 0
        %v7312 = vand.u32 %v1089, 2139095040
        %v7313 = vshrl.u32 %v7312, 23
        %v7314 = vsub.s32 %v7313, 127
        %v7315 = vand.u32 2147483647, %v1089
        %v7316 = vand.u32 %v7315, 8388607
        %v7317 = vor.u32 %v7316, 8388608
        %v7318 = vsub.s32 0, %v7317
        %v7319 = vadd.s32 %v7314, 1
        %vm7320 = vcmp.gt.s32.totalorder %v7319, 0
        %v7321 = vsel %vm7320, %v7319, 0
        %v7322 = vshrl.u32 %v7321, 5
        %v7323 = vand.u32 %v7321, 31
        %v7324 = vsub.s32 32, %v7323
        %v7325 = vshrl.u32 683565275, %v7324
        %v7326 = vshll.u32 683565275, %v7323
        %v7327 = vshrl.u32 2475754826, %v7324
        %v7328 = vor.u32 %v7326, %v7327
        %v7329 = vshll.u32 2475754826, %v7323
        %v7330 = vshrl.u32 2131351028, %v7324
        %v7331 = vor.u32 %v7329, %v7330
        %v7332 = vshll.u32 2131351028, %v7323
        %v7333 = vshrl.u32 2102212464, %v7324
        %v7334 = vor.u32 %v7332, %v7333
        %v7335 = vshll.u32 2102212464, %v7323
        %v7336 = vshrl.u32 920167782, %v7324
        %v7337 = vor.u32 %v7335, %v7336
        %v7338 = vshll.u32 920167782, %v7323
        %v7339 = vshrl.u32 1326507024, %v7324
        %v7340 = vor.u32 %v7338, %v7339
        %vm7341 = vcmp.lt.s32.totalorder %v7322, 1
        %vm7342 = vcmp.lt.s32.totalorder %v7322, 2
        %vm7343 = vcmp.lt.s32.totalorder %v7322, 3
        %vm7344 = vcmp.lt.s32.totalorder %v7322, 4
        %v7345 = vsel %vm7341, %v7325, %v7328
        %v7346 = vsel %vm7344, %v7334, 2102212464
        %v7347 = vsel %vm7343, %v7331, %v7346
        %v7348 = vsel %vm7342, %v7345, %v7347
        %v7349 = vsel %vm7341, %v7328, %v7331
        %v7350 = vsel %vm7344, %v7337, 920167782
        %v7351 = vsel %vm7343, %v7334, %v7350
        %v7352 = vsel %vm7342, %v7349, %v7351
        %v7353 = vsel %vm7341, %v7331, %v7334
        %v7354 = vsel %vm7344, %v7340, 1326507024
        %v7355 = vsel %vm7343, %v7337, %v7354
        %v7356 = vsel %vm7342, %v7353, %v7355
        %v7357 = vshll.u32 %v7317, 8
        %v7358 = vmul.u32.u64.compose %v7357, %v7356
        %v7359 = vextract.low.u32 %v7358
        %v7360 = vextract.high.u32 %v7358
        %v7361 = vmul.u32.u64.compose %v7357, %v7352
        %v7362 = vextract.low.u32 %v7361
        %v7363 = vextract.high.u32 %v7361
        %v7364 = vmul.u32 %v7357, %v7348
        %v7365 = vadd.s32 %v7360, %v7362
        %vm7366 = vc.u32 %v7360, %v7362
        %v7367 = vadd.s32 %v7363, 1
        %v7368 = vsel %vm7366, %v7367, %v7363
        %v7369 = vadd.s32 %v7364, %v7368
        %v7370 = vadd.s32 %v7369, 536870912
        %v7371 = vshrl.u32 %v7370, 30
        %v7372 = vshll.u32 %v7371, 30
        %v7373 = vsub.s32 %v7369, %v7372
        %vm7374 = vcmp.lt.s32.totalorder %v7373, 0
        %v7375 = vsub.s32 0, %v7373
        %v7376 = vsel %vm7374, %v7375, %v7373
        %v7377 = vclz %v7376
        %v7378 = vsub.s32 %v7377, 2
        %vm7379 = vcmp.gt.s32.totalorder 0, %v7378
        %v7380 = vsel %vm7379, 0, %v7378
        %v7381 = vsub.s32 32, %v7380
        %v7382 = vshll.u32 %v7373, %v7380
        %v7383 = vshrl.u32 %v7365, %v7381
        %v7384 = vor.u32 %v7382, %v7383
        %v7385 = vsub.s32 4294967266, %v7380
        %v7386 = vadd.s32 %v7385, 127
        %v7387 = vshll.u32 %v7386, 23
        %v7388 = vor.u32 4788187, %v7387
        %v7389 = vand.u32 2147483647, %v7388
        %v7391 = vcvt.s32.f32 %v7384
        %v7392 = vmul.f32 %v7391, %v7389
        %v7393 = vxor.u32 %v7392, 2147483648
        %v7394 = vsel %vm7311, %v7393, %v7392
        %v7395 = vsub.s32 4, %v7371
        %v7396 = vsel %vm7311, %v7395, %v7371
        %v7397 = vsel %vm7310, %v1089, %v7394
        %v7398 = vsel %vm7310, 0, %v7396
        %v7399 = vcosq.f32.pop %v7397
        %v7400 = vsinq.f32.pop %v7397
        %vm7401 = vweird.f32 %v1089
        %v7402 = vand.u32 %v7398, 3
        %vm7403 = vcmp.lt.s32.totalorder %v7402, 2
        %vm7404 = vcmp.eq.s32.totalorder %v7402, 0
        %v7405 = vxor.u32 %v7400, 2147483648
        %v7406 = vsel %vm7404, %v7399, %v7405
        %vm7407 = vcmp.eq.s32.totalorder %v7402, 2
        %v7408 = vxor.u32 %v7399, 2147483648
        %v7409 = vsel %vm7407, %v7408, %v7400
        %v7410 = vsel %vm7403, %v7406, %v7409
        %v7411 = vsel %vm7401, nan, %v7410
        %v7412 = vand.u32 2147483647, %v1090
        %vm7413 = vcmp.le.f32.partialorder %v7412, 0.7853982
        %vm7414 = vcmp.lt.s32.totalorder %v1090, 0
        %v7415 = vand.u32 %v1090, 2139095040
        %v7416 = vshrl.u32 %v7415, 23
        %v7417 = vsub.s32 %v7416, 127
        %v7418 = vand.u32 2147483647, %v1090
        %v7419 = vand.u32 %v7418, 8388607
        %v7420 = vor.u32 %v7419, 8388608
        %v7421 = vsub.s32 0, %v7420
        %v7422 = vadd.s32 %v7417, 1
        %vm7423 = vcmp.gt.s32.totalorder %v7422, 0
        %v7424 = vsel %vm7423, %v7422, 0
        %v7425 = vshrl.u32 %v7424, 5
        %v7426 = vand.u32 %v7424, 31
        %v7427 = vsub.s32 32, %v7426
        %v7428 = vshrl.u32 683565275, %v7427
        %v7429 = vshll.u32 683565275, %v7426
        %v7430 = vshrl.u32 2475754826, %v7427
        %v7431 = vor.u32 %v7429, %v7430
        %v7432 = vshll.u32 2475754826, %v7426
        %v7433 = vshrl.u32 2131351028, %v7427
        %v7434 = vor.u32 %v7432, %v7433
        %v7435 = vshll.u32 2131351028, %v7426
        %v7436 = vshrl.u32 2102212464, %v7427
        %v7437 = vor.u32 %v7435, %v7436
        %v7438 = vshll.u32 2102212464, %v7426
        %v7439 = vshrl.u32 920167782, %v7427
        %v7440 = vor.u32 %v7438, %v7439
        %v7441 = vshll.u32 920167782, %v7426
        %v7442 = vshrl.u32 1326507024, %v7427
        %v7443 = vor.u32 %v7441, %v7442
        %vm7444 = vcmp.lt.s32.totalorder %v7425, 1
        %vm7445 = vcmp.lt.s32.totalorder %v7425, 2
        %vm7446 = vcmp.lt.s32.totalorder %v7425, 3
        %vm7447 = vcmp.lt.s32.totalorder %v7425, 4
        %v7448 = vsel %vm7444, %v7428, %v7431
        %v7449 = vsel %vm7447, %v7437, 2102212464
        %v7450 = vsel %vm7446, %v7434, %v7449
        %v7451 = vsel %vm7445, %v7448, %v7450
        %v7452 = vsel %vm7444, %v7431, %v7434
        %v7453 = vsel %vm7447, %v7440, 920167782
        %v7454 = vsel %vm7446, %v7437, %v7453
        %v7455 = vsel %vm7445, %v7452, %v7454
        %v7456 = vsel %vm7444, %v7434, %v7437
        %v7457 = vsel %vm7447, %v7443, 1326507024
        %v7458 = vsel %vm7446, %v7440, %v7457
        %v7459 = vsel %vm7445, %v7456, %v7458
        %v7460 = vshll.u32 %v7420, 8
        %v7461 = vmul.u32.u64.compose %v7460, %v7459
        %v7462 = vextract.low.u32 %v7461
        %v7463 = vextract.high.u32 %v7461
        %v7464 = vmul.u32.u64.compose %v7460, %v7455
        %v7465 = vextract.low.u32 %v7464
        %v7466 = vextract.high.u32 %v7464
        %v7467 = vmul.u32 %v7460, %v7451
        %v7468 = vadd.s32 %v7463, %v7465
        %vm7469 = vc.u32 %v7463, %v7465
        %v7470 = vadd.s32 %v7466, 1
        %v7471 = vsel %vm7469, %v7470, %v7466
        %v7472 = vadd.s32 %v7467, %v7471
        %v7473 = vadd.s32 %v7472, 536870912
        %v7474 = vshrl.u32 %v7473, 30
        %v7475 = vshll.u32 %v7474, 30
        %v7476 = vsub.s32 %v7472, %v7475
        %vm7477 = vcmp.lt.s32.totalorder %v7476, 0
        %v7478 = vsub.s32 0, %v7476
        %v7479 = vsel %vm7477, %v7478, %v7476
        %v7480 = vclz %v7479
        %v7481 = vsub.s32 %v7480, 2
        %vm7482 = vcmp.gt.s32.totalorder 0, %v7481
        %v7483 = vsel %vm7482, 0, %v7481
        %v7484 = vsub.s32 32, %v7483
        %v7485 = vshll.u32 %v7476, %v7483
        %v7486 = vshrl.u32 %v7468, %v7484
        %v7487 = vor.u32 %v7485, %v7486
        %v7488 = vsub.s32 4294967266, %v7483
        %v7489 = vadd.s32 %v7488, 127
        %v7490 = vshll.u32 %v7489, 23
        %v7491 = vor.u32 4788187, %v7490
        %v7492 = vand.u32 2147483647, %v7491
        %v7494 = vcvt.s32.f32 %v7487
        %v7495 = vmul.f32 %v7494, %v7492
        %v7496 = vxor.u32 %v7495, 2147483648
        %v7497 = vsel %vm7414, %v7496, %v7495
        %v7498 = vsub.s32 4, %v7474
        %v7499 = vsel %vm7414, %v7498, %v7474
        %v7500 = vsel %vm7413, %v1090, %v7497
        %v7501 = vsel %vm7413, 0, %v7499
        %v7502 = vcosq.f32.pop %v7500
        %v7503 = vsinq.f32.pop %v7500
        %vm7504 = vweird.f32 %v1090
        %v7505 = vand.u32 %v7501, 3
        %vm7506 = vcmp.lt.s32.totalorder %v7505, 2
        %vm7507 = vcmp.eq.s32.totalorder %v7505, 0
        %v7508 = vxor.u32 %v7503, 2147483648
        %v7509 = vsel %vm7507, %v7502, %v7508
        %vm7510 = vcmp.eq.s32.totalorder %v7505, 2
        %v7511 = vxor.u32 %v7502, 2147483648
        %v7512 = vsel %vm7510, %v7511, %v7503
        %v7513 = vsel %vm7506, %v7509, %v7512
        %v7514 = vsel %vm7504, nan, %v7513
        %v7515 = vand.u32 2147483647, %v1091
        %vm7516 = vcmp.le.f32.partialorder %v7515, 0.7853982
        %vm7517 = vcmp.lt.s32.totalorder %v1091, 0
        %v7518 = vand.u32 %v1091, 2139095040
        %v7519 = vshrl.u32 %v7518, 23
        %v7520 = vsub.s32 %v7519, 127
        %v7521 = vand.u32 2147483647, %v1091
        %v7522 = vand.u32 %v7521, 8388607
        %v7523 = vor.u32 %v7522, 8388608
        %v7524 = vsub.s32 0, %v7523
        %v7525 = vadd.s32 %v7520, 1
        %vm7526 = vcmp.gt.s32.totalorder %v7525, 0
        %v7527 = vsel %vm7526, %v7525, 0
        %v7528 = vshrl.u32 %v7527, 5
        %v7529 = vand.u32 %v7527, 31
        %v7530 = vsub.s32 32, %v7529
        %v7531 = vshrl.u32 683565275, %v7530
        %v7532 = vshll.u32 683565275, %v7529
        %v7533 = vshrl.u32 2475754826, %v7530
        %v7534 = vor.u32 %v7532, %v7533
        %v7535 = vshll.u32 2475754826, %v7529
        %v7536 = vshrl.u32 2131351028, %v7530
        %v7537 = vor.u32 %v7535, %v7536
        %v7538 = vshll.u32 2131351028, %v7529
        %v7539 = vshrl.u32 2102212464, %v7530
        %v7540 = vor.u32 %v7538, %v7539
        %v7541 = vshll.u32 2102212464, %v7529
        %v7542 = vshrl.u32 920167782, %v7530
        %v7543 = vor.u32 %v7541, %v7542
        %v7544 = vshll.u32 920167782, %v7529
        %v7545 = vshrl.u32 1326507024, %v7530
        %v7546 = vor.u32 %v7544, %v7545
        %vm7547 = vcmp.lt.s32.totalorder %v7528, 1
        %vm7548 = vcmp.lt.s32.totalorder %v7528, 2
        %vm7549 = vcmp.lt.s32.totalorder %v7528, 3
        %vm7550 = vcmp.lt.s32.totalorder %v7528, 4
        %v7551 = vsel %vm7547, %v7531, %v7534
        %v7552 = vsel %vm7550, %v7540, 2102212464
        %v7553 = vsel %vm7549, %v7537, %v7552
        %v7554 = vsel %vm7548, %v7551, %v7553
        %v7555 = vsel %vm7547, %v7534, %v7537
        %v7556 = vsel %vm7550, %v7543, 920167782
        %v7557 = vsel %vm7549, %v7540, %v7556
        %v7558 = vsel %vm7548, %v7555, %v7557
        %v7559 = vsel %vm7547, %v7537, %v7540
        %v7560 = vsel %vm7550, %v7546, 1326507024
        %v7561 = vsel %vm7549, %v7543, %v7560
        %v7562 = vsel %vm7548, %v7559, %v7561
        %v7563 = vshll.u32 %v7523, 8
        %v7564 = vmul.u32.u64.compose %v7563, %v7562
        %v7565 = vextract.low.u32 %v7564
        %v7566 = vextract.high.u32 %v7564
        %v7567 = vmul.u32.u64.compose %v7563, %v7558
        %v7568 = vextract.low.u32 %v7567
        %v7569 = vextract.high.u32 %v7567
        %v7570 = vmul.u32 %v7563, %v7554
        %v7571 = vadd.s32 %v7566, %v7568
        %vm7572 = vc.u32 %v7566, %v7568
        %v7573 = vadd.s32 %v7569, 1
        %v7574 = vsel %vm7572, %v7573, %v7569
        %v7575 = vadd.s32 %v7570, %v7574
        %v7576 = vadd.s32 %v7575, 536870912
        %v7577 = vshrl.u32 %v7576, 30
        %v7578 = vshll.u32 %v7577, 30
        %v7579 = vsub.s32 %v7575, %v7578
        %vm7580 = vcmp.lt.s32.totalorder %v7579, 0
        %v7581 = vsub.s32 0, %v7579
        %v7582 = vsel %vm7580, %v7581, %v7579
        %v7583 = vclz %v7582
        %v7584 = vsub.s32 %v7583, 2
        %vm7585 = vcmp.gt.s32.totalorder 0, %v7584
        %v7586 = vsel %vm7585, 0, %v7584
        %v7587 = vsub.s32 32, %v7586
        %v7588 = vshll.u32 %v7579, %v7586
        %v7589 = vshrl.u32 %v7571, %v7587
        %v7590 = vor.u32 %v7588, %v7589
        %v7591 = vsub.s32 4294967266, %v7586
        %v7592 = vadd.s32 %v7591, 127
        %v7593 = vshll.u32 %v7592, 23
        %v7594 = vor.u32 4788187, %v7593
        %v7595 = vand.u32 2147483647, %v7594
        %v7597 = vcvt.s32.f32 %v7590
        %v7598 = vmul.f32 %v7597, %v7595
        %v7599 = vxor.u32 %v7598, 2147483648
        %v7600 = vsel %vm7517, %v7599, %v7598
        %v7601 = vsub.s32 4, %v7577
        %v7602 = vsel %vm7517, %v7601, %v7577
        %v7603 = vsel %vm7516, %v1091, %v7600
        %v7604 = vsel %vm7516, 0, %v7602
        %v7605 = vcosq.f32.pop %v7603
        %v7606 = vsinq.f32.pop %v7603
        %vm7607 = vweird.f32 %v1091
        %v7608 = vand.u32 %v7604, 3
        %vm7609 = vcmp.lt.s32.totalorder %v7608, 2
        %vm7610 = vcmp.eq.s32.totalorder %v7608, 0
        %v7611 = vxor.u32 %v7606, 2147483648
        %v7612 = vsel %vm7610, %v7605, %v7611
        %vm7613 = vcmp.eq.s32.totalorder %v7608, 2
        %v7614 = vxor.u32 %v7605, 2147483648
        %v7615 = vsel %vm7613, %v7614, %v7606
        %v7616 = vsel %vm7609, %v7612, %v7615
        %v7617 = vsel %vm7607, nan, %v7616
        %v7618 = vand.u32 2147483647, %v1092
        %vm7619 = vcmp.le.f32.partialorder %v7618, 0.7853982
        %vm7620 = vcmp.lt.s32.totalorder %v1092, 0
        %v7621 = vand.u32 %v1092, 2139095040
        %v7622 = vshrl.u32 %v7621, 23
        %v7623 = vsub.s32 %v7622, 127
        %v7624 = vand.u32 2147483647, %v1092
        %v7625 = vand.u32 %v7624, 8388607
        %v7626 = vor.u32 %v7625, 8388608
        %v7627 = vsub.s32 0, %v7626
        %v7628 = vadd.s32 %v7623, 1
        %vm7629 = vcmp.gt.s32.totalorder %v7628, 0
        %v7630 = vsel %vm7629, %v7628, 0
        %v7631 = vshrl.u32 %v7630, 5
        %v7632 = vand.u32 %v7630, 31
        %v7633 = vsub.s32 32, %v7632
        %v7634 = vshrl.u32 683565275, %v7633
        %v7635 = vshll.u32 683565275, %v7632
        %v7636 = vshrl.u32 2475754826, %v7633
        %v7637 = vor.u32 %v7635, %v7636
        %v7638 = vshll.u32 2475754826, %v7632
        %v7639 = vshrl.u32 2131351028, %v7633
        %v7640 = vor.u32 %v7638, %v7639
        %v7641 = vshll.u32 2131351028, %v7632
        %v7642 = vshrl.u32 2102212464, %v7633
        %v7643 = vor.u32 %v7641, %v7642
        %v7644 = vshll.u32 2102212464, %v7632
        %v7645 = vshrl.u32 920167782, %v7633
        %v7646 = vor.u32 %v7644, %v7645
        %v7647 = vshll.u32 920167782, %v7632
        %v7648 = vshrl.u32 1326507024, %v7633
        %v7649 = vor.u32 %v7647, %v7648
        %vm7650 = vcmp.lt.s32.totalorder %v7631, 1
        %vm7651 = vcmp.lt.s32.totalorder %v7631, 2
        %vm7652 = vcmp.lt.s32.totalorder %v7631, 3
        %vm7653 = vcmp.lt.s32.totalorder %v7631, 4
        %v7654 = vsel %vm7650, %v7634, %v7637
        %v7655 = vsel %vm7653, %v7643, 2102212464
        %v7656 = vsel %vm7652, %v7640, %v7655
        %v7657 = vsel %vm7651, %v7654, %v7656
        %v7658 = vsel %vm7650, %v7637, %v7640
        %v7659 = vsel %vm7653, %v7646, 920167782
        %v7660 = vsel %vm7652, %v7643, %v7659
        %v7661 = vsel %vm7651, %v7658, %v7660
        %v7662 = vsel %vm7650, %v7640, %v7643
        %v7663 = vsel %vm7653, %v7649, 1326507024
        %v7664 = vsel %vm7652, %v7646, %v7663
        %v7665 = vsel %vm7651, %v7662, %v7664
        %v7666 = vshll.u32 %v7626, 8
        %v7667 = vmul.u32.u64.compose %v7666, %v7665
        %v7668 = vextract.low.u32 %v7667
        %v7669 = vextract.high.u32 %v7667
        %v7670 = vmul.u32.u64.compose %v7666, %v7661
        %v7671 = vextract.low.u32 %v7670
        %v7672 = vextract.high.u32 %v7670
        %v7673 = vmul.u32 %v7666, %v7657
        %v7674 = vadd.s32 %v7669, %v7671
        %vm7675 = vc.u32 %v7669, %v7671
        %v7676 = vadd.s32 %v7672, 1
        %v7677 = vsel %vm7675, %v7676, %v7672
        %v7678 = vadd.s32 %v7673, %v7677
        %v7679 = vadd.s32 %v7678, 536870912
        %v7680 = vshrl.u32 %v7679, 30
        %v7681 = vshll.u32 %v7680, 30
        %v7682 = vsub.s32 %v7678, %v7681
        %vm7683 = vcmp.lt.s32.totalorder %v7682, 0
        %v7684 = vsub.s32 0, %v7682
        %v7685 = vsel %vm7683, %v7684, %v7682
        %v7686 = vclz %v7685
        %v7687 = vsub.s32 %v7686, 2
        %vm7688 = vcmp.gt.s32.totalorder 0, %v7687
        %v7689 = vsel %vm7688, 0, %v7687
        %v7690 = vsub.s32 32, %v7689
        %v7691 = vshll.u32 %v7682, %v7689
        %v7692 = vshrl.u32 %v7674, %v7690
        %v7693 = vor.u32 %v7691, %v7692
        %v7694 = vsub.s32 4294967266, %v7689
        %v7695 = vadd.s32 %v7694, 127
        %v7696 = vshll.u32 %v7695, 23
        %v7697 = vor.u32 4788187, %v7696
        %v7698 = vand.u32 2147483647, %v7697
        %v7700 = vcvt.s32.f32 %v7693
        %v7701 = vmul.f32 %v7700, %v7698
        %v7702 = vxor.u32 %v7701, 2147483648
        %v7703 = vsel %vm7620, %v7702, %v7701
        %v7704 = vsub.s32 4, %v7680
        %v7705 = vsel %vm7620, %v7704, %v7680
        %v7706 = vsel %vm7619, %v1092, %v7703
        %v7707 = vsel %vm7619, 0, %v7705
        %v7708 = vcosq.f32.pop %v7706
        %v7709 = vsinq.f32.pop %v7706
        %vm7710 = vweird.f32 %v1092
        %v7711 = vand.u32 %v7707, 3
        %vm7712 = vcmp.lt.s32.totalorder %v7711, 2
        %vm7713 = vcmp.eq.s32.totalorder %v7711, 0
        %v7714 = vxor.u32 %v7709, 2147483648
        %v7715 = vsel %vm7713, %v7708, %v7714
        %vm7716 = vcmp.eq.s32.totalorder %v7711, 2
        %v7717 = vxor.u32 %v7708, 2147483648
        %v7718 = vsel %vm7716, %v7717, %v7709
        %v7719 = vsel %vm7712, %v7715, %v7718
        %v7720 = vsel %vm7710, nan, %v7719
        %v7721 = vsel %vm1096, %v1200, %v4527
        %v7722 = vsel %vm1096, %v1304, %v4630
        %v7723 = vsel %vm1096, %v1408, %v4733
        %v7724 = vsel %vm1096, %v1512, %v4836
        %v7725 = vsel %vm1096, %v1616, %v4939
        %v7726 = vsel %vm1096, %v1720, %v5042
        %v7727 = vsel %vm1096, %v1824, %v5145
        %v7728 = vsel %vm1096, %v1928, %v5248
        %v7729 = vsel %vm1096, %v2032, %v5351
        %v7730 = vsel %vm1096, %v2136, %v5454
        %v7731 = vsel %vm1096, %v2240, %v5557
        %v7732 = vsel %vm1096, %v2344, %v5660
        %v7733 = vsel %vm1096, %v2448, %v5763
        %v7734 = vsel %vm1096, %v2552, %v5866
        %v7735 = vsel %vm1096, %v2656, %v5969
        %v7736 = vsel %vm1096, %v2760, %v6072
        %v7737 = vsel %vm1096, %v2864, %v6175
        %v7738 = vsel %vm1096, %v2968, %v6278
        %v7739 = vsel %vm1096, %v3072, %v6381
        %v7740 = vsel %vm1096, %v3176, %v6484
        %v7741 = vsel %vm1096, %v3280, %v6587
        %v7742 = vsel %vm1096, %v3384, %v6690
        %v7743 = vsel %vm1096, %v3488, %v6793
        %v7744 = vsel %vm1096, %v3592, %v6896
        %v7745 = vsel %vm1096, %v3696, %v6999
        %v7746 = vsel %vm1096, %v3800, %v7102
        %v7747 = vsel %vm1096, %v3904, %v7205
        %v7748 = vsel %vm1096, %v4008, %v7308
        %v7749 = vsel %vm1096, %v4112, %v7411
        %v7750 = vsel %vm1096, %v4216, %v7514
        %v7751 = vsel %vm1096, %v4320, %v7617
        %v7752 = vsel %vm1096, %v4424, %v7720
        %v7753 = vsel %vm1095, %v1061, %v7721
        %v7754 = vsel %vm1095, %v1062, %v7722
        %v7755 = vsel %vm1095, %v1063, %v7723
        %v7756 = vsel %vm1095, %v1064, %v7724
        %v7757 = vsel %vm1095, %v1065, %v7725
        %v7758 = vsel %vm1095, %v1066, %v7726
        %v7759 = vsel %vm1095, %v1067, %v7727
        %v7760 = vsel %vm1095, %v1068, %v7728
        %v7761 = vsel %vm1095, %v1069, %v7729
        %v7762 = vsel %vm1095, %v1070, %v7730
        %v7763 = vsel %vm1095, %v1071, %v7731
        %v7764 = vsel %vm1095, %v1072, %v7732
        %v7765 = vsel %vm1095, %v1073, %v7733
        %v7766 = vsel %vm1095, %v1074, %v7734
        %v7767 = vsel %vm1095, %v1075, %v7735
        %v7768 = vsel %vm1095, %v1076, %v7736
        %v7769 = vsel %vm1095, %v1077, %v7737
        %v7770 = vsel %vm1095, %v1078, %v7738
        %v7771 = vsel %vm1095, %v1079, %v7739
        %v7772 = vsel %vm1095, %v1080, %v7740
        %v7773 = vsel %vm1095, %v1081, %v7741
        %v7774 = vsel %vm1095, %v1082, %v7742
        %v7775 = vsel %vm1095, %v1083, %v7743
        %v7776 = vsel %vm1095, %v1084, %v7744
        %v7777 = vsel %vm1095, %v1085, %v7745
        %v7778 = vsel %vm1095, %v1086, %v7746
        %v7779 = vsel %vm1095, %v1087, %v7747
        %v7780 = vsel %vm1095, %v1088, %v7748
        %v7781 = vsel %vm1095, %v1089, %v7749
        %v7782 = vsel %vm1095, %v1090, %v7750
        %v7783 = vsel %vm1095, %v1091, %v7751
        %v7784 = vsel %vm1095, %v1092, %v7752
        %v7785 = vld [vmem:[%s3] sm:$0xf]
        %v7786 = vld [vmem:[%s3 + $0x4] sm:$0xf]
        %v7787 = vld [vmem:[%s3 + $0x8] sm:$0xf]
        %v7788 = vpack.c.bf16 %v7754, %v7753
        %v7789 = vpack.c.bf16 %v7756, %v7755
        %v7790 = vpack.c.bf16 %v7758, %v7757
        %v7791 = vpack.c.bf16 %v7760, %v7759
        %v7792 = vpack.c.bf16 %v7762, %v7761
        %v7793 = vpack.c.bf16 %v7764, %v7763
        %v7794 = vpack.c.bf16 %v7766, %v7765
        %v7795 = vpack.c.bf16 %v7768, %v7767
        %v7796 = vpack.c.bf16 %v7770, %v7769
        %v7797 = vpack.c.bf16 %v7772, %v7771
        %v7798 = vpack.c.bf16 %v7774, %v7773
        %v7799 = vpack.c.bf16 %v7776, %v7775
        %v7800 = vpack.c.bf16 %v7778, %v7777
        %v7801 = vpack.c.bf16 %v7780, %v7779
        %v7802 = vpack.c.bf16 %v7782, %v7781
        %v7803 = vpack.c.bf16 %v7784, %v7783
        %v7804 = vld [vmem:[%s4] sm:$0xf]
        %v7805 = vld [vmem:[%s4 + $0x4] sm:$0xf]
        %v7806 = vld [vmem:[%s4 + $0x8] sm:$0xf]
        %v7807 = vld [vmem:[%s4 + $0xc] sm:$0xf]
        %v7808 = vld [vmem:[%s4 + $0x10] sm:$0xf]
        %v7809 = vld [vmem:[%s4 + $0x14] sm:$0xf]
        %v7810 = vld [vmem:[%s4 + $0x18] sm:$0xf]
        %v7811 = vld [vmem:[%s4 + $0x1c] sm:$0xf]
        %v7812 = vld [vmem:[%s4 + $0x20] sm:$0xf]
        %v7813 = vld [vmem:[%s4 + $0x24] sm:$0xf]
        %v7814 = vld [vmem:[%s4 + $0x28] sm:$0xf]
        %v7815 = vld [vmem:[%s4 + $0x2c] sm:$0xf]
        %v7816 = vld [vmem:[%s4 + $0x30] sm:$0xf]
        %v7817 = vld [vmem:[%s4 + $0x34] sm:$0xf]
        %v7818 = vld [vmem:[%s4 + $0x38] sm:$0xf]
        %v7819 = vld [vmem:[%s4 + $0x3c] sm:$0xf]
        %v7836 = vunpack.c.l.b16 %v7804
        %v7837 = vunpack.c.l.b16 %v7805
        %v7838 = vunpack.c.l.b16 %v7806
        %v7839 = vunpack.c.l.b16 %v7807
        %v7840 = vunpack.c.l.b16 %v7808
        %v7841 = vunpack.c.l.b16 %v7809
        %v7842 = vunpack.c.l.b16 %v7810
        %v7843 = vunpack.c.l.b16 %v7811
        %v7844 = vunpack.c.l.b16 %v7812
        %v7845 = vunpack.c.l.b16 %v7813
        %v7846 = vunpack.c.l.b16 %v7814
        %v7847 = vunpack.c.l.b16 %v7815
        %v7848 = vunpack.c.l.b16 %v7816
        %v7849 = vunpack.c.l.b16 %v7817
        %v7850 = vunpack.c.l.b16 %v7818
        %v7851 = vunpack.c.l.b16 %v7819
        %v7852 = vpack.c.b16 %v7837, %v7836
        %v7853 = vpack.c.b16 %v7839, %v7838
        %v7854 = vpack.c.b16 %v7841, %v7840
        %v7855 = vpack.c.b16 %v7843, %v7842
        %v7856 = vpack.c.b16 %v7845, %v7844
        %v7857 = vpack.c.b16 %v7847, %v7846
        %v7858 = vpack.c.b16 %v7849, %v7848
        %v7859 = vpack.c.b16 %v7851, %v7850
        %7868 = vmatprep.subr.bf16.mxu0 0
        %7869 = vmatpush1.bf16.msra.mxu0 %v7852
        %7870 = vmatprep.subr.bf16.mxu0 0
        %7871 = vmatpush1.bf16.msra.mxu0 %v7853
        %7872 = vmatprep.subr.bf16.mxu0 0
        %7873 = vmatpush1.bf16.msra.mxu0 %v7854
        %7874 = vmatprep.subr.bf16.mxu0 0
        %7875 = vmatpush1.bf16.msra.mxu0 %v7855
        %7876 = vmatprep.subr.bf16.mxu0 0
        %7877 = vmatpush1.bf16.msra.mxu0 %v7856
        %7878 = vmatprep.subr.bf16.mxu0 0
        %7879 = vmatpush1.bf16.msra.mxu0 %v7857
        %7880 = vmatprep.subr.bf16.mxu0 0
        %7881 = vmatpush1.bf16.msra.mxu0 %v7858
        %7882 = vmatprep.subr.bf16.mxu0 0
        %7883 = vmatpush1.bf16.msra.mxu0 %v7859
        %7884 = vmatprep.subr.bf16.mxu0 0
        %7885 = vmatpush1.bf16.msra.mxu0 0
        %7886 = vmatprep.subr.bf16.mxu0 0
        %7887 = vmatpush1.bf16.msra.mxu0 0
        %7888 = vmatprep.subr.bf16.mxu0 0
        %7889 = vmatpush1.bf16.msra.mxu0 0
        %7890 = vmatprep.subr.bf16.mxu0 0
        %7891 = vmatpush1.bf16.msra.mxu0 0
        %7892 = vmatprep.subr.bf16.mxu0 0
        %7893 = vmatpush1.bf16.msra.mxu0 0
        %7894 = vmatprep.subr.bf16.mxu0 0
        %7895 = vmatpush1.bf16.msra.mxu0 0
        %7896 = vmatprep.subr.bf16.mxu0 0
        %7897 = vmatpush1.bf16.msra.mxu0 0
        %7898 = vmatprep.subr.bf16.mxu0 0
        %7899 = vmatpush1.bf16.msra.mxu0 0
        %7900 = vmatprep.mubr.bf16.mxu0 0
        %7901 = vmatmul.mubr.bf16.gmra.mrb[0].mxu0 %v7788
        %v7902 = vpop.f32.mrb[0].mxu0
        %v7903 = vadd.f32 0.0, %v7902
        %v7904 = vpop.f32.mrb[0].mxu0
        %v7905 = vpop.f32.mrb[0].mxu0
        %v7906 = vadd.f32 0.0, %v7905
        %v7907 = vpop.f32.mrb[0].mxu0
        %7908 = vmatprep.mubr.bf16.mxu0 0
        %7909 = vmatmul.mubr.bf16.gmra.mrb[0].mxu0 %v7789
        %v7910 = vpop.f32.mrb[0].mxu0
        %v7911 = vadd.f32 0.0, %v7910
        %v7912 = vpop.f32.mrb[0].mxu0
        %v7913 = vpop.f32.mrb[0].mxu0
        %v7914 = vadd.f32 0.0, %v7913
        %v7915 = vpop.f32.mrb[0].mxu0
        %7916 = vmatprep.mubr.bf16.mxu0 0
        %7917 = vmatmul.mubr.bf16.gmra.mrb[0].mxu0 %v7790
        %v7918 = vpop.f32.mrb[0].mxu0
        %v7919 = vadd.f32 0.0, %v7918
        %v7920 = vpop.f32.mrb[0].mxu0
        %v7921 = vpop.f32.mrb[0].mxu0
        %v7922 = vadd.f32 0.0, %v7921
        %v7923 = vpop.f32.mrb[0].mxu0
        %7924 = vmatprep.mubr.bf16.mxu0 0
        %7925 = vmatmul.mubr.bf16.gmra.mrb[0].mxu0 %v7791
        %v7926 = vpop.f32.mrb[0].mxu0
        %v7927 = vadd.f32 0.0, %v7926
        %v7928 = vpop.f32.mrb[0].mxu0
        %v7929 = vpop.f32.mrb[0].mxu0
        %v7930 = vadd.f32 0.0, %v7929
        %v7931 = vpop.f32.mrb[0].mxu0
        %7932 = vmatprep.mubr.bf16.mxu0 0
        %7933 = vmatmul.mubr.bf16.gmra.mrb[0].mxu0 %v7792
        %v7934 = vpop.f32.mrb[0].mxu0
        %v7935 = vadd.f32 0.0, %v7934
        %v7936 = vpop.f32.mrb[0].mxu0
        %v7937 = vpop.f32.mrb[0].mxu0
        %v7938 = vadd.f32 0.0, %v7937
        %v7939 = vpop.f32.mrb[0].mxu0
        %7940 = vmatprep.mubr.bf16.mxu0 0
        %7941 = vmatmul.mubr.bf16.gmra.mrb[0].mxu0 %v7793
        %v7942 = vpop.f32.mrb[0].mxu0
        %v7943 = vadd.f32 0.0, %v7942
        %v7944 = vpop.f32.mrb[0].mxu0
        %v7945 = vpop.f32.mrb[0].mxu0
        %v7946 = vadd.f32 0.0, %v7945
        %v7947 = vpop.f32.mrb[0].mxu0
        %7948 = vmatprep.mubr.bf16.mxu0 0
        %7949 = vmatmul.mubr.bf16.gmra.mrb[0].mxu0 %v7794
        %v7950 = vpop.f32.mrb[0].mxu0
        %v7951 = vadd.f32 0.0, %v7950
        %v7952 = vpop.f32.mrb[0].mxu0
        %v7953 = vpop.f32.mrb[0].mxu0
        %v7954 = vadd.f32 0.0, %v7953
        %v7955 = vpop.f32.mrb[0].mxu0
        %7956 = vmatprep.mubr.bf16.mxu0 0
        %7957 = vmatmul.mubr.bf16.gmra.mrb[0].mxu0 %v7795
        %v7958 = vpop.f32.mrb[0].mxu0
        %v7959 = vadd.f32 0.0, %v7958
        %v7960 = vpop.f32.mrb[0].mxu0
        %v7961 = vpop.f32.mrb[0].mxu0
        %v7962 = vadd.f32 0.0, %v7961
        %v7963 = vpop.f32.mrb[0].mxu0
        %7964 = vmatprep.mubr.bf16.mxu0 0
        %7965 = vmatmul.mubr.bf16.gmra.mrb[0].mxu0 %v7796
        %v7966 = vpop.f32.mrb[0].mxu0
        %v7967 = vadd.f32 0.0, %v7966
        %v7968 = vpop.f32.mrb[0].mxu0
        %v7969 = vpop.f32.mrb[0].mxu0
        %v7970 = vadd.f32 0.0, %v7969
        %v7971 = vpop.f32.mrb[0].mxu0
        %7972 = vmatprep.mubr.bf16.mxu0 0
        %7973 = vmatmul.mubr.bf16.gmra.mrb[0].mxu0 %v7797
        %v7974 = vpop.f32.mrb[0].mxu0
        %v7975 = vadd.f32 0.0, %v7974
        %v7976 = vpop.f32.mrb[0].mxu0
        %v7977 = vpop.f32.mrb[0].mxu0
        %v7978 = vadd.f32 0.0, %v7977
        %v7979 = vpop.f32.mrb[0].mxu0
        %7980 = vmatprep.mubr.bf16.mxu0 0
        %7981 = vmatmul.mubr.bf16.gmra.mrb[0].mxu0 %v7798
        %v7982 = vpop.f32.mrb[0].mxu0
        %v7983 = vadd.f32 0.0, %v7982
        %v7984 = vpop.f32.mrb[0].mxu0
        %v7985 = vpop.f32.mrb[0].mxu0
        %v7986 = vadd.f32 0.0, %v7985
        %v7987 = vpop.f32.mrb[0].mxu0
        %7988 = vmatprep.mubr.bf16.mxu0 0
        %7989 = vmatmul.mubr.bf16.gmra.mrb[0].mxu0 %v7799
        %v7990 = vpop.f32.mrb[0].mxu0
        %v7991 = vadd.f32 0.0, %v7990
        %v7992 = vpop.f32.mrb[0].mxu0
        %v7993 = vpop.f32.mrb[0].mxu0
        %v7994 = vadd.f32 0.0, %v7993
        %v7995 = vpop.f32.mrb[0].mxu0
        %7996 = vmatprep.mubr.bf16.mxu0 0
        %7997 = vmatmul.mubr.bf16.gmra.mrb[0].mxu0 %v7800
        %v7998 = vpop.f32.mrb[0].mxu0
        %v7999 = vadd.f32 0.0, %v7998
        %v8000 = vpop.f32.mrb[0].mxu0
        %v8001 = vpop.f32.mrb[0].mxu0
        %v8002 = vadd.f32 0.0, %v8001
        %v8003 = vpop.f32.mrb[0].mxu0
        %8004 = vmatprep.mubr.bf16.mxu0 0
        %8005 = vmatmul.mubr.bf16.gmra.mrb[0].mxu0 %v7801
        %v8006 = vpop.f32.mrb[0].mxu0
        %v8007 = vadd.f32 0.0, %v8006
        %v8008 = vpop.f32.mrb[0].mxu0
        %v8009 = vpop.f32.mrb[0].mxu0
        %v8010 = vadd.f32 0.0, %v8009
        %v8011 = vpop.f32.mrb[0].mxu0
        %8012 = vmatprep.mubr.bf16.mxu0 0
        %8013 = vmatmul.mubr.bf16.gmra.mrb[0].mxu0 %v7802
        %v8014 = vpop.f32.mrb[0].mxu0
        %v8015 = vadd.f32 0.0, %v8014
        %v8016 = vpop.f32.mrb[0].mxu0
        %v8017 = vpop.f32.mrb[0].mxu0
        %v8018 = vadd.f32 0.0, %v8017
        %v8019 = vpop.f32.mrb[0].mxu0
        %8020 = vmatprep.mubr.bf16.mxu0 0
        %8021 = vmatmul.mubr.bf16.gmra.mrb[0].mxu0 %v7803
        %v8022 = vpop.f32.mrb[0].mxu0
        %v8023 = vadd.f32 0.0, %v8022
        %v8024 = vpop.f32.mrb[0].mxu0
        %v8025 = vpop.f32.mrb[0].mxu0
        %v8026 = vadd.f32 0.0, %v8025
        %v8027 = vpop.f32.mrb[0].mxu0
        %8028 = vdwg.mxu0
        %v8032 = vunpack.c.l.b16 %v7785
        %v8033 = vunpack.c.l.b16 %v7786
        %v8034 = vunpack.c.l.b16 %v7787
        %v8035 = vpack.c.b16 %v8033, %v8032
        %v8036 = vpack.c.b16 %v8034, %v8034
        %vm8038 = vcmask 195584
        %v8040 = vsel %vm8038, %v488, 0
        %v8043 = vsel %vm8038, %v489, 0
        %v8046 = vsel %vm8038, %v490, 0
        %v8049 = vsel %vm8038, %v491, 0
        %v8052 = vsel %vm8038, %v492, 0
        %v8055 = vsel %vm8038, %v493, 0
        %v8058 = vsel %vm8038, %v494, 0
        %v8061 = vsel %vm8038, %v495, 0
        %v8064 = vsel %vm8038, %v496, 0
        %v8067 = vsel %vm8038, %v497, 0
        %v8070 = vsel %vm8038, %v498, 0
        %v8073 = vsel %vm8038, %v499, 0
        %v8076 = vsel %vm8038, %v500, 0
        %v8079 = vsel %vm8038, %v501, 0
        %v8082 = vsel %vm8038, %v502, 0
        %v8085 = vsel %vm8038, %v503, 0
        %vm8087 = vcmask 1043456
        %v8089 = vsel %vm8087, %v8036, 0
        %8091 = vmatprep.subr.bf16.mxu0 0
        %8092 = vmatpush1.bf16.msra.mxu0 %v8035
        %8093 = vmatprep.subr.bf16.mxu0 0
        %8094 = vmatpush1.bf16.msra.mxu0 %v8089
        %8095 = vmatprep.subr.bf16.mxu0 0
        %8096 = vmatpush1.bf16.msra.mxu0 0
        %8097 = vmatprep.subr.bf16.mxu0 0
        %8098 = vmatpush1.bf16.msra.mxu0 0
        %8099 = vmatprep.subr.bf16.mxu0 0
        %8100 = vmatpush1.bf16.msra.mxu0 0
        %8101 = vmatprep.subr.bf16.mxu0 0
        %8102 = vmatpush1.bf16.msra.mxu0 0
        %8103 = vmatprep.subr.bf16.mxu0 0
        %8104 = vmatpush1.bf16.msra.mxu0 0
        %8105 = vmatprep.subr.bf16.mxu0 0
        %8106 = vmatpush1.bf16.msra.mxu0 0
        %8107 = vmatprep.subr.bf16.mxu0 0
        %8108 = vmatpush1.bf16.msra.mxu0 0
        %8109 = vmatprep.subr.bf16.mxu0 0
        %8110 = vmatpush1.bf16.msra.mxu0 0
        %8111 = vmatprep.subr.bf16.mxu0 0
        %8112 = vmatpush1.bf16.msra.mxu0 0
        %8113 = vmatprep.subr.bf16.mxu0 0
        %8114 = vmatpush1.bf16.msra.mxu0 0
        %8115 = vmatprep.subr.bf16.mxu0 0
        %8116 = vmatpush1.bf16.msra.mxu0 0
        %8117 = vmatprep.subr.bf16.mxu0 0
        %8118 = vmatpush1.bf16.msra.mxu0 0
        %8119 = vmatprep.subr.bf16.mxu0 0
        %8120 = vmatpush1.bf16.msra.mxu0 0
        %8121 = vmatprep.subr.bf16.mxu0 0
        %8122 = vmatpush1.bf16.msra.mxu0 0
        %8123 = vmatprep.mubr.bf16.mxu0 0
        %8124 = vmatmul.mubr.bf16.gmra.mrb[0].mxu0 %v8040
        %v8125 = vpop.f32.mrb[0].mxu0
        %v8126 = vadd.f32 %v7903, %v8125
        %v8127 = vpop.f32.mrb[0].mxu0
        %v8128 = vpop.f32.mrb[0].mxu0
        %v8129 = vadd.f32 %v7906, %v8128
        %v8130 = vpop.f32.mrb[0].mxu0
        %8131 = vmatprep.mubr.bf16.mxu0 0
        %8132 = vmatmul.mubr.bf16.gmra.mrb[0].mxu0 %v8043
        %v8133 = vpop.f32.mrb[0].mxu0
        %v8134 = vadd.f32 %v7911, %v8133
        %v8135 = vpop.f32.mrb[0].mxu0
        %v8136 = vpop.f32.mrb[0].mxu0
        %v8137 = vadd.f32 %v7914, %v8136
        %v8138 = vpop.f32.mrb[0].mxu0
        %8139 = vmatprep.mubr.bf16.mxu0 0
        %8140 = vmatmul.mubr.bf16.gmra.mrb[0].mxu0 %v8046
        %v8141 = vpop.f32.mrb[0].mxu0
        %v8142 = vadd.f32 %v7919, %v8141
        %v8143 = vpop.f32.mrb[0].mxu0
        %v8144 = vpop.f32.mrb[0].mxu0
        %v8145 = vadd.f32 %v7922, %v8144
        %v8146 = vpop.f32.mrb[0].mxu0
        %8147 = vmatprep.mubr.bf16.mxu0 0
        %8148 = vmatmul.mubr.bf16.gmra.mrb[0].mxu0 %v8049
        %v8149 = vpop.f32.mrb[0].mxu0
        %v8150 = vadd.f32 %v7927, %v8149
        %v8151 = vpop.f32.mrb[0].mxu0
        %v8152 = vpop.f32.mrb[0].mxu0
        %v8153 = vadd.f32 %v7930, %v8152
        %v8154 = vpop.f32.mrb[0].mxu0
        %8155 = vmatprep.mubr.bf16.mxu0 0
        %8156 = vmatmul.mubr.bf16.gmra.mrb[0].mxu0 %v8052
        %v8157 = vpop.f32.mrb[0].mxu0
        %v8158 = vadd.f32 %v7935, %v8157
        %v8159 = vpop.f32.mrb[0].mxu0
        %v8160 = vpop.f32.mrb[0].mxu0
        %v8161 = vadd.f32 %v7938, %v8160
        %v8162 = vpop.f32.mrb[0].mxu0
        %8163 = vmatprep.mubr.bf16.mxu0 0
        %8164 = vmatmul.mubr.bf16.gmra.mrb[0].mxu0 %v8055
        %v8165 = vpop.f32.mrb[0].mxu0
        %v8166 = vadd.f32 %v7943, %v8165
        %v8167 = vpop.f32.mrb[0].mxu0
        %v8168 = vpop.f32.mrb[0].mxu0
        %v8169 = vadd.f32 %v7946, %v8168
        %v8170 = vpop.f32.mrb[0].mxu0
        %8171 = vmatprep.mubr.bf16.mxu0 0
        %8172 = vmatmul.mubr.bf16.gmra.mrb[0].mxu0 %v8058
        %v8173 = vpop.f32.mrb[0].mxu0
        %v8174 = vadd.f32 %v7951, %v8173
        %v8175 = vpop.f32.mrb[0].mxu0
        %v8176 = vpop.f32.mrb[0].mxu0
        %v8177 = vadd.f32 %v7954, %v8176
        %v8178 = vpop.f32.mrb[0].mxu0
        %8179 = vmatprep.mubr.bf16.mxu0 0
        %8180 = vmatmul.mubr.bf16.gmra.mrb[0].mxu0 %v8061
        %v8181 = vpop.f32.mrb[0].mxu0
        %v8182 = vadd.f32 %v7959, %v8181
        %v8183 = vpop.f32.mrb[0].mxu0
        %v8184 = vpop.f32.mrb[0].mxu0
        %v8185 = vadd.f32 %v7962, %v8184
        %v8186 = vpop.f32.mrb[0].mxu0
        %8187 = vmatprep.mubr.bf16.mxu0 0
        %8188 = vmatmul.mubr.bf16.gmra.mrb[0].mxu0 %v8064
        %v8189 = vpop.f32.mrb[0].mxu0
        %v8190 = vadd.f32 %v7967, %v8189
        %v8191 = vpop.f32.mrb[0].mxu0
        %v8192 = vpop.f32.mrb[0].mxu0
        %v8193 = vadd.f32 %v7970, %v8192
        %v8194 = vpop.f32.mrb[0].mxu0
        %8195 = vmatprep.mubr.bf16.mxu0 0
        %8196 = vmatmul.mubr.bf16.gmra.mrb[0].mxu0 %v8067
        %v8197 = vpop.f32.mrb[0].mxu0
        %v8198 = vadd.f32 %v7975, %v8197
        %v8199 = vpop.f32.mrb[0].mxu0
        %v8200 = vpop.f32.mrb[0].mxu0
        %v8201 = vadd.f32 %v7978, %v8200
        %v8202 = vpop.f32.mrb[0].mxu0
        %8203 = vmatprep.mubr.bf16.mxu0 0
        %8204 = vmatmul.mubr.bf16.gmra.mrb[0].mxu0 %v8070
        %v8205 = vpop.f32.mrb[0].mxu0
        %v8206 = vadd.f32 %v7983, %v8205
        %v8207 = vpop.f32.mrb[0].mxu0
        %v8208 = vpop.f32.mrb[0].mxu0
        %v8209 = vadd.f32 %v7986, %v8208
        %v8210 = vpop.f32.mrb[0].mxu0
        %8211 = vmatprep.mubr.bf16.mxu0 0
        %8212 = vmatmul.mubr.bf16.gmra.mrb[0].mxu0 %v8073
        %v8213 = vpop.f32.mrb[0].mxu0
        %v8214 = vadd.f32 %v7991, %v8213
        %v8215 = vpop.f32.mrb[0].mxu0
        %v8216 = vpop.f32.mrb[0].mxu0
        %v8217 = vadd.f32 %v7994, %v8216
        %v8218 = vpop.f32.mrb[0].mxu0
        %8219 = vmatprep.mubr.bf16.mxu0 0
        %8220 = vmatmul.mubr.bf16.gmra.mrb[0].mxu0 %v8076
        %v8221 = vpop.f32.mrb[0].mxu0
        %v8222 = vadd.f32 %v7999, %v8221
        %v8223 = vpop.f32.mrb[0].mxu0
        %v8224 = vpop.f32.mrb[0].mxu0
        %v8225 = vadd.f32 %v8002, %v8224
        %v8226 = vpop.f32.mrb[0].mxu0
        %8227 = vmatprep.mubr.bf16.mxu0 0
        %8228 = vmatmul.mubr.bf16.gmra.mrb[0].mxu0 %v8079
        %v8229 = vpop.f32.mrb[0].mxu0
        %v8230 = vadd.f32 %v8007, %v8229
        %v8231 = vpop.f32.mrb[0].mxu0
        %v8232 = vpop.f32.mrb[0].mxu0
        %v8233 = vadd.f32 %v8010, %v8232
        %v8234 = vpop.f32.mrb[0].mxu0
        %8235 = vmatprep.mubr.bf16.mxu0 0
        %8236 = vmatmul.mubr.bf16.gmra.mrb[0].mxu0 %v8082
        %v8237 = vpop.f32.mrb[0].mxu0
        %v8238 = vadd.f32 %v8015, %v8237
        %v8239 = vpop.f32.mrb[0].mxu0
        %v8240 = vpop.f32.mrb[0].mxu0
        %v8241 = vadd.f32 %v8018, %v8240
        %v8242 = vpop.f32.mrb[0].mxu0
        %8243 = vmatprep.mubr.bf16.mxu0 0
        %8244 = vmatmul.mubr.bf16.gmra.mrb[0].mxu0 %v8085
        %v8245 = vpop.f32.mrb[0].mxu0
        %v8246 = vadd.f32 %v8023, %v8245
        %v8247 = vpop.f32.mrb[0].mxu0
        %v8248 = vpop.f32.mrb[0].mxu0
        %v8249 = vadd.f32 %v8026, %v8248
        %v8250 = vpop.f32.mrb[0].mxu0
        %8251 = vdwg.mxu0
        %v8252 = vld [vmem:[%s5] sm:$0x1]
        %v8254 = vlaneseq
        %v8255 = vshrl.u32 %v8254, 7
        %v8256 = vsub.s32 0, %v8255
        %v8257 = vrot.slane %v8252, %v8256
        %v8259 = vadd.f32 %v8126, %v8257
        %v8260 = vadd.f32 %v8129, %v8257
        %v8261 = vadd.f32 %v8134, %v8257
        %v8262 = vadd.f32 %v8137, %v8257
        %v8263 = vadd.f32 %v8142, %v8257
        %v8264 = vadd.f32 %v8145, %v8257
        %v8265 = vadd.f32 %v8150, %v8257
        %v8266 = vadd.f32 %v8153, %v8257
        %v8267 = vadd.f32 %v8158, %v8257
        %v8268 = vadd.f32 %v8161, %v8257
        %v8269 = vadd.f32 %v8166, %v8257
        %v8270 = vadd.f32 %v8169, %v8257
        %v8271 = vadd.f32 %v8174, %v8257
        %v8272 = vadd.f32 %v8177, %v8257
        %v8273 = vadd.f32 %v8182, %v8257
        %v8274 = vadd.f32 %v8185, %v8257
        %v8275 = vadd.f32 %v8190, %v8257
        %v8276 = vadd.f32 %v8193, %v8257
        %v8277 = vadd.f32 %v8198, %v8257
        %v8278 = vadd.f32 %v8201, %v8257
        %v8279 = vadd.f32 %v8206, %v8257
        %v8280 = vadd.f32 %v8209, %v8257
        %v8281 = vadd.f32 %v8214, %v8257
        %v8282 = vadd.f32 %v8217, %v8257
        %v8283 = vadd.f32 %v8222, %v8257
        %v8284 = vadd.f32 %v8225, %v8257
        %v8285 = vadd.f32 %v8230, %v8257
        %v8286 = vadd.f32 %v8233, %v8257
        %v8287 = vadd.f32 %v8238, %v8257
        %v8288 = vadd.f32 %v8241, %v8257
        %v8289 = vadd.f32 %v8246, %v8257
        %v8290 = vadd.f32 %v8249, %v8257
        %v8291 = vmax.f32 %v8259, 0.0
        %v8292 = vmax.f32 %v8260, 0.0
        %v8293 = vmax.f32 %v8261, 0.0
        %v8294 = vmax.f32 %v8262, 0.0
        %v8295 = vmax.f32 %v8263, 0.0
        %v8296 = vmax.f32 %v8264, 0.0
        %v8297 = vmax.f32 %v8265, 0.0
        %v8298 = vmax.f32 %v8266, 0.0
        %v8299 = vmax.f32 %v8267, 0.0
        %v8300 = vmax.f32 %v8268, 0.0
        %v8301 = vmax.f32 %v8269, 0.0
        %v8302 = vmax.f32 %v8270, 0.0
        %v8303 = vmax.f32 %v8271, 0.0
        %v8304 = vmax.f32 %v8272, 0.0
        %v8305 = vmax.f32 %v8273, 0.0
        %v8306 = vmax.f32 %v8274, 0.0
        %v8307 = vmax.f32 %v8275, 0.0
        %v8308 = vmax.f32 %v8276, 0.0
        %v8309 = vmax.f32 %v8277, 0.0
        %v8310 = vmax.f32 %v8278, 0.0
        %v8311 = vmax.f32 %v8279, 0.0
        %v8312 = vmax.f32 %v8280, 0.0
        %v8313 = vmax.f32 %v8281, 0.0
        %v8314 = vmax.f32 %v8282, 0.0
        %v8315 = vmax.f32 %v8283, 0.0
        %v8316 = vmax.f32 %v8284, 0.0
        %v8317 = vmax.f32 %v8285, 0.0
        %v8318 = vmax.f32 %v8286, 0.0
        %v8319 = vmax.f32 %v8287, 0.0
        %v8320 = vmax.f32 %v8288, 0.0
        %v8321 = vmax.f32 %v8289, 0.0
        %v8322 = vmax.f32 %v8290, 0.0
        %v8323 = vpack.c.bf16 %v8292, %v8291
        %v8324 = vpack.c.bf16 %v8294, %v8293
        %v8325 = vpack.c.bf16 %v8296, %v8295
        %v8326 = vpack.c.bf16 %v8298, %v8297
        %v8327 = vpack.c.bf16 %v8300, %v8299
        %v8328 = vpack.c.bf16 %v8302, %v8301
        %v8329 = vpack.c.bf16 %v8304, %v8303
        %v8330 = vpack.c.bf16 %v8306, %v8305
        %v8331 = vpack.c.bf16 %v8308, %v8307
        %v8332 = vpack.c.bf16 %v8310, %v8309
        %v8333 = vpack.c.bf16 %v8312, %v8311
        %v8334 = vpack.c.bf16 %v8314, %v8313
        %v8335 = vpack.c.bf16 %v8316, %v8315
        %v8336 = vpack.c.bf16 %v8318, %v8317
        %v8337 = vpack.c.bf16 %v8320, %v8319
        %v8338 = vpack.c.bf16 %v8322, %v8321
        %v8339 = vld [vmem:[%s6] sm:$0xf]
        %v8340 = vld [vmem:[%s6 + $0x4] sm:$0xf]
        %v8341 = vld [vmem:[%s6 + $0x8] sm:$0xf]
        %v8342 = vld [vmem:[%s6 + $0xc] sm:$0xf]
        %v8343 = vld [vmem:[%s6 + $0x10] sm:$0xf]
        %v8344 = vld [vmem:[%s6 + $0x14] sm:$0xf]
        %v8345 = vld [vmem:[%s6 + $0x18] sm:$0xf]
        %v8346 = vld [vmem:[%s6 + $0x1c] sm:$0xf]
        %v8347 = vld [vmem:[%s6 + $0x20] sm:$0xf]
        %v8348 = vld [vmem:[%s6 + $0x24] sm:$0xf]
        %v8349 = vld [vmem:[%s6 + $0x28] sm:$0xf]
        %v8350 = vld [vmem:[%s6 + $0x2c] sm:$0xf]
        %v8351 = vld [vmem:[%s6 + $0x30] sm:$0xf]
        %v8352 = vld [vmem:[%s6 + $0x34] sm:$0xf]
        %v8353 = vld [vmem:[%s6 + $0x38] sm:$0xf]
        %v8354 = vld [vmem:[%s6 + $0x3c] sm:$0xf]
        %v8355 = vld [vmem:[%s7] sm:$0x1]
        %v8357 = vlaneseq
        %v8358 = vshrl.u32 %v8357, 7
        %v8359 = vsub.s32 0, %v8358
        %v8360 = vrot.slane %v8355, %v8359
        %v8378 = vunpack.c.l.b16 %v8339
        %v8379 = vunpack.c.l.b16 %v8340
        %v8380 = vunpack.c.l.b16 %v8341
        %v8381 = vunpack.c.l.b16 %v8342
        %v8382 = vunpack.c.l.b16 %v8343
        %v8383 = vunpack.c.l.b16 %v8344
        %v8384 = vunpack.c.l.b16 %v8345
        %v8385 = vunpack.c.l.b16 %v8346
        %v8386 = vunpack.c.l.b16 %v8347
        %v8387 = vunpack.c.l.b16 %v8348
        %v8388 = vunpack.c.l.b16 %v8349
        %v8389 = vunpack.c.l.b16 %v8350
        %v8390 = vunpack.c.l.b16 %v8351
        %v8391 = vunpack.c.l.b16 %v8352
        %v8392 = vunpack.c.l.b16 %v8353
        %v8393 = vunpack.c.l.b16 %v8354
        %v8394 = vpack.c.b16 %v8379, %v8378
        %v8395 = vpack.c.b16 %v8381, %v8380
        %v8396 = vpack.c.b16 %v8383, %v8382
        %v8397 = vpack.c.b16 %v8385, %v8384
        %v8398 = vpack.c.b16 %v8387, %v8386
        %v8399 = vpack.c.b16 %v8389, %v8388
        %v8400 = vpack.c.b16 %v8391, %v8390
        %v8401 = vpack.c.b16 %v8393, %v8392
        %8410 = vmatprep.subr.bf16.mxu0 0
        %8411 = vmatpush1.bf16.msra.mxu0 %v8394
        %8412 = vmatprep.subr.bf16.mxu0 0
        %8413 = vmatpush1.bf16.msra.mxu0 %v8395
        %8414 = vmatprep.subr.bf16.mxu0 0
        %8415 = vmatpush1.bf16.msra.mxu0 %v8396
        %8416 = vmatprep.subr.bf16.mxu0 0
        %8417 = vmatpush1.bf16.msra.mxu0 %v8397
        %8418 = vmatprep.subr.bf16.mxu0 0
        %8419 = vmatpush1.bf16.msra.mxu0 %v8398
        %8420 = vmatprep.subr.bf16.mxu0 0
        %8421 = vmatpush1.bf16.msra.mxu0 %v8399
        %8422 = vmatprep.subr.bf16.mxu0 0
        %8423 = vmatpush1.bf16.msra.mxu0 %v8400
        %8424 = vmatprep.subr.bf16.mxu0 0
        %8425 = vmatpush1.bf16.msra.mxu0 %v8401
        %8426 = vmatprep.subr.bf16.mxu0 0
        %8427 = vmatpush1.bf16.msra.mxu0 0
        %8428 = vmatprep.subr.bf16.mxu0 0
        %8429 = vmatpush1.bf16.msra.mxu0 0
        %8430 = vmatprep.subr.bf16.mxu0 0
        %8431 = vmatpush1.bf16.msra.mxu0 0
        %8432 = vmatprep.subr.bf16.mxu0 0
        %8433 = vmatpush1.bf16.msra.mxu0 0
        %8434 = vmatprep.subr.bf16.mxu0 0
        %8435 = vmatpush1.bf16.msra.mxu0 0
        %8436 = vmatprep.subr.bf16.mxu0 0
        %8437 = vmatpush1.bf16.msra.mxu0 0
        %8438 = vmatprep.subr.bf16.mxu0 0
        %8439 = vmatpush1.bf16.msra.mxu0 0
        %8440 = vmatprep.subr.bf16.mxu0 0
        %8441 = vmatpush1.bf16.msra.mxu0 0
        %8442 = vmatprep.mubr.bf16.mxu0 0
        %8443 = vmatmul.mubr.bf16.gmra.mrb[0].mxu0 %v8323
        %v8444 = vpop.f32.mrb[0].mxu0
        %v8445 = vadd.f32 %v8360, %v8444
        %v8446 = vpop.f32.mrb[0].mxu0
        %v8447 = vpop.f32.mrb[0].mxu0
        %v8448 = vadd.f32 %v8360, %v8447
        %v8449 = vpop.f32.mrb[0].mxu0
        %8450 = vmatprep.mubr.bf16.mxu0 0
        %8451 = vmatmul.mubr.bf16.gmra.mrb[0].mxu0 %v8324
        %v8452 = vpop.f32.mrb[0].mxu0
        %v8453 = vadd.f32 %v8360, %v8452
        %v8454 = vpop.f32.mrb[0].mxu0
        %v8455 = vpop.f32.mrb[0].mxu0
        %v8456 = vadd.f32 %v8360, %v8455
        %v8457 = vpop.f32.mrb[0].mxu0
        %8458 = vmatprep.mubr.bf16.mxu0 0
        %8459 = vmatmul.mubr.bf16.gmra.mrb[0].mxu0 %v8325
        %v8460 = vpop.f32.mrb[0].mxu0
        %v8461 = vadd.f32 %v8360, %v8460
        %v8462 = vpop.f32.mrb[0].mxu0
        %v8463 = vpop.f32.mrb[0].mxu0
        %v8464 = vadd.f32 %v8360, %v8463
        %v8465 = vpop.f32.mrb[0].mxu0
        %8466 = vmatprep.mubr.bf16.mxu0 0
        %8467 = vmatmul.mubr.bf16.gmra.mrb[0].mxu0 %v8326
        %v8468 = vpop.f32.mrb[0].mxu0
        %v8469 = vadd.f32 %v8360, %v8468
        %v8470 = vpop.f32.mrb[0].mxu0
        %v8471 = vpop.f32.mrb[0].mxu0
        %v8472 = vadd.f32 %v8360, %v8471
        %v8473 = vpop.f32.mrb[0].mxu0
        %8474 = vmatprep.mubr.bf16.mxu0 0
        %8475 = vmatmul.mubr.bf16.gmra.mrb[0].mxu0 %v8327
        %v8476 = vpop.f32.mrb[0].mxu0
        %v8477 = vadd.f32 %v8360, %v8476
        %v8478 = vpop.f32.mrb[0].mxu0
        %v8479 = vpop.f32.mrb[0].mxu0
        %v8480 = vadd.f32 %v8360, %v8479
        %v8481 = vpop.f32.mrb[0].mxu0
        %8482 = vmatprep.mubr.bf16.mxu0 0
        %8483 = vmatmul.mubr.bf16.gmra.mrb[0].mxu0 %v8328
        %v8484 = vpop.f32.mrb[0].mxu0
        %v8485 = vadd.f32 %v8360, %v8484
        %v8486 = vpop.f32.mrb[0].mxu0
        %v8487 = vpop.f32.mrb[0].mxu0
        %v8488 = vadd.f32 %v8360, %v8487
        %v8489 = vpop.f32.mrb[0].mxu0
        %8490 = vmatprep.mubr.bf16.mxu0 0
        %8491 = vmatmul.mubr.bf16.gmra.mrb[0].mxu0 %v8329
        %v8492 = vpop.f32.mrb[0].mxu0
        %v8493 = vadd.f32 %v8360, %v8492
        %v8494 = vpop.f32.mrb[0].mxu0
        %v8495 = vpop.f32.mrb[0].mxu0
        %v8496 = vadd.f32 %v8360, %v8495
        %v8497 = vpop.f32.mrb[0].mxu0
        %8498 = vmatprep.mubr.bf16.mxu0 0
        %8499 = vmatmul.mubr.bf16.gmra.mrb[0].mxu0 %v8330
        %v8500 = vpop.f32.mrb[0].mxu0
        %v8501 = vadd.f32 %v8360, %v8500
        %v8502 = vpop.f32.mrb[0].mxu0
        %v8503 = vpop.f32.mrb[0].mxu0
        %v8504 = vadd.f32 %v8360, %v8503
        %v8505 = vpop.f32.mrb[0].mxu0
        %8506 = vmatprep.mubr.bf16.mxu0 0
        %8507 = vmatmul.mubr.bf16.gmra.mrb[0].mxu0 %v8331
        %v8508 = vpop.f32.mrb[0].mxu0
        %v8509 = vadd.f32 %v8360, %v8508
        %v8510 = vpop.f32.mrb[0].mxu0
        %v8511 = vpop.f32.mrb[0].mxu0
        %v8512 = vadd.f32 %v8360, %v8511
        %v8513 = vpop.f32.mrb[0].mxu0
        %8514 = vmatprep.mubr.bf16.mxu0 0
        %8515 = vmatmul.mubr.bf16.gmra.mrb[0].mxu0 %v8332
        %v8516 = vpop.f32.mrb[0].mxu0
        %v8517 = vadd.f32 %v8360, %v8516
        %v8518 = vpop.f32.mrb[0].mxu0
        %v8519 = vpop.f32.mrb[0].mxu0
        %v8520 = vadd.f32 %v8360, %v8519
        %v8521 = vpop.f32.mrb[0].mxu0
        %8522 = vmatprep.mubr.bf16.mxu0 0
        %8523 = vmatmul.mubr.bf16.gmra.mrb[0].mxu0 %v8333
        %v8524 = vpop.f32.mrb[0].mxu0
        %v8525 = vadd.f32 %v8360, %v8524
        %v8526 = vpop.f32.mrb[0].mxu0
        %v8527 = vpop.f32.mrb[0].mxu0
        %v8528 = vadd.f32 %v8360, %v8527
        %v8529 = vpop.f32.mrb[0].mxu0
        %8530 = vmatprep.mubr.bf16.mxu0 0
        %8531 = vmatmul.mubr.bf16.gmra.mrb[0].mxu0 %v8334
        %v8532 = vpop.f32.mrb[0].mxu0
        %v8533 = vadd.f32 %v8360, %v8532
        %v8534 = vpop.f32.mrb[0].mxu0
        %v8535 = vpop.f32.mrb[0].mxu0
        %v8536 = vadd.f32 %v8360, %v8535
        %v8537 = vpop.f32.mrb[0].mxu0
        %8538 = vmatprep.mubr.bf16.mxu0 0
        %8539 = vmatmul.mubr.bf16.gmra.mrb[0].mxu0 %v8335
        %v8540 = vpop.f32.mrb[0].mxu0
        %v8541 = vadd.f32 %v8360, %v8540
        %v8542 = vpop.f32.mrb[0].mxu0
        %v8543 = vpop.f32.mrb[0].mxu0
        %v8544 = vadd.f32 %v8360, %v8543
        %v8545 = vpop.f32.mrb[0].mxu0
        %8546 = vmatprep.mubr.bf16.mxu0 0
        %8547 = vmatmul.mubr.bf16.gmra.mrb[0].mxu0 %v8336
        %v8548 = vpop.f32.mrb[0].mxu0
        %v8549 = vadd.f32 %v8360, %v8548
        %v8550 = vpop.f32.mrb[0].mxu0
        %v8551 = vpop.f32.mrb[0].mxu0
        %v8552 = vadd.f32 %v8360, %v8551
        %v8553 = vpop.f32.mrb[0].mxu0
        %8554 = vmatprep.mubr.bf16.mxu0 0
        %8555 = vmatmul.mubr.bf16.gmra.mrb[0].mxu0 %v8337
        %v8556 = vpop.f32.mrb[0].mxu0
        %v8557 = vadd.f32 %v8360, %v8556
        %v8558 = vpop.f32.mrb[0].mxu0
        %v8559 = vpop.f32.mrb[0].mxu0
        %v8560 = vadd.f32 %v8360, %v8559
        %v8561 = vpop.f32.mrb[0].mxu0
        %8562 = vmatprep.mubr.bf16.mxu0 0
        %8563 = vmatmul.mubr.bf16.gmra.mrb[0].mxu0 %v8338
        %v8564 = vpop.f32.mrb[0].mxu0
        %v8565 = vadd.f32 %v8360, %v8564
        %v8566 = vpop.f32.mrb[0].mxu0
        %v8567 = vpop.f32.mrb[0].mxu0
        %v8568 = vadd.f32 %v8360, %v8567
        %v8569 = vpop.f32.mrb[0].mxu0
        %8570 = vdwg.mxu0
        %v8571 = vmax.f32 %v8445, 0.0
        %v8572 = vmax.f32 %v8448, 0.0
        %v8573 = vmax.f32 %v8453, 0.0
        %v8574 = vmax.f32 %v8456, 0.0
        %v8575 = vmax.f32 %v8461, 0.0
        %v8576 = vmax.f32 %v8464, 0.0
        %v8577 = vmax.f32 %v8469, 0.0
        %v8578 = vmax.f32 %v8472, 0.0
        %v8579 = vmax.f32 %v8477, 0.0
        %v8580 = vmax.f32 %v8480, 0.0
        %v8581 = vmax.f32 %v8485, 0.0
        %v8582 = vmax.f32 %v8488, 0.0
        %v8583 = vmax.f32 %v8493, 0.0
        %v8584 = vmax.f32 %v8496, 0.0
        %v8585 = vmax.f32 %v8501, 0.0
        %v8586 = vmax.f32 %v8504, 0.0
        %v8587 = vmax.f32 %v8509, 0.0
        %v8588 = vmax.f32 %v8512, 0.0
        %v8589 = vmax.f32 %v8517, 0.0
        %v8590 = vmax.f32 %v8520, 0.0
        %v8591 = vmax.f32 %v8525, 0.0
        %v8592 = vmax.f32 %v8528, 0.0
        %v8593 = vmax.f32 %v8533, 0.0
        %v8594 = vmax.f32 %v8536, 0.0
        %v8595 = vmax.f32 %v8541, 0.0
        %v8596 = vmax.f32 %v8544, 0.0
        %v8597 = vmax.f32 %v8549, 0.0
        %v8598 = vmax.f32 %v8552, 0.0
        %v8599 = vmax.f32 %v8557, 0.0
        %v8600 = vmax.f32 %v8560, 0.0
        %v8601 = vmax.f32 %v8565, 0.0
        %v8602 = vmax.f32 %v8568, 0.0
        %v8603 = vpack.c.bf16 %v8572, %v8571
        %v8604 = vpack.c.bf16 %v8574, %v8573
        %v8605 = vpack.c.bf16 %v8576, %v8575
        %v8606 = vpack.c.bf16 %v8578, %v8577
        %v8607 = vpack.c.bf16 %v8580, %v8579
        %v8608 = vpack.c.bf16 %v8582, %v8581
        %v8609 = vpack.c.bf16 %v8584, %v8583
        %v8610 = vpack.c.bf16 %v8586, %v8585
        %v8611 = vpack.c.bf16 %v8588, %v8587
        %v8612 = vpack.c.bf16 %v8590, %v8589
        %v8613 = vpack.c.bf16 %v8592, %v8591
        %v8614 = vpack.c.bf16 %v8594, %v8593
        %v8615 = vpack.c.bf16 %v8596, %v8595
        %v8616 = vpack.c.bf16 %v8598, %v8597
        %v8617 = vpack.c.bf16 %v8600, %v8599
        %v8618 = vpack.c.bf16 %v8602, %v8601
        %v8619 = vld [vmem:[%s8] sm:$0xf]
        %v8620 = vld [vmem:[%s8 + $0x4] sm:$0xf]
        %v8621 = vld [vmem:[%s8 + $0x8] sm:$0xf]
        %v8622 = vld [vmem:[%s8 + $0xc] sm:$0xf]
        %v8623 = vld [vmem:[%s8 + $0x10] sm:$0xf]
        %v8624 = vld [vmem:[%s8 + $0x14] sm:$0xf]
        %v8625 = vld [vmem:[%s8 + $0x18] sm:$0xf]
        %v8626 = vld [vmem:[%s8 + $0x1c] sm:$0xf]
        %v8627 = vld [vmem:[%s8 + $0x20] sm:$0xf]
        %v8628 = vld [vmem:[%s8 + $0x24] sm:$0xf]
        %v8629 = vld [vmem:[%s8 + $0x28] sm:$0xf]
        %v8630 = vld [vmem:[%s8 + $0x2c] sm:$0xf]
        %v8631 = vld [vmem:[%s8 + $0x30] sm:$0xf]
        %v8632 = vld [vmem:[%s8 + $0x34] sm:$0xf]
        %v8633 = vld [vmem:[%s8 + $0x38] sm:$0xf]
        %v8634 = vld [vmem:[%s8 + $0x3c] sm:$0xf]
        %v8635 = vld [vmem:[%s9] sm:$0x1]
        %v8637 = vlaneseq
        %v8638 = vshrl.u32 %v8637, 7
        %v8639 = vsub.s32 0, %v8638
        %v8640 = vrot.slane %v8635, %v8639
        %v8658 = vunpack.c.l.b16 %v8619
        %v8659 = vunpack.c.l.b16 %v8620
        %v8660 = vunpack.c.l.b16 %v8621
        %v8661 = vunpack.c.l.b16 %v8622
        %v8662 = vunpack.c.l.b16 %v8623
        %v8663 = vunpack.c.l.b16 %v8624
        %v8664 = vunpack.c.l.b16 %v8625
        %v8665 = vunpack.c.l.b16 %v8626
        %v8666 = vunpack.c.l.b16 %v8627
        %v8667 = vunpack.c.l.b16 %v8628
        %v8668 = vunpack.c.l.b16 %v8629
        %v8669 = vunpack.c.l.b16 %v8630
        %v8670 = vunpack.c.l.b16 %v8631
        %v8671 = vunpack.c.l.b16 %v8632
        %v8672 = vunpack.c.l.b16 %v8633
        %v8673 = vunpack.c.l.b16 %v8634
        %v8674 = vpack.c.b16 %v8659, %v8658
        %v8675 = vpack.c.b16 %v8661, %v8660
        %v8676 = vpack.c.b16 %v8663, %v8662
        %v8677 = vpack.c.b16 %v8665, %v8664
        %v8678 = vpack.c.b16 %v8667, %v8666
        %v8679 = vpack.c.b16 %v8669, %v8668
        %v8680 = vpack.c.b16 %v8671, %v8670
        %v8681 = vpack.c.b16 %v8673, %v8672
        %8690 = vmatprep.subr.bf16.mxu0 0
        %8691 = vmatpush1.bf16.msra.mxu0 %v8674
        %8692 = vmatprep.subr.bf16.mxu0 0
        %8693 = vmatpush1.bf16.msra.mxu0 %v8675
        %8694 = vmatprep.subr.bf16.mxu0 0
        %8695 = vmatpush1.bf16.msra.mxu0 %v8676
        %8696 = vmatprep.subr.bf16.mxu0 0
        %8697 = vmatpush1.bf16.msra.mxu0 %v8677
        %8698 = vmatprep.subr.bf16.mxu0 0
        %8699 = vmatpush1.bf16.msra.mxu0 %v8678
        %8700 = vmatprep.subr.bf16.mxu0 0
        %8701 = vmatpush1.bf16.msra.mxu0 %v8679
        %8702 = vmatprep.subr.bf16.mxu0 0
        %8703 = vmatpush1.bf16.msra.mxu0 %v8680
        %8704 = vmatprep.subr.bf16.mxu0 0
        %8705 = vmatpush1.bf16.msra.mxu0 %v8681
        %8706 = vmatprep.subr.bf16.mxu0 0
        %8707 = vmatpush1.bf16.msra.mxu0 0
        %8708 = vmatprep.subr.bf16.mxu0 0
        %8709 = vmatpush1.bf16.msra.mxu0 0
        %8710 = vmatprep.subr.bf16.mxu0 0
        %8711 = vmatpush1.bf16.msra.mxu0 0
        %8712 = vmatprep.subr.bf16.mxu0 0
        %8713 = vmatpush1.bf16.msra.mxu0 0
        %8714 = vmatprep.subr.bf16.mxu0 0
        %8715 = vmatpush1.bf16.msra.mxu0 0
        %8716 = vmatprep.subr.bf16.mxu0 0
        %8717 = vmatpush1.bf16.msra.mxu0 0
        %8718 = vmatprep.subr.bf16.mxu0 0
        %8719 = vmatpush1.bf16.msra.mxu0 0
        %8720 = vmatprep.subr.bf16.mxu0 0
        %8721 = vmatpush1.bf16.msra.mxu0 0
        %8722 = vmatprep.mubr.bf16.mxu0 0
        %8723 = vmatmul.mubr.bf16.gmra.mrb[0].mxu0 %v8603
        %v8724 = vpop.f32.mrb[0].mxu0
        %v8725 = vadd.f32 %v8640, %v8724
        %v8726 = vpop.f32.mrb[0].mxu0
        %v8727 = vpop.f32.mrb[0].mxu0
        %v8728 = vadd.f32 %v8640, %v8727
        %v8729 = vpop.f32.mrb[0].mxu0
        %8730 = vmatprep.mubr.bf16.mxu0 0
        %8731 = vmatmul.mubr.bf16.gmra.mrb[0].mxu0 %v8604
        %v8732 = vpop.f32.mrb[0].mxu0
        %v8733 = vadd.f32 %v8640, %v8732
        %v8734 = vpop.f32.mrb[0].mxu0
        %v8735 = vpop.f32.mrb[0].mxu0
        %v8736 = vadd.f32 %v8640, %v8735
        %v8737 = vpop.f32.mrb[0].mxu0
        %8738 = vmatprep.mubr.bf16.mxu0 0
        %8739 = vmatmul.mubr.bf16.gmra.mrb[0].mxu0 %v8605
        %v8740 = vpop.f32.mrb[0].mxu0
        %v8741 = vadd.f32 %v8640, %v8740
        %v8742 = vpop.f32.mrb[0].mxu0
        %v8743 = vpop.f32.mrb[0].mxu0
        %v8744 = vadd.f32 %v8640, %v8743
        %v8745 = vpop.f32.mrb[0].mxu0
        %8746 = vmatprep.mubr.bf16.mxu0 0
        %8747 = vmatmul.mubr.bf16.gmra.mrb[0].mxu0 %v8606
        %v8748 = vpop.f32.mrb[0].mxu0
        %v8749 = vadd.f32 %v8640, %v8748
        %v8750 = vpop.f32.mrb[0].mxu0
        %v8751 = vpop.f32.mrb[0].mxu0
        %v8752 = vadd.f32 %v8640, %v8751
        %v8753 = vpop.f32.mrb[0].mxu0
        %8754 = vmatprep.mubr.bf16.mxu0 0
        %8755 = vmatmul.mubr.bf16.gmra.mrb[0].mxu0 %v8607
        %v8756 = vpop.f32.mrb[0].mxu0
        %v8757 = vadd.f32 %v8640, %v8756
        %v8758 = vpop.f32.mrb[0].mxu0
        %v8759 = vpop.f32.mrb[0].mxu0
        %v8760 = vadd.f32 %v8640, %v8759
        %v8761 = vpop.f32.mrb[0].mxu0
        %8762 = vmatprep.mubr.bf16.mxu0 0
        %8763 = vmatmul.mubr.bf16.gmra.mrb[0].mxu0 %v8608
        %v8764 = vpop.f32.mrb[0].mxu0
        %v8765 = vadd.f32 %v8640, %v8764
        %v8766 = vpop.f32.mrb[0].mxu0
        %v8767 = vpop.f32.mrb[0].mxu0
        %v8768 = vadd.f32 %v8640, %v8767
        %v8769 = vpop.f32.mrb[0].mxu0
        %8770 = vmatprep.mubr.bf16.mxu0 0
        %8771 = vmatmul.mubr.bf16.gmra.mrb[0].mxu0 %v8609
        %v8772 = vpop.f32.mrb[0].mxu0
        %v8773 = vadd.f32 %v8640, %v8772
        %v8774 = vpop.f32.mrb[0].mxu0
        %v8775 = vpop.f32.mrb[0].mxu0
        %v8776 = vadd.f32 %v8640, %v8775
        %v8777 = vpop.f32.mrb[0].mxu0
        %8778 = vmatprep.mubr.bf16.mxu0 0
        %8779 = vmatmul.mubr.bf16.gmra.mrb[0].mxu0 %v8610
        %v8780 = vpop.f32.mrb[0].mxu0
        %v8781 = vadd.f32 %v8640, %v8780
        %v8782 = vpop.f32.mrb[0].mxu0
        %v8783 = vpop.f32.mrb[0].mxu0
        %v8784 = vadd.f32 %v8640, %v8783
        %v8785 = vpop.f32.mrb[0].mxu0
        %8786 = vmatprep.mubr.bf16.mxu0 0
        %8787 = vmatmul.mubr.bf16.gmra.mrb[0].mxu0 %v8611
        %v8788 = vpop.f32.mrb[0].mxu0
        %v8789 = vadd.f32 %v8640, %v8788
        %v8790 = vpop.f32.mrb[0].mxu0
        %v8791 = vpop.f32.mrb[0].mxu0
        %v8792 = vadd.f32 %v8640, %v8791
        %v8793 = vpop.f32.mrb[0].mxu0
        %8794 = vmatprep.mubr.bf16.mxu0 0
        %8795 = vmatmul.mubr.bf16.gmra.mrb[0].mxu0 %v8612
        %v8796 = vpop.f32.mrb[0].mxu0
        %v8797 = vadd.f32 %v8640, %v8796
        %v8798 = vpop.f32.mrb[0].mxu0
        %v8799 = vpop.f32.mrb[0].mxu0
        %v8800 = vadd.f32 %v8640, %v8799
        %v8801 = vpop.f32.mrb[0].mxu0
        %8802 = vmatprep.mubr.bf16.mxu0 0
        %8803 = vmatmul.mubr.bf16.gmra.mrb[0].mxu0 %v8613
        %v8804 = vpop.f32.mrb[0].mxu0
        %v8805 = vadd.f32 %v8640, %v8804
        %v8806 = vpop.f32.mrb[0].mxu0
        %v8807 = vpop.f32.mrb[0].mxu0
        %v8808 = vadd.f32 %v8640, %v8807
        %v8809 = vpop.f32.mrb[0].mxu0
        %8810 = vmatprep.mubr.bf16.mxu0 0
        %8811 = vmatmul.mubr.bf16.gmra.mrb[0].mxu0 %v8614
        %v8812 = vpop.f32.mrb[0].mxu0
        %v8813 = vadd.f32 %v8640, %v8812
        %v8814 = vpop.f32.mrb[0].mxu0
        %v8815 = vpop.f32.mrb[0].mxu0
        %v8816 = vadd.f32 %v8640, %v8815
        %v8817 = vpop.f32.mrb[0].mxu0
        %8818 = vmatprep.mubr.bf16.mxu0 0
        %8819 = vmatmul.mubr.bf16.gmra.mrb[0].mxu0 %v8615
        %v8820 = vpop.f32.mrb[0].mxu0
        %v8821 = vadd.f32 %v8640, %v8820
        %v8822 = vpop.f32.mrb[0].mxu0
        %v8823 = vpop.f32.mrb[0].mxu0
        %v8824 = vadd.f32 %v8640, %v8823
        %v8825 = vpop.f32.mrb[0].mxu0
        %8826 = vmatprep.mubr.bf16.mxu0 0
        %8827 = vmatmul.mubr.bf16.gmra.mrb[0].mxu0 %v8616
        %v8828 = vpop.f32.mrb[0].mxu0
        %v8829 = vadd.f32 %v8640, %v8828
        %v8830 = vpop.f32.mrb[0].mxu0
        %v8831 = vpop.f32.mrb[0].mxu0
        %v8832 = vadd.f32 %v8640, %v8831
        %v8833 = vpop.f32.mrb[0].mxu0
        %8834 = vmatprep.mubr.bf16.mxu0 0
        %8835 = vmatmul.mubr.bf16.gmra.mrb[0].mxu0 %v8617
        %v8836 = vpop.f32.mrb[0].mxu0
        %v8837 = vadd.f32 %v8640, %v8836
        %v8838 = vpop.f32.mrb[0].mxu0
        %v8839 = vpop.f32.mrb[0].mxu0
        %v8840 = vadd.f32 %v8640, %v8839
        %v8841 = vpop.f32.mrb[0].mxu0
        %8842 = vmatprep.mubr.bf16.mxu0 0
        %8843 = vmatmul.mubr.bf16.gmra.mrb[0].mxu0 %v8618
        %v8844 = vpop.f32.mrb[0].mxu0
        %v8845 = vadd.f32 %v8640, %v8844
        %v8846 = vpop.f32.mrb[0].mxu0
        %v8847 = vpop.f32.mrb[0].mxu0
        %v8848 = vadd.f32 %v8640, %v8847
        %v8849 = vpop.f32.mrb[0].mxu0
        %8850 = vdwg.mxu0
        %v8851 = vxor.u32 %v8725, 2147483648
        %v8852 = vxor.u32 %v8728, 2147483648
        %v8853 = vxor.u32 %v8733, 2147483648
        %v8854 = vxor.u32 %v8736, 2147483648
        %v8855 = vxor.u32 %v8741, 2147483648
        %v8856 = vxor.u32 %v8744, 2147483648
        %v8857 = vxor.u32 %v8749, 2147483648
        %v8858 = vxor.u32 %v8752, 2147483648
        %v8859 = vxor.u32 %v8757, 2147483648
        %v8860 = vxor.u32 %v8760, 2147483648
        %v8861 = vxor.u32 %v8765, 2147483648
        %v8862 = vxor.u32 %v8768, 2147483648
        %v8863 = vxor.u32 %v8773, 2147483648
        %v8864 = vxor.u32 %v8776, 2147483648
        %v8865 = vxor.u32 %v8781, 2147483648
        %v8866 = vxor.u32 %v8784, 2147483648
        %v8867 = vxor.u32 %v8789, 2147483648
        %v8868 = vxor.u32 %v8792, 2147483648
        %v8869 = vxor.u32 %v8797, 2147483648
        %v8870 = vxor.u32 %v8800, 2147483648
        %v8871 = vxor.u32 %v8805, 2147483648
        %v8872 = vxor.u32 %v8808, 2147483648
        %v8873 = vxor.u32 %v8813, 2147483648
        %v8874 = vxor.u32 %v8816, 2147483648
        %v8875 = vxor.u32 %v8821, 2147483648
        %v8876 = vxor.u32 %v8824, 2147483648
        %v8877 = vxor.u32 %v8829, 2147483648
        %v8878 = vxor.u32 %v8832, 2147483648
        %v8879 = vxor.u32 %v8837, 2147483648
        %v8880 = vxor.u32 %v8840, 2147483648
        %v8881 = vxor.u32 %v8845, 2147483648
        %v8882 = vxor.u32 %v8848, 2147483648
        %v8883 = vmul.f32 %v8851, 1.442695
        %v8884 = vpow.pop %v8883
        %v8885 = vmul.f32 %v8852, 1.442695
        %v8886 = vpow.pop %v8885
        %v8887 = vmul.f32 %v8853, 1.442695
        %v8888 = vpow.pop %v8887
        %v8889 = vmul.f32 %v8854, 1.442695
        %v8890 = vpow.pop %v8889
        %v8891 = vmul.f32 %v8855, 1.442695
        %v8892 = vpow.pop %v8891
        %v8893 = vmul.f32 %v8856, 1.442695
        %v8894 = vpow.pop %v8893
        %v8895 = vmul.f32 %v8857, 1.442695
        %v8896 = vpow.pop %v8895
        %v8897 = vmul.f32 %v8858, 1.442695
        %v8898 = vpow.pop %v8897
        %v8899 = vmul.f32 %v8859, 1.442695
        %v8900 = vpow.pop %v8899
        %v8901 = vmul.f32 %v8860, 1.442695
        %v8902 = vpow.pop %v8901
        %v8903 = vmul.f32 %v8861, 1.442695
        %v8904 = vpow.pop %v8903
        %v8905 = vmul.f32 %v8862, 1.442695
        %v8906 = vpow.pop %v8905
        %v8907 = vmul.f32 %v8863, 1.442695
        %v8908 = vpow.pop %v8907
        %v8909 = vmul.f32 %v8864, 1.442695
        %v8910 = vpow.pop %v8909
        %v8911 = vmul.f32 %v8865, 1.442695
        %v8912 = vpow.pop %v8911
        %v8913 = vmul.f32 %v8866, 1.442695
        %v8914 = vpow.pop %v8913
        %v8915 = vmul.f32 %v8867, 1.442695
        %v8916 = vpow.pop %v8915
        %v8917 = vmul.f32 %v8868, 1.442695
        %v8918 = vpow.pop %v8917
        %v8919 = vmul.f32 %v8869, 1.442695
        %v8920 = vpow.pop %v8919
        %v8921 = vmul.f32 %v8870, 1.442695
        %v8922 = vpow.pop %v8921
        %v8923 = vmul.f32 %v8871, 1.442695
        %v8924 = vpow.pop %v8923
        %v8925 = vmul.f32 %v8872, 1.442695
        %v8926 = vpow.pop %v8925
        %v8927 = vmul.f32 %v8873, 1.442695
        %v8928 = vpow.pop %v8927
        %v8929 = vmul.f32 %v8874, 1.442695
        %v8930 = vpow.pop %v8929
        %v8931 = vmul.f32 %v8875, 1.442695
        %v8932 = vpow.pop %v8931
        %v8933 = vmul.f32 %v8876, 1.442695
        %v8934 = vpow.pop %v8933
        %v8935 = vmul.f32 %v8877, 1.442695
        %v8936 = vpow.pop %v8935
        %v8937 = vmul.f32 %v8878, 1.442695
        %v8938 = vpow.pop %v8937
        %v8939 = vmul.f32 %v8879, 1.442695
        %v8940 = vpow.pop %v8939
        %v8941 = vmul.f32 %v8880, 1.442695
        %v8942 = vpow.pop %v8941
        %v8943 = vmul.f32 %v8881, 1.442695
        %v8944 = vpow.pop %v8943
        %v8945 = vmul.f32 %v8882, 1.442695
        %v8946 = vpow.pop %v8945
        %v8947 = vadd.f32 %v8884, 1.0
        %v8948 = vadd.f32 %v8886, 1.0
        %v8949 = vadd.f32 %v8888, 1.0
        %v8950 = vadd.f32 %v8890, 1.0
        %v8951 = vadd.f32 %v8892, 1.0
        %v8952 = vadd.f32 %v8894, 1.0
        %v8953 = vadd.f32 %v8896, 1.0
        %v8954 = vadd.f32 %v8898, 1.0
        %v8955 = vadd.f32 %v8900, 1.0
        %v8956 = vadd.f32 %v8902, 1.0
        %v8957 = vadd.f32 %v8904, 1.0
        %v8958 = vadd.f32 %v8906, 1.0
        %v8959 = vadd.f32 %v8908, 1.0
        %v8960 = vadd.f32 %v8910, 1.0
        %v8961 = vadd.f32 %v8912, 1.0
        %v8962 = vadd.f32 %v8914, 1.0
        %v8963 = vadd.f32 %v8916, 1.0
        %v8964 = vadd.f32 %v8918, 1.0
        %v8965 = vadd.f32 %v8920, 1.0
        %v8966 = vadd.f32 %v8922, 1.0
        %v8967 = vadd.f32 %v8924, 1.0
        %v8968 = vadd.f32 %v8926, 1.0
        %v8969 = vadd.f32 %v8928, 1.0
        %v8970 = vadd.f32 %v8930, 1.0
        %v8971 = vadd.f32 %v8932, 1.0
        %v8972 = vadd.f32 %v8934, 1.0
        %v8973 = vadd.f32 %v8936, 1.0
        %v8974 = vadd.f32 %v8938, 1.0
        %v8975 = vadd.f32 %v8940, 1.0
        %v8976 = vadd.f32 %v8942, 1.0
        %v8977 = vadd.f32 %v8944, 1.0
        %v8978 = vadd.f32 %v8946, 1.0
        %v8979 = vrcp.pop %v8947
        %v8980 = vmul.f32 1.0, %v8979
        %v8981 = vrcp.pop %v8948
        %v8982 = vmul.f32 1.0, %v8981
        %v8983 = vrcp.pop %v8949
        %v8984 = vmul.f32 1.0, %v8983
        %v8985 = vrcp.pop %v8950
        %v8986 = vmul.f32 1.0, %v8985
        %v8987 = vrcp.pop %v8951
        %v8988 = vmul.f32 1.0, %v8987
        %v8989 = vrcp.pop %v8952
        %v8990 = vmul.f32 1.0, %v8989
        %v8991 = vrcp.pop %v8953
        %v8992 = vmul.f32 1.0, %v8991
        %v8993 = vrcp.pop %v8954
        %v8994 = vmul.f32 1.0, %v8993
        %v8995 = vrcp.pop %v8955
        %v8996 = vmul.f32 1.0, %v8995
        %v8997 = vrcp.pop %v8956
        %v8998 = vmul.f32 1.0, %v8997
        %v8999 = vrcp.pop %v8957
        %v9000 = vmul.f32 1.0, %v8999
        %v9001 = vrcp.pop %v8958
        %v9002 = vmul.f32 1.0, %v9001
        %v9003 = vrcp.pop %v8959
        %v9004 = vmul.f32 1.0, %v9003
        %v9005 = vrcp.pop %v8960
        %v9006 = vmul.f32 1.0, %v9005
        %v9007 = vrcp.pop %v8961
        %v9008 = vmul.f32 1.0, %v9007
        %v9009 = vrcp.pop %v8962
        %v9010 = vmul.f32 1.0, %v9009
        %v9011 = vrcp.pop %v8963
        %v9012 = vmul.f32 1.0, %v9011
        %v9013 = vrcp.pop %v8964
        %v9014 = vmul.f32 1.0, %v9013
        %v9015 = vrcp.pop %v8965
        %v9016 = vmul.f32 1.0, %v9015
        %v9017 = vrcp.pop %v8966
        %v9018 = vmul.f32 1.0, %v9017
        %v9019 = vrcp.pop %v8967
        %v9020 = vmul.f32 1.0, %v9019
        %v9021 = vrcp.pop %v8968
        %v9022 = vmul.f32 1.0, %v9021
        %v9023 = vrcp.pop %v8969
        %v9024 = vmul.f32 1.0, %v9023
        %v9025 = vrcp.pop %v8970
        %v9026 = vmul.f32 1.0, %v9025
        %v9027 = vrcp.pop %v8971
        %v9028 = vmul.f32 1.0, %v9027
        %v9029 = vrcp.pop %v8972
        %v9030 = vmul.f32 1.0, %v9029
        %v9031 = vrcp.pop %v8973
        %v9032 = vmul.f32 1.0, %v9031
        %v9033 = vrcp.pop %v8974
        %v9034 = vmul.f32 1.0, %v9033
        %v9035 = vrcp.pop %v8975
        %v9036 = vmul.f32 1.0, %v9035
        %v9037 = vrcp.pop %v8976
        %v9038 = vmul.f32 1.0, %v9037
        %v9039 = vrcp.pop %v8977
        %v9040 = vmul.f32 1.0, %v9039
        %v9041 = vrcp.pop %v8978
        %v9042 = vmul.f32 1.0, %v9041
        %vm9043 = vcmask 23552
        %9044 = vst.msk [vmem:[%s389] sm:$0xff] %vm9043, %v8980
        %9045 = vst.msk [vmem:[%s389 + $0x8] sm:$0xff] %vm9043, %v8982
        %9046 = vst.msk [vmem:[%s389 + $0x10] sm:$0xff] %vm9043, %v8984
        %9047 = vst.msk [vmem:[%s389 + $0x18] sm:$0xff] %vm9043, %v8986
        %9048 = vst.msk [vmem:[%s389 + $0x20] sm:$0xff] %vm9043, %v8988
        %9049 = vst.msk [vmem:[%s389 + $0x28] sm:$0xff] %vm9043, %v8990
        %9050 = vst.msk [vmem:[%s389 + $0x30] sm:$0xff] %vm9043, %v8992
        %9051 = vst.msk [vmem:[%s389 + $0x38] sm:$0xff] %vm9043, %v8994
        %9052 = vst.msk [vmem:[%s389 + $0x40] sm:$0xff] %vm9043, %v8996
        %9053 = vst.msk [vmem:[%s389 + $0x48] sm:$0xff] %vm9043, %v8998
        %9054 = vst.msk [vmem:[%s389 + $0x50] sm:$0xff] %vm9043, %v9000
        %9055 = vst.msk [vmem:[%s389 + $0x58] sm:$0xff] %vm9043, %v9002
        %9056 = vst.msk [vmem:[%s389 + $0x60] sm:$0xff] %vm9043, %v9004
        %9057 = vst.msk [vmem:[%s389 + $0x68] sm:$0xff] %vm9043, %v9006
        %9058 = vst.msk [vmem:[%s389 + $0x70] sm:$0xff] %vm9043, %v9008
        %9059 = vst.msk [vmem:[%s389 + $0x78] sm:$0xff] %vm9043, %v9010
        %9060 = vst.msk [vmem:[%s389 + $0x80] sm:$0xff] %vm9043, %v9012
        %9061 = vst.msk [vmem:[%s389 + $0x88] sm:$0xff] %vm9043, %v9014
        %9062 = vst.msk [vmem:[%s389 + $0x90] sm:$0xff] %vm9043, %v9016
        %9063 = vst.msk [vmem:[%s389 + $0x98] sm:$0xff] %vm9043, %v9018
        %9064 = vst.msk [vmem:[%s389 + $0xa0] sm:$0xff] %vm9043, %v9020
        %9065 = vst.msk [vmem:[%s389 + $0xa8] sm:$0xff] %vm9043, %v9022
        %9066 = vst.msk [vmem:[%s389 + $0xb0] sm:$0xff] %vm9043, %v9024
        %9067 = vst.msk [vmem:[%s389 + $0xb8] sm:$0xff] %vm9043, %v9026
        %9068 = vst.msk [vmem:[%s389 + $0xc0] sm:$0xff] %vm9043, %v9028
        %9069 = vst.msk [vmem:[%s389 + $0xc8] sm:$0xff] %vm9043, %v9030
        %9070 = vst.msk [vmem:[%s389 + $0xd0] sm:$0xff] %vm9043, %v9032
        %9071 = vst.msk [vmem:[%s389 + $0xd8] sm:$0xff] %vm9043, %v9034
        %9072 = vst.msk [vmem:[%s389 + $0xe0] sm:$0xff] %vm9043, %v9036
        %9073 = vst.msk [vmem:[%s389 + $0xe8] sm:$0xff] %vm9043, %v9038
        %9074 = vst.msk [vmem:[%s389 + $0xf0] sm:$0xff] %vm9043, %v9040
        %9075 = vst.msk [vmem:[%s389 + $0xf8] sm:$0xff] %vm9043, %v9042
        %s9076 = sand.u32 %s249, 1
        %s9077 = sand.u32 %s249, 1
        %s9078 = smul.addr %s9077, 256
        %s9079 = scalar_lea.vmem [#allocation2], %s9078
        // Predicated region
        $region61: #{mlp_render_forward.1} parent=59 // pred_check
          %p9080 = pneg %p259
        $region62: #{mlp_render_forward.1} parent=59 // pred_check_branch
          %9082 = sbr.rel (%p9080) target = $region64
        $region63: #{mlp_render_forward.1} parent=59 // pred_region
          %s9083 = smul.u32 32, %s21
          %s9084 = ssub.s32 125, %s9083
          %p9085 = scmp.lt.s32.totalorder %s9084, 32
          %s9086 = scalar_select %p9085, %s9084, 32
          %s9087 = smul.u32 128, %s9086
          %p9088 = scmp.ne.s32.totalorder 0, %s9087
          %s9089 = smul.addr %s9083, 8
          %s9090 = scalar_lea.vmem %s10, %s9089
          // Predicated region
          $region65: #{mlp_render_forward.1} parent=63 // pred_check
            %p9091 = pneg %p9088
          $region66: #{mlp_render_forward.1} parent=63 // pred_check_branch
            %9093 = sbr.rel (%p9091) target = $region68
          $region67: #{mlp_render_forward.1} parent=63 // pred_region
            // Predicated region
            $region69: #{mlp_render_forward.1} parent=67 // pred_check
              _
            $region70: #{mlp_render_forward.1} parent=67 // pred_check_branch
              %9095 = sbr.rel (0) target = $region72
            $region71: #{mlp_render_forward.1} parent=67 // pred_region
              // Predicated region
              $region91: #{mlp_render_forward.1} parent=71 // pred_check
                _
              $region92: #{mlp_render_forward.1} parent=71 // pred_check_branch
                %9206 = sbr.rel (0) target = $region94
              $region93: #{mlp_render_forward.1} parent=71 // pred_region
                %s9207 = sshrl.u32 %s9086, 5
                // While loop
                $region95: #{mlp_render_forward.1} parent=93 // loop_pre_header
                  _
                $region96: #{mlp_render_forward.1} parent=93 // loop_header
                  %s9209 = sphi 0, %s9211
                  %p9210 = scmp.ge.s32.totalorder %s9209, %s9207
                  %s9214 = sphi 0, %s9283
                  %s9215 = sphi %s9079, %s9286
                  %s9216 = sphi %s9090, %s9287
                $region97: #{mlp_render_forward.1} parent=93 // loop_header_branch
                  %9213 = sbr.rel (%p9210) target = $region101
                $region98: #{mlp_render_forward.1} parent=93 // loop_body
                  %v9217 = vld [vmem:[%s9215] sm:$0xff]
                  %9218 = vst [vmem:[%s9216] sm:$0xff] %v9217
                  %v9219 = vld [vmem:[%s9215 + $0x8] sm:$0xff]
                  %9220 = vst [vmem:[%s9216 + $0x8] sm:$0xff] %v9219
                  %v9221 = vld [vmem:[%s9215 + $0x10] sm:$0xff]
                  %9222 = vst [vmem:[%s9216 + $0x10] sm:$0xff] %v9221
                  %v9223 = vld [vmem:[%s9215 + $0x18] sm:$0xff]
                  %9224 = vst [vmem:[%s9216 + $0x18] sm:$0xff] %v9223
                  %v9225 = vld [vmem:[%s9215 + $0x20] sm:$0xff]
                  %9226 = vst [vmem:[%s9216 + $0x20] sm:$0xff] %v9225
                  %v9227 = vld [vmem:[%s9215 + $0x28] sm:$0xff]
                  %9228 = vst [vmem:[%s9216 + $0x28] sm:$0xff] %v9227
                  %v9229 = vld [vmem:[%s9215 + $0x30] sm:$0xff]
                  %9230 = vst [vmem:[%s9216 + $0x30] sm:$0xff] %v9229
                  %v9231 = vld [vmem:[%s9215 + $0x38] sm:$0xff]
                  %9232 = vst [vmem:[%s9216 + $0x38] sm:$0xff] %v9231
                  %v9233 = vld [vmem:[%s9215 + $0x40] sm:$0xff]
                  %9234 = vst [vmem:[%s9216 + $0x40] sm:$0xff] %v9233
                  %v9235 = vld [vmem:[%s9215 + $0x48] sm:$0xff]
                  %9236 = vst [vmem:[%s9216 + $0x48] sm:$0xff] %v9235
                  %v9237 = vld [vmem:[%s9215 + $0x50] sm:$0xff]
                  %9238 = vst [vmem:[%s9216 + $0x50] sm:$0xff] %v9237
                  %v9239 = vld [vmem:[%s9215 + $0x58] sm:$0xff]
                  %9240 = vst [vmem:[%s9216 + $0x58] sm:$0xff] %v9239
                  %v9241 = vld [vmem:[%s9215 + $0x60] sm:$0xff]
                  %9242 = vst [vmem:[%s9216 + $0x60] sm:$0xff] %v9241
                  %v9243 = vld [vmem:[%s9215 + $0x68] sm:$0xff]
                  %9244 = vst [vmem:[%s9216 + $0x68] sm:$0xff] %v9243
                  %v9245 = vld [vmem:[%s9215 + $0x70] sm:$0xff]
                  %9246 = vst [vmem:[%s9216 + $0x70] sm:$0xff] %v9245
                  %v9247 = vld [vmem:[%s9215 + $0x78] sm:$0xff]
                  %9248 = vst [vmem:[%s9216 + $0x78] sm:$0xff] %v9247
                  %v9249 = vld [vmem:[%s9215 + $0x80] sm:$0xff]
                  %9250 = vst [vmem:[%s9216 + $0x80] sm:$0xff] %v9249
                  %v9251 = vld [vmem:[%s9215 + $0x88] sm:$0xff]
                  %9252 = vst [vmem:[%s9216 + $0x88] sm:$0xff] %v9251
                  %v9253 = vld [vmem:[%s9215 + $0x90] sm:$0xff]
                  %9254 = vst [vmem:[%s9216 + $0x90] sm:$0xff] %v9253
                  %v9255 = vld [vmem:[%s9215 + $0x98] sm:$0xff]
                  %9256 = vst [vmem:[%s9216 + $0x98] sm:$0xff] %v9255
                  %v9257 = vld [vmem:[%s9215 + $0xa0] sm:$0xff]
                  %9258 = vst [vmem:[%s9216 + $0xa0] sm:$0xff] %v9257
                  %v9259 = vld [vmem:[%s9215 + $0xa8] sm:$0xff]
                  %9260 = vst [vmem:[%s9216 + $0xa8] sm:$0xff] %v9259
                  %v9261 = vld [vmem:[%s9215 + $0xb0] sm:$0xff]
                  %9262 = vst [vmem:[%s9216 + $0xb0] sm:$0xff] %v9261
                  %v9263 = vld [vmem:[%s9215 + $0xb8] sm:$0xff]
                  %9264 = vst [vmem:[%s9216 + $0xb8] sm:$0xff] %v9263
                  %v9265 = vld [vmem:[%s9215 + $0xc0] sm:$0xff]
                  %9266 = vst [vmem:[%s9216 + $0xc0] sm:$0xff] %v9265
                  %v9267 = vld [vmem:[%s9215 + $0xc8] sm:$0xff]
                  %9268 = vst [vmem:[%s9216 + $0xc8] sm:$0xff] %v9267
                  %v9269 = vld [vmem:[%s9215 + $0xd0] sm:$0xff]
                  %9270 = vst [vmem:[%s9216 + $0xd0] sm:$0xff] %v9269
                  %v9271 = vld [vmem:[%s9215 + $0xd8] sm:$0xff]
                  %9272 = vst [vmem:[%s9216 + $0xd8] sm:$0xff] %v9271
                  %v9273 = vld [vmem:[%s9215 + $0xe0] sm:$0xff]
                  %9274 = vst [vmem:[%s9216 + $0xe0] sm:$0xff] %v9273
                  %v9275 = vld [vmem:[%s9215 + $0xe8] sm:$0xff]
                  %9276 = vst [vmem:[%s9216 + $0xe8] sm:$0xff] %v9275
                  %v9277 = vld [vmem:[%s9215 + $0xf0] sm:$0xff]
                  %9278 = vst [vmem:[%s9216 + $0xf0] sm:$0xff] %v9277
                  %v9279 = vld [vmem:[%s9215 + $0xf8] sm:$0xff]
                  %9280 = vst [vmem:[%s9216 + $0xf8] sm:$0xff] %v9279
                  %s9281 = sadd.s32 1, %s9214
                  %p9282 = scmp.ge.s32.totalorder %s9281, %s9207
                  %s9283 = scalar_select %p9282, 0, %s9281
                  %s9284 = smul.u32 %s9283, 256
                  %s9285 = smul.u32 %s9283, 256
                  %s9286 = scalar_lea.vmem %s9079, %s9284 [#allocation2]
                  %s9287 = scalar_lea.vmem %s9090, %s9285
                $region99: #{mlp_render_forward.1} parent=93 // loop_footer
                  %s9211 = sadd.s32 %s9209, 1
                $region100: #{mlp_render_forward.1} parent=93 // loop_footer_branch
                  %9208 = sbr.rel target = $region96
                $region101: #{mlp_render_forward.1} parent=93 // loop_exit
                  _
                %s9288 = sshrl.u32 %s9086, 5
                %s9289 = sand.u32 %s9086, 31
                %s9290 = smul.u32 %s9288, 32
                %s9291 = smul.u32 8, %s9290
                %s9292 = scalar_lea.vmem %s9079, %s9291 [#allocation2]
                %s9293 = smul.u32 8, %s9290
                %s9294 = scalar_lea.vmem %s9090, %s9293
                // While loop
                $region102: #{mlp_render_forward.1} parent=93 // loop_pre_header
                  _
                $region103: #{mlp_render_forward.1} parent=93 // loop_header
                  %s9296 = sphi 0, %s9298
                  %p9297 = scmp.ge.s32.totalorder %s9296, %s9289
                  %s9301 = sphi 0, %s9308
                  %s9302 = sphi %s9292, %s9311
                  %s9303 = sphi %s9294, %s9312
                $region104: #{mlp_render_forward.1} parent=93 // loop_header_branch
                  %9300 = sbr.rel (%p9297) target = $region108
                $region105: #{mlp_render_forward.1} parent=93 // loop_body
                  %v9304 = vld [vmem:[%s9302] sm:$0xff]
                  %9305 = vst [vmem:[%s9303] sm:$0xff] %v9304
                  %s9306 = sadd.s32 1, %s9301
                  %p9307 = scmp.ge.s32.totalorder %s9306, %s9289
                  %s9308 = scalar_select %p9307, 0, %s9306
                  %s9309 = smul.u32 %s9308, 8
                  %s9310 = smul.u32 %s9308, 8
                  %s9311 = scalar_lea.vmem %s9292, %s9309 [#allocation2]
                  %s9312 = scalar_lea.vmem %s9294, %s9310
                $region106: #{mlp_render_forward.1} parent=93 // loop_footer
                  %s9298 = sadd.s32 %s9296, 1
                $region107: #{mlp_render_forward.1} parent=93 // loop_footer_branch
                  %9295 = sbr.rel target = $region103
                $region108: #{mlp_render_forward.1} parent=93 // loop_exit
                  _
              $region94: #{mlp_render_forward.1} parent=71 // pred_fallthru
                _
              // Predicated region
              $region109: #{mlp_render_forward.1} parent=71 // pred_check
                _
              $region110: #{mlp_render_forward.1} parent=71 // pred_check_branch
                %9314 = sbr.rel target = $region112
              $region111: #{mlp_render_forward.1} parent=71 // pred_region
                _
              $region112: #{mlp_render_forward.1} parent=71 // pred_fallthru
                _
            $region72: #{mlp_render_forward.1} parent=67 // pred_fallthru
              _
            // Predicated region
            $region73: #{mlp_render_forward.1} parent=67 // pred_check
              _
            $region74: #{mlp_render_forward.1} parent=67 // pred_check_branch
              %9097 = sbr.rel target = $region76
            $region75: #{mlp_render_forward.1} parent=67 // pred_region
              %s9099 = sshrl.u32 %s9086, 5
              // While loop
              $region77: #{mlp_render_forward.1} parent=75 // loop_pre_header
                _
              $region78: #{mlp_render_forward.1} parent=75 // loop_header
                %s9101 = sphi 0, %s9103
                %p9102 = scmp.ge.s32.totalorder %s9101, %s9099
                %s9106 = sphi 0, %s9175
                %s9107 = sphi %s9079, %s9178
                %s9108 = sphi %s9090, %s9179
              $region79: #{mlp_render_forward.1} parent=75 // loop_header_branch
                %9105 = sbr.rel (%p9102) target = $region83
              $region80: #{mlp_render_forward.1} parent=75 // loop_body
                %v9109 = vld [vmem:[%s9107] sm:$0xff]
                %9110 = vst [vmem:[%s9108] sm:$0xff] %v9109
                %v9111 = vld [vmem:[%s9107 + $0x8] sm:$0xff]
                %9112 = vst [vmem:[%s9108 + $0x8] sm:$0xff] %v9111
                %v9113 = vld [vmem:[%s9107 + $0x10] sm:$0xff]
                %9114 = vst [vmem:[%s9108 + $0x10] sm:$0xff] %v9113
                %v9115 = vld [vmem:[%s9107 + $0x18] sm:$0xff]
                %9116 = vst [vmem:[%s9108 + $0x18] sm:$0xff] %v9115
                %v9117 = vld [vmem:[%s9107 + $0x20] sm:$0xff]
                %9118 = vst [vmem:[%s9108 + $0x20] sm:$0xff] %v9117
                %v9119 = vld [vmem:[%s9107 + $0x28] sm:$0xff]
                %9120 = vst [vmem:[%s9108 + $0x28] sm:$0xff] %v9119
                %v9121 = vld [vmem:[%s9107 + $0x30] sm:$0xff]
                %9122 = vst [vmem:[%s9108 + $0x30] sm:$0xff] %v9121
                %v9123 = vld [vmem:[%s9107 + $0x38] sm:$0xff]
                %9124 = vst [vmem:[%s9108 + $0x38] sm:$0xff] %v9123
                %v9125 = vld [vmem:[%s9107 + $0x40] sm:$0xff]
                %9126 = vst [vmem:[%s9108 + $0x40] sm:$0xff] %v9125
                %v9127 = vld [vmem:[%s9107 + $0x48] sm:$0xff]
                %9128 = vst [vmem:[%s9108 + $0x48] sm:$0xff] %v9127
                %v9129 = vld [vmem:[%s9107 + $0x50] sm:$0xff]
                %9130 = vst [vmem:[%s9108 + $0x50] sm:$0xff] %v9129
                %v9131 = vld [vmem:[%s9107 + $0x58] sm:$0xff]
                %9132 = vst [vmem:[%s9108 + $0x58] sm:$0xff] %v9131
                %v9133 = vld [vmem:[%s9107 + $0x60] sm:$0xff]
                %9134 = vst [vmem:[%s9108 + $0x60] sm:$0xff] %v9133
                %v9135 = vld [vmem:[%s9107 + $0x68] sm:$0xff]
                %9136 = vst [vmem:[%s9108 + $0x68] sm:$0xff] %v9135
                %v9137 = vld [vmem:[%s9107 + $0x70] sm:$0xff]
                %9138 = vst [vmem:[%s9108 + $0x70] sm:$0xff] %v9137
                %v9139 = vld [vmem:[%s9107 + $0x78] sm:$0xff]
                %9140 = vst [vmem:[%s9108 + $0x78] sm:$0xff] %v9139
                %v9141 = vld [vmem:[%s9107 + $0x80] sm:$0xff]
                %9142 = vst [vmem:[%s9108 + $0x80] sm:$0xff] %v9141
                %v9143 = vld [vmem:[%s9107 + $0x88] sm:$0xff]
                %9144 = vst [vmem:[%s9108 + $0x88] sm:$0xff] %v9143
                %v9145 = vld [vmem:[%s9107 + $0x90] sm:$0xff]
                %9146 = vst [vmem:[%s9108 + $0x90] sm:$0xff] %v9145
                %v9147 = vld [vmem:[%s9107 + $0x98] sm:$0xff]
                %9148 = vst [vmem:[%s9108 + $0x98] sm:$0xff] %v9147
                %v9149 = vld [vmem:[%s9107 + $0xa0] sm:$0xff]
                %9150 = vst [vmem:[%s9108 + $0xa0] sm:$0xff] %v9149
                %v9151 = vld [vmem:[%s9107 + $0xa8] sm:$0xff]
                %9152 = vst [vmem:[%s9108 + $0xa8] sm:$0xff] %v9151
                %v9153 = vld [vmem:[%s9107 + $0xb0] sm:$0xff]
                %9154 = vst [vmem:[%s9108 + $0xb0] sm:$0xff] %v9153
                %v9155 = vld [vmem:[%s9107 + $0xb8] sm:$0xff]
                %9156 = vst [vmem:[%s9108 + $0xb8] sm:$0xff] %v9155
                %v9157 = vld [vmem:[%s9107 + $0xc0] sm:$0xff]
                %9158 = vst [vmem:[%s9108 + $0xc0] sm:$0xff] %v9157
                %v9159 = vld [vmem:[%s9107 + $0xc8] sm:$0xff]
                %9160 = vst [vmem:[%s9108 + $0xc8] sm:$0xff] %v9159
                %v9161 = vld [vmem:[%s9107 + $0xd0] sm:$0xff]
                %9162 = vst [vmem:[%s9108 + $0xd0] sm:$0xff] %v9161
                %v9163 = vld [vmem:[%s9107 + $0xd8] sm:$0xff]
                %9164 = vst [vmem:[%s9108 + $0xd8] sm:$0xff] %v9163
                %v9165 = vld [vmem:[%s9107 + $0xe0] sm:$0xff]
                %9166 = vst [vmem:[%s9108 + $0xe0] sm:$0xff] %v9165
                %v9167 = vld [vmem:[%s9107 + $0xe8] sm:$0xff]
                %9168 = vst [vmem:[%s9108 + $0xe8] sm:$0xff] %v9167
                %v9169 = vld [vmem:[%s9107 + $0xf0] sm:$0xff]
                %9170 = vst [vmem:[%s9108 + $0xf0] sm:$0xff] %v9169
                %v9171 = vld [vmem:[%s9107 + $0xf8] sm:$0xff]
                %9172 = vst [vmem:[%s9108 + $0xf8] sm:$0xff] %v9171
                %s9173 = sadd.s32 1, %s9106
                %p9174 = scmp.ge.s32.totalorder %s9173, %s9099
                %s9175 = scalar_select %p9174, 0, %s9173
                %s9176 = smul.u32 %s9175, 256
                %s9177 = smul.u32 %s9175, 256
                %s9178 = scalar_lea.vmem %s9079, %s9176 [#allocation2]
                %s9179 = scalar_lea.vmem %s9090, %s9177
              $region81: #{mlp_render_forward.1} parent=75 // loop_footer
                %s9103 = sadd.s32 %s9101, 1
              $region82: #{mlp_render_forward.1} parent=75 // loop_footer_branch
                %9100 = sbr.rel target = $region78
              $region83: #{mlp_render_forward.1} parent=75 // loop_exit
                _
              %s9180 = sshrl.u32 %s9086, 5
              %s9181 = sand.u32 %s9086, 31
              %s9182 = smul.u32 %s9180, 32
              %s9183 = smul.u32 8, %s9182
              %s9184 = scalar_lea.vmem %s9079, %s9183 [#allocation2]
              %s9185 = smul.u32 8, %s9182
              %s9186 = scalar_lea.vmem %s9090, %s9185
              // While loop
              $region84: #{mlp_render_forward.1} parent=75 // loop_pre_header
                _
              $region85: #{mlp_render_forward.1} parent=75 // loop_header
                %s9188 = sphi 0, %s9190
                %p9189 = scmp.ge.s32.totalorder %s9188, %s9181
                %s9193 = sphi 0, %s9200
                %s9194 = sphi %s9184, %s9203
                %s9195 = sphi %s9186, %s9204
              $region86: #{mlp_render_forward.1} parent=75 // loop_header_branch
                %9192 = sbr.rel (%p9189) target = $region90
              $region87: #{mlp_render_forward.1} parent=75 // loop_body
                %v9196 = vld [vmem:[%s9194] sm:$0xff]
                %9197 = vst [vmem:[%s9195] sm:$0xff] %v9196
                %s9198 = sadd.s32 1, %s9193
                %p9199 = scmp.ge.s32.totalorder %s9198, %s9181
                %s9200 = scalar_select %p9199, 0, %s9198
                %s9201 = smul.u32 %s9200, 8
                %s9202 = smul.u32 %s9200, 8
                %s9203 = scalar_lea.vmem %s9184, %s9201 [#allocation2]
                %s9204 = scalar_lea.vmem %s9186, %s9202
              $region88: #{mlp_render_forward.1} parent=75 // loop_footer
                %s9190 = sadd.s32 %s9188, 1
              $region89: #{mlp_render_forward.1} parent=75 // loop_footer_branch
                %9187 = sbr.rel target = $region85
              $region90: #{mlp_render_forward.1} parent=75 // loop_exit
                _
            $region76: #{mlp_render_forward.1} parent=67 // pred_fallthru
              _
          $region68: #{mlp_render_forward.1} parent=63 // pred_fallthru
            _
          %9315 = vnop
        $region64: #{mlp_render_forward.1} parent=59 // pred_fallthru
          _
      $region60: #{mlp_render_forward.1} parent=5 // pred_fallthru
        _
      %p9316 = scmp.le.s32.totalorder 2, %s16
      // Predicated region
      $region113: #{mlp_render_forward.1} parent=5 // pred_check
        %p9317 = pneg %p9316
      $region114: #{mlp_render_forward.1} parent=5 // pred_check_branch
        %9319 = sbr.rel (%p9317) target = $region116
      $region115: #{mlp_render_forward.1} parent=5 // pred_region
        %s9320 = ssub.s32 %s16, 2
        // Predicated region
        $region117: #{mlp_render_forward.1} parent=115 // pred_check
          %p9321 = pneg %p265
        $region118: #{mlp_render_forward.1} parent=115 // pred_check_branch
          %9323 = sbr.rel (%p9321) target = $region120
        $region119: #{mlp_render_forward.1} parent=115 // pred_region
          %s9324 = sand.u32 %s250, 1
          %s9325 = sand.u32 %s250, 1
          %s9326 = smul.addr %s9325, 256
          %s9327 = scalar_lea.vmem [#allocation2], %s9326
        $region120: #{mlp_render_forward.1} parent=115 // pred_fallthru
          _
      $region116: #{mlp_render_forward.1} parent=5 // pred_fallthru
        _
    $region6: #{mlp_render_forward.1} parent=1 // loop_footer
      %s20 = sadd.s32 1, %s16
    $region7: #{mlp_render_forward.1} parent=1 // loop_footer_branch
      %15 = sbr.rel target = $region3
    $region8: #{mlp_render_forward.1} parent=1 // loop_exit
      _

</llo_original>
